<compile_context>
chip_gen: v6e
topology: v6e:2x2x1
jax: 0.10.0
libtpu: 0.0.40
codegen_flags: <defaults>
</compile_context>

<pallas_src>
import jax
import jax.numpy as jnp
from jax.experimental import pallas as pl
from jax.experimental.pallas import tpu as pltpu


def _bottleneck_kernel(x_ref, w1_ref, b1_ref, w2_ref, b2_ref, w3_ref, b3_ref,
                       out_ref, h1_pad_ref):
    """NB batch elements per grid step.

    x_ref      : (NB, H, W, Cin)     f32   VMEM
    w1_ref     : (Cin, P)            bf16  BN1 scale pre-folded
    w2_ref     : (9*P, P)            bf16  3x3 taps flattened (ky, kx, cin), BN2 folded
    w3_ref     : (P, 4P)             bf16  BN3 scale pre-folded
    b*_ref     : (1, Cout)           f32   folded BN bias
    out_ref    : (NB, H, W, Cin)     f32   (Cin == 4P)
    h1_pad_ref : (NB, H+2, W+2, P)   bf16  zero-halo scratch for the 3x3 conv
    """
    NB, H, W, Cin = x_ref.shape
    P = w1_ref.shape[1]
    M = NB * H * W

    x2d = x_ref[...].reshape(M, Cin)            # f32, kept for the residual

    # ---- conv1 (1x1) + bn1 + relu  (bf16 MXU, f32 accumulate) -----------
    h1 = jnp.dot(x2d.astype(jnp.bfloat16), w1_ref[...],
                 preferred_element_type=jnp.float32)
    h1 = jnp.maximum(h1 + b1_ref[...], 0.0)

    # ---- conv2 (3x3, stride 1, pad 1) + bn2 + relu -----------------------
    # Zero only the 1-pixel halo; the interior is fully overwritten each step.
    zrow = jnp.zeros((NB, 1, W + 2, P), h1_pad_ref.dtype)
    zcol = jnp.zeros((NB, H, 1, P), h1_pad_ref.dtype)
    h1_pad_ref[:, 0:1, :, :] = zrow
    h1_pad_ref[:, H + 1:H + 2, :, :] = zrow
    h1_pad_ref[:, 1:H + 1, 0:1, :] = zcol
    h1_pad_ref[:, 1:H + 1, W + 1:W + 2, :] = zcol
    h1_pad_ref[:, 1:H + 1, 1:W + 1, :] = (
        h1.astype(jnp.bfloat16).reshape(NB, H, W, P))

    # im2col: one fat matmul (M, 9P) x (9P, P) instead of 9 tiny K=P dots.
    patches = jnp.concatenate(
        [h1_pad_ref[:, dy:dy + H, dx:dx + W, :].reshape(M, P)
         for dy in range(3) for dx in range(3)],
        axis=-1)                                               # (M, 9P) bf16
    h2 = jnp.dot(patches, w2_ref[...], preferred_element_type=jnp.float32)
    h2 = jnp.maximum(h2 + b2_ref[...], 0.0)

    # ---- conv3 (1x1, expansion 4) + bn3 ----------------------------------
    h3 = jnp.dot(h2.astype(jnp.bfloat16), w3_ref[...],
                 preferred_element_type=jnp.float32)

    # ---- bias + residual + relu (f32 epilogue) ----------------------------
    out_ref[...] = jnp.maximum(h3 + b3_ref[...] + x2d, 0.0).reshape(NB, H, W, Cin)


def bottleneck_forward(x_nchw, params):
    """x_nchw: (N, Cin, H, W) float32; returns (N, Cin, H, W) float32."""
    (w1, s1, b1, w2, s2, b2, w3, s3, b3) = params
    N, Cin, H, W = x_nchw.shape
    P = w1.shape[1]
    assert Cin == 4 * P, "residual path requires in_planes == planes * expansion"

    # Batch-block size: keep >= 2 grid steps for megacore when possible.
    NB = 2 if (N % 2 == 0 and N >= 4) else 1
    assert N % NB == 0

    # Fold BN scale into the conv weights (once, outside the kernel) and cast
    # the MXU operands to bf16.  Biases stay f32 (epilogue on f32 accumulator).
    w1f = (w1 * s1[0]).astype(jnp.bfloat16)                     # (Cin, P)
    w2f = (w2 * s2[0]).astype(jnp.bfloat16).reshape(9 * P, P)   # (9P, P)
    w3f = (w3 * s3[0]).astype(jnp.bfloat16)                     # (P, 4P)

    x_nhwc = jnp.transpose(x_nchw, (0, 2, 3, 1))  # NCHW -> NHWC (lane-dense C)

    full = lambda shape: pl.BlockSpec(shape, lambda n: (0,) * len(shape))

    flops = 2 * N * H * W * (Cin * P + 9 * P * P + P * 4 * P)
    bytes_accessed = int(2 * N * H * W * Cin * 4
                         + (w1f.size + w2f.size + w3f.size) * 2
                         + (b1.size + b2.size + b3.size) * 4)

    out_nhwc = pl.pallas_call(
        _bottleneck_kernel,
        out_shape=jax.ShapeDtypeStruct((N, H, W, Cin), jnp.float32),
        grid_spec=pltpu.PrefetchScalarGridSpec(
            num_scalar_prefetch=0,
            grid=(N // NB,),
            in_specs=[
                pl.BlockSpec((NB, H, W, Cin), lambda n: (n, 0, 0, 0)),
                full((Cin, P)), full((1, P)),
                full((9 * P, P)), full((1, P)),
                full((P, 4 * P)), full((1, 4 * P)),
            ],
            out_specs=pl.BlockSpec((NB, H, W, Cin), lambda n: (n, 0, 0, 0)),
            scratch_shapes=[pltpu.VMEM((NB, H + 2, W + 2, P), jnp.bfloat16)],
        ),
        compiler_params=pltpu.CompilerParams(
            dimension_semantics=("parallel",),
            vmem_limit_bytes=32 * 1024 * 1024),
        cost_estimate=pl.CostEstimate(flops=flops, transcendentals=0,
                                      bytes_accessed=bytes_accessed),
    )(x_nhwc, w1f, b1, w2f, b2, w3f, b3)

    return jnp.transpose(out_nhwc, (0, 3, 1, 2))  # NHWC -> NCHW


def _fold_bn(gamma, beta, mean, var, eps=1e-5):
    scale = gamma / jnp.sqrt(var + eps)
    bias = beta - mean * scale
    return scale[None, :], bias[None, :]


def make_params(key, in_planes, planes):
    """Deterministic synthetic weights matching Bottleneck's __init__ shapes."""
    ks = jax.random.split(key, 12)
    exp = 4 * planes

    # conv weights, stored as [in, out] (1x1) / [kH, kW, in, out] (3x3)
    w1 = jax.random.normal(ks[0], (in_planes, planes), jnp.float32) * 0.1
    w2 = jax.random.normal(ks[1], (3, 3, planes, planes), jnp.float32) * 0.1
    w3 = jax.random.normal(ks[2], (planes, exp), jnp.float32) * 0.1

    def bn_params(kg, kb, km, kv, c):
        gamma = 1.0 + 0.1 * jax.random.normal(kg, (c,), jnp.float32)
        beta = 0.1 * jax.random.normal(kb, (c,), jnp.float32)
        mean = 0.1 * jax.random.normal(km, (c,), jnp.float32)
        var = jnp.abs(jax.random.normal(kv, (c,), jnp.float32)) + 0.5
        return _fold_bn(gamma, beta, mean, var)

    s1, b1 = bn_params(ks[3], ks[4], ks[5], ks[6], planes)
    s2, b2 = bn_params(ks[7], ks[8], ks[9], ks[10], planes)
    s3, b3 = bn_params(ks[11], ks[0], ks[1], ks[2], exp)  # key reuse: intentional, deterministic
    return (w1, s1, b1, w2, s2, b2, w3, s3, b3)


def reference_forward(x_nchw, params):
    """Plain f32 reference (unfolded BN) used to sanity-check the scale fold."""
    (w1, s1, b1, w2, s2, b2, w3, s3, b3) = params
    hi = jax.lax.Precision.HIGHEST
    x = jnp.transpose(x_nchw, (0, 2, 3, 1))
    h = jax.nn.relu(jnp.einsum('nhwc,cd->nhwd', x, w1, precision=hi) * s1[0] + b1[0])
    h = jax.lax.conv_general_dilated(
        h, w2, window_strides=(1, 1), padding='SAME',
        dimension_numbers=('NHWC', 'HWIO', 'NHWC'), precision=hi)
    h = jax.nn.relu(h * s2[0] + b2[0])
    h = jnp.einsum('nhwc,cd->nhwd', h, w3, precision=hi) * s3[0] + b3[0]
    y = jax.nn.relu(x + h)
    return jnp.transpose(y, (0, 3, 1, 2))


def reference_forward_bf16(x_nchw, params):
    """Reference mirroring the kernel's arithmetic: BN scale folded into the
    weights, matmul/conv operands rounded to bf16, f32 accumulation."""
    (w1, s1, b1, w2, s2, b2, w3, s3, b3) = params
    hi = jax.lax.Precision.HIGHEST
    rnd = lambda a: a.astype(jnp.bfloat16).astype(jnp.float32)
    w1f, w2f, w3f = rnd(w1 * s1[0]), rnd(w2 * s2[0]), rnd(w3 * s3[0])
    x = jnp.transpose(x_nchw, (0, 2, 3, 1))
    h = jax.nn.relu(jnp.einsum('nhwc,cd->nhwd', rnd(x), w1f, precision=hi) + b1[0])
    h = jax.lax.conv_general_dilated(
        rnd(h), w2f, window_strides=(1, 1), padding='SAME',
        dimension_numbers=('NHWC', 'HWIO', 'NHWC'), precision=hi)
    h = jax.nn.relu(h + b2[0])
    h = jnp.einsum('nhwc,cd->nhwd', rnd(h), w3f, precision=hi) + b3[0]
    y = jax.nn.relu(x + h)
    return jnp.transpose(y, (0, 3, 1, 2))


if __name__ == "__main__":
    key = jax.random.PRNGKey(0)
    k_x, k_p = jax.random.split(key)

    planes = 32
    in_planes = 4 * planes      # 128: lane-dense residual / output channels
    N, H, W = 4, 16, 16         # NB=2 per step -> 2 parallel grid units (v7x)

    x = jax.random.normal(k_x, (N, in_planes, H, W), jnp.float32)
    params = make_params(k_p, in_planes, planes)

    fwd = jax.jit(bottleneck_forward)
    out = jax.block_until_ready(fwd(x, params))

    ref_bf16 = reference_forward_bf16(x, params)   # same rounding as the kernel
    ref_f32 = reference_forward(x, params)         # plain f32, unfolded BN

    assert out.shape == ref_f32.shape == (N, in_planes, H, W)
    err_tight = float(jnp.max(jnp.abs(out - ref_bf16)))
    err_loose = float(jnp.max(jnp.abs(out - ref_f32)))
    assert err_tight < 2e-2, f"Pallas kernel mismatch vs bf16 reference: {err_tight}"
    assert err_loose < 2e-1, f"Pallas kernel mismatch vs f32 reference: {err_loose}"

    print("KERNEL_OK")
</pallas_src>

<mosaic_0001>
module attributes {stable_mosaic.version = 11 : i64} {
  func.func @_bottleneck_kernel(%arg0: i32, %arg1: memref<2x16x16x128xf32, #tpu.memory_space<vmem>>, %arg2: memref<128x32xbf16, #tpu.memory_space<vmem>>, %arg3: memref<1x32xf32, #tpu.memory_space<vmem>>, %arg4: memref<288x32xbf16, #tpu.memory_space<vmem>>, %arg5: memref<1x32xf32, #tpu.memory_space<vmem>>, %arg6: memref<32x128xbf16, #tpu.memory_space<vmem>>, %arg7: memref<1x128xf32, #tpu.memory_space<vmem>>, %arg8: memref<2x16x16x128xf32, #tpu.memory_space<vmem>>, %arg9: memref<2x18x18x32xbf16, #tpu.memory_space<vmem>>) attributes {dimension_semantics = [#tpu.dimension_semantics<parallel>], iteration_bounds = array<i64: 2>, scalar_prefetch = 0 : i64, scratch_operands = 1 : i64, tpu.core_type = #tpu.core_type<tc>, window_params = [{transform_indices = @transform_0, window_bounds = array<i64: 2, 16, 16, 128>}, {pipeline_mode = #tpu.pipeline_mode<synchronous>, transform_indices = @transform_1, window_bounds = array<i64: 128, 32>}, {pipeline_mode = #tpu.pipeline_mode<synchronous>, transform_indices = @transform_2, window_bounds = array<i64: 1, 32>}, {pipeline_mode = #tpu.pipeline_mode<synchronous>, transform_indices = @transform_3, window_bounds = array<i64: 288, 32>}, {pipeline_mode = #tpu.pipeline_mode<synchronous>, transform_indices = @transform_4, window_bounds = array<i64: 1, 32>}, {pipeline_mode = #tpu.pipeline_mode<synchronous>, transform_indices = @transform_5, window_bounds = array<i64: 32, 128>}, {pipeline_mode = #tpu.pipeline_mode<synchronous>, transform_indices = @transform_6, window_bounds = array<i64: 1, 128>}, {transform_indices = @transform_7, window_bounds = array<i64: 2, 16, 16, 128>}]} {
    %c0 = arith.constant 0 : index
    %c0_0 = arith.constant 0 : index
    %c0_1 = arith.constant 0 : index
    %c0_2 = arith.constant 0 : index
    %0 = vector.load %arg1[%c0, %c0_0, %c0_1, %c0_2] : memref<2x16x16x128xf32, #tpu.memory_space<vmem>>, vector<2x16x16x128xf32>
    %1 = vector.shape_cast %0 : vector<2x16x16x128xf32> to vector<512x128xf32>
    %2 = arith.truncf %1 : vector<512x128xf32> to vector<512x128xbf16>
    %c0_3 = arith.constant 0 : index
    %c0_4 = arith.constant 0 : index
    %3 = vector.load %arg2[%c0_3, %c0_4] : memref<128x32xbf16, #tpu.memory_space<vmem>>, vector<128x32xbf16>
    %cst = arith.constant dense<0.000000e+00> : vector<512x32xf32>
    %4 = tpu.matmul %2, %3, %cst {dimension_numbers = #tpu.dot_dimension_numbers<[1], [0], [0], [1], [0, 0, 1, 1], [], []>} : vector<512x128xbf16>, vector<128x32xbf16>, vector<512x32xf32> -> vector<512x32xf32>
    %c0_5 = arith.constant 0 : index
    %c0_6 = arith.constant 0 : index
    %5 = vector.load %arg3[%c0_5, %c0_6] : memref<1x32xf32, #tpu.memory_space<vmem>>, vector<1x32xf32>
    %6 = vector.broadcast %5 : vector<1x32xf32> to vector<512x32xf32>
    %7 = arith.addf %4, %6 : vector<512x32xf32>
    %cst_7 = arith.constant 0.000000e+00 : f32
    %8 = vector.broadcast %cst_7 : f32 to vector<512x32xf32>
    %9 = arith.maximumf %7, %8 : vector<512x32xf32>
    %cst_8 = arith.constant 0.000000e+00 : bf16
    %10 = vector.broadcast %cst_8 : bf16 to vector<2x1x18x32xbf16>
    %cst_9 = arith.constant 0.000000e+00 : bf16
    %11 = vector.broadcast %cst_9 : bf16 to vector<2x16x1x32xbf16>
    %c0_10 = arith.constant 0 : index
    %c0_11 = arith.constant 0 : index
    %c0_12 = arith.constant 0 : index
    %c0_13 = arith.constant 0 : index
    %12 = vector.load %arg9[%c0_10, %c0_11, %c0_12, %c0_13] : memref<2x18x18x32xbf16, #tpu.memory_space<vmem>>, vector<2x1x18x32xbf16>
    tpu.vector_store %arg9[%c0_10, %c0_11, %c0_12, %c0_13], %10 {strides = array<i32>} : memref<2x18x18x32xbf16, #tpu.memory_space<vmem>>, vector<2x1x18x32xbf16>,
    %c0_14 = arith.constant 0 : index
    %c17 = arith.constant 17 : index
    %c0_15 = arith.constant 0 : index
    %c0_16 = arith.constant 0 : index
    %13 = vector.load %arg9[%c0_14, %c17, %c0_15, %c0_16] : memref<2x18x18x32xbf16, #tpu.memory_space<vmem>>, vector<2x1x18x32xbf16>
    tpu.vector_store %arg9[%c0_14, %c17, %c0_15, %c0_16], %10 {strides = array<i32>} : memref<2x18x18x32xbf16, #tpu.memory_space<vmem>>, vector<2x1x18x32xbf16>,
    %c0_17 = arith.constant 0 : index
    %c1 = arith.constant 1 : index
    %c0_18 = arith.constant 0 : index
    %c0_19 = arith.constant 0 : index
    %14 = vector.load %arg9[%c0_17, %c1, %c0_18, %c0_19] : memref<2x18x18x32xbf16, #tpu.memory_space<vmem>>, vector<2x16x1x32xbf16>
    tpu.vector_store %arg9[%c0_17, %c1, %c0_18, %c0_19], %11 {strides = array<i32>} : memref<2x18x18x32xbf16, #tpu.memory_space<vmem>>, vector<2x16x1x32xbf16>,
    %c0_20 = arith.constant 0 : index
    %c1_21 = arith.constant 1 : index
    %c17_22 = arith.constant 17 : index
    %c0_23 = arith.constant 0 : index
    %15 = vector.load %arg9[%c0_20, %c1_21, %c17_22, %c0_23] : memref<2x18x18x32xbf16, #tpu.memory_space<vmem>>, vector<2x16x1x32xbf16>
    tpu.vector_store %arg9[%c0_20, %c1_21, %c17_22, %c0_23], %11 {strides = array<i32>} : memref<2x18x18x32xbf16, #tpu.memory_space<vmem>>, vector<2x16x1x32xbf16>,
    %16 = arith.truncf %9 : vector<512x32xf32> to vector<512x32xbf16>
    %17 = vector.shape_cast %16 : vector<512x32xbf16> to vector<2x16x16x32xbf16>
    %c0_24 = arith.constant 0 : index
    %c1_25 = arith.constant 1 : index
    %c1_26 = arith.constant 1 : index
    %c0_27 = arith.constant 0 : index
    %18 = vector.load %arg9[%c0_24, %c1_25, %c1_26, %c0_27] : memref<2x18x18x32xbf16, #tpu.memory_space<vmem>>, vector<2x16x16x32xbf16>
    tpu.vector_store %arg9[%c0_24, %c1_25, %c1_26, %c0_27], %17 {strides = array<i32>} : memref<2x18x18x32xbf16, #tpu.memory_space<vmem>>, vector<2x16x16x32xbf16>,
    %c0_28 = arith.constant 0 : index
    %c0_29 = arith.constant 0 : index
    %c0_30 = arith.constant 0 : index
    %c0_31 = arith.constant 0 : index
    %19 = vector.load %arg9[%c0_28, %c0_29, %c0_30, %c0_31] : memref<2x18x18x32xbf16, #tpu.memory_space<vmem>>, vector<2x16x16x32xbf16>
    %20 = vector.shape_cast %19 : vector<2x16x16x32xbf16> to vector<512x32xbf16>
    %c0_32 = arith.constant 0 : index
    %c0_33 = arith.constant 0 : index
    %c1_34 = arith.constant 1 : index
    %c0_35 = arith.constant 0 : index
    %21 = vector.load %arg9[%c0_32, %c0_33, %c1_34, %c0_35] : memref<2x18x18x32xbf16, #tpu.memory_space<vmem>>, vector<2x16x16x32xbf16>
    %22 = vector.shape_cast %21 : vector<2x16x16x32xbf16> to vector<512x32xbf16>
    %c0_36 = arith.constant 0 : index
    %c0_37 = arith.constant 0 : index
    %c2 = arith.constant 2 : index
    %c0_38 = arith.constant 0 : index
    %23 = vector.load %arg9[%c0_36, %c0_37, %c2, %c0_38] : memref<2x18x18x32xbf16, #tpu.memory_space<vmem>>, vector<2x16x16x32xbf16>
    %24 = vector.shape_cast %23 : vector<2x16x16x32xbf16> to vector<512x32xbf16>
    %c0_39 = arith.constant 0 : index
    %c1_40 = arith.constant 1 : index
    %c0_41 = arith.constant 0 : index
    %c0_42 = arith.constant 0 : index
    %25 = vector.load %arg9[%c0_39, %c1_40, %c0_41, %c0_42] : memref<2x18x18x32xbf16, #tpu.memory_space<vmem>>, vector<2x16x16x32xbf16>
    %26 = vector.shape_cast %25 : vector<2x16x16x32xbf16> to vector<512x32xbf16>
    %c0_43 = arith.constant 0 : index
    %c1_44 = arith.constant 1 : index
    %c1_45 = arith.constant 1 : index
    %c0_46 = arith.constant 0 : index
    %27 = vector.load %arg9[%c0_43, %c1_44, %c1_45, %c0_46] : memref<2x18x18x32xbf16, #tpu.memory_space<vmem>>, vector<2x16x16x32xbf16>
    %28 = vector.shape_cast %27 : vector<2x16x16x32xbf16> to vector<512x32xbf16>
    %c0_47 = arith.constant 0 : index
    %c1_48 = arith.constant 1 : index
    %c2_49 = arith.constant 2 : index
    %c0_50 = arith.constant 0 : index
    %29 = vector.load %arg9[%c0_47, %c1_48, %c2_49, %c0_50] : memref<2x18x18x32xbf16, #tpu.memory_space<vmem>>, vector<2x16x16x32xbf16>
    %30 = vector.shape_cast %29 : vector<2x16x16x32xbf16> to vector<512x32xbf16>
    %c0_51 = arith.constant 0 : index
    %c2_52 = arith.constant 2 : index
    %c0_53 = arith.constant 0 : index
    %c0_54 = arith.constant 0 : index
    %31 = vector.load %arg9[%c0_51, %c2_52, %c0_53, %c0_54] : memref<2x18x18x32xbf16, #tpu.memory_space<vmem>>, vector<2x16x16x32xbf16>
    %32 = vector.shape_cast %31 : vector<2x16x16x32xbf16> to vector<512x32xbf16>
    %c0_55 = arith.constant 0 : index
    %c2_56 = arith.constant 2 : index
    %c1_57 = arith.constant 1 : index
    %c0_58 = arith.constant 0 : index
    %33 = vector.load %arg9[%c0_55, %c2_56, %c1_57, %c0_58] : memref<2x18x18x32xbf16, #tpu.memory_space<vmem>>, vector<2x16x16x32xbf16>
    %34 = vector.shape_cast %33 : vector<2x16x16x32xbf16> to vector<512x32xbf16>
    %c0_59 = arith.constant 0 : index
    %c2_60 = arith.constant 2 : index
    %c2_61 = arith.constant 2 : index
    %c0_62 = arith.constant 0 : index
    %35 = vector.load %arg9[%c0_59, %c2_60, %c2_61, %c0_62] : memref<2x18x18x32xbf16, #tpu.memory_space<vmem>>, vector<2x16x16x32xbf16>
    %36 = vector.shape_cast %35 : vector<2x16x16x32xbf16> to vector<512x32xbf16>
    %37 = tpu.concatenate %20, %22, %24, %26, %28, %30, %32, %34, %36 in 1 : vector<512x32xbf16>, vector<512x32xbf16>, vector<512x32xbf16>, vector<512x32xbf16>, vector<512x32xbf16>, vector<512x32xbf16>, vector<512x32xbf16>, vector<512x32xbf16>, vector<512x32xbf16> -> vector<512x288xbf16>
    %c0_63 = arith.constant 0 : index
    %c0_64 = arith.constant 0 : index
    %38 = vector.load %arg4[%c0_63, %c0_64] : memref<288x32xbf16, #tpu.memory_space<vmem>>, vector<288x32xbf16>
    %cst_65 = arith.constant dense<0.000000e+00> : vector<512x32xf32>
    %39 = tpu.matmul %37, %38, %cst_65 {dimension_numbers = #tpu.dot_dimension_numbers<[1], [0], [0], [1], [0, 0, 1, 1], [], []>} : vector<512x288xbf16>, vector<288x32xbf16>, vector<512x32xf32> -> vector<512x32xf32>
    %c0_66 = arith.constant 0 : index
    %c0_67 = arith.constant 0 : index
    %40 = vector.load %arg5[%c0_66, %c0_67] : memref<1x32xf32, #tpu.memory_space<vmem>>, vector<1x32xf32>
    %41 = vector.broadcast %40 : vector<1x32xf32> to vector<512x32xf32>
    %42 = arith.addf %39, %41 : vector<512x32xf32>
    %cst_68 = arith.constant 0.000000e+00 : f32
    %43 = vector.broadcast %cst_68 : f32 to vector<512x32xf32>
    %44 = arith.maximumf %42, %43 : vector<512x32xf32>
    %45 = arith.truncf %44 : vector<512x32xf32> to vector<512x32xbf16>
    %c0_69 = arith.constant 0 : index
    %c0_70 = arith.constant 0 : index
    %46 = vector.load %arg6[%c0_69, %c0_70] : memref<32x128xbf16, #tpu.memory_space<vmem>>, vector<32x128xbf16>
    %cst_71 = arith.constant dense<0.000000e+00> : vector<512x128xf32>
    %47 = tpu.matmul %45, %46, %cst_71 {dimension_numbers = #tpu.dot_dimension_numbers<[1], [0], [0], [1], [0, 0, 1, 1], [], []>} : vector<512x32xbf16>, vector<32x128xbf16>, vector<512x128xf32> -> vector<512x128xf32>
    %c0_72 = arith.constant 0 : index
    %c0_73 = arith.constant 0 : index
    %48 = vector.load %arg7[%c0_72, %c0_73] : memref<1x128xf32, #tpu.memory_space<vmem>>, vector<1x128xf32>
    %49 = vector.broadcast %48 : vector<1x128xf32> to vector<512x128xf32>
    %50 = arith.addf %47, %49 : vector<512x128xf32>
    %51 = arith.addf %50, %1 : vector<512x128xf32>
    %cst_74 = arith.constant 0.000000e+00 : f32
    %52 = vector.broadcast %cst_74 : f32 to vector<512x128xf32>
    %53 = arith.maximumf %51, %52 : vector<512x128xf32>
    %54 = vector.shape_cast %53 : vector<512x128xf32> to vector<2x16x16x128xf32>
    %c0_75 = arith.constant 0 : index
    %c0_76 = arith.constant 0 : index
    %c0_77 = arith.constant 0 : index
    %c0_78 = arith.constant 0 : index
    %55 = vector.load %arg8[%c0_75, %c0_76, %c0_77, %c0_78] : memref<2x16x16x128xf32, #tpu.memory_space<vmem>>, vector<2x16x16x128xf32>
    tpu.vector_store %arg8[%c0_75, %c0_76, %c0_77, %c0_78], %54 {strides = array<i32>} : memref<2x16x16x128xf32, #tpu.memory_space<vmem>>, vector<2x16x16x128xf32>,
    return
  }
  func.func @transform_0(%arg0: i32) -> (i32, i32, i32, i32) {
    %c0_i32 = arith.constant 0 : i32
    %c0_i32_0 = arith.constant 0 : i32
    %c0_i32_1 = arith.constant 0 : i32
    %c0_i32_2 = arith.constant 0 : i32
    return %arg0, %c0_i32, %c0_i32_0, %c0_i32_1 : i32, i32, i32, i32
  }
  func.func @transform_1(%arg0: i32) -> (i32, i32) {
    %c0_i32 = arith.constant 0 : i32
    %c0_i32_0 = arith.constant 0 : i32
    %c0_i32_1 = arith.constant 0 : i32
    return %c0_i32, %c0_i32_0 : i32, i32
  }
  func.func @transform_2(%arg0: i32) -> (i32, i32) {
    %c0_i32 = arith.constant 0 : i32
    %c0_i32_0 = arith.constant 0 : i32
    %c0_i32_1 = arith.constant 0 : i32
    return %c0_i32, %c0_i32_0 : i32, i32
  }
  func.func @transform_3(%arg0: i32) -> (i32, i32) {
    %c0_i32 = arith.constant 0 : i32
    %c0_i32_0 = arith.constant 0 : i32
    %c0_i32_1 = arith.constant 0 : i32
    return %c0_i32, %c0_i32_0 : i32, i32
  }
  func.func @transform_4(%arg0: i32) -> (i32, i32) {
    %c0_i32 = arith.constant 0 : i32
    %c0_i32_0 = arith.constant 0 : i32
    %c0_i32_1 = arith.constant 0 : i32
    return %c0_i32, %c0_i32_0 : i32, i32
  }
  func.func @transform_5(%arg0: i32) -> (i32, i32) {
    %c0_i32 = arith.constant 0 : i32
    %c0_i32_0 = arith.constant 0 : i32
    %c0_i32_1 = arith.constant 0 : i32
    return %c0_i32, %c0_i32_0 : i32, i32
  }
  func.func @transform_6(%arg0: i32) -> (i32, i32) {
    %c0_i32 = arith.constant 0 : i32
    %c0_i32_0 = arith.constant 0 : i32
    %c0_i32_1 = arith.constant 0 : i32
    return %c0_i32, %c0_i32_0 : i32, i32
  }
  func.func @transform_7(%arg0: i32) -> (i32, i32, i32, i32) {
    %c0_i32 = arith.constant 0 : i32
    %c0_i32_0 = arith.constant 0 : i32
    %c0_i32_1 = arith.constant 0 : i32
    %c0_i32_2 = arith.constant 0 : i32
    return %arg0, %c0_i32, %c0_i32_0, %c0_i32_1 : i32, i32, i32, i32
  }
}

</mosaic_0001>

<llo_original>
// kernel: bottleneck_forward.1
$region0: #{bottleneck_forward.1}
  #allocation0 [shape = 'u32[]', space=smem, size = 0x4, offset = 0x4, fixed_abs, tag = 'smem constant byte address 0x4 - core index']
  #allocation1 [shape = 'u32[144,128]{1,0:T(1,128)}', space=vmem, size = 0x12000, scoped, tag = 'internal scratch']
  #allocation2 [shape = 'bf16[2,18,18,32]{3,2,1,0:T(8,128)(2,1)}', space=vmem, size = 0x36000, scoped, tag = 'scratch operand']
  %s0 = inlined_call_operand.hbm [shape: f32[4,16,16,128], index: 0, kind: input, shape index: {}]
  %s1 = inlined_call_operand.vmem [shape: bf16[128,32], index: 1, kind: input, shape index: {}]
  %s2 = inlined_call_operand.vmem [shape: f32[1,32], index: 2, kind: input, shape index: {}]
  %s3 = inlined_call_operand.vmem [shape: bf16[288,32], index: 3, kind: input, shape index: {}]
  %s4 = inlined_call_operand.vmem [shape: f32[1,32], index: 4, kind: input, shape index: {}]
  %s5 = inlined_call_operand.vmem [shape: bf16[32,128], index: 5, kind: input, shape index: {}]
  %s6 = inlined_call_operand.vmem [shape: f32[1,128], index: 6, kind: input, shape index: {}]
  %s7 = inlined_call_operand.hbm [shape: f32[4,16,16,128], index: 7, kind: output, shape index: {}]
  %s8 = sld [smem:[#allocation0]]
  $region65: #{bottleneck_forward.1} parent=0
    _
  %s10 = ssub.s32 1, %s8
  %s11 = scalar_select 0, %s10, %s8
  $region1: #{bottleneck_forward.1} parent=0
    #allocation3 [shape = 'u8[524288]{0}', space=vmem, size = 0x80000, scoped, tag = 'input window, operand 0']
    #allocation4 [shape = 's32[2]{0}', space=sflag, size = 0x8, scoped, tag = 'scoped memory for bottleneck_forward.1']
    #allocation5 [shape = 's32[2]{0}', space=sflag, size = 0x8, scoped, tag = 'scoped memory for bottleneck_forward.1']
    #allocation6 [shape = 'u8[524288]{0}', space=vmem, size = 0x80000, scoped, tag = 'output window, operand 0']
    %12 = vsyncpa [#allocation4], 0
    %s13 = scalar_lea.sflag [#allocation4], 1
    %14 = vsyncpa %s13, 0
    %15 = vsyncpa [#allocation5], 0
    %s16 = scalar_lea.sflag [#allocation5], 1
    %17 = vsyncpa %s16, 0
    loop: start=0, step=1, limit=4
    $region2: #{bottleneck_forward.1} parent=1 // loop_pre_header
      _
    $region3: #{bottleneck_forward.1} parent=1 // loop_header
      %s19 = sphi 0, %s23
      %p20 = scmp.ge.s32.totalorder %s19, 4
      %s29 = sphi 0, %s31
      %s32 = sphi 0, %s29
      %s33 = sphi 0, %s32
      %s49 = sphi 0, %s33
      %s53 = sphi 0, %s53
      %s55 = sphi 0, %s53
      %s56 = sphi 0, %s55
      %s70 = sphi 0, %s56
      %s74 = sphi 0, %s74
      %s76 = sphi 0, %s74
      %s77 = sphi 0, %s76
      %s91 = sphi 0, %s77
      %s95 = sphi 0, %s95
      %s97 = sphi 0, %s95
      %s98 = sphi 0, %s97
      %s112 = sphi 0, %s98
      %s116 = sphi 0, %s116
      %s118 = sphi 0, %s116
      %s119 = sphi 0, %s118
      %s133 = sphi 0, %s119
      %s137 = sphi 0, %s137
      %s139 = sphi 0, %s137
      %s140 = sphi 0, %s139
      %s154 = sphi 0, %s140
      %s158 = sphi 0, %s158
      %s160 = sphi 0, %s158
      %s161 = sphi 0, %s160
      %s175 = sphi 0, %s161
      %s181 = sphi 0, %s183
      %s184 = sphi 0, %s181
      %s185 = sphi 0, %s184
      %s201 = sphi 0, %s185
    $region4: #{bottleneck_forward.1} parent=1 // loop_header_branch
      %22 = sbr.rel (%p20) target = $region8
    $region5: #{bottleneck_forward.1} parent=1 // loop_body
      %s24 = ssub.s32 %s19, 1
      %s25 = ssub.s32 %s19, 2
      %s26 = sadd.s32 %s19, 1
      %s27 = ssub.s32 %s19, %s26
      %p28 = scmp.eq.s32.totalorder %s27, 0
      %s30 = sadd.s32 %s29, 1
      %s31 = scalar_select %p28, %s29, %s30
      %p34 = pneg %p28
      %p35 = scmp.eq.s32.totalorder %s19, 1
      %p36 = por %p34, %p35
      %p37 = scmp.ne.s32.totalorder %s29, %s32
      %p38 = scmp.eq.s32.totalorder %s19, 0
      %p39 = por %p37, %p38
      %p40 = scmp.ne.s32.totalorder %s29, %s32
      %p41 = scmp.eq.s32.totalorder %s24, 1
      %p42 = por %p40, %p41
      %p43 = scmp.ne.s32.totalorder %s32, %s33
      %p44 = scmp.eq.s32.totalorder %s24, 0
      %p45 = por %p43, %p44
      %p46 = scmp.ne.s32.totalorder %s32, %s33
      %p47 = scmp.eq.s32.totalorder %s25, 1
      %p48 = por %p46, %p47
      %p50 = scmp.ne.s32.totalorder %s33, %s49
      %p51 = scmp.eq.s32.totalorder %s25, 0
      %p52 = por %p50, %p51
      %s54 = sadd.s32 %s53, 1
      %p57 = scmp.eq.s32.totalorder %s19, 1
      %p58 = scmp.ne.s32.totalorder %s53, %s55
      %p59 = scmp.eq.s32.totalorder %s19, 0
      %p60 = por %p58, %p59
      %p61 = scmp.ne.s32.totalorder %s53, %s55
      %p62 = scmp.eq.s32.totalorder %s24, 1
      %p63 = por %p61, %p62
      %p64 = scmp.ne.s32.totalorder %s55, %s56
      %p65 = scmp.eq.s32.totalorder %s24, 0
      %p66 = por %p64, %p65
      %p67 = scmp.ne.s32.totalorder %s55, %s56
      %p68 = scmp.eq.s32.totalorder %s25, 1
      %p69 = por %p67, %p68
      %p71 = scmp.ne.s32.totalorder %s56, %s70
      %p72 = scmp.eq.s32.totalorder %s25, 0
      %p73 = por %p71, %p72
      %s75 = sadd.s32 %s74, 1
      %p78 = scmp.eq.s32.totalorder %s19, 1
      %p79 = scmp.ne.s32.totalorder %s74, %s76
      %p80 = scmp.eq.s32.totalorder %s19, 0
      %p81 = por %p79, %p80
      %p82 = scmp.ne.s32.totalorder %s74, %s76
      %p83 = scmp.eq.s32.totalorder %s24, 1
      %p84 = por %p82, %p83
      %p85 = scmp.ne.s32.totalorder %s76, %s77
      %p86 = scmp.eq.s32.totalorder %s24, 0
      %p87 = por %p85, %p86
      %p88 = scmp.ne.s32.totalorder %s76, %s77
      %p89 = scmp.eq.s32.totalorder %s25, 1
      %p90 = por %p88, %p89
      %p92 = scmp.ne.s32.totalorder %s77, %s91
      %p93 = scmp.eq.s32.totalorder %s25, 0
      %p94 = por %p92, %p93
      %s96 = sadd.s32 %s95, 1
      %p99 = scmp.eq.s32.totalorder %s19, 1
      %p100 = scmp.ne.s32.totalorder %s95, %s97
      %p101 = scmp.eq.s32.totalorder %s19, 0
      %p102 = por %p100, %p101
      %p103 = scmp.ne.s32.totalorder %s95, %s97
      %p104 = scmp.eq.s32.totalorder %s24, 1
      %p105 = por %p103, %p104
      %p106 = scmp.ne.s32.totalorder %s97, %s98
      %p107 = scmp.eq.s32.totalorder %s24, 0
      %p108 = por %p106, %p107
      %p109 = scmp.ne.s32.totalorder %s97, %s98
      %p110 = scmp.eq.s32.totalorder %s25, 1
      %p111 = por %p109, %p110
      %p113 = scmp.ne.s32.totalorder %s98, %s112
      %p114 = scmp.eq.s32.totalorder %s25, 0
      %p115 = por %p113, %p114
      %s117 = sadd.s32 %s116, 1
      %p120 = scmp.eq.s32.totalorder %s19, 1
      %p121 = scmp.ne.s32.totalorder %s116, %s118
      %p122 = scmp.eq.s32.totalorder %s19, 0
      %p123 = por %p121, %p122
      %p124 = scmp.ne.s32.totalorder %s116, %s118
      %p125 = scmp.eq.s32.totalorder %s24, 1
      %p126 = por %p124, %p125
      %p127 = scmp.ne.s32.totalorder %s118, %s119
      %p128 = scmp.eq.s32.totalorder %s24, 0
      %p129 = por %p127, %p128
      %p130 = scmp.ne.s32.totalorder %s118, %s119
      %p131 = scmp.eq.s32.totalorder %s25, 1
      %p132 = por %p130, %p131
      %p134 = scmp.ne.s32.totalorder %s119, %s133
      %p135 = scmp.eq.s32.totalorder %s25, 0
      %p136 = por %p134, %p135
      %s138 = sadd.s32 %s137, 1
      %p141 = scmp.eq.s32.totalorder %s19, 1
      %p142 = scmp.ne.s32.totalorder %s137, %s139
      %p143 = scmp.eq.s32.totalorder %s19, 0
      %p144 = por %p142, %p143
      %p145 = scmp.ne.s32.totalorder %s137, %s139
      %p146 = scmp.eq.s32.totalorder %s24, 1
      %p147 = por %p145, %p146
      %p148 = scmp.ne.s32.totalorder %s139, %s140
      %p149 = scmp.eq.s32.totalorder %s24, 0
      %p150 = por %p148, %p149
      %p151 = scmp.ne.s32.totalorder %s139, %s140
      %p152 = scmp.eq.s32.totalorder %s25, 1
      %p153 = por %p151, %p152
      %p155 = scmp.ne.s32.totalorder %s140, %s154
      %p156 = scmp.eq.s32.totalorder %s25, 0
      %p157 = por %p155, %p156
      %s159 = sadd.s32 %s158, 1
      %p162 = scmp.eq.s32.totalorder %s19, 1
      %p163 = scmp.ne.s32.totalorder %s158, %s160
      %p164 = scmp.eq.s32.totalorder %s19, 0
      %p165 = por %p163, %p164
      %p166 = scmp.ne.s32.totalorder %s158, %s160
      %p167 = scmp.eq.s32.totalorder %s24, 1
      %p168 = por %p166, %p167
      %p169 = scmp.ne.s32.totalorder %s160, %s161
      %p170 = scmp.eq.s32.totalorder %s24, 0
      %p171 = por %p169, %p170
      %p172 = scmp.ne.s32.totalorder %s160, %s161
      %p173 = scmp.eq.s32.totalorder %s25, 1
      %p174 = por %p172, %p173
      %p176 = scmp.ne.s32.totalorder %s161, %s175
      %p177 = scmp.eq.s32.totalorder %s25, 0
      %p178 = por %p176, %p177
      %s179 = ssub.s32 %s19, %s26
      %p180 = scmp.eq.s32.totalorder %s179, 0
      %s182 = sadd.s32 %s181, 1
      %s183 = scalar_select %p180, %s181, %s182
      %p186 = pneg %p180
      %p187 = scmp.eq.s32.totalorder %s19, 1
      %p188 = por %p186, %p187
      %p189 = scmp.ne.s32.totalorder %s181, %s184
      %p190 = scmp.eq.s32.totalorder %s19, 0
      %p191 = por %p189, %p190
      %p192 = scmp.ne.s32.totalorder %s181, %s184
      %p193 = scmp.eq.s32.totalorder %s24, 1
      %p194 = por %p192, %p193
      %p195 = scmp.ne.s32.totalorder %s184, %s185
      %p196 = scmp.eq.s32.totalorder %s24, 0
      %p197 = por %p195, %p196
      %p198 = scmp.ne.s32.totalorder %s184, %s185
      %p199 = scmp.eq.s32.totalorder %s25, 1
      %p200 = por %p198, %p199
      %p202 = scmp.ne.s32.totalorder %s185, %s201
      %p203 = scmp.eq.s32.totalorder %s25, 0
      %p204 = por %p202, %p203
      %p205 = scmp.le.s32.totalorder 1, %s19
      %p206 = scmp.lt.s32.totalorder %s19, 3
      %p207 = pnand %p205, %p206
      %p208 = pneg %p207
      // Predicated region
      $region9: #{bottleneck_forward.1} parent=5 // pred_check
        _
      $region10: #{bottleneck_forward.1} parent=5 // pred_check_branch
        %210 = sbr.rel (%p207) target = $region12
      $region11: #{bottleneck_forward.1} parent=5 // pred_region
        %s211 = ssub.s32 %s19, 1
        // Predicated region
        $region13: #{bottleneck_forward.1} parent=11 // pred_check
          %p212 = pneg %p66
        $region14: #{bottleneck_forward.1} parent=11 // pred_check_branch
          %214 = sbr.rel (%p212) target = $region16
        $region15: #{bottleneck_forward.1} parent=11 // pred_region
          _
        $region16: #{bottleneck_forward.1} parent=11 // pred_fallthru
          _
        // Predicated region
        $region17: #{bottleneck_forward.1} parent=11 // pred_check
          %p215 = pneg %p87
        $region18: #{bottleneck_forward.1} parent=11 // pred_check_branch
          %217 = sbr.rel (%p215) target = $region20
        $region19: #{bottleneck_forward.1} parent=11 // pred_region
          _
        $region20: #{bottleneck_forward.1} parent=11 // pred_fallthru
          _
        // Predicated region
        $region21: #{bottleneck_forward.1} parent=11 // pred_check
          %p218 = pneg %p108
        $region22: #{bottleneck_forward.1} parent=11 // pred_check_branch
          %220 = sbr.rel (%p218) target = $region24
        $region23: #{bottleneck_forward.1} parent=11 // pred_region
          _
        $region24: #{bottleneck_forward.1} parent=11 // pred_fallthru
          _
        // Predicated region
        $region25: #{bottleneck_forward.1} parent=11 // pred_check
          %p221 = pneg %p129
        $region26: #{bottleneck_forward.1} parent=11 // pred_check_branch
          %223 = sbr.rel (%p221) target = $region28
        $region27: #{bottleneck_forward.1} parent=11 // pred_region
          _
        $region28: #{bottleneck_forward.1} parent=11 // pred_fallthru
          _
        // Predicated region
        $region29: #{bottleneck_forward.1} parent=11 // pred_check
          %p224 = pneg %p150
        $region30: #{bottleneck_forward.1} parent=11 // pred_check_branch
          %226 = sbr.rel (%p224) target = $region32
        $region31: #{bottleneck_forward.1} parent=11 // pred_region
          _
        $region32: #{bottleneck_forward.1} parent=11 // pred_fallthru
          _
        // Predicated region
        $region33: #{bottleneck_forward.1} parent=11 // pred_check
          %p227 = pneg %p171
        $region34: #{bottleneck_forward.1} parent=11 // pred_check_branch
          %229 = sbr.rel (%p227) target = $region36
        $region35: #{bottleneck_forward.1} parent=11 // pred_region
          _
        $region36: #{bottleneck_forward.1} parent=11 // pred_fallthru
          _
      $region12: #{bottleneck_forward.1} parent=5 // pred_fallthru
        _
      %p230 = scmp.lt.s32.totalorder %s19, 2
      // Predicated region
      $region37: #{bottleneck_forward.1} parent=5 // pred_check
        %p231 = pneg %p230
      $region38: #{bottleneck_forward.1} parent=5 // pred_check_branch
        %233 = sbr.rel (%p231) target = $region40
      $region39: #{bottleneck_forward.1} parent=5 // pred_region
        // Predicated region
        $region41: #{bottleneck_forward.1} parent=39 // pred_check
          %p234 = pneg %p39
        $region42: #{bottleneck_forward.1} parent=39 // pred_check_branch
          %236 = sbr.rel (%p234) target = $region44
        $region43: #{bottleneck_forward.1} parent=39 // pred_region
          %s237 = sand.u32 %s29, 1
          %s238 = scalar_lea.sflag [#allocation4], %s237
          %s239 = sand.u32 %s29, 1
          %s240 = smul.addr %s239, 512
          %s241 = scalar_lea.vmem [#allocation3], %s240
          %s242 = smul.u32 2, %s19
          %s244 = ssub.s32 8192, 8192
          %245 = vsyncadd %s238, %s244
          %s246 = smul.addr %s242, 32
          %s247 = smul.addr %s246, 128
          %s248 = scalar_lea.hbm %s0, %s247
          %s249 = sshll.u32 %s241, 4
          %s250 = int_to_ptr.vmem [resolvable:$true] %s249
          %255 = dma.hbm_to_vmem [thread:$0]  %s248, 8192, %s250, %s238, 128, 128, 8
        $region44: #{bottleneck_forward.1} parent=39 // pred_fallthru
          _
      $region40: #{bottleneck_forward.1} parent=5 // pred_fallthru
        _
      %p256 = scmp.le.s32.totalorder 1, %s19
      %p257 = scmp.lt.s32.totalorder %s19, 3
      %p258 = pnand %p256, %p257
      %p259 = pneg %p258
      // Predicated region
      $region45: #{bottleneck_forward.1} parent=5 // pred_check
        _
      $region46: #{bottleneck_forward.1} parent=5 // pred_check_branch
        %261 = sbr.rel (%p258) target = $region48
      $region47: #{bottleneck_forward.1} parent=5 // pred_region
        %s262 = ssub.s32 %s19, 1
        %s263 = sand.u32 %s32, 1
        %s264 = scalar_lea.sflag [#allocation4], %s263
        %s265 = sand.u32 %s32, 1
        %s266 = smul.addr %s265, 512
        %s267 = scalar_lea.vmem [#allocation3], %s266
        // Predicated region
        $region49: #{bottleneck_forward.1} parent=47 // pred_check
          %p268 = pneg %p45
        $region50: #{bottleneck_forward.1} parent=47 // pred_check_branch
          %270 = sbr.rel (%p268) target = $region52
        $region51: #{bottleneck_forward.1} parent=47 // pred_region
          %271 = dma.done %s264, 8192
        $region52: #{bottleneck_forward.1} parent=47 // pred_fallthru
          _
        %s272 = sand.u32 %s32, 1
        %s273 = scalar_lea.sflag [#allocation4], %s272
        %s274 = sand.u32 %s32, 1
        %s275 = smul.addr %s274, 512
        %s276 = scalar_lea.vmem [#allocation3], %s275
        %p277 = pneg %p45
        %p278 = pneg %p42
        %p279 = pneg %p66
        %p280 = pneg %p63
        %p281 = pneg %p87
        %p282 = pneg %p84
        %p283 = pneg %p108
        %p284 = pneg %p105
        %p285 = pneg %p129
        %p286 = pneg %p126
        %p287 = pneg %p150
        %p288 = pneg %p147
        %p289 = pneg %p171
        %p290 = pneg %p168
        %p291 = pneg %p197
        %p292 = pneg %p194
        %s293 = sand.u32 %s184, 1
        %s294 = scalar_lea.sflag [#allocation5], %s293
        %s295 = sand.u32 %s184, 1
        %s296 = smul.addr %s295, 512
        %s297 = scalar_lea.vmem [#allocation6], %s296
        %s298 = smul.u32 2, %s24
        %s299 = smul.u32 2, %s24
        %v301 = vld [vmem:[%s267] sm:$0xff]
        %v302 = vld [vmem:[%s267 + $0x8] sm:$0xff]
        %v303 = vld [vmem:[%s267 + $0x10] sm:$0xff]
        %v304 = vld [vmem:[%s267 + $0x18] sm:$0xff]
        %v305 = vld [vmem:[%s267 + $0x20] sm:$0xff]
        %v306 = vld [vmem:[%s267 + $0x28] sm:$0xff]
        %v307 = vld [vmem:[%s267 + $0x30] sm:$0xff]
        %v308 = vld [vmem:[%s267 + $0x38] sm:$0xff]
        %v309 = vld [vmem:[%s267 + $0x40] sm:$0xff]
        %v310 = vld [vmem:[%s267 + $0x48] sm:$0xff]
        %v311 = vld [vmem:[%s267 + $0x50] sm:$0xff]
        %v312 = vld [vmem:[%s267 + $0x58] sm:$0xff]
        %v313 = vld [vmem:[%s267 + $0x60] sm:$0xff]
        %v314 = vld [vmem:[%s267 + $0x68] sm:$0xff]
        %v315 = vld [vmem:[%s267 + $0x70] sm:$0xff]
        %v316 = vld [vmem:[%s267 + $0x78] sm:$0xff]
        %v317 = vld [vmem:[%s267 + $0x80] sm:$0xff]
        %v318 = vld [vmem:[%s267 + $0x88] sm:$0xff]
        %v319 = vld [vmem:[%s267 + $0x90] sm:$0xff]
        %v320 = vld [vmem:[%s267 + $0x98] sm:$0xff]
        %v321 = vld [vmem:[%s267 + $0xa0] sm:$0xff]
        %v322 = vld [vmem:[%s267 + $0xa8] sm:$0xff]
        %v323 = vld [vmem:[%s267 + $0xb0] sm:$0xff]
        %v324 = vld [vmem:[%s267 + $0xb8] sm:$0xff]
        %v325 = vld [vmem:[%s267 + $0xc0] sm:$0xff]
        %v326 = vld [vmem:[%s267 + $0xc8] sm:$0xff]
        %v327 = vld [vmem:[%s267 + $0xd0] sm:$0xff]
        %v328 = vld [vmem:[%s267 + $0xd8] sm:$0xff]
        %v329 = vld [vmem:[%s267 + $0xe0] sm:$0xff]
        %v330 = vld [vmem:[%s267 + $0xe8] sm:$0xff]
        %v331 = vld [vmem:[%s267 + $0xf0] sm:$0xff]
        %v332 = vld [vmem:[%s267 + $0xf8] sm:$0xff]
        %v333 = vld [vmem:[%s267 + $0x100] sm:$0xff]
        %v334 = vld [vmem:[%s267 + $0x108] sm:$0xff]
        %v335 = vld [vmem:[%s267 + $0x110] sm:$0xff]
        %v336 = vld [vmem:[%s267 + $0x118] sm:$0xff]
        %v337 = vld [vmem:[%s267 + $0x120] sm:$0xff]
        %v338 = vld [vmem:[%s267 + $0x128] sm:$0xff]
        %v339 = vld [vmem:[%s267 + $0x130] sm:$0xff]
        %v340 = vld [vmem:[%s267 + $0x138] sm:$0xff]
        %v341 = vld [vmem:[%s267 + $0x140] sm:$0xff]
        %v342 = vld [vmem:[%s267 + $0x148] sm:$0xff]
        %v343 = vld [vmem:[%s267 + $0x150] sm:$0xff]
        %v344 = vld [vmem:[%s267 + $0x158] sm:$0xff]
        %v345 = vld [vmem:[%s267 + $0x160] sm:$0xff]
        %v346 = vld [vmem:[%s267 + $0x168] sm:$0xff]
        %v347 = vld [vmem:[%s267 + $0x170] sm:$0xff]
        %v348 = vld [vmem:[%s267 + $0x178] sm:$0xff]
        %v349 = vld [vmem:[%s267 + $0x180] sm:$0xff]
        %v350 = vld [vmem:[%s267 + $0x188] sm:$0xff]
        %v351 = vld [vmem:[%s267 + $0x190] sm:$0xff]
        %v352 = vld [vmem:[%s267 + $0x198] sm:$0xff]
        %v353 = vld [vmem:[%s267 + $0x1a0] sm:$0xff]
        %v354 = vld [vmem:[%s267 + $0x1a8] sm:$0xff]
        %v355 = vld [vmem:[%s267 + $0x1b0] sm:$0xff]
        %v356 = vld [vmem:[%s267 + $0x1b8] sm:$0xff]
        %v357 = vld [vmem:[%s267 + $0x1c0] sm:$0xff]
        %v358 = vld [vmem:[%s267 + $0x1c8] sm:$0xff]
        %v359 = vld [vmem:[%s267 + $0x1d0] sm:$0xff]
        %v360 = vld [vmem:[%s267 + $0x1d8] sm:$0xff]
        %v361 = vld [vmem:[%s267 + $0x1e0] sm:$0xff]
        %v362 = vld [vmem:[%s267 + $0x1e8] sm:$0xff]
        %v363 = vld [vmem:[%s267 + $0x1f0] sm:$0xff]
        %v364 = vld [vmem:[%s267 + $0x1f8] sm:$0xff]
        %v365 = vpack.c.bf16 %v302, %v301
        %v366 = vpack.c.bf16 %v304, %v303
        %v367 = vpack.c.bf16 %v306, %v305
        %v368 = vpack.c.bf16 %v308, %v307
        %v369 = vpack.c.bf16 %v310, %v309
        %v370 = vpack.c.bf16 %v312, %v311
        %v371 = vpack.c.bf16 %v314, %v313
        %v372 = vpack.c.bf16 %v316, %v315
        %v373 = vpack.c.bf16 %v318, %v317
        %v374 = vpack.c.bf16 %v320, %v319
        %v375 = vpack.c.bf16 %v322, %v321
        %v376 = vpack.c.bf16 %v324, %v323
        %v377 = vpack.c.bf16 %v326, %v325
        %v378 = vpack.c.bf16 %v328, %v327
        %v379 = vpack.c.bf16 %v330, %v329
        %v380 = vpack.c.bf16 %v332, %v331
        %v381 = vpack.c.bf16 %v334, %v333
        %v382 = vpack.c.bf16 %v336, %v335
        %v383 = vpack.c.bf16 %v338, %v337
        %v384 = vpack.c.bf16 %v340, %v339
        %v385 = vpack.c.bf16 %v342, %v341
        %v386 = vpack.c.bf16 %v344, %v343
        %v387 = vpack.c.bf16 %v346, %v345
        %v388 = vpack.c.bf16 %v348, %v347
        %v389 = vpack.c.bf16 %v350, %v349
        %v390 = vpack.c.bf16 %v352, %v351
        %v391 = vpack.c.bf16 %v354, %v353
        %v392 = vpack.c.bf16 %v356, %v355
        %v393 = vpack.c.bf16 %v358, %v357
        %v394 = vpack.c.bf16 %v360, %v359
        %v395 = vpack.c.bf16 %v362, %v361
        %v396 = vpack.c.bf16 %v364, %v363
        %v397 = vld [vmem:[%s1] sm:$0xf]
        %v398 = vld [vmem:[%s1 + $0x4] sm:$0xf]
        %v399 = vld [vmem:[%s1 + $0x8] sm:$0xf]
        %v400 = vld [vmem:[%s1 + $0xc] sm:$0xf]
        %v401 = vld [vmem:[%s1 + $0x10] sm:$0xf]
        %v402 = vld [vmem:[%s1 + $0x14] sm:$0xf]
        %v403 = vld [vmem:[%s1 + $0x18] sm:$0xf]
        %v404 = vld [vmem:[%s1 + $0x1c] sm:$0xf]
        %v405 = vld [vmem:[%s1 + $0x20] sm:$0xf]
        %v406 = vld [vmem:[%s1 + $0x24] sm:$0xf]
        %v407 = vld [vmem:[%s1 + $0x28] sm:$0xf]
        %v408 = vld [vmem:[%s1 + $0x2c] sm:$0xf]
        %v409 = vld [vmem:[%s1 + $0x30] sm:$0xf]
        %v410 = vld [vmem:[%s1 + $0x34] sm:$0xf]
        %v411 = vld [vmem:[%s1 + $0x38] sm:$0xf]
        %v412 = vld [vmem:[%s1 + $0x3c] sm:$0xf]
        %v413 = vld [vmem:[%s2] sm:$0x1]
        %v415 = vlaneseq
        %v416 = vshrl.u32 %v415, 7
        %v417 = vsub.s32 0, %v416
        %v418 = vrot.slane %v413, %v417
        %v436 = vunpack.c.l.b16 %v397
        %v437 = vunpack.c.l.b16 %v398
        %v438 = vunpack.c.l.b16 %v399
        %v439 = vunpack.c.l.b16 %v400
        %v440 = vunpack.c.l.b16 %v401
        %v441 = vunpack.c.l.b16 %v402
        %v442 = vunpack.c.l.b16 %v403
        %v443 = vunpack.c.l.b16 %v404
        %v444 = vunpack.c.l.b16 %v405
        %v445 = vunpack.c.l.b16 %v406
        %v446 = vunpack.c.l.b16 %v407
        %v447 = vunpack.c.l.b16 %v408
        %v448 = vunpack.c.l.b16 %v409
        %v449 = vunpack.c.l.b16 %v410
        %v450 = vunpack.c.l.b16 %v411
        %v451 = vunpack.c.l.b16 %v412
        %v452 = vpack.c.b16 %v437, %v436
        %v453 = vpack.c.b16 %v439, %v438
        %v454 = vpack.c.b16 %v441, %v440
        %v455 = vpack.c.b16 %v443, %v442
        %v456 = vpack.c.b16 %v445, %v444
        %v457 = vpack.c.b16 %v447, %v446
        %v458 = vpack.c.b16 %v449, %v448
        %v459 = vpack.c.b16 %v451, %v450
        %468 = vmatprep.subr.bf16.mxu0 0
        %469 = vmatpush1.bf16.msra.mxu0 %v459
        %470 = vmatprep.subr.bf16.mxu0 0
        %471 = vmatpush1.bf16.msra.mxu0 %v458
        %472 = vmatprep.subr.bf16.mxu0 0
        %473 = vmatpush1.bf16.msra.mxu0 %v457
        %474 = vmatprep.subr.bf16.mxu0 0
        %475 = vmatpush1.bf16.msra.mxu0 %v456
        %476 = vmatprep.subr.bf16.mxu0 0
        %477 = vmatpush1.bf16.msra.mxu0 %v455
        %478 = vmatprep.subr.bf16.mxu0 0
        %479 = vmatpush1.bf16.msra.mxu0 %v454
        %480 = vmatprep.subr.bf16.mxu0 0
        %481 = vmatpush1.bf16.msra.mxu0 %v453
        %482 = vmatprep.subr.bf16.mxu0 0
        %483 = vmatpush1.bf16.msra.mxu0 %v452
        %484 = vmatprep.subr.bf16.mxu0 0
        %485 = vmatpush2.bf16.msra.mxu0 0
        %486 = vmatprep.subr.bf16.mxu0 0
        %487 = vmatpush2.bf16.msra.mxu0 0
        %488 = vmatprep.subr.bf16.mxu0 0
        %489 = vmatpush2.bf16.msra.mxu0 0
        %490 = vmatprep.subr.bf16.mxu0 0
        %491 = vmatpush2.bf16.msra.mxu0 0
        %492 = vmatprep.subr.bf16.mxu0 0
        %493 = vmatpush2.bf16.msra.mxu0 0
        %494 = vmatprep.subr.bf16.mxu0 0
        %495 = vmatpush2.bf16.msra.mxu0 0
        %496 = vmatprep.subr.bf16.mxu0 0
        %497 = vmatpush2.bf16.msra.mxu0 0
        %498 = vmatprep.subr.bf16.mxu0 0
        %499 = vmatpush2.bf16.msra.mxu0 0
        %500 = vmatprep.mubr.bf16.mxu0 0
        %501 = vmatmul.mubr.bf16.gmra.mxu0 %v365
        %v502 = vpop.f32.mrf.mxu0
        %v503 = vadd.f32 %v418, %v502
        %v504 = vpop.f32.mrf.mxu0
        %v505 = vpop.f32.mrf.mxu0
        %v506 = vadd.f32 %v418, %v505
        %v507 = vpop.f32.mrf.mxu0
        %508 = vmatprep.mubr.bf16.mxu0 0
        %509 = vmatmul.mubr.bf16.gmra.mxu0 %v366
        %v510 = vpop.f32.mrf.mxu0
        %v511 = vadd.f32 %v418, %v510
        %v512 = vpop.f32.mrf.mxu0
        %v513 = vpop.f32.mrf.mxu0
        %v514 = vadd.f32 %v418, %v513
        %v515 = vpop.f32.mrf.mxu0
        %516 = vmatprep.mubr.bf16.mxu0 0
        %517 = vmatmul.mubr.bf16.gmra.mxu0 %v367
        %v518 = vpop.f32.mrf.mxu0
        %v519 = vadd.f32 %v418, %v518
        %v520 = vpop.f32.mrf.mxu0
        %v521 = vpop.f32.mrf.mxu0
        %v522 = vadd.f32 %v418, %v521
        %v523 = vpop.f32.mrf.mxu0
        %524 = vmatprep.mubr.bf16.mxu0 0
        %525 = vmatmul.mubr.bf16.gmra.mxu0 %v368
        %v526 = vpop.f32.mrf.mxu0
        %v527 = vadd.f32 %v418, %v526
        %v528 = vpop.f32.mrf.mxu0
        %v529 = vpop.f32.mrf.mxu0
        %v530 = vadd.f32 %v418, %v529
        %v531 = vpop.f32.mrf.mxu0
        %532 = vmatprep.mubr.bf16.mxu0 0
        %533 = vmatmul.mubr.bf16.gmra.mxu0 %v369
        %v534 = vpop.f32.mrf.mxu0
        %v535 = vadd.f32 %v418, %v534
        %v536 = vpop.f32.mrf.mxu0
        %v537 = vpop.f32.mrf.mxu0
        %v538 = vadd.f32 %v418, %v537
        %v539 = vpop.f32.mrf.mxu0
        %540 = vmatprep.mubr.bf16.mxu0 0
        %541 = vmatmul.mubr.bf16.gmra.mxu0 %v370
        %v542 = vpop.f32.mrf.mxu0
        %v543 = vadd.f32 %v418, %v542
        %v544 = vpop.f32.mrf.mxu0
        %v545 = vpop.f32.mrf.mxu0
        %v546 = vadd.f32 %v418, %v545
        %v547 = vpop.f32.mrf.mxu0
        %548 = vmatprep.mubr.bf16.mxu0 0
        %549 = vmatmul.mubr.bf16.gmra.mxu0 %v371
        %v550 = vpop.f32.mrf.mxu0
        %v551 = vadd.f32 %v418, %v550
        %v552 = vpop.f32.mrf.mxu0
        %v553 = vpop.f32.mrf.mxu0
        %v554 = vadd.f32 %v418, %v553
        %v555 = vpop.f32.mrf.mxu0
        %556 = vmatprep.mubr.bf16.mxu0 0
        %557 = vmatmul.mubr.bf16.gmra.mxu0 %v372
        %v558 = vpop.f32.mrf.mxu0
        %v559 = vadd.f32 %v418, %v558
        %v560 = vpop.f32.mrf.mxu0
        %v561 = vpop.f32.mrf.mxu0
        %v562 = vadd.f32 %v418, %v561
        %v563 = vpop.f32.mrf.mxu0
        %564 = vmatprep.mubr.bf16.mxu0 0
        %565 = vmatmul.mubr.bf16.gmra.mxu0 %v373
        %v566 = vpop.f32.mrf.mxu0
        %v567 = vadd.f32 %v418, %v566
        %v568 = vpop.f32.mrf.mxu0
        %v569 = vpop.f32.mrf.mxu0
        %v570 = vadd.f32 %v418, %v569
        %v571 = vpop.f32.mrf.mxu0
        %572 = vmatprep.mubr.bf16.mxu0 0
        %573 = vmatmul.mubr.bf16.gmra.mxu0 %v374
        %v574 = vpop.f32.mrf.mxu0
        %v575 = vadd.f32 %v418, %v574
        %v576 = vpop.f32.mrf.mxu0
        %v577 = vpop.f32.mrf.mxu0
        %v578 = vadd.f32 %v418, %v577
        %v579 = vpop.f32.mrf.mxu0
        %580 = vmatprep.mubr.bf16.mxu0 0
        %581 = vmatmul.mubr.bf16.gmra.mxu0 %v375
        %v582 = vpop.f32.mrf.mxu0
        %v583 = vadd.f32 %v418, %v582
        %v584 = vpop.f32.mrf.mxu0
        %v585 = vpop.f32.mrf.mxu0
        %v586 = vadd.f32 %v418, %v585
        %v587 = vpop.f32.mrf.mxu0
        %588 = vmatprep.mubr.bf16.mxu0 0
        %589 = vmatmul.mubr.bf16.gmra.mxu0 %v376
        %v590 = vpop.f32.mrf.mxu0
        %v591 = vadd.f32 %v418, %v590
        %v592 = vpop.f32.mrf.mxu0
        %v593 = vpop.f32.mrf.mxu0
        %v594 = vadd.f32 %v418, %v593
        %v595 = vpop.f32.mrf.mxu0
        %596 = vmatprep.mubr.bf16.mxu0 0
        %597 = vmatmul.mubr.bf16.gmra.mxu0 %v377
        %v598 = vpop.f32.mrf.mxu0
        %v599 = vadd.f32 %v418, %v598
        %v600 = vpop.f32.mrf.mxu0
        %v601 = vpop.f32.mrf.mxu0
        %v602 = vadd.f32 %v418, %v601
        %v603 = vpop.f32.mrf.mxu0
        %604 = vmatprep.mubr.bf16.mxu0 0
        %605 = vmatmul.mubr.bf16.gmra.mxu0 %v378
        %v606 = vpop.f32.mrf.mxu0
        %v607 = vadd.f32 %v418, %v606
        %v608 = vpop.f32.mrf.mxu0
        %v609 = vpop.f32.mrf.mxu0
        %v610 = vadd.f32 %v418, %v609
        %v611 = vpop.f32.mrf.mxu0
        %612 = vmatprep.mubr.bf16.mxu0 0
        %613 = vmatmul.mubr.bf16.gmra.mxu0 %v379
        %v614 = vpop.f32.mrf.mxu0
        %v615 = vadd.f32 %v418, %v614
        %v616 = vpop.f32.mrf.mxu0
        %v617 = vpop.f32.mrf.mxu0
        %v618 = vadd.f32 %v418, %v617
        %v619 = vpop.f32.mrf.mxu0
        %620 = vmatprep.mubr.bf16.mxu0 0
        %621 = vmatmul.mubr.bf16.gmra.mxu0 %v380
        %v622 = vpop.f32.mrf.mxu0
        %v623 = vadd.f32 %v418, %v622
        %v624 = vpop.f32.mrf.mxu0
        %v625 = vpop.f32.mrf.mxu0
        %v626 = vadd.f32 %v418, %v625
        %v627 = vpop.f32.mrf.mxu0
        %628 = vmatprep.mubr.bf16.mxu0 0
        %629 = vmatmul.mubr.bf16.gmra.mxu0 %v381
        %v630 = vpop.f32.mrf.mxu0
        %v631 = vadd.f32 %v418, %v630
        %v632 = vpop.f32.mrf.mxu0
        %v633 = vpop.f32.mrf.mxu0
        %v634 = vadd.f32 %v418, %v633
        %v635 = vpop.f32.mrf.mxu0
        %636 = vmatprep.mubr.bf16.mxu0 0
        %637 = vmatmul.mubr.bf16.gmra.mxu0 %v382
        %v638 = vpop.f32.mrf.mxu0
        %v639 = vadd.f32 %v418, %v638
        %v640 = vpop.f32.mrf.mxu0
        %v641 = vpop.f32.mrf.mxu0
        %v642 = vadd.f32 %v418, %v641
        %v643 = vpop.f32.mrf.mxu0
        %644 = vmatprep.mubr.bf16.mxu0 0
        %645 = vmatmul.mubr.bf16.gmra.mxu0 %v383
        %v646 = vpop.f32.mrf.mxu0
        %v647 = vadd.f32 %v418, %v646
        %v648 = vpop.f32.mrf.mxu0
        %v649 = vpop.f32.mrf.mxu0
        %v650 = vadd.f32 %v418, %v649
        %v651 = vpop.f32.mrf.mxu0
        %652 = vmatprep.mubr.bf16.mxu0 0
        %653 = vmatmul.mubr.bf16.gmra.mxu0 %v384
        %v654 = vpop.f32.mrf.mxu0
        %v655 = vadd.f32 %v418, %v654
        %v656 = vpop.f32.mrf.mxu0
        %v657 = vpop.f32.mrf.mxu0
        %v658 = vadd.f32 %v418, %v657
        %v659 = vpop.f32.mrf.mxu0
        %660 = vmatprep.mubr.bf16.mxu0 0
        %661 = vmatmul.mubr.bf16.gmra.mxu0 %v385
        %v662 = vpop.f32.mrf.mxu0
        %v663 = vadd.f32 %v418, %v662
        %v664 = vpop.f32.mrf.mxu0
        %v665 = vpop.f32.mrf.mxu0
        %v666 = vadd.f32 %v418, %v665
        %v667 = vpop.f32.mrf.mxu0
        %668 = vmatprep.mubr.bf16.mxu0 0
        %669 = vmatmul.mubr.bf16.gmra.mxu0 %v386
        %v670 = vpop.f32.mrf.mxu0
        %v671 = vadd.f32 %v418, %v670
        %v672 = vpop.f32.mrf.mxu0
        %v673 = vpop.f32.mrf.mxu0
        %v674 = vadd.f32 %v418, %v673
        %v675 = vpop.f32.mrf.mxu0
        %676 = vmatprep.mubr.bf16.mxu0 0
        %677 = vmatmul.mubr.bf16.gmra.mxu0 %v387
        %v678 = vpop.f32.mrf.mxu0
        %v679 = vadd.f32 %v418, %v678
        %v680 = vpop.f32.mrf.mxu0
        %v681 = vpop.f32.mrf.mxu0
        %v682 = vadd.f32 %v418, %v681
        %v683 = vpop.f32.mrf.mxu0
        %684 = vmatprep.mubr.bf16.mxu0 0
        %685 = vmatmul.mubr.bf16.gmra.mxu0 %v388
        %v686 = vpop.f32.mrf.mxu0
        %v687 = vadd.f32 %v418, %v686
        %v688 = vpop.f32.mrf.mxu0
        %v689 = vpop.f32.mrf.mxu0
        %v690 = vadd.f32 %v418, %v689
        %v691 = vpop.f32.mrf.mxu0
        %692 = vmatprep.mubr.bf16.mxu0 0
        %693 = vmatmul.mubr.bf16.gmra.mxu0 %v389
        %v694 = vpop.f32.mrf.mxu0
        %v695 = vadd.f32 %v418, %v694
        %v696 = vpop.f32.mrf.mxu0
        %v697 = vpop.f32.mrf.mxu0
        %v698 = vadd.f32 %v418, %v697
        %v699 = vpop.f32.mrf.mxu0
        %700 = vmatprep.mubr.bf16.mxu0 0
        %701 = vmatmul.mubr.bf16.gmra.mxu0 %v390
        %v702 = vpop.f32.mrf.mxu0
        %v703 = vadd.f32 %v418, %v702
        %v704 = vpop.f32.mrf.mxu0
        %v705 = vpop.f32.mrf.mxu0
        %v706 = vadd.f32 %v418, %v705
        %v707 = vpop.f32.mrf.mxu0
        %708 = vmatprep.mubr.bf16.mxu0 0
        %709 = vmatmul.mubr.bf16.gmra.mxu0 %v391
        %v710 = vpop.f32.mrf.mxu0
        %v711 = vadd.f32 %v418, %v710
        %v712 = vpop.f32.mrf.mxu0
        %v713 = vpop.f32.mrf.mxu0
        %v714 = vadd.f32 %v418, %v713
        %v715 = vpop.f32.mrf.mxu0
        %716 = vmatprep.mubr.bf16.mxu0 0
        %717 = vmatmul.mubr.bf16.gmra.mxu0 %v392
        %v718 = vpop.f32.mrf.mxu0
        %v719 = vadd.f32 %v418, %v718
        %v720 = vpop.f32.mrf.mxu0
        %v721 = vpop.f32.mrf.mxu0
        %v722 = vadd.f32 %v418, %v721
        %v723 = vpop.f32.mrf.mxu0
        %724 = vmatprep.mubr.bf16.mxu0 0
        %725 = vmatmul.mubr.bf16.gmra.mxu0 %v393
        %v726 = vpop.f32.mrf.mxu0
        %v727 = vadd.f32 %v418, %v726
        %v728 = vpop.f32.mrf.mxu0
        %v729 = vpop.f32.mrf.mxu0
        %v730 = vadd.f32 %v418, %v729
        %v731 = vpop.f32.mrf.mxu0
        %732 = vmatprep.mubr.bf16.mxu0 0
        %733 = vmatmul.mubr.bf16.gmra.mxu0 %v394
        %v734 = vpop.f32.mrf.mxu0
        %v735 = vadd.f32 %v418, %v734
        %v736 = vpop.f32.mrf.mxu0
        %v737 = vpop.f32.mrf.mxu0
        %v738 = vadd.f32 %v418, %v737
        %v739 = vpop.f32.mrf.mxu0
        %740 = vmatprep.mubr.bf16.mxu0 0
        %741 = vmatmul.mubr.bf16.gmra.mxu0 %v395
        %v742 = vpop.f32.mrf.mxu0
        %v743 = vadd.f32 %v418, %v742
        %v744 = vpop.f32.mrf.mxu0
        %v745 = vpop.f32.mrf.mxu0
        %v746 = vadd.f32 %v418, %v745
        %v747 = vpop.f32.mrf.mxu0
        %748 = vmatprep.mubr.bf16.mxu0 0
        %749 = vmatmul.mubr.bf16.gmra.mxu0 %v396
        %v750 = vpop.f32.mrf.mxu0
        %v751 = vadd.f32 %v418, %v750
        %v752 = vpop.f32.mrf.mxu0
        %v753 = vpop.f32.mrf.mxu0
        %v754 = vadd.f32 %v418, %v753
        %v755 = vpop.f32.mrf.mxu0
        %756 = vdwg.mxu0
        %v757 = vmax.f32 %v503, 0.0
        %v758 = vmax.f32 %v506, 0.0
        %v759 = vmax.f32 %v511, 0.0
        %v760 = vmax.f32 %v514, 0.0
        %v761 = vmax.f32 %v519, 0.0
        %v762 = vmax.f32 %v522, 0.0
        %v763 = vmax.f32 %v527, 0.0
        %v764 = vmax.f32 %v530, 0.0
        %v765 = vmax.f32 %v535, 0.0
        %v766 = vmax.f32 %v538, 0.0
        %v767 = vmax.f32 %v543, 0.0
        %v768 = vmax.f32 %v546, 0.0
        %v769 = vmax.f32 %v551, 0.0
        %v770 = vmax.f32 %v554, 0.0
        %v771 = vmax.f32 %v559, 0.0
        %v772 = vmax.f32 %v562, 0.0
        %v773 = vmax.f32 %v567, 0.0
        %v774 = vmax.f32 %v570, 0.0
        %v775 = vmax.f32 %v575, 0.0
        %v776 = vmax.f32 %v578, 0.0
        %v777 = vmax.f32 %v583, 0.0
        %v778 = vmax.f32 %v586, 0.0
        %v779 = vmax.f32 %v591, 0.0
        %v780 = vmax.f32 %v594, 0.0
        %v781 = vmax.f32 %v599, 0.0
        %v782 = vmax.f32 %v602, 0.0
        %v783 = vmax.f32 %v607, 0.0
        %v784 = vmax.f32 %v610, 0.0
        %v785 = vmax.f32 %v615, 0.0
        %v786 = vmax.f32 %v618, 0.0
        %v787 = vmax.f32 %v623, 0.0
        %v788 = vmax.f32 %v626, 0.0
        %v789 = vmax.f32 %v631, 0.0
        %v790 = vmax.f32 %v634, 0.0
        %v791 = vmax.f32 %v639, 0.0
        %v792 = vmax.f32 %v642, 0.0
        %v793 = vmax.f32 %v647, 0.0
        %v794 = vmax.f32 %v650, 0.0
        %v795 = vmax.f32 %v655, 0.0
        %v796 = vmax.f32 %v658, 0.0
        %v797 = vmax.f32 %v663, 0.0
        %v798 = vmax.f32 %v666, 0.0
        %v799 = vmax.f32 %v671, 0.0
        %v800 = vmax.f32 %v674, 0.0
        %v801 = vmax.f32 %v679, 0.0
        %v802 = vmax.f32 %v682, 0.0
        %v803 = vmax.f32 %v687, 0.0
        %v804 = vmax.f32 %v690, 0.0
        %v805 = vmax.f32 %v695, 0.0
        %v806 = vmax.f32 %v698, 0.0
        %v807 = vmax.f32 %v703, 0.0
        %v808 = vmax.f32 %v706, 0.0
        %v809 = vmax.f32 %v711, 0.0
        %v810 = vmax.f32 %v714, 0.0
        %v811 = vmax.f32 %v719, 0.0
        %v812 = vmax.f32 %v722, 0.0
        %v813 = vmax.f32 %v727, 0.0
        %v814 = vmax.f32 %v730, 0.0
        %v815 = vmax.f32 %v735, 0.0
        %v816 = vmax.f32 %v738, 0.0
        %v817 = vmax.f32 %v743, 0.0
        %v818 = vmax.f32 %v746, 0.0
        %v819 = vmax.f32 %v751, 0.0
        %v820 = vmax.f32 %v754, 0.0
        %vm821 = vcmask 257024
        %822 = vst.msk [vmem:[#allocation2] sm:$0xf] %vm821, 0
        %823 = vst.msk [vmem:[#allocation2 + $0x4] sm:$0xf] %vm821, 0
        %vm824 = vcmask 253952
        %825 = vst.msk [vmem:[#allocation2 + $0x8] sm:$0x1] %vm824, 0
        %826 = vst.msk [vmem:[#allocation2 + $0xd8] sm:$0xf] %vm821, 0
        %827 = vst.msk [vmem:[#allocation2 + $0xdc] sm:$0xf] %vm821, 0
        %828 = vst.msk [vmem:[#allocation2 + $0xe0] sm:$0x1] %vm824, 0
        %s829 = scalar_lea.vmem [#allocation2], 204
        %830 = vst.msk [vmem:[%s829] sm:$0xf] %vm821, 0
        %831 = vst.msk [vmem:[%s829 + $0x4] sm:$0xf] %vm821, 0
        %832 = vst.msk [vmem:[%s829 + $0x8] sm:$0x1] %vm824, 0
        %833 = vst.msk [vmem:[%s829 + $0xd8] sm:$0xf] %vm821, 0
        %834 = vst.msk [vmem:[%s829 + $0xdc] sm:$0xf] %vm821, 0
        %835 = vst.msk [vmem:[%s829 + $0xe0] sm:$0x1] %vm824, 0
        %s836 = scalar_lea.vmem [#allocation2], 12
        %vm837 = vcmask 253952
        %vm838 = vsmask.f32 256
        %vm839 = vmand %vm837, %vm838
        %v840 = vld [vmem:[%s836] sm:$0x1]
        %v841 = vsel %vm839, 0, %v840
        %842 = vst [vmem:[%s836] sm:$0x1] %v841
        %v843 = vld [vmem:[%s836 + $0xc] sm:$0x1]
        %v844 = vsel %vm839, 0, %v843
        %845 = vst [vmem:[%s836 + $0xc] sm:$0x1] %v844
        %v846 = vld [vmem:[%s836 + $0x18] sm:$0x1]
        %v847 = vsel %vm839, 0, %v846
        %848 = vst [vmem:[%s836 + $0x18] sm:$0x1] %v847
        %v849 = vld [vmem:[%s836 + $0x24] sm:$0x1]
        %v850 = vsel %vm839, 0, %v849
        %851 = vst [vmem:[%s836 + $0x24] sm:$0x1] %v850
        %v852 = vld [vmem:[%s836 + $0x30] sm:$0x1]
        %v853 = vsel %vm839, 0, %v852
        %854 = vst [vmem:[%s836 + $0x30] sm:$0x1] %v853
        %v855 = vld [vmem:[%s836 + $0x3c] sm:$0x1]
        %v856 = vsel %vm839, 0, %v855
        %857 = vst [vmem:[%s836 + $0x3c] sm:$0x1] %v856
        %v858 = vld [vmem:[%s836 + $0x48] sm:$0x1]
        %v859 = vsel %vm839, 0, %v858
        %860 = vst [vmem:[%s836 + $0x48] sm:$0x1] %v859
        %v861 = vld [vmem:[%s836 + $0x54] sm:$0x1]
        %v862 = vsel %vm839, 0, %v861
        %863 = vst [vmem:[%s836 + $0x54] sm:$0x1] %v862
        %v864 = vld [vmem:[%s836 + $0x60] sm:$0x1]
        %v865 = vsel %vm839, 0, %v864
        %866 = vst [vmem:[%s836 + $0x60] sm:$0x1] %v865
        %v867 = vld [vmem:[%s836 + $0x6c] sm:$0x1]
        %v868 = vsel %vm839, 0, %v867
        %869 = vst [vmem:[%s836 + $0x6c] sm:$0x1] %v868
        %v870 = vld [vmem:[%s836 + $0x78] sm:$0x1]
        %v871 = vsel %vm839, 0, %v870
        %872 = vst [vmem:[%s836 + $0x78] sm:$0x1] %v871
        %v873 = vld [vmem:[%s836 + $0x84] sm:$0x1]
        %v874 = vsel %vm839, 0, %v873
        %875 = vst [vmem:[%s836 + $0x84] sm:$0x1] %v874
        %v876 = vld [vmem:[%s836 + $0x90] sm:$0x1]
        %v877 = vsel %vm839, 0, %v876
        %878 = vst [vmem:[%s836 + $0x90] sm:$0x1] %v877
        %v879 = vld [vmem:[%s836 + $0x9c] sm:$0x1]
        %v880 = vsel %vm839, 0, %v879
        %881 = vst [vmem:[%s836 + $0x9c] sm:$0x1] %v880
        %v882 = vld [vmem:[%s836 + $0xa8] sm:$0x1]
        %v883 = vsel %vm839, 0, %v882
        %884 = vst [vmem:[%s836 + $0xa8] sm:$0x1] %v883
        %v885 = vld [vmem:[%s836 + $0xb4] sm:$0x1]
        %v886 = vsel %vm839, 0, %v885
        %887 = vst [vmem:[%s836 + $0xb4] sm:$0x1] %v886
        %v888 = vld [vmem:[%s836 + $0xd8] sm:$0x1]
        %v889 = vsel %vm839, 0, %v888
        %890 = vst [vmem:[%s836 + $0xd8] sm:$0x1] %v889
        %v891 = vld [vmem:[%s836 + $0xe4] sm:$0x1]
        %v892 = vsel %vm839, 0, %v891
        %893 = vst [vmem:[%s836 + $0xe4] sm:$0x1] %v892
        %v894 = vld [vmem:[%s836 + $0xf0] sm:$0x1]
        %v895 = vsel %vm839, 0, %v894
        %896 = vst [vmem:[%s836 + $0xf0] sm:$0x1] %v895
        %v897 = vld [vmem:[%s836 + $0xfc] sm:$0x1]
        %v898 = vsel %vm839, 0, %v897
        %899 = vst [vmem:[%s836 + $0xfc] sm:$0x1] %v898
        %v900 = vld [vmem:[%s836 + $0x108] sm:$0x1]
        %v901 = vsel %vm839, 0, %v900
        %902 = vst [vmem:[%s836 + $0x108] sm:$0x1] %v901
        %v903 = vld [vmem:[%s836 + $0x114] sm:$0x1]
        %v904 = vsel %vm839, 0, %v903
        %905 = vst [vmem:[%s836 + $0x114] sm:$0x1] %v904
        %v906 = vld [vmem:[%s836 + $0x120] sm:$0x1]
        %v907 = vsel %vm839, 0, %v906
        %908 = vst [vmem:[%s836 + $0x120] sm:$0x1] %v907
        %v909 = vld [vmem:[%s836 + $0x12c] sm:$0x1]
        %v910 = vsel %vm839, 0, %v909
        %911 = vst [vmem:[%s836 + $0x12c] sm:$0x1] %v910
        %v912 = vld [vmem:[%s836 + $0x138] sm:$0x1]
        %v913 = vsel %vm839, 0, %v912
        %914 = vst [vmem:[%s836 + $0x138] sm:$0x1] %v913
        %v915 = vld [vmem:[%s836 + $0x144] sm:$0x1]
        %v916 = vsel %vm839, 0, %v915
        %917 = vst [vmem:[%s836 + $0x144] sm:$0x1] %v916
        %v918 = vld [vmem:[%s836 + $0x150] sm:$0x1]
        %v919 = vsel %vm839, 0, %v918
        %920 = vst [vmem:[%s836 + $0x150] sm:$0x1] %v919
        %v921 = vld [vmem:[%s836 + $0x15c] sm:$0x1]
        %v922 = vsel %vm839, 0, %v921
        %923 = vst [vmem:[%s836 + $0x15c] sm:$0x1] %v922
        %v924 = vld [vmem:[%s836 + $0x168] sm:$0x1]
        %v925 = vsel %vm839, 0, %v924
        %926 = vst [vmem:[%s836 + $0x168] sm:$0x1] %v925
        %v927 = vld [vmem:[%s836 + $0x174] sm:$0x1]
        %v928 = vsel %vm839, 0, %v927
        %929 = vst [vmem:[%s836 + $0x174] sm:$0x1] %v928
        %v930 = vld [vmem:[%s836 + $0x180] sm:$0x1]
        %v931 = vsel %vm839, 0, %v930
        %932 = vst [vmem:[%s836 + $0x180] sm:$0x1] %v931
        %v933 = vld [vmem:[%s836 + $0x18c] sm:$0x1]
        %v934 = vsel %vm839, 0, %v933
        %935 = vst [vmem:[%s836 + $0x18c] sm:$0x1] %v934
        %vm936 = vsmask.f32 7938
        %vm937 = vmand %vm837, %vm936
        %v938 = vld [vmem:[%s836 + $0x8] sm:$0x1]
        %v939 = vsel %vm937, 0, %v938
        %940 = vst [vmem:[%s836 + $0x8] sm:$0x1] %v939
        %v941 = vld [vmem:[%s836 + $0x14] sm:$0x1]
        %v942 = vsel %vm937, 0, %v941
        %943 = vst [vmem:[%s836 + $0x14] sm:$0x1] %v942
        %v944 = vld [vmem:[%s836 + $0x20] sm:$0x1]
        %v945 = vsel %vm937, 0, %v944
        %946 = vst [vmem:[%s836 + $0x20] sm:$0x1] %v945
        %v947 = vld [vmem:[%s836 + $0x2c] sm:$0x1]
        %v948 = vsel %vm937, 0, %v947
        %949 = vst [vmem:[%s836 + $0x2c] sm:$0x1] %v948
        %v950 = vld [vmem:[%s836 + $0x38] sm:$0x1]
        %v951 = vsel %vm937, 0, %v950
        %952 = vst [vmem:[%s836 + $0x38] sm:$0x1] %v951
        %v953 = vld [vmem:[%s836 + $0x44] sm:$0x1]
        %v954 = vsel %vm937, 0, %v953
        %955 = vst [vmem:[%s836 + $0x44] sm:$0x1] %v954
        %v956 = vld [vmem:[%s836 + $0x50] sm:$0x1]
        %v957 = vsel %vm937, 0, %v956
        %958 = vst [vmem:[%s836 + $0x50] sm:$0x1] %v957
        %v959 = vld [vmem:[%s836 + $0x5c] sm:$0x1]
        %v960 = vsel %vm937, 0, %v959
        %961 = vst [vmem:[%s836 + $0x5c] sm:$0x1] %v960
        %v962 = vld [vmem:[%s836 + $0x68] sm:$0x1]
        %v963 = vsel %vm937, 0, %v962
        %964 = vst [vmem:[%s836 + $0x68] sm:$0x1] %v963
        %v965 = vld [vmem:[%s836 + $0x74] sm:$0x1]
        %v966 = vsel %vm937, 0, %v965
        %967 = vst [vmem:[%s836 + $0x74] sm:$0x1] %v966
        %v968 = vld [vmem:[%s836 + $0x80] sm:$0x1]
        %v969 = vsel %vm937, 0, %v968
        %970 = vst [vmem:[%s836 + $0x80] sm:$0x1] %v969
        %v971 = vld [vmem:[%s836 + $0x8c] sm:$0x1]
        %v972 = vsel %vm937, 0, %v971
        %973 = vst [vmem:[%s836 + $0x8c] sm:$0x1] %v972
        %v974 = vld [vmem:[%s836 + $0x98] sm:$0x1]
        %v975 = vsel %vm937, 0, %v974
        %976 = vst [vmem:[%s836 + $0x98] sm:$0x1] %v975
        %v977 = vld [vmem:[%s836 + $0xa4] sm:$0x1]
        %v978 = vsel %vm937, 0, %v977
        %979 = vst [vmem:[%s836 + $0xa4] sm:$0x1] %v978
        %v980 = vld [vmem:[%s836 + $0xb0] sm:$0x1]
        %v981 = vsel %vm937, 0, %v980
        %982 = vst [vmem:[%s836 + $0xb0] sm:$0x1] %v981
        %v983 = vld [vmem:[%s836 + $0xbc] sm:$0x1]
        %v984 = vsel %vm937, 0, %v983
        %985 = vst [vmem:[%s836 + $0xbc] sm:$0x1] %v984
        %v986 = vld [vmem:[%s836 + $0xe0] sm:$0x1]
        %v987 = vsel %vm937, 0, %v986
        %988 = vst [vmem:[%s836 + $0xe0] sm:$0x1] %v987
        %v989 = vld [vmem:[%s836 + $0xec] sm:$0x1]
        %v990 = vsel %vm937, 0, %v989
        %991 = vst [vmem:[%s836 + $0xec] sm:$0x1] %v990
        %v992 = vld [vmem:[%s836 + $0xf8] sm:$0x1]
        %v993 = vsel %vm937, 0, %v992
        %994 = vst [vmem:[%s836 + $0xf8] sm:$0x1] %v993
        %v995 = vld [vmem:[%s836 + $0x104] sm:$0x1]
        %v996 = vsel %vm937, 0, %v995
        %997 = vst [vmem:[%s836 + $0x104] sm:$0x1] %v996
        %v998 = vld [vmem:[%s836 + $0x110] sm:$0x1]
        %v999 = vsel %vm937, 0, %v998
        %1000 = vst [vmem:[%s836 + $0x110] sm:$0x1] %v999
        %v1001 = vld [vmem:[%s836 + $0x11c] sm:$0x1]
        %v1002 = vsel %vm937, 0, %v1001
        %1003 = vst [vmem:[%s836 + $0x11c] sm:$0x1] %v1002
        %v1004 = vld [vmem:[%s836 + $0x128] sm:$0x1]
        %v1005 = vsel %vm937, 0, %v1004
        %1006 = vst [vmem:[%s836 + $0x128] sm:$0x1] %v1005
        %v1007 = vld [vmem:[%s836 + $0x134] sm:$0x1]
        %v1008 = vsel %vm937, 0, %v1007
        %1009 = vst [vmem:[%s836 + $0x134] sm:$0x1] %v1008
        %v1010 = vld [vmem:[%s836 + $0x140] sm:$0x1]
        %v1011 = vsel %vm937, 0, %v1010
        %1012 = vst [vmem:[%s836 + $0x140] sm:$0x1] %v1011
        %v1013 = vld [vmem:[%s836 + $0x14c] sm:$0x1]
        %v1014 = vsel %vm937, 0, %v1013
        %1015 = vst [vmem:[%s836 + $0x14c] sm:$0x1] %v1014
        %v1016 = vld [vmem:[%s836 + $0x158] sm:$0x1]
        %v1017 = vsel %vm937, 0, %v1016
        %1018 = vst [vmem:[%s836 + $0x158] sm:$0x1] %v1017
        %v1019 = vld [vmem:[%s836 + $0x164] sm:$0x1]
        %v1020 = vsel %vm937, 0, %v1019
        %1021 = vst [vmem:[%s836 + $0x164] sm:$0x1] %v1020
        %v1022 = vld [vmem:[%s836 + $0x170] sm:$0x1]
        %v1023 = vsel %vm937, 0, %v1022
        %1024 = vst [vmem:[%s836 + $0x170] sm:$0x1] %v1023
        %v1025 = vld [vmem:[%s836 + $0x17c] sm:$0x1]
        %v1026 = vsel %vm937, 0, %v1025
        %1027 = vst [vmem:[%s836 + $0x17c] sm:$0x1] %v1026
        %v1028 = vld [vmem:[%s836 + $0x188] sm:$0x1]
        %v1029 = vsel %vm937, 0, %v1028
        %1030 = vst [vmem:[%s836 + $0x188] sm:$0x1] %v1029
        %v1031 = vld [vmem:[%s836 + $0x194] sm:$0x1]
        %v1032 = vsel %vm937, 0, %v1031
        %1033 = vst [vmem:[%s836 + $0x194] sm:$0x1] %v1032
        %v1034 = vpack.c.bf16 %v758, %v757
        %v1035 = vpack.c.bf16 %v760, %v759
        %v1036 = vpack.c.bf16 %v762, %v761
        %v1037 = vpack.c.bf16 %v764, %v763
        %v1038 = vpack.c.bf16 %v766, %v765
        %v1039 = vpack.c.bf16 %v768, %v767
        %v1040 = vpack.c.bf16 %v770, %v769
        %v1041 = vpack.c.bf16 %v772, %v771
        %v1042 = vpack.c.bf16 %v774, %v773
        %v1043 = vpack.c.bf16 %v776, %v775
        %v1044 = vpack.c.bf16 %v778, %v777
        %v1045 = vpack.c.bf16 %v780, %v779
        %v1046 = vpack.c.bf16 %v782, %v781
        %v1047 = vpack.c.bf16 %v784, %v783
        %v1048 = vpack.c.bf16 %v786, %v785
        %v1049 = vpack.c.bf16 %v788, %v787
        %v1050 = vpack.c.bf16 %v790, %v789
        %v1051 = vpack.c.bf16 %v792, %v791
        %v1052 = vpack.c.bf16 %v794, %v793
        %v1053 = vpack.c.bf16 %v796, %v795
        %v1054 = vpack.c.bf16 %v798, %v797
        %v1055 = vpack.c.bf16 %v800, %v799
        %v1056 = vpack.c.bf16 %v802, %v801
        %v1057 = vpack.c.bf16 %v804, %v803
        %v1058 = vpack.c.bf16 %v806, %v805
        %v1059 = vpack.c.bf16 %v808, %v807
        %v1060 = vpack.c.bf16 %v810, %v809
        %v1061 = vpack.c.bf16 %v812, %v811
        %v1062 = vpack.c.bf16 %v814, %v813
        %v1063 = vpack.c.bf16 %v816, %v815
        %v1064 = vpack.c.bf16 %v818, %v817
        %v1065 = vpack.c.bf16 %v820, %v819
        %v1098 = vunpack.c.l.b16 %v1034
        %v1099 = vunpack.c.h.b16 %v1034
        %v1100 = vunpack.c.l.b16 %v1035
        %v1101 = vunpack.c.h.b16 %v1035
        %v1102 = vunpack.c.l.b16 %v1036
        %v1103 = vunpack.c.h.b16 %v1036
        %v1104 = vunpack.c.l.b16 %v1037
        %v1105 = vunpack.c.h.b16 %v1037
        %v1106 = vunpack.c.l.b16 %v1038
        %v1107 = vunpack.c.h.b16 %v1038
        %v1108 = vunpack.c.l.b16 %v1039
        %v1109 = vunpack.c.h.b16 %v1039
        %v1110 = vunpack.c.l.b16 %v1040
        %v1111 = vunpack.c.h.b16 %v1040
        %v1112 = vunpack.c.l.b16 %v1041
        %v1113 = vunpack.c.h.b16 %v1041
        %v1114 = vunpack.c.l.b16 %v1042
        %v1115 = vunpack.c.h.b16 %v1042
        %v1116 = vunpack.c.l.b16 %v1043
        %v1117 = vunpack.c.h.b16 %v1043
        %v1118 = vunpack.c.l.b16 %v1044
        %v1119 = vunpack.c.h.b16 %v1044
        %v1120 = vunpack.c.l.b16 %v1045
        %v1121 = vunpack.c.h.b16 %v1045
        %v1122 = vunpack.c.l.b16 %v1046
        %v1123 = vunpack.c.h.b16 %v1046
        %v1124 = vunpack.c.l.b16 %v1047
        %v1125 = vunpack.c.h.b16 %v1047
        %v1126 = vunpack.c.l.b16 %v1048
        %v1127 = vunpack.c.h.b16 %v1048
        %v1128 = vunpack.c.l.b16 %v1049
        %v1129 = vunpack.c.h.b16 %v1049
        %v1130 = vunpack.c.l.b16 %v1050
        %v1131 = vunpack.c.h.b16 %v1050
        %v1132 = vunpack.c.l.b16 %v1051
        %v1133 = vunpack.c.h.b16 %v1051
        %v1134 = vunpack.c.l.b16 %v1052
        %v1135 = vunpack.c.h.b16 %v1052
        %v1136 = vunpack.c.l.b16 %v1053
        %v1137 = vunpack.c.h.b16 %v1053
        %v1138 = vunpack.c.l.b16 %v1054
        %v1139 = vunpack.c.h.b16 %v1054
        %v1140 = vunpack.c.l.b16 %v1055
        %v1141 = vunpack.c.h.b16 %v1055
        %v1142 = vunpack.c.l.b16 %v1056
        %v1143 = vunpack.c.h.b16 %v1056
        %v1144 = vunpack.c.l.b16 %v1057
        %v1145 = vunpack.c.h.b16 %v1057
        %v1146 = vunpack.c.l.b16 %v1058
        %v1147 = vunpack.c.h.b16 %v1058
        %v1148 = vunpack.c.l.b16 %v1059
        %v1149 = vunpack.c.h.b16 %v1059
        %v1150 = vunpack.c.l.b16 %v1060
        %v1151 = vunpack.c.h.b16 %v1060
        %v1152 = vunpack.c.l.b16 %v1061
        %v1153 = vunpack.c.h.b16 %v1061
        %v1154 = vunpack.c.l.b16 %v1062
        %v1155 = vunpack.c.h.b16 %v1062
        %v1156 = vunpack.c.l.b16 %v1063
        %v1157 = vunpack.c.h.b16 %v1063
        %v1158 = vunpack.c.l.b16 %v1064
        %v1159 = vunpack.c.h.b16 %v1064
        %v1160 = vunpack.c.l.b16 %v1065
        %v1161 = vunpack.c.h.b16 %v1065
        %v1162 = vpack.c.b16 %v1098, %v1098
        %v1163 = vpack.c.b16 %v1099, %v1099
        %v1164 = vpack.c.b16 %v1100, %v1100
        %v1165 = vpack.c.b16 %v1101, %v1101
        %v1166 = vpack.c.b16 %v1102, %v1102
        %v1167 = vpack.c.b16 %v1103, %v1103
        %v1168 = vpack.c.b16 %v1104, %v1104
        %v1169 = vpack.c.b16 %v1105, %v1105
        %v1170 = vpack.c.b16 %v1106, %v1106
        %v1171 = vpack.c.b16 %v1107, %v1107
        %v1172 = vpack.c.b16 %v1108, %v1108
        %v1173 = vpack.c.b16 %v1109, %v1109
        %v1174 = vpack.c.b16 %v1110, %v1110
        %v1175 = vpack.c.b16 %v1111, %v1111
        %v1176 = vpack.c.b16 %v1112, %v1112
        %v1177 = vpack.c.b16 %v1113, %v1113
        %v1178 = vpack.c.b16 %v1114, %v1114
        %v1179 = vpack.c.b16 %v1115, %v1115
        %v1180 = vpack.c.b16 %v1116, %v1116
        %v1181 = vpack.c.b16 %v1117, %v1117
        %v1182 = vpack.c.b16 %v1118, %v1118
        %v1183 = vpack.c.b16 %v1119, %v1119
        %v1184 = vpack.c.b16 %v1120, %v1120
        %v1185 = vpack.c.b16 %v1121, %v1121
        %v1186 = vpack.c.b16 %v1122, %v1122
        %v1187 = vpack.c.b16 %v1123, %v1123
        %v1188 = vpack.c.b16 %v1124, %v1124
        %v1189 = vpack.c.b16 %v1125, %v1125
        %v1190 = vpack.c.b16 %v1126, %v1126
        %v1191 = vpack.c.b16 %v1127, %v1127
        %v1192 = vpack.c.b16 %v1128, %v1128
        %v1193 = vpack.c.b16 %v1129, %v1129
        %v1194 = vpack.c.b16 %v1130, %v1130
        %v1195 = vpack.c.b16 %v1131, %v1131
        %v1196 = vpack.c.b16 %v1132, %v1132
        %v1197 = vpack.c.b16 %v1133, %v1133
        %v1198 = vpack.c.b16 %v1134, %v1134
        %v1199 = vpack.c.b16 %v1135, %v1135
        %v1200 = vpack.c.b16 %v1136, %v1136
        %v1201 = vpack.c.b16 %v1137, %v1137
        %v1202 = vpack.c.b16 %v1138, %v1138
        %v1203 = vpack.c.b16 %v1139, %v1139
        %v1204 = vpack.c.b16 %v1140, %v1140
        %v1205 = vpack.c.b16 %v1141, %v1141
        %v1206 = vpack.c.b16 %v1142, %v1142
        %v1207 = vpack.c.b16 %v1143, %v1143
        %v1208 = vpack.c.b16 %v1144, %v1144
        %v1209 = vpack.c.b16 %v1145, %v1145
        %v1210 = vpack.c.b16 %v1146, %v1146
        %v1211 = vpack.c.b16 %v1147, %v1147
        %v1212 = vpack.c.b16 %v1148, %v1148
        %v1213 = vpack.c.b16 %v1149, %v1149
        %v1214 = vpack.c.b16 %v1150, %v1150
        %v1215 = vpack.c.b16 %v1151, %v1151
        %v1216 = vpack.c.b16 %v1152, %v1152
        %v1217 = vpack.c.b16 %v1153, %v1153
        %v1218 = vpack.c.b16 %v1154, %v1154
        %v1219 = vpack.c.b16 %v1155, %v1155
        %v1220 = vpack.c.b16 %v1156, %v1156
        %v1221 = vpack.c.b16 %v1157, %v1157
        %v1222 = vpack.c.b16 %v1158, %v1158
        %v1223 = vpack.c.b16 %v1159, %v1159
        %v1224 = vpack.c.b16 %v1160, %v1160
        %v1225 = vpack.c.b16 %v1161, %v1161
        %vm1226 = vsmask.f32 4368
        %vm1227 = vmor %vm838, %vm1226
        %v1229 = vshrl.u32 %v1162, 16
        %v1231 = vrot.slane %v1229, 7
        %v1232 = vshll.u32 %v1162, 16
        %v1234 = vor.u32 %v1231, %v1232
        %v1235 = vrot.slane %v1231, 4
        %v1237 = vshrl.u32 %v1163, 16
        %v1239 = vrot.slane %v1237, 7
        %v1240 = vshll.u32 %v1163, 16
        %v1242 = vor.u32 %v1239, %v1240
        %v1243 = vsel %vm1227, %v1235, %v1242
        %v1244 = vrot.slane %v1239, 4
        %v1246 = vshrl.u32 %v1164, 16
        %v1248 = vrot.slane %v1246, 7
        %v1249 = vshll.u32 %v1164, 16
        %v1251 = vor.u32 %v1248, %v1249
        %v1252 = vrot.slane %v1248, 4
        %v1254 = vshrl.u32 %v1165, 16
        %v1256 = vrot.slane %v1254, 7
        %v1257 = vshll.u32 %v1165, 16
        %v1259 = vor.u32 %v1256, %v1257
        %v1260 = vsel %vm1227, %v1252, %v1259
        %v1261 = vrot.slane %v1256, 4
        %v1263 = vshrl.u32 %v1166, 16
        %v1265 = vrot.slane %v1263, 7
        %v1266 = vshll.u32 %v1166, 16
        %v1268 = vor.u32 %v1265, %v1266
        %v1269 = vrot.slane %v1265, 4
        %v1271 = vshrl.u32 %v1167, 16
        %v1273 = vrot.slane %v1271, 7
        %v1274 = vshll.u32 %v1167, 16
        %v1276 = vor.u32 %v1273, %v1274
        %v1277 = vsel %vm1227, %v1269, %v1276
        %v1278 = vrot.slane %v1273, 4
        %v1280 = vshrl.u32 %v1168, 16
        %v1282 = vrot.slane %v1280, 7
        %v1283 = vshll.u32 %v1168, 16
        %v1285 = vor.u32 %v1282, %v1283
        %v1286 = vrot.slane %v1282, 4
        %v1288 = vshrl.u32 %v1169, 16
        %v1290 = vrot.slane %v1288, 7
        %v1291 = vshll.u32 %v1169, 16
        %v1293 = vor.u32 %v1290, %v1291
        %v1294 = vsel %vm1227, %v1286, %v1293
        %v1295 = vrot.slane %v1290, 4
        %v1297 = vshrl.u32 %v1170, 16
        %v1299 = vrot.slane %v1297, 7
        %v1300 = vshll.u32 %v1170, 16
        %v1302 = vor.u32 %v1299, %v1300
        %v1303 = vrot.slane %v1299, 4
        %v1305 = vshrl.u32 %v1171, 16
        %v1307 = vrot.slane %v1305, 7
        %v1308 = vshll.u32 %v1171, 16
        %v1310 = vor.u32 %v1307, %v1308
        %v1311 = vsel %vm1227, %v1303, %v1310
        %v1312 = vrot.slane %v1307, 4
        %v1314 = vshrl.u32 %v1172, 16
        %v1316 = vrot.slane %v1314, 7
        %v1317 = vshll.u32 %v1172, 16
        %v1319 = vor.u32 %v1316, %v1317
        %v1320 = vrot.slane %v1316, 4
        %v1322 = vshrl.u32 %v1173, 16
        %v1324 = vrot.slane %v1322, 7
        %v1325 = vshll.u32 %v1173, 16
        %v1327 = vor.u32 %v1324, %v1325
        %v1328 = vsel %vm1227, %v1320, %v1327
        %v1329 = vrot.slane %v1324, 4
        %v1331 = vshrl.u32 %v1174, 16
        %v1333 = vrot.slane %v1331, 7
        %v1334 = vshll.u32 %v1174, 16
        %v1336 = vor.u32 %v1333, %v1334
        %v1337 = vrot.slane %v1333, 4
        %v1339 = vshrl.u32 %v1175, 16
        %v1341 = vrot.slane %v1339, 7
        %v1342 = vshll.u32 %v1175, 16
        %v1344 = vor.u32 %v1341, %v1342
        %v1345 = vsel %vm1227, %v1337, %v1344
        %v1346 = vrot.slane %v1341, 4
        %v1348 = vshrl.u32 %v1176, 16
        %v1350 = vrot.slane %v1348, 7
        %v1351 = vshll.u32 %v1176, 16
        %v1353 = vor.u32 %v1350, %v1351
        %v1354 = vrot.slane %v1350, 4
        %v1356 = vshrl.u32 %v1177, 16
        %v1358 = vrot.slane %v1356, 7
        %v1359 = vshll.u32 %v1177, 16
        %v1361 = vor.u32 %v1358, %v1359
        %v1362 = vsel %vm1227, %v1354, %v1361
        %v1363 = vrot.slane %v1358, 4
        %v1365 = vshrl.u32 %v1178, 16
        %v1367 = vrot.slane %v1365, 7
        %v1368 = vshll.u32 %v1178, 16
        %v1370 = vor.u32 %v1367, %v1368
        %v1371 = vrot.slane %v1367, 4
        %v1373 = vshrl.u32 %v1179, 16
        %v1375 = vrot.slane %v1373, 7
        %v1376 = vshll.u32 %v1179, 16
        %v1378 = vor.u32 %v1375, %v1376
        %v1379 = vsel %vm1227, %v1371, %v1378
        %v1380 = vrot.slane %v1375, 4
        %v1382 = vshrl.u32 %v1180, 16
        %v1384 = vrot.slane %v1382, 7
        %v1385 = vshll.u32 %v1180, 16
        %v1387 = vor.u32 %v1384, %v1385
        %v1388 = vrot.slane %v1384, 4
        %v1390 = vshrl.u32 %v1181, 16
        %v1392 = vrot.slane %v1390, 7
        %v1393 = vshll.u32 %v1181, 16
        %v1395 = vor.u32 %v1392, %v1393
        %v1396 = vsel %vm1227, %v1388, %v1395
        %v1397 = vrot.slane %v1392, 4
        %v1399 = vshrl.u32 %v1182, 16
        %v1401 = vrot.slane %v1399, 7
        %v1402 = vshll.u32 %v1182, 16
        %v1404 = vor.u32 %v1401, %v1402
        %v1405 = vrot.slane %v1401, 4
        %v1407 = vshrl.u32 %v1183, 16
        %v1409 = vrot.slane %v1407, 7
        %v1410 = vshll.u32 %v1183, 16
        %v1412 = vor.u32 %v1409, %v1410
        %v1413 = vsel %vm1227, %v1405, %v1412
        %v1414 = vrot.slane %v1409, 4
        %v1416 = vshrl.u32 %v1184, 16
        %v1418 = vrot.slane %v1416, 7
        %v1419 = vshll.u32 %v1184, 16
        %v1421 = vor.u32 %v1418, %v1419
        %v1422 = vrot.slane %v1418, 4
        %v1424 = vshrl.u32 %v1185, 16
        %v1426 = vrot.slane %v1424, 7
        %v1427 = vshll.u32 %v1185, 16
        %v1429 = vor.u32 %v1426, %v1427
        %v1430 = vsel %vm1227, %v1422, %v1429
        %v1431 = vrot.slane %v1426, 4
        %v1433 = vshrl.u32 %v1186, 16
        %v1435 = vrot.slane %v1433, 7
        %v1436 = vshll.u32 %v1186, 16
        %v1438 = vor.u32 %v1435, %v1436
        %v1439 = vrot.slane %v1435, 4
        %v1441 = vshrl.u32 %v1187, 16
        %v1443 = vrot.slane %v1441, 7
        %v1444 = vshll.u32 %v1187, 16
        %v1446 = vor.u32 %v1443, %v1444
        %v1447 = vsel %vm1227, %v1439, %v1446
        %v1448 = vrot.slane %v1443, 4
        %v1450 = vshrl.u32 %v1188, 16
        %v1452 = vrot.slane %v1450, 7
        %v1453 = vshll.u32 %v1188, 16
        %v1455 = vor.u32 %v1452, %v1453
        %v1456 = vrot.slane %v1452, 4
        %v1458 = vshrl.u32 %v1189, 16
        %v1460 = vrot.slane %v1458, 7
        %v1461 = vshll.u32 %v1189, 16
        %v1463 = vor.u32 %v1460, %v1461
        %v1464 = vsel %vm1227, %v1456, %v1463
        %v1465 = vrot.slane %v1460, 4
        %v1467 = vshrl.u32 %v1190, 16
        %v1469 = vrot.slane %v1467, 7
        %v1470 = vshll.u32 %v1190, 16
        %v1472 = vor.u32 %v1469, %v1470
        %v1473 = vrot.slane %v1469, 4
        %v1475 = vshrl.u32 %v1191, 16
        %v1477 = vrot.slane %v1475, 7
        %v1478 = vshll.u32 %v1191, 16
        %v1480 = vor.u32 %v1477, %v1478
        %v1481 = vsel %vm1227, %v1473, %v1480
        %v1482 = vrot.slane %v1477, 4
        %v1484 = vshrl.u32 %v1192, 16
        %v1486 = vrot.slane %v1484, 7
        %v1487 = vshll.u32 %v1192, 16
        %v1489 = vor.u32 %v1486, %v1487
        %v1490 = vrot.slane %v1486, 4
        %v1492 = vshrl.u32 %v1193, 16
        %v1494 = vrot.slane %v1492, 7
        %v1495 = vshll.u32 %v1193, 16
        %v1497 = vor.u32 %v1494, %v1495
        %v1498 = vsel %vm1227, %v1490, %v1497
        %v1499 = vrot.slane %v1494, 4
        %v1501 = vshrl.u32 %v1194, 16
        %v1503 = vrot.slane %v1501, 7
        %v1504 = vshll.u32 %v1194, 16
        %v1506 = vor.u32 %v1503, %v1504
        %v1507 = vrot.slane %v1503, 4
        %v1509 = vshrl.u32 %v1195, 16
        %v1511 = vrot.slane %v1509, 7
        %v1512 = vshll.u32 %v1195, 16
        %v1514 = vor.u32 %v1511, %v1512
        %v1515 = vsel %vm1227, %v1507, %v1514
        %v1516 = vrot.slane %v1511, 4
        %v1518 = vshrl.u32 %v1196, 16
        %v1520 = vrot.slane %v1518, 7
        %v1521 = vshll.u32 %v1196, 16
        %v1523 = vor.u32 %v1520, %v1521
        %v1524 = vrot.slane %v1520, 4
        %v1526 = vshrl.u32 %v1197, 16
        %v1528 = vrot.slane %v1526, 7
        %v1529 = vshll.u32 %v1197, 16
        %v1531 = vor.u32 %v1528, %v1529
        %v1532 = vsel %vm1227, %v1524, %v1531
        %v1533 = vrot.slane %v1528, 4
        %v1535 = vshrl.u32 %v1198, 16
        %v1537 = vrot.slane %v1535, 7
        %v1538 = vshll.u32 %v1198, 16
        %v1540 = vor.u32 %v1537, %v1538
        %v1541 = vrot.slane %v1537, 4
        %v1543 = vshrl.u32 %v1199, 16
        %v1545 = vrot.slane %v1543, 7
        %v1546 = vshll.u32 %v1199, 16
        %v1548 = vor.u32 %v1545, %v1546
        %v1549 = vsel %vm1227, %v1541, %v1548
        %v1550 = vrot.slane %v1545, 4
        %v1552 = vshrl.u32 %v1200, 16
        %v1554 = vrot.slane %v1552, 7
        %v1555 = vshll.u32 %v1200, 16
        %v1557 = vor.u32 %v1554, %v1555
        %v1558 = vrot.slane %v1554, 4
        %v1560 = vshrl.u32 %v1201, 16
        %v1562 = vrot.slane %v1560, 7
        %v1563 = vshll.u32 %v1201, 16
        %v1565 = vor.u32 %v1562, %v1563
        %v1566 = vsel %vm1227, %v1558, %v1565
        %v1567 = vrot.slane %v1562, 4
        %v1569 = vshrl.u32 %v1202, 16
        %v1571 = vrot.slane %v1569, 7
        %v1572 = vshll.u32 %v1202, 16
        %v1574 = vor.u32 %v1571, %v1572
        %v1575 = vrot.slane %v1571, 4
        %v1577 = vshrl.u32 %v1203, 16
        %v1579 = vrot.slane %v1577, 7
        %v1580 = vshll.u32 %v1203, 16
        %v1582 = vor.u32 %v1579, %v1580
        %v1583 = vsel %vm1227, %v1575, %v1582
        %v1584 = vrot.slane %v1579, 4
        %v1586 = vshrl.u32 %v1204, 16
        %v1588 = vrot.slane %v1586, 7
        %v1589 = vshll.u32 %v1204, 16
        %v1591 = vor.u32 %v1588, %v1589
        %v1592 = vrot.slane %v1588, 4
        %v1594 = vshrl.u32 %v1205, 16
        %v1596 = vrot.slane %v1594, 7
        %v1597 = vshll.u32 %v1205, 16
        %v1599 = vor.u32 %v1596, %v1597
        %v1600 = vsel %vm1227, %v1592, %v1599
        %v1601 = vrot.slane %v1596, 4
        %v1603 = vshrl.u32 %v1206, 16
        %v1605 = vrot.slane %v1603, 7
        %v1606 = vshll.u32 %v1206, 16
        %v1608 = vor.u32 %v1605, %v1606
        %v1609 = vrot.slane %v1605, 4
        %v1611 = vshrl.u32 %v1207, 16
        %v1613 = vrot.slane %v1611, 7
        %v1614 = vshll.u32 %v1207, 16
        %v1616 = vor.u32 %v1613, %v1614
        %v1617 = vsel %vm1227, %v1609, %v1616
        %v1618 = vrot.slane %v1613, 4
        %v1620 = vshrl.u32 %v1208, 16
        %v1622 = vrot.slane %v1620, 7
        %v1623 = vshll.u32 %v1208, 16
        %v1625 = vor.u32 %v1622, %v1623
        %v1626 = vrot.slane %v1622, 4
        %v1628 = vshrl.u32 %v1209, 16
        %v1630 = vrot.slane %v1628, 7
        %v1631 = vshll.u32 %v1209, 16
        %v1633 = vor.u32 %v1630, %v1631
        %v1634 = vsel %vm1227, %v1626, %v1633
        %v1635 = vrot.slane %v1630, 4
        %v1637 = vshrl.u32 %v1210, 16
        %v1639 = vrot.slane %v1637, 7
        %v1640 = vshll.u32 %v1210, 16
        %v1642 = vor.u32 %v1639, %v1640
        %v1643 = vrot.slane %v1639, 4
        %v1645 = vshrl.u32 %v1211, 16
        %v1647 = vrot.slane %v1645, 7
        %v1648 = vshll.u32 %v1211, 16
        %v1650 = vor.u32 %v1647, %v1648
        %v1651 = vsel %vm1227, %v1643, %v1650
        %v1652 = vrot.slane %v1647, 4
        %v1654 = vshrl.u32 %v1212, 16
        %v1656 = vrot.slane %v1654, 7
        %v1657 = vshll.u32 %v1212, 16
        %v1659 = vor.u32 %v1656, %v1657
        %v1660 = vrot.slane %v1656, 4
        %v1662 = vshrl.u32 %v1213, 16
        %v1664 = vrot.slane %v1662, 7
        %v1665 = vshll.u32 %v1213, 16
        %v1667 = vor.u32 %v1664, %v1665
        %v1668 = vsel %vm1227, %v1660, %v1667
        %v1669 = vrot.slane %v1664, 4
        %v1671 = vshrl.u32 %v1214, 16
        %v1673 = vrot.slane %v1671, 7
        %v1674 = vshll.u32 %v1214, 16
        %v1676 = vor.u32 %v1673, %v1674
        %v1677 = vrot.slane %v1673, 4
        %v1679 = vshrl.u32 %v1215, 16
        %v1681 = vrot.slane %v1679, 7
        %v1682 = vshll.u32 %v1215, 16
        %v1684 = vor.u32 %v1681, %v1682
        %v1685 = vsel %vm1227, %v1677, %v1684
        %v1686 = vrot.slane %v1681, 4
        %v1688 = vshrl.u32 %v1216, 16
        %v1690 = vrot.slane %v1688, 7
        %v1691 = vshll.u32 %v1216, 16
        %v1693 = vor.u32 %v1690, %v1691
        %v1694 = vrot.slane %v1690, 4
        %v1696 = vshrl.u32 %v1217, 16
        %v1698 = vrot.slane %v1696, 7
        %v1699 = vshll.u32 %v1217, 16
        %v1701 = vor.u32 %v1698, %v1699
        %v1702 = vsel %vm1227, %v1694, %v1701
        %v1703 = vrot.slane %v1698, 4
        %v1705 = vshrl.u32 %v1218, 16
        %v1707 = vrot.slane %v1705, 7
        %v1708 = vshll.u32 %v1218, 16
        %v1710 = vor.u32 %v1707, %v1708
        %v1711 = vrot.slane %v1707, 4
        %v1713 = vshrl.u32 %v1219, 16
        %v1715 = vrot.slane %v1713, 7
        %v1716 = vshll.u32 %v1219, 16
        %v1718 = vor.u32 %v1715, %v1716
        %v1719 = vsel %vm1227, %v1711, %v1718
        %v1720 = vrot.slane %v1715, 4
        %v1722 = vshrl.u32 %v1220, 16
        %v1724 = vrot.slane %v1722, 7
        %v1725 = vshll.u32 %v1220, 16
        %v1727 = vor.u32 %v1724, %v1725
        %v1728 = vrot.slane %v1724, 4
        %v1730 = vshrl.u32 %v1221, 16
        %v1732 = vrot.slane %v1730, 7
        %v1733 = vshll.u32 %v1221, 16
        %v1735 = vor.u32 %v1732, %v1733
        %v1736 = vsel %vm1227, %v1728, %v1735
        %v1737 = vrot.slane %v1732, 4
        %v1739 = vshrl.u32 %v1222, 16
        %v1741 = vrot.slane %v1739, 7
        %v1742 = vshll.u32 %v1222, 16
        %v1744 = vor.u32 %v1741, %v1742
        %v1745 = vrot.slane %v1741, 4
        %v1747 = vshrl.u32 %v1223, 16
        %v1749 = vrot.slane %v1747, 7
        %v1750 = vshll.u32 %v1223, 16
        %v1752 = vor.u32 %v1749, %v1750
        %v1753 = vsel %vm1227, %v1745, %v1752
        %v1754 = vrot.slane %v1749, 4
        %v1756 = vshrl.u32 %v1224, 16
        %v1758 = vrot.slane %v1756, 7
        %v1759 = vshll.u32 %v1224, 16
        %v1761 = vor.u32 %v1758, %v1759
        %v1762 = vrot.slane %v1758, 4
        %v1764 = vshrl.u32 %v1225, 16
        %v1766 = vrot.slane %v1764, 7
        %v1767 = vshll.u32 %v1225, 16
        %v1769 = vor.u32 %v1766, %v1767
        %v1770 = vsel %vm1227, %v1762, %v1769
        %v1771 = vrot.slane %v1766, 4
        %vm1868 = vcmask 257024
        %vm1869 = vmand %vm1868, %vm936
        %v1870 = vld [vmem:[%s836] sm:$0xf]
        %v1871 = vsel %vm1869, %v1234, %v1870
        %1872 = vst [vmem:[%s836] sm:$0xf] %v1871
        %1873 = vst.msk [vmem:[%s836 + $0x4] sm:$0xf] %vm821, %v1243
        %v1874 = vld [vmem:[%s836 + $0x8] sm:$0x1]
        %v1875 = vsel %vm839, %v1244, %v1874
        %1876 = vst [vmem:[%s836 + $0x8] sm:$0x1] %v1875
        %v1877 = vld [vmem:[%s836 + $0xc] sm:$0xf]
        %v1878 = vsel %vm1869, %v1251, %v1877
        %1879 = vst [vmem:[%s836 + $0xc] sm:$0xf] %v1878
        %1880 = vst.msk [vmem:[%s836 + $0x10] sm:$0xf] %vm821, %v1260
        %v1881 = vld [vmem:[%s836 + $0x14] sm:$0x1]
        %v1882 = vsel %vm839, %v1261, %v1881
        %1883 = vst [vmem:[%s836 + $0x14] sm:$0x1] %v1882
        %v1884 = vld [vmem:[%s836 + $0x18] sm:$0xf]
        %v1885 = vsel %vm1869, %v1268, %v1884
        %1886 = vst [vmem:[%s836 + $0x18] sm:$0xf] %v1885
        %1887 = vst.msk [vmem:[%s836 + $0x1c] sm:$0xf] %vm821, %v1277
        %v1888 = vld [vmem:[%s836 + $0x20] sm:$0x1]
        %v1889 = vsel %vm839, %v1278, %v1888
        %1890 = vst [vmem:[%s836 + $0x20] sm:$0x1] %v1889
        %v1891 = vld [vmem:[%s836 + $0x24] sm:$0xf]
        %v1892 = vsel %vm1869, %v1285, %v1891
        %1893 = vst [vmem:[%s836 + $0x24] sm:$0xf] %v1892
        %1894 = vst.msk [vmem:[%s836 + $0x28] sm:$0xf] %vm821, %v1294
        %v1895 = vld [vmem:[%s836 + $0x2c] sm:$0x1]
        %v1896 = vsel %vm839, %v1295, %v1895
        %1897 = vst [vmem:[%s836 + $0x2c] sm:$0x1] %v1896
        %v1898 = vld [vmem:[%s836 + $0x30] sm:$0xf]
        %v1899 = vsel %vm1869, %v1302, %v1898
        %1900 = vst [vmem:[%s836 + $0x30] sm:$0xf] %v1899
        %1901 = vst.msk [vmem:[%s836 + $0x34] sm:$0xf] %vm821, %v1311
        %v1902 = vld [vmem:[%s836 + $0x38] sm:$0x1]
        %v1903 = vsel %vm839, %v1312, %v1902
        %1904 = vst [vmem:[%s836 + $0x38] sm:$0x1] %v1903
        %v1905 = vld [vmem:[%s836 + $0x3c] sm:$0xf]
        %v1906 = vsel %vm1869, %v1319, %v1905
        %1907 = vst [vmem:[%s836 + $0x3c] sm:$0xf] %v1906
        %1908 = vst.msk [vmem:[%s836 + $0x40] sm:$0xf] %vm821, %v1328
        %v1909 = vld [vmem:[%s836 + $0x44] sm:$0x1]
        %v1910 = vsel %vm839, %v1329, %v1909
        %1911 = vst [vmem:[%s836 + $0x44] sm:$0x1] %v1910
        %v1912 = vld [vmem:[%s836 + $0x48] sm:$0xf]
        %v1913 = vsel %vm1869, %v1336, %v1912
        %1914 = vst [vmem:[%s836 + $0x48] sm:$0xf] %v1913
        %1915 = vst.msk [vmem:[%s836 + $0x4c] sm:$0xf] %vm821, %v1345
        %v1916 = vld [vmem:[%s836 + $0x50] sm:$0x1]
        %v1917 = vsel %vm839, %v1346, %v1916
        %1918 = vst [vmem:[%s836 + $0x50] sm:$0x1] %v1917
        %v1919 = vld [vmem:[%s836 + $0x54] sm:$0xf]
        %v1920 = vsel %vm1869, %v1353, %v1919
        %1921 = vst [vmem:[%s836 + $0x54] sm:$0xf] %v1920
        %1922 = vst.msk [vmem:[%s836 + $0x58] sm:$0xf] %vm821, %v1362
        %v1923 = vld [vmem:[%s836 + $0x5c] sm:$0x1]
        %v1924 = vsel %vm839, %v1363, %v1923
        %1925 = vst [vmem:[%s836 + $0x5c] sm:$0x1] %v1924
        %v1926 = vld [vmem:[%s836 + $0x60] sm:$0xf]
        %v1927 = vsel %vm1869, %v1370, %v1926
        %1928 = vst [vmem:[%s836 + $0x60] sm:$0xf] %v1927
        %1929 = vst.msk [vmem:[%s836 + $0x64] sm:$0xf] %vm821, %v1379
        %v1930 = vld [vmem:[%s836 + $0x68] sm:$0x1]
        %v1931 = vsel %vm839, %v1380, %v1930
        %1932 = vst [vmem:[%s836 + $0x68] sm:$0x1] %v1931
        %v1933 = vld [vmem:[%s836 + $0x6c] sm:$0xf]
        %v1934 = vsel %vm1869, %v1387, %v1933
        %1935 = vst [vmem:[%s836 + $0x6c] sm:$0xf] %v1934
        %1936 = vst.msk [vmem:[%s836 + $0x70] sm:$0xf] %vm821, %v1396
        %v1937 = vld [vmem:[%s836 + $0x74] sm:$0x1]
        %v1938 = vsel %vm839, %v1397, %v1937
        %1939 = vst [vmem:[%s836 + $0x74] sm:$0x1] %v1938
        %v1940 = vld [vmem:[%s836 + $0x78] sm:$0xf]
        %v1941 = vsel %vm1869, %v1404, %v1940
        %1942 = vst [vmem:[%s836 + $0x78] sm:$0xf] %v1941
        %1943 = vst.msk [vmem:[%s836 + $0x7c] sm:$0xf] %vm821, %v1413
        %v1944 = vld [vmem:[%s836 + $0x80] sm:$0x1]
        %v1945 = vsel %vm839, %v1414, %v1944
        %1946 = vst [vmem:[%s836 + $0x80] sm:$0x1] %v1945
        %v1947 = vld [vmem:[%s836 + $0x84] sm:$0xf]
        %v1948 = vsel %vm1869, %v1421, %v1947
        %1949 = vst [vmem:[%s836 + $0x84] sm:$0xf] %v1948
        %1950 = vst.msk [vmem:[%s836 + $0x88] sm:$0xf] %vm821, %v1430
        %v1951 = vld [vmem:[%s836 + $0x8c] sm:$0x1]
        %v1952 = vsel %vm839, %v1431, %v1951
        %1953 = vst [vmem:[%s836 + $0x8c] sm:$0x1] %v1952
        %v1954 = vld [vmem:[%s836 + $0x90] sm:$0xf]
        %v1955 = vsel %vm1869, %v1438, %v1954
        %1956 = vst [vmem:[%s836 + $0x90] sm:$0xf] %v1955
        %1957 = vst.msk [vmem:[%s836 + $0x94] sm:$0xf] %vm821, %v1447
        %v1958 = vld [vmem:[%s836 + $0x98] sm:$0x1]
        %v1959 = vsel %vm839, %v1448, %v1958
        %1960 = vst [vmem:[%s836 + $0x98] sm:$0x1] %v1959
        %v1961 = vld [vmem:[%s836 + $0x9c] sm:$0xf]
        %v1962 = vsel %vm1869, %v1455, %v1961
        %1963 = vst [vmem:[%s836 + $0x9c] sm:$0xf] %v1962
        %1964 = vst.msk [vmem:[%s836 + $0xa0] sm:$0xf] %vm821, %v1464
        %v1965 = vld [vmem:[%s836 + $0xa4] sm:$0x1]
        %v1966 = vsel %vm839, %v1465, %v1965
        %1967 = vst [vmem:[%s836 + $0xa4] sm:$0x1] %v1966
        %v1968 = vld [vmem:[%s836 + $0xa8] sm:$0xf]
        %v1969 = vsel %vm1869, %v1472, %v1968
        %1970 = vst [vmem:[%s836 + $0xa8] sm:$0xf] %v1969
        %1971 = vst.msk [vmem:[%s836 + $0xac] sm:$0xf] %vm821, %v1481
        %v1972 = vld [vmem:[%s836 + $0xb0] sm:$0x1]
        %v1973 = vsel %vm839, %v1482, %v1972
        %1974 = vst [vmem:[%s836 + $0xb0] sm:$0x1] %v1973
        %v1975 = vld [vmem:[%s836 + $0xb4] sm:$0xf]
        %v1976 = vsel %vm1869, %v1489, %v1975
        %1977 = vst [vmem:[%s836 + $0xb4] sm:$0xf] %v1976
        %1978 = vst.msk [vmem:[%s836 + $0xb8] sm:$0xf] %vm821, %v1498
        %v1979 = vld [vmem:[%s836 + $0xbc] sm:$0x1]
        %v1980 = vsel %vm839, %v1499, %v1979
        %1981 = vst [vmem:[%s836 + $0xbc] sm:$0x1] %v1980
        %v1982 = vld [vmem:[%s836 + $0xd8] sm:$0xf]
        %v1983 = vsel %vm1869, %v1506, %v1982
        %1984 = vst [vmem:[%s836 + $0xd8] sm:$0xf] %v1983
        %1985 = vst.msk [vmem:[%s836 + $0xdc] sm:$0xf] %vm821, %v1515
        %v1986 = vld [vmem:[%s836 + $0xe0] sm:$0x1]
        %v1987 = vsel %vm839, %v1516, %v1986
        %1988 = vst [vmem:[%s836 + $0xe0] sm:$0x1] %v1987
        %v1989 = vld [vmem:[%s836 + $0xe4] sm:$0xf]
        %v1990 = vsel %vm1869, %v1523, %v1989
        %1991 = vst [vmem:[%s836 + $0xe4] sm:$0xf] %v1990
        %1992 = vst.msk [vmem:[%s836 + $0xe8] sm:$0xf] %vm821, %v1532
        %v1993 = vld [vmem:[%s836 + $0xec] sm:$0x1]
        %v1994 = vsel %vm839, %v1533, %v1993
        %1995 = vst [vmem:[%s836 + $0xec] sm:$0x1] %v1994
        %v1996 = vld [vmem:[%s836 + $0xf0] sm:$0xf]
        %v1997 = vsel %vm1869, %v1540, %v1996
        %1998 = vst [vmem:[%s836 + $0xf0] sm:$0xf] %v1997
        %1999 = vst.msk [vmem:[%s836 + $0xf4] sm:$0xf] %vm821, %v1549
        %v2000 = vld [vmem:[%s836 + $0xf8] sm:$0x1]
        %v2001 = vsel %vm839, %v1550, %v2000
        %2002 = vst [vmem:[%s836 + $0xf8] sm:$0x1] %v2001
        %v2003 = vld [vmem:[%s836 + $0xfc] sm:$0xf]
        %v2004 = vsel %vm1869, %v1557, %v2003
        %2005 = vst [vmem:[%s836 + $0xfc] sm:$0xf] %v2004
        %2006 = vst.msk [vmem:[%s836 + $0x100] sm:$0xf] %vm821, %v1566
        %v2007 = vld [vmem:[%s836 + $0x104] sm:$0x1]
        %v2008 = vsel %vm839, %v1567, %v2007
        %2009 = vst [vmem:[%s836 + $0x104] sm:$0x1] %v2008
        %v2010 = vld [vmem:[%s836 + $0x108] sm:$0xf]
        %v2011 = vsel %vm1869, %v1574, %v2010
        %2012 = vst [vmem:[%s836 + $0x108] sm:$0xf] %v2011
        %2013 = vst.msk [vmem:[%s836 + $0x10c] sm:$0xf] %vm821, %v1583
        %v2014 = vld [vmem:[%s836 + $0x110] sm:$0x1]
        %v2015 = vsel %vm839, %v1584, %v2014
        %2016 = vst [vmem:[%s836 + $0x110] sm:$0x1] %v2015
        %v2017 = vld [vmem:[%s836 + $0x114] sm:$0xf]
        %v2018 = vsel %vm1869, %v1591, %v2017
        %2019 = vst [vmem:[%s836 + $0x114] sm:$0xf] %v2018
        %2020 = vst.msk [vmem:[%s836 + $0x118] sm:$0xf] %vm821, %v1600
        %v2021 = vld [vmem:[%s836 + $0x11c] sm:$0x1]
        %v2022 = vsel %vm839, %v1601, %v2021
        %2023 = vst [vmem:[%s836 + $0x11c] sm:$0x1] %v2022
        %v2024 = vld [vmem:[%s836 + $0x120] sm:$0xf]
        %v2025 = vsel %vm1869, %v1608, %v2024
        %2026 = vst [vmem:[%s836 + $0x120] sm:$0xf] %v2025
        %2027 = vst.msk [vmem:[%s836 + $0x124] sm:$0xf] %vm821, %v1617
        %v2028 = vld [vmem:[%s836 + $0x128] sm:$0x1]
        %v2029 = vsel %vm839, %v1618, %v2028
        %2030 = vst [vmem:[%s836 + $0x128] sm:$0x1] %v2029
        %v2031 = vld [vmem:[%s836 + $0x12c] sm:$0xf]
        %v2032 = vsel %vm1869, %v1625, %v2031
        %2033 = vst [vmem:[%s836 + $0x12c] sm:$0xf] %v2032
        %2034 = vst.msk [vmem:[%s836 + $0x130] sm:$0xf] %vm821, %v1634
        %v2035 = vld [vmem:[%s836 + $0x134] sm:$0x1]
        %v2036 = vsel %vm839, %v1635, %v2035
        %2037 = vst [vmem:[%s836 + $0x134] sm:$0x1] %v2036
        %v2038 = vld [vmem:[%s836 + $0x138] sm:$0xf]
        %v2039 = vsel %vm1869, %v1642, %v2038
        %2040 = vst [vmem:[%s836 + $0x138] sm:$0xf] %v2039
        %2041 = vst.msk [vmem:[%s836 + $0x13c] sm:$0xf] %vm821, %v1651
        %v2042 = vld [vmem:[%s836 + $0x140] sm:$0x1]
        %v2043 = vsel %vm839, %v1652, %v2042
        %2044 = vst [vmem:[%s836 + $0x140] sm:$0x1] %v2043
        %v2045 = vld [vmem:[%s836 + $0x144] sm:$0xf]
        %v2046 = vsel %vm1869, %v1659, %v2045
        %2047 = vst [vmem:[%s836 + $0x144] sm:$0xf] %v2046
        %2048 = vst.msk [vmem:[%s836 + $0x148] sm:$0xf] %vm821, %v1668
        %v2049 = vld [vmem:[%s836 + $0x14c] sm:$0x1]
        %v2050 = vsel %vm839, %v1669, %v2049
        %2051 = vst [vmem:[%s836 + $0x14c] sm:$0x1] %v2050
        %v2052 = vld [vmem:[%s836 + $0x150] sm:$0xf]
        %v2053 = vsel %vm1869, %v1676, %v2052
        %2054 = vst [vmem:[%s836 + $0x150] sm:$0xf] %v2053
        %2055 = vst.msk [vmem:[%s836 + $0x154] sm:$0xf] %vm821, %v1685
        %v2056 = vld [vmem:[%s836 + $0x158] sm:$0x1]
        %v2057 = vsel %vm839, %v1686, %v2056
        %2058 = vst [vmem:[%s836 + $0x158] sm:$0x1] %v2057
        %v2059 = vld [vmem:[%s836 + $0x15c] sm:$0xf]
        %v2060 = vsel %vm1869, %v1693, %v2059
        %2061 = vst [vmem:[%s836 + $0x15c] sm:$0xf] %v2060
        %2062 = vst.msk [vmem:[%s836 + $0x160] sm:$0xf] %vm821, %v1702
        %v2063 = vld [vmem:[%s836 + $0x164] sm:$0x1]
        %v2064 = vsel %vm839, %v1703, %v2063
        %2065 = vst [vmem:[%s836 + $0x164] sm:$0x1] %v2064
        %v2066 = vld [vmem:[%s836 + $0x168] sm:$0xf]
        %v2067 = vsel %vm1869, %v1710, %v2066
        %2068 = vst [vmem:[%s836 + $0x168] sm:$0xf] %v2067
        %2069 = vst.msk [vmem:[%s836 + $0x16c] sm:$0xf] %vm821, %v1719
        %v2070 = vld [vmem:[%s836 + $0x170] sm:$0x1]
        %v2071 = vsel %vm839, %v1720, %v2070
        %2072 = vst [vmem:[%s836 + $0x170] sm:$0x1] %v2071
        %v2073 = vld [vmem:[%s836 + $0x174] sm:$0xf]
        %v2074 = vsel %vm1869, %v1727, %v2073
        %2075 = vst [vmem:[%s836 + $0x174] sm:$0xf] %v2074
        %2076 = vst.msk [vmem:[%s836 + $0x178] sm:$0xf] %vm821, %v1736
        %v2077 = vld [vmem:[%s836 + $0x17c] sm:$0x1]
        %v2078 = vsel %vm839, %v1737, %v2077
        %2079 = vst [vmem:[%s836 + $0x17c] sm:$0x1] %v2078
        %v2080 = vld [vmem:[%s836 + $0x180] sm:$0xf]
        %v2081 = vsel %vm1869, %v1744, %v2080
        %2082 = vst [vmem:[%s836 + $0x180] sm:$0xf] %v2081
        %2083 = vst.msk [vmem:[%s836 + $0x184] sm:$0xf] %vm821, %v1753
        %v2084 = vld [vmem:[%s836 + $0x188] sm:$0x1]
        %v2085 = vsel %vm839, %v1754, %v2084
        %2086 = vst [vmem:[%s836 + $0x188] sm:$0x1] %v2085
        %v2087 = vld [vmem:[%s836 + $0x18c] sm:$0xf]
        %v2088 = vsel %vm1869, %v1761, %v2087
        %2089 = vst [vmem:[%s836 + $0x18c] sm:$0xf] %v2088
        %2090 = vst.msk [vmem:[%s836 + $0x190] sm:$0xf] %vm821, %v1770
        %v2091 = vld [vmem:[%s836 + $0x194] sm:$0x1]
        %v2092 = vsel %vm839, %v1771, %v2091
        %2093 = vst [vmem:[%s836 + $0x194] sm:$0x1] %v2092
        %v2094 = vld [vmem:[#allocation2] sm:$0xf]
        %v2095 = vld [vmem:[#allocation2 + $0x4] sm:$0xf]
        %v2096 = vld [vmem:[#allocation2 + $0xc] sm:$0xf]
        %v2097 = vld [vmem:[#allocation2 + $0x10] sm:$0xf]
        %v2098 = vld [vmem:[#allocation2 + $0x18] sm:$0xf]
        %v2099 = vld [vmem:[#allocation2 + $0x1c] sm:$0xf]
        %v2100 = vld [vmem:[#allocation2 + $0x24] sm:$0xf]
        %v2101 = vld [vmem:[#allocation2 + $0x28] sm:$0xf]
        %v2102 = vld [vmem:[#allocation2 + $0x30] sm:$0xf]
        %v2103 = vld [vmem:[#allocation2 + $0x34] sm:$0xf]
        %v2104 = vld [vmem:[#allocation2 + $0x3c] sm:$0xf]
        %v2105 = vld [vmem:[#allocation2 + $0x40] sm:$0xf]
        %v2106 = vld [vmem:[#allocation2 + $0x48] sm:$0xf]
        %v2107 = vld [vmem:[#allocation2 + $0x4c] sm:$0xf]
        %v2108 = vld [vmem:[#allocation2 + $0x54] sm:$0xf]
        %v2109 = vld [vmem:[#allocation2 + $0x58] sm:$0xf]
        %v2110 = vld [vmem:[#allocation2 + $0x60] sm:$0xf]
        %v2111 = vld [vmem:[#allocation2 + $0x64] sm:$0xf]
        %v2112 = vld [vmem:[#allocation2 + $0x6c] sm:$0xf]
        %v2113 = vld [vmem:[#allocation2 + $0x70] sm:$0xf]
        %v2114 = vld [vmem:[#allocation2 + $0x78] sm:$0xf]
        %v2115 = vld [vmem:[#allocation2 + $0x7c] sm:$0xf]
        %v2116 = vld [vmem:[#allocation2 + $0x84] sm:$0xf]
        %v2117 = vld [vmem:[#allocation2 + $0x88] sm:$0xf]
        %v2118 = vld [vmem:[#allocation2 + $0x90] sm:$0xf]
        %v2119 = vld [vmem:[#allocation2 + $0x94] sm:$0xf]
        %v2120 = vld [vmem:[#allocation2 + $0x9c] sm:$0xf]
        %v2121 = vld [vmem:[#allocation2 + $0xa0] sm:$0xf]
        %v2122 = vld [vmem:[#allocation2 + $0xa8] sm:$0xf]
        %v2123 = vld [vmem:[#allocation2 + $0xac] sm:$0xf]
        %v2124 = vld [vmem:[#allocation2 + $0xb4] sm:$0xf]
        %v2125 = vld [vmem:[#allocation2 + $0xb8] sm:$0xf]
        %v2126 = vld [vmem:[#allocation2 + $0xd8] sm:$0xf]
        %v2127 = vld [vmem:[#allocation2 + $0xdc] sm:$0xf]
        %v2128 = vld [vmem:[#allocation2 + $0xe4] sm:$0xf]
        %v2129 = vld [vmem:[#allocation2 + $0xe8] sm:$0xf]
        %v2130 = vld [vmem:[#allocation2 + $0xf0] sm:$0xf]
        %v2131 = vld [vmem:[#allocation2 + $0xf4] sm:$0xf]
        %v2132 = vld [vmem:[#allocation2 + $0xfc] sm:$0xf]
        %v2133 = vld [vmem:[#allocation2 + $0x100] sm:$0xf]
        %v2134 = vld [vmem:[#allocation2 + $0x108] sm:$0xf]
        %v2135 = vld [vmem:[#allocation2 + $0x10c] sm:$0xf]
        %v2136 = vld [vmem:[#allocation2 + $0x114] sm:$0xf]
        %v2137 = vld [vmem:[#allocation2 + $0x118] sm:$0xf]
        %v2138 = vld [vmem:[#allocation2 + $0x120] sm:$0xf]
        %v2139 = vld [vmem:[#allocation2 + $0x124] sm:$0xf]
        %v2140 = vld [vmem:[#allocation2 + $0x12c] sm:$0xf]
        %v2141 = vld [vmem:[#allocation2 + $0x130] sm:$0xf]
        %v2142 = vld [vmem:[#allocation2 + $0x138] sm:$0xf]
        %v2143 = vld [vmem:[#allocation2 + $0x13c] sm:$0xf]
        %v2144 = vld [vmem:[#allocation2 + $0x144] sm:$0xf]
        %v2145 = vld [vmem:[#allocation2 + $0x148] sm:$0xf]
        %v2146 = vld [vmem:[#allocation2 + $0x150] sm:$0xf]
        %v2147 = vld [vmem:[#allocation2 + $0x154] sm:$0xf]
        %v2148 = vld [vmem:[#allocation2 + $0x15c] sm:$0xf]
        %v2149 = vld [vmem:[#allocation2 + $0x160] sm:$0xf]
        %v2150 = vld [vmem:[#allocation2 + $0x168] sm:$0xf]
        %v2151 = vld [vmem:[#allocation2 + $0x16c] sm:$0xf]
        %v2152 = vld [vmem:[#allocation2 + $0x174] sm:$0xf]
        %v2153 = vld [vmem:[#allocation2 + $0x178] sm:$0xf]
        %v2154 = vld [vmem:[#allocation2 + $0x180] sm:$0xf]
        %v2155 = vld [vmem:[#allocation2 + $0x184] sm:$0xf]
        %v2156 = vld [vmem:[#allocation2 + $0x18c] sm:$0xf]
        %v2157 = vld [vmem:[#allocation2 + $0x190] sm:$0xf]
        %v2158 = vld [vmem:[#allocation2 + $0x8] sm:$0x1]
        %v2159 = vld [vmem:[#allocation2 + $0x14] sm:$0x1]
        %v2160 = vld [vmem:[#allocation2 + $0x20] sm:$0x1]
        %v2161 = vld [vmem:[#allocation2 + $0x2c] sm:$0x1]
        %v2162 = vld [vmem:[#allocation2 + $0x38] sm:$0x1]
        %v2163 = vld [vmem:[#allocation2 + $0x44] sm:$0x1]
        %v2164 = vld [vmem:[#allocation2 + $0x50] sm:$0x1]
        %v2165 = vld [vmem:[#allocation2 + $0x5c] sm:$0x1]
        %v2166 = vld [vmem:[#allocation2 + $0x68] sm:$0x1]
        %v2167 = vld [vmem:[#allocation2 + $0x74] sm:$0x1]
        %v2168 = vld [vmem:[#allocation2 + $0x80] sm:$0x1]
        %v2169 = vld [vmem:[#allocation2 + $0x8c] sm:$0x1]
        %v2170 = vld [vmem:[#allocation2 + $0x98] sm:$0x1]
        %v2171 = vld [vmem:[#allocation2 + $0xa4] sm:$0x1]
        %v2172 = vld [vmem:[#allocation2 + $0xb0] sm:$0x1]
        %v2173 = vld [vmem:[#allocation2 + $0xbc] sm:$0x1]
        %v2174 = vld [vmem:[#allocation2 + $0xe0] sm:$0x1]
        %v2175 = vld [vmem:[#allocation2 + $0xec] sm:$0x1]
        %v2176 = vld [vmem:[#allocation2 + $0xf8] sm:$0x1]
        %v2177 = vld [vmem:[#allocation2 + $0x104] sm:$0x1]
        %v2178 = vld [vmem:[#allocation2 + $0x110] sm:$0x1]
        %v2179 = vld [vmem:[#allocation2 + $0x11c] sm:$0x1]
        %v2180 = vld [vmem:[#allocation2 + $0x128] sm:$0x1]
        %v2181 = vld [vmem:[#allocation2 + $0x134] sm:$0x1]
        %v2182 = vld [vmem:[#allocation2 + $0x140] sm:$0x1]
        %v2183 = vld [vmem:[#allocation2 + $0x14c] sm:$0x1]
        %v2184 = vld [vmem:[#allocation2 + $0x158] sm:$0x1]
        %v2185 = vld [vmem:[#allocation2 + $0x164] sm:$0x1]
        %v2186 = vld [vmem:[#allocation2 + $0x170] sm:$0x1]
        %v2187 = vld [vmem:[#allocation2 + $0x17c] sm:$0x1]
        %v2188 = vld [vmem:[#allocation2 + $0x188] sm:$0x1]
        %v2189 = vld [vmem:[#allocation2 + $0x194] sm:$0x1]
        %vm2190 = vsmask.f32 3328
        %vm2191 = vsmask.f32 7440
        %vm2192 = vmor %vm2190, %vm2191
        %v2194 = vshrl.u32 %v2094, 16
        %v2196 = vrot.slane %v2194, 4
        %v2197 = vshll.u32 %v2094, 16
        %v2199 = vrot.slane %v2197, 5
        %v2200 = vor.u32 %v2196, %v2199
        %v2201 = vrot.slane %v2200, 4
        %v2203 = vshll.u32 %v2095, 16
        %v2205 = vrot.slane %v2203, 5
        %v2206 = vsel %vm2192, %v2201, %v2205
        %v2207 = vshrl.u32 %v2095, 16
        %v2209 = vrot.slane %v2207, 4
        %v2210 = vor.u32 %v2209, %v2205
        %v2211 = vrot.slane %v2210, 4
        %v2213 = vshll.u32 %v2158, 16
        %v2215 = vrot.slane %v2213, 5
        %v2216 = vsel %vm2192, %v2211, %v2215
        %v2218 = vshrl.u32 %v2096, 16
        %v2220 = vrot.slane %v2218, 4
        %v2221 = vshll.u32 %v2096, 16
        %v2223 = vrot.slane %v2221, 5
        %v2224 = vor.u32 %v2220, %v2223
        %v2225 = vrot.slane %v2224, 4
        %v2227 = vshll.u32 %v2097, 16
        %v2229 = vrot.slane %v2227, 5
        %v2230 = vsel %vm2192, %v2225, %v2229
        %v2231 = vshrl.u32 %v2097, 16
        %v2233 = vrot.slane %v2231, 4
        %v2234 = vor.u32 %v2233, %v2229
        %v2235 = vrot.slane %v2234, 4
        %v2237 = vshll.u32 %v2159, 16
        %v2239 = vrot.slane %v2237, 5
        %v2240 = vsel %vm2192, %v2235, %v2239
        %v2242 = vshrl.u32 %v2098, 16
        %v2244 = vrot.slane %v2242, 4
        %v2245 = vshll.u32 %v2098, 16
        %v2247 = vrot.slane %v2245, 5
        %v2248 = vor.u32 %v2244, %v2247
        %v2249 = vrot.slane %v2248, 4
        %v2251 = vshll.u32 %v2099, 16
        %v2253 = vrot.slane %v2251, 5
        %v2254 = vsel %vm2192, %v2249, %v2253
        %v2255 = vshrl.u32 %v2099, 16
        %v2257 = vrot.slane %v2255, 4
        %v2258 = vor.u32 %v2257, %v2253
        %v2259 = vrot.slane %v2258, 4
        %v2261 = vshll.u32 %v2160, 16
        %v2263 = vrot.slane %v2261, 5
        %v2264 = vsel %vm2192, %v2259, %v2263
        %v2266 = vshrl.u32 %v2100, 16
        %v2268 = vrot.slane %v2266, 4
        %v2269 = vshll.u32 %v2100, 16
        %v2271 = vrot.slane %v2269, 5
        %v2272 = vor.u32 %v2268, %v2271
        %v2273 = vrot.slane %v2272, 4
        %v2275 = vshll.u32 %v2101, 16
        %v2277 = vrot.slane %v2275, 5
        %v2278 = vsel %vm2192, %v2273, %v2277
        %v2279 = vshrl.u32 %v2101, 16
        %v2281 = vrot.slane %v2279, 4
        %v2282 = vor.u32 %v2281, %v2277
        %v2283 = vrot.slane %v2282, 4
        %v2285 = vshll.u32 %v2161, 16
        %v2287 = vrot.slane %v2285, 5
        %v2288 = vsel %vm2192, %v2283, %v2287
        %v2290 = vshrl.u32 %v2102, 16
        %v2292 = vrot.slane %v2290, 4
        %v2293 = vshll.u32 %v2102, 16
        %v2295 = vrot.slane %v2293, 5
        %v2296 = vor.u32 %v2292, %v2295
        %v2297 = vrot.slane %v2296, 4
        %v2299 = vshll.u32 %v2103, 16
        %v2301 = vrot.slane %v2299, 5
        %v2302 = vsel %vm2192, %v2297, %v2301
        %v2303 = vshrl.u32 %v2103, 16
        %v2305 = vrot.slane %v2303, 4
        %v2306 = vor.u32 %v2305, %v2301
        %v2307 = vrot.slane %v2306, 4
        %v2309 = vshll.u32 %v2162, 16
        %v2311 = vrot.slane %v2309, 5
        %v2312 = vsel %vm2192, %v2307, %v2311
        %v2314 = vshrl.u32 %v2104, 16
        %v2316 = vrot.slane %v2314, 4
        %v2317 = vshll.u32 %v2104, 16
        %v2319 = vrot.slane %v2317, 5
        %v2320 = vor.u32 %v2316, %v2319
        %v2321 = vrot.slane %v2320, 4
        %v2323 = vshll.u32 %v2105, 16
        %v2325 = vrot.slane %v2323, 5
        %v2326 = vsel %vm2192, %v2321, %v2325
        %v2327 = vshrl.u32 %v2105, 16
        %v2329 = vrot.slane %v2327, 4
        %v2330 = vor.u32 %v2329, %v2325
        %v2331 = vrot.slane %v2330, 4
        %v2333 = vshll.u32 %v2163, 16
        %v2335 = vrot.slane %v2333, 5
        %v2336 = vsel %vm2192, %v2331, %v2335
        %v2338 = vshrl.u32 %v2106, 16
        %v2340 = vrot.slane %v2338, 4
        %v2341 = vshll.u32 %v2106, 16
        %v2343 = vrot.slane %v2341, 5
        %v2344 = vor.u32 %v2340, %v2343
        %v2345 = vrot.slane %v2344, 4
        %v2347 = vshll.u32 %v2107, 16
        %v2349 = vrot.slane %v2347, 5
        %v2350 = vsel %vm2192, %v2345, %v2349
        %v2351 = vshrl.u32 %v2107, 16
        %v2353 = vrot.slane %v2351, 4
        %v2354 = vor.u32 %v2353, %v2349
        %v2355 = vrot.slane %v2354, 4
        %v2357 = vshll.u32 %v2164, 16
        %v2359 = vrot.slane %v2357, 5
        %v2360 = vsel %vm2192, %v2355, %v2359
        %v2362 = vshrl.u32 %v2108, 16
        %v2364 = vrot.slane %v2362, 4
        %v2365 = vshll.u32 %v2108, 16
        %v2367 = vrot.slane %v2365, 5
        %v2368 = vor.u32 %v2364, %v2367
        %v2369 = vrot.slane %v2368, 4
        %v2371 = vshll.u32 %v2109, 16
        %v2373 = vrot.slane %v2371, 5
        %v2374 = vsel %vm2192, %v2369, %v2373
        %v2375 = vshrl.u32 %v2109, 16
        %v2377 = vrot.slane %v2375, 4
        %v2378 = vor.u32 %v2377, %v2373
        %v2379 = vrot.slane %v2378, 4
        %v2381 = vshll.u32 %v2165, 16
        %v2383 = vrot.slane %v2381, 5
        %v2384 = vsel %vm2192, %v2379, %v2383
        %v2386 = vshrl.u32 %v2110, 16
        %v2388 = vrot.slane %v2386, 4
        %v2389 = vshll.u32 %v2110, 16
        %v2391 = vrot.slane %v2389, 5
        %v2392 = vor.u32 %v2388, %v2391
        %v2393 = vrot.slane %v2392, 4
        %v2395 = vshll.u32 %v2111, 16
        %v2397 = vrot.slane %v2395, 5
        %v2398 = vsel %vm2192, %v2393, %v2397
        %v2399 = vshrl.u32 %v2111, 16
        %v2401 = vrot.slane %v2399, 4
        %v2402 = vor.u32 %v2401, %v2397
        %v2403 = vrot.slane %v2402, 4
        %v2405 = vshll.u32 %v2166, 16
        %v2407 = vrot.slane %v2405, 5
        %v2408 = vsel %vm2192, %v2403, %v2407
        %v2410 = vshrl.u32 %v2112, 16
        %v2412 = vrot.slane %v2410, 4
        %v2413 = vshll.u32 %v2112, 16
        %v2415 = vrot.slane %v2413, 5
        %v2416 = vor.u32 %v2412, %v2415
        %v2417 = vrot.slane %v2416, 4
        %v2419 = vshll.u32 %v2113, 16
        %v2421 = vrot.slane %v2419, 5
        %v2422 = vsel %vm2192, %v2417, %v2421
        %v2423 = vshrl.u32 %v2113, 16
        %v2425 = vrot.slane %v2423, 4
        %v2426 = vor.u32 %v2425, %v2421
        %v2427 = vrot.slane %v2426, 4
        %v2429 = vshll.u32 %v2167, 16
        %v2431 = vrot.slane %v2429, 5
        %v2432 = vsel %vm2192, %v2427, %v2431
        %v2434 = vshrl.u32 %v2114, 16
        %v2436 = vrot.slane %v2434, 4
        %v2437 = vshll.u32 %v2114, 16
        %v2439 = vrot.slane %v2437, 5
        %v2440 = vor.u32 %v2436, %v2439
        %v2441 = vrot.slane %v2440, 4
        %v2443 = vshll.u32 %v2115, 16
        %v2445 = vrot.slane %v2443, 5
        %v2446 = vsel %vm2192, %v2441, %v2445
        %v2447 = vshrl.u32 %v2115, 16
        %v2449 = vrot.slane %v2447, 4
        %v2450 = vor.u32 %v2449, %v2445
        %v2451 = vrot.slane %v2450, 4
        %v2453 = vshll.u32 %v2168, 16
        %v2455 = vrot.slane %v2453, 5
        %v2456 = vsel %vm2192, %v2451, %v2455
        %v2458 = vshrl.u32 %v2116, 16
        %v2460 = vrot.slane %v2458, 4
        %v2461 = vshll.u32 %v2116, 16
        %v2463 = vrot.slane %v2461, 5
        %v2464 = vor.u32 %v2460, %v2463
        %v2465 = vrot.slane %v2464, 4
        %v2467 = vshll.u32 %v2117, 16
        %v2469 = vrot.slane %v2467, 5
        %v2470 = vsel %vm2192, %v2465, %v2469
        %v2471 = vshrl.u32 %v2117, 16
        %v2473 = vrot.slane %v2471, 4
        %v2474 = vor.u32 %v2473, %v2469
        %v2475 = vrot.slane %v2474, 4
        %v2477 = vshll.u32 %v2169, 16
        %v2479 = vrot.slane %v2477, 5
        %v2480 = vsel %vm2192, %v2475, %v2479
        %v2482 = vshrl.u32 %v2118, 16
        %v2484 = vrot.slane %v2482, 4
        %v2485 = vshll.u32 %v2118, 16
        %v2487 = vrot.slane %v2485, 5
        %v2488 = vor.u32 %v2484, %v2487
        %v2489 = vrot.slane %v2488, 4
        %v2491 = vshll.u32 %v2119, 16
        %v2493 = vrot.slane %v2491, 5
        %v2494 = vsel %vm2192, %v2489, %v2493
        %v2495 = vshrl.u32 %v2119, 16
        %v2497 = vrot.slane %v2495, 4
        %v2498 = vor.u32 %v2497, %v2493
        %v2499 = vrot.slane %v2498, 4
        %v2501 = vshll.u32 %v2170, 16
        %v2503 = vrot.slane %v2501, 5
        %v2504 = vsel %vm2192, %v2499, %v2503
        %v2506 = vshrl.u32 %v2120, 16
        %v2508 = vrot.slane %v2506, 4
        %v2509 = vshll.u32 %v2120, 16
        %v2511 = vrot.slane %v2509, 5
        %v2512 = vor.u32 %v2508, %v2511
        %v2513 = vrot.slane %v2512, 4
        %v2515 = vshll.u32 %v2121, 16
        %v2517 = vrot.slane %v2515, 5
        %v2518 = vsel %vm2192, %v2513, %v2517
        %v2519 = vshrl.u32 %v2121, 16
        %v2521 = vrot.slane %v2519, 4
        %v2522 = vor.u32 %v2521, %v2517
        %v2523 = vrot.slane %v2522, 4
        %v2525 = vshll.u32 %v2171, 16
        %v2527 = vrot.slane %v2525, 5
        %v2528 = vsel %vm2192, %v2523, %v2527
        %v2530 = vshrl.u32 %v2122, 16
        %v2532 = vrot.slane %v2530, 4
        %v2533 = vshll.u32 %v2122, 16
        %v2535 = vrot.slane %v2533, 5
        %v2536 = vor.u32 %v2532, %v2535
        %v2537 = vrot.slane %v2536, 4
        %v2539 = vshll.u32 %v2123, 16
        %v2541 = vrot.slane %v2539, 5
        %v2542 = vsel %vm2192, %v2537, %v2541
        %v2543 = vshrl.u32 %v2123, 16
        %v2545 = vrot.slane %v2543, 4
        %v2546 = vor.u32 %v2545, %v2541
        %v2547 = vrot.slane %v2546, 4
        %v2549 = vshll.u32 %v2172, 16
        %v2551 = vrot.slane %v2549, 5
        %v2552 = vsel %vm2192, %v2547, %v2551
        %v2554 = vshrl.u32 %v2124, 16
        %v2556 = vrot.slane %v2554, 4
        %v2557 = vshll.u32 %v2124, 16
        %v2559 = vrot.slane %v2557, 5
        %v2560 = vor.u32 %v2556, %v2559
        %v2561 = vrot.slane %v2560, 4
        %v2563 = vshll.u32 %v2125, 16
        %v2565 = vrot.slane %v2563, 5
        %v2566 = vsel %vm2192, %v2561, %v2565
        %v2567 = vshrl.u32 %v2125, 16
        %v2569 = vrot.slane %v2567, 4
        %v2570 = vor.u32 %v2569, %v2565
        %v2571 = vrot.slane %v2570, 4
        %v2573 = vshll.u32 %v2173, 16
        %v2575 = vrot.slane %v2573, 5
        %v2576 = vsel %vm2192, %v2571, %v2575
        %v2578 = vshrl.u32 %v2126, 16
        %v2580 = vrot.slane %v2578, 4
        %v2581 = vshll.u32 %v2126, 16
        %v2583 = vrot.slane %v2581, 5
        %v2584 = vor.u32 %v2580, %v2583
        %v2585 = vrot.slane %v2584, 4
        %v2587 = vshll.u32 %v2127, 16
        %v2589 = vrot.slane %v2587, 5
        %v2590 = vsel %vm2192, %v2585, %v2589
        %v2591 = vshrl.u32 %v2127, 16
        %v2593 = vrot.slane %v2591, 4
        %v2594 = vor.u32 %v2593, %v2589
        %v2595 = vrot.slane %v2594, 4
        %v2597 = vshll.u32 %v2174, 16
        %v2599 = vrot.slane %v2597, 5
        %v2600 = vsel %vm2192, %v2595, %v2599
        %v2602 = vshrl.u32 %v2128, 16
        %v2604 = vrot.slane %v2602, 4
        %v2605 = vshll.u32 %v2128, 16
        %v2607 = vrot.slane %v2605, 5
        %v2608 = vor.u32 %v2604, %v2607
        %v2609 = vrot.slane %v2608, 4
        %v2611 = vshll.u32 %v2129, 16
        %v2613 = vrot.slane %v2611, 5
        %v2614 = vsel %vm2192, %v2609, %v2613
        %v2615 = vshrl.u32 %v2129, 16
        %v2617 = vrot.slane %v2615, 4
        %v2618 = vor.u32 %v2617, %v2613
        %v2619 = vrot.slane %v2618, 4
        %v2621 = vshll.u32 %v2175, 16
        %v2623 = vrot.slane %v2621, 5
        %v2624 = vsel %vm2192, %v2619, %v2623
        %v2626 = vshrl.u32 %v2130, 16
        %v2628 = vrot.slane %v2626, 4
        %v2629 = vshll.u32 %v2130, 16
        %v2631 = vrot.slane %v2629, 5
        %v2632 = vor.u32 %v2628, %v2631
        %v2633 = vrot.slane %v2632, 4
        %v2635 = vshll.u32 %v2131, 16
        %v2637 = vrot.slane %v2635, 5
        %v2638 = vsel %vm2192, %v2633, %v2637
        %v2639 = vshrl.u32 %v2131, 16
        %v2641 = vrot.slane %v2639, 4
        %v2642 = vor.u32 %v2641, %v2637
        %v2643 = vrot.slane %v2642, 4
        %v2645 = vshll.u32 %v2176, 16
        %v2647 = vrot.slane %v2645, 5
        %v2648 = vsel %vm2192, %v2643, %v2647
        %v2650 = vshrl.u32 %v2132, 16
        %v2652 = vrot.slane %v2650, 4
        %v2653 = vshll.u32 %v2132, 16
        %v2655 = vrot.slane %v2653, 5
        %v2656 = vor.u32 %v2652, %v2655
        %v2657 = vrot.slane %v2656, 4
        %v2659 = vshll.u32 %v2133, 16
        %v2661 = vrot.slane %v2659, 5
        %v2662 = vsel %vm2192, %v2657, %v2661
        %v2663 = vshrl.u32 %v2133, 16
        %v2665 = vrot.slane %v2663, 4
        %v2666 = vor.u32 %v2665, %v2661
        %v2667 = vrot.slane %v2666, 4
        %v2669 = vshll.u32 %v2177, 16
        %v2671 = vrot.slane %v2669, 5
        %v2672 = vsel %vm2192, %v2667, %v2671
        %v2674 = vshrl.u32 %v2134, 16
        %v2676 = vrot.slane %v2674, 4
        %v2677 = vshll.u32 %v2134, 16
        %v2679 = vrot.slane %v2677, 5
        %v2680 = vor.u32 %v2676, %v2679
        %v2681 = vrot.slane %v2680, 4
        %v2683 = vshll.u32 %v2135, 16
        %v2685 = vrot.slane %v2683, 5
        %v2686 = vsel %vm2192, %v2681, %v2685
        %v2687 = vshrl.u32 %v2135, 16
        %v2689 = vrot.slane %v2687, 4
        %v2690 = vor.u32 %v2689, %v2685
        %v2691 = vrot.slane %v2690, 4
        %v2693 = vshll.u32 %v2178, 16
        %v2695 = vrot.slane %v2693, 5
        %v2696 = vsel %vm2192, %v2691, %v2695
        %v2698 = vshrl.u32 %v2136, 16
        %v2700 = vrot.slane %v2698, 4
        %v2701 = vshll.u32 %v2136, 16
        %v2703 = vrot.slane %v2701, 5
        %v2704 = vor.u32 %v2700, %v2703
        %v2705 = vrot.slane %v2704, 4
        %v2707 = vshll.u32 %v2137, 16
        %v2709 = vrot.slane %v2707, 5
        %v2710 = vsel %vm2192, %v2705, %v2709
        %v2711 = vshrl.u32 %v2137, 16
        %v2713 = vrot.slane %v2711, 4
        %v2714 = vor.u32 %v2713, %v2709
        %v2715 = vrot.slane %v2714, 4
        %v2717 = vshll.u32 %v2179, 16
        %v2719 = vrot.slane %v2717, 5
        %v2720 = vsel %vm2192, %v2715, %v2719
        %v2722 = vshrl.u32 %v2138, 16
        %v2724 = vrot.slane %v2722, 4
        %v2725 = vshll.u32 %v2138, 16
        %v2727 = vrot.slane %v2725, 5
        %v2728 = vor.u32 %v2724, %v2727
        %v2729 = vrot.slane %v2728, 4
        %v2731 = vshll.u32 %v2139, 16
        %v2733 = vrot.slane %v2731, 5
        %v2734 = vsel %vm2192, %v2729, %v2733
        %v2735 = vshrl.u32 %v2139, 16
        %v2737 = vrot.slane %v2735, 4
        %v2738 = vor.u32 %v2737, %v2733
        %v2739 = vrot.slane %v2738, 4
        %v2741 = vshll.u32 %v2180, 16
        %v2743 = vrot.slane %v2741, 5
        %v2744 = vsel %vm2192, %v2739, %v2743
        %v2746 = vshrl.u32 %v2140, 16
        %v2748 = vrot.slane %v2746, 4
        %v2749 = vshll.u32 %v2140, 16
        %v2751 = vrot.slane %v2749, 5
        %v2752 = vor.u32 %v2748, %v2751
        %v2753 = vrot.slane %v2752, 4
        %v2755 = vshll.u32 %v2141, 16
        %v2757 = vrot.slane %v2755, 5
        %v2758 = vsel %vm2192, %v2753, %v2757
        %v2759 = vshrl.u32 %v2141, 16
        %v2761 = vrot.slane %v2759, 4
        %v2762 = vor.u32 %v2761, %v2757
        %v2763 = vrot.slane %v2762, 4
        %v2765 = vshll.u32 %v2181, 16
        %v2767 = vrot.slane %v2765, 5
        %v2768 = vsel %vm2192, %v2763, %v2767
        %v2770 = vshrl.u32 %v2142, 16
        %v2772 = vrot.slane %v2770, 4
        %v2773 = vshll.u32 %v2142, 16
        %v2775 = vrot.slane %v2773, 5
        %v2776 = vor.u32 %v2772, %v2775
        %v2777 = vrot.slane %v2776, 4
        %v2779 = vshll.u32 %v2143, 16
        %v2781 = vrot.slane %v2779, 5
        %v2782 = vsel %vm2192, %v2777, %v2781
        %v2783 = vshrl.u32 %v2143, 16
        %v2785 = vrot.slane %v2783, 4
        %v2786 = vor.u32 %v2785, %v2781
        %v2787 = vrot.slane %v2786, 4
        %v2789 = vshll.u32 %v2182, 16
        %v2791 = vrot.slane %v2789, 5
        %v2792 = vsel %vm2192, %v2787, %v2791
        %v2794 = vshrl.u32 %v2144, 16
        %v2796 = vrot.slane %v2794, 4
        %v2797 = vshll.u32 %v2144, 16
        %v2799 = vrot.slane %v2797, 5
        %v2800 = vor.u32 %v2796, %v2799
        %v2801 = vrot.slane %v2800, 4
        %v2803 = vshll.u32 %v2145, 16
        %v2805 = vrot.slane %v2803, 5
        %v2806 = vsel %vm2192, %v2801, %v2805
        %v2807 = vshrl.u32 %v2145, 16
        %v2809 = vrot.slane %v2807, 4
        %v2810 = vor.u32 %v2809, %v2805
        %v2811 = vrot.slane %v2810, 4
        %v2813 = vshll.u32 %v2183, 16
        %v2815 = vrot.slane %v2813, 5
        %v2816 = vsel %vm2192, %v2811, %v2815
        %v2818 = vshrl.u32 %v2146, 16
        %v2820 = vrot.slane %v2818, 4
        %v2821 = vshll.u32 %v2146, 16
        %v2823 = vrot.slane %v2821, 5
        %v2824 = vor.u32 %v2820, %v2823
        %v2825 = vrot.slane %v2824, 4
        %v2827 = vshll.u32 %v2147, 16
        %v2829 = vrot.slane %v2827, 5
        %v2830 = vsel %vm2192, %v2825, %v2829
        %v2831 = vshrl.u32 %v2147, 16
        %v2833 = vrot.slane %v2831, 4
        %v2834 = vor.u32 %v2833, %v2829
        %v2835 = vrot.slane %v2834, 4
        %v2837 = vshll.u32 %v2184, 16
        %v2839 = vrot.slane %v2837, 5
        %v2840 = vsel %vm2192, %v2835, %v2839
        %v2842 = vshrl.u32 %v2148, 16
        %v2844 = vrot.slane %v2842, 4
        %v2845 = vshll.u32 %v2148, 16
        %v2847 = vrot.slane %v2845, 5
        %v2848 = vor.u32 %v2844, %v2847
        %v2849 = vrot.slane %v2848, 4
        %v2851 = vshll.u32 %v2149, 16
        %v2853 = vrot.slane %v2851, 5
        %v2854 = vsel %vm2192, %v2849, %v2853
        %v2855 = vshrl.u32 %v2149, 16
        %v2857 = vrot.slane %v2855, 4
        %v2858 = vor.u32 %v2857, %v2853
        %v2859 = vrot.slane %v2858, 4
        %v2861 = vshll.u32 %v2185, 16
        %v2863 = vrot.slane %v2861, 5
        %v2864 = vsel %vm2192, %v2859, %v2863
        %v2866 = vshrl.u32 %v2150, 16
        %v2868 = vrot.slane %v2866, 4
        %v2869 = vshll.u32 %v2150, 16
        %v2871 = vrot.slane %v2869, 5
        %v2872 = vor.u32 %v2868, %v2871
        %v2873 = vrot.slane %v2872, 4
        %v2875 = vshll.u32 %v2151, 16
        %v2877 = vrot.slane %v2875, 5
        %v2878 = vsel %vm2192, %v2873, %v2877
        %v2879 = vshrl.u32 %v2151, 16
        %v2881 = vrot.slane %v2879, 4
        %v2882 = vor.u32 %v2881, %v2877
        %v2883 = vrot.slane %v2882, 4
        %v2885 = vshll.u32 %v2186, 16
        %v2887 = vrot.slane %v2885, 5
        %v2888 = vsel %vm2192, %v2883, %v2887
        %v2890 = vshrl.u32 %v2152, 16
        %v2892 = vrot.slane %v2890, 4
        %v2893 = vshll.u32 %v2152, 16
        %v2895 = vrot.slane %v2893, 5
        %v2896 = vor.u32 %v2892, %v2895
        %v2897 = vrot.slane %v2896, 4
        %v2899 = vshll.u32 %v2153, 16
        %v2901 = vrot.slane %v2899, 5
        %v2902 = vsel %vm2192, %v2897, %v2901
        %v2903 = vshrl.u32 %v2153, 16
        %v2905 = vrot.slane %v2903, 4
        %v2906 = vor.u32 %v2905, %v2901
        %v2907 = vrot.slane %v2906, 4
        %v2909 = vshll.u32 %v2187, 16
        %v2911 = vrot.slane %v2909, 5
        %v2912 = vsel %vm2192, %v2907, %v2911
        %v2914 = vshrl.u32 %v2154, 16
        %v2916 = vrot.slane %v2914, 4
        %v2917 = vshll.u32 %v2154, 16
        %v2919 = vrot.slane %v2917, 5
        %v2920 = vor.u32 %v2916, %v2919
        %v2921 = vrot.slane %v2920, 4
        %v2923 = vshll.u32 %v2155, 16
        %v2925 = vrot.slane %v2923, 5
        %v2926 = vsel %vm2192, %v2921, %v2925
        %v2927 = vshrl.u32 %v2155, 16
        %v2929 = vrot.slane %v2927, 4
        %v2930 = vor.u32 %v2929, %v2925
        %v2931 = vrot.slane %v2930, 4
        %v2933 = vshll.u32 %v2188, 16
        %v2935 = vrot.slane %v2933, 5
        %v2936 = vsel %vm2192, %v2931, %v2935
        %v2938 = vshrl.u32 %v2156, 16
        %v2940 = vrot.slane %v2938, 4
        %v2941 = vshll.u32 %v2156, 16
        %v2943 = vrot.slane %v2941, 5
        %v2944 = vor.u32 %v2940, %v2943
        %v2945 = vrot.slane %v2944, 4
        %v2947 = vshll.u32 %v2157, 16
        %v2949 = vrot.slane %v2947, 5
        %v2950 = vsel %vm2192, %v2945, %v2949
        %v2951 = vshrl.u32 %v2157, 16
        %v2953 = vrot.slane %v2951, 4
        %v2954 = vor.u32 %v2953, %v2949
        %v2955 = vrot.slane %v2954, 4
        %v2957 = vshll.u32 %v2189, 16
        %v2959 = vrot.slane %v2957, 5
        %v2960 = vsel %vm2192, %v2955, %v2959
        %v2961 = vld [vmem:[#allocation2] sm:$0xe]
        %v2962 = vld [vmem:[#allocation2 + $0xc] sm:$0xe]
        %v2963 = vld [vmem:[#allocation2 + $0x18] sm:$0xe]
        %v2964 = vld [vmem:[#allocation2 + $0x24] sm:$0xe]
        %v2965 = vld [vmem:[#allocation2 + $0x30] sm:$0xe]
        %v2966 = vld [vmem:[#allocation2 + $0x3c] sm:$0xe]
        %v2967 = vld [vmem:[#allocation2 + $0x48] sm:$0xe]
        %v2968 = vld [vmem:[#allocation2 + $0x54] sm:$0xe]
        %v2969 = vld [vmem:[#allocation2 + $0x60] sm:$0xe]
        %v2970 = vld [vmem:[#allocation2 + $0x6c] sm:$0xe]
        %v2971 = vld [vmem:[#allocation2 + $0x78] sm:$0xe]
        %v2972 = vld [vmem:[#allocation2 + $0x84] sm:$0xe]
        %v2973 = vld [vmem:[#allocation2 + $0x90] sm:$0xe]
        %v2974 = vld [vmem:[#allocation2 + $0x9c] sm:$0xe]
        %v2975 = vld [vmem:[#allocation2 + $0xa8] sm:$0xe]
        %v2976 = vld [vmem:[#allocation2 + $0xb4] sm:$0xe]
        %v2977 = vld [vmem:[#allocation2 + $0xd8] sm:$0xe]
        %v2978 = vld [vmem:[#allocation2 + $0xe4] sm:$0xe]
        %v2979 = vld [vmem:[#allocation2 + $0xf0] sm:$0xe]
        %v2980 = vld [vmem:[#allocation2 + $0xfc] sm:$0xe]
        %v2981 = vld [vmem:[#allocation2 + $0x108] sm:$0xe]
        %v2982 = vld [vmem:[#allocation2 + $0x114] sm:$0xe]
        %v2983 = vld [vmem:[#allocation2 + $0x120] sm:$0xe]
        %v2984 = vld [vmem:[#allocation2 + $0x12c] sm:$0xe]
        %v2985 = vld [vmem:[#allocation2 + $0x138] sm:$0xe]
        %v2986 = vld [vmem:[#allocation2 + $0x144] sm:$0xe]
        %v2987 = vld [vmem:[#allocation2 + $0x150] sm:$0xe]
        %v2988 = vld [vmem:[#allocation2 + $0x15c] sm:$0xe]
        %v2989 = vld [vmem:[#allocation2 + $0x168] sm:$0xe]
        %v2990 = vld [vmem:[#allocation2 + $0x174] sm:$0xe]
        %v2991 = vld [vmem:[#allocation2 + $0x180] sm:$0xe]
        %v2992 = vld [vmem:[#allocation2 + $0x18c] sm:$0xe]
        %vm3089 = vcmask 1042432
        %vm3090 = vcmask 1046532
        %vm3091 = vmor %vm3089, %vm3090
        %v3092 = vrot.slane %v2961, 5
        %v3093 = vrot.slane %v3092, 4
        %v3094 = vrot.slane %v2095, 5
        %v3095 = vsel %vm3091, %v3093, %v3094
        %v3096 = vrot.slane %v3094, 4
        %v3097 = vrot.slane %v2158, 5
        %v3098 = vsel %vm3091, %v3096, %v3097
        %v3099 = vrot.slane %v2962, 5
        %v3100 = vrot.slane %v3099, 4
        %v3101 = vrot.slane %v2097, 5
        %v3102 = vsel %vm3091, %v3100, %v3101
        %v3103 = vrot.slane %v3101, 4
        %v3104 = vrot.slane %v2159, 5
        %v3105 = vsel %vm3091, %v3103, %v3104
        %v3106 = vrot.slane %v2963, 5
        %v3107 = vrot.slane %v3106, 4
        %v3108 = vrot.slane %v2099, 5
        %v3109 = vsel %vm3091, %v3107, %v3108
        %v3110 = vrot.slane %v3108, 4
        %v3111 = vrot.slane %v2160, 5
        %v3112 = vsel %vm3091, %v3110, %v3111
        %v3113 = vrot.slane %v2964, 5
        %v3114 = vrot.slane %v3113, 4
        %v3115 = vrot.slane %v2101, 5
        %v3116 = vsel %vm3091, %v3114, %v3115
        %v3117 = vrot.slane %v3115, 4
        %v3118 = vrot.slane %v2161, 5
        %v3119 = vsel %vm3091, %v3117, %v3118
        %v3120 = vrot.slane %v2965, 5
        %v3121 = vrot.slane %v3120, 4
        %v3122 = vrot.slane %v2103, 5
        %v3123 = vsel %vm3091, %v3121, %v3122
        %v3124 = vrot.slane %v3122, 4
        %v3125 = vrot.slane %v2162, 5
        %v3126 = vsel %vm3091, %v3124, %v3125
        %v3127 = vrot.slane %v2966, 5
        %v3128 = vrot.slane %v3127, 4
        %v3129 = vrot.slane %v2105, 5
        %v3130 = vsel %vm3091, %v3128, %v3129
        %v3131 = vrot.slane %v3129, 4
        %v3132 = vrot.slane %v2163, 5
        %v3133 = vsel %vm3091, %v3131, %v3132
        %v3134 = vrot.slane %v2967, 5
        %v3135 = vrot.slane %v3134, 4
        %v3136 = vrot.slane %v2107, 5
        %v3137 = vsel %vm3091, %v3135, %v3136
        %v3138 = vrot.slane %v3136, 4
        %v3139 = vrot.slane %v2164, 5
        %v3140 = vsel %vm3091, %v3138, %v3139
        %v3141 = vrot.slane %v2968, 5
        %v3142 = vrot.slane %v3141, 4
        %v3143 = vrot.slane %v2109, 5
        %v3144 = vsel %vm3091, %v3142, %v3143
        %v3145 = vrot.slane %v3143, 4
        %v3146 = vrot.slane %v2165, 5
        %v3147 = vsel %vm3091, %v3145, %v3146
        %v3148 = vrot.slane %v2969, 5
        %v3149 = vrot.slane %v3148, 4
        %v3150 = vrot.slane %v2111, 5
        %v3151 = vsel %vm3091, %v3149, %v3150
        %v3152 = vrot.slane %v3150, 4
        %v3153 = vrot.slane %v2166, 5
        %v3154 = vsel %vm3091, %v3152, %v3153
        %v3155 = vrot.slane %v2970, 5
        %v3156 = vrot.slane %v3155, 4
        %v3157 = vrot.slane %v2113, 5
        %v3158 = vsel %vm3091, %v3156, %v3157
        %v3159 = vrot.slane %v3157, 4
        %v3160 = vrot.slane %v2167, 5
        %v3161 = vsel %vm3091, %v3159, %v3160
        %v3162 = vrot.slane %v2971, 5
        %v3163 = vrot.slane %v3162, 4
        %v3164 = vrot.slane %v2115, 5
        %v3165 = vsel %vm3091, %v3163, %v3164
        %v3166 = vrot.slane %v3164, 4
        %v3167 = vrot.slane %v2168, 5
        %v3168 = vsel %vm3091, %v3166, %v3167
        %v3169 = vrot.slane %v2972, 5
        %v3170 = vrot.slane %v3169, 4
        %v3171 = vrot.slane %v2117, 5
        %v3172 = vsel %vm3091, %v3170, %v3171
        %v3173 = vrot.slane %v3171, 4
        %v3174 = vrot.slane %v2169, 5
        %v3175 = vsel %vm3091, %v3173, %v3174
        %v3176 = vrot.slane %v2973, 5
        %v3177 = vrot.slane %v3176, 4
        %v3178 = vrot.slane %v2119, 5
        %v3179 = vsel %vm3091, %v3177, %v3178
        %v3180 = vrot.slane %v3178, 4
        %v3181 = vrot.slane %v2170, 5
        %v3182 = vsel %vm3091, %v3180, %v3181
        %v3183 = vrot.slane %v2974, 5
        %v3184 = vrot.slane %v3183, 4
        %v3185 = vrot.slane %v2121, 5
        %v3186 = vsel %vm3091, %v3184, %v3185
        %v3187 = vrot.slane %v3185, 4
        %v3188 = vrot.slane %v2171, 5
        %v3189 = vsel %vm3091, %v3187, %v3188
        %v3190 = vrot.slane %v2975, 5
        %v3191 = vrot.slane %v3190, 4
        %v3192 = vrot.slane %v2123, 5
        %v3193 = vsel %vm3091, %v3191, %v3192
        %v3194 = vrot.slane %v3192, 4
        %v3195 = vrot.slane %v2172, 5
        %v3196 = vsel %vm3091, %v3194, %v3195
        %v3197 = vrot.slane %v2976, 5
        %v3198 = vrot.slane %v3197, 4
        %v3199 = vrot.slane %v2125, 5
        %v3200 = vsel %vm3091, %v3198, %v3199
        %v3201 = vrot.slane %v3199, 4
        %v3202 = vrot.slane %v2173, 5
        %v3203 = vsel %vm3091, %v3201, %v3202
        %v3204 = vrot.slane %v2977, 5
        %v3205 = vrot.slane %v3204, 4
        %v3206 = vrot.slane %v2127, 5
        %v3207 = vsel %vm3091, %v3205, %v3206
        %v3208 = vrot.slane %v3206, 4
        %v3209 = vrot.slane %v2174, 5
        %v3210 = vsel %vm3091, %v3208, %v3209
        %v3211 = vrot.slane %v2978, 5
        %v3212 = vrot.slane %v3211, 4
        %v3213 = vrot.slane %v2129, 5
        %v3214 = vsel %vm3091, %v3212, %v3213
        %v3215 = vrot.slane %v3213, 4
        %v3216 = vrot.slane %v2175, 5
        %v3217 = vsel %vm3091, %v3215, %v3216
        %v3218 = vrot.slane %v2979, 5
        %v3219 = vrot.slane %v3218, 4
        %v3220 = vrot.slane %v2131, 5
        %v3221 = vsel %vm3091, %v3219, %v3220
        %v3222 = vrot.slane %v3220, 4
        %v3223 = vrot.slane %v2176, 5
        %v3224 = vsel %vm3091, %v3222, %v3223
        %v3225 = vrot.slane %v2980, 5
        %v3226 = vrot.slane %v3225, 4
        %v3227 = vrot.slane %v2133, 5
        %v3228 = vsel %vm3091, %v3226, %v3227
        %v3229 = vrot.slane %v3227, 4
        %v3230 = vrot.slane %v2177, 5
        %v3231 = vsel %vm3091, %v3229, %v3230
        %v3232 = vrot.slane %v2981, 5
        %v3233 = vrot.slane %v3232, 4
        %v3234 = vrot.slane %v2135, 5
        %v3235 = vsel %vm3091, %v3233, %v3234
        %v3236 = vrot.slane %v3234, 4
        %v3237 = vrot.slane %v2178, 5
        %v3238 = vsel %vm3091, %v3236, %v3237
        %v3239 = vrot.slane %v2982, 5
        %v3240 = vrot.slane %v3239, 4
        %v3241 = vrot.slane %v2137, 5
        %v3242 = vsel %vm3091, %v3240, %v3241
        %v3243 = vrot.slane %v3241, 4
        %v3244 = vrot.slane %v2179, 5
        %v3245 = vsel %vm3091, %v3243, %v3244
        %v3246 = vrot.slane %v2983, 5
        %v3247 = vrot.slane %v3246, 4
        %v3248 = vrot.slane %v2139, 5
        %v3249 = vsel %vm3091, %v3247, %v3248
        %v3250 = vrot.slane %v3248, 4
        %v3251 = vrot.slane %v2180, 5
        %v3252 = vsel %vm3091, %v3250, %v3251
        %v3253 = vrot.slane %v2984, 5
        %v3254 = vrot.slane %v3253, 4
        %v3255 = vrot.slane %v2141, 5
        %v3256 = vsel %vm3091, %v3254, %v3255
        %v3257 = vrot.slane %v3255, 4
        %v3258 = vrot.slane %v2181, 5
        %v3259 = vsel %vm3091, %v3257, %v3258
        %v3260 = vrot.slane %v2985, 5
        %v3261 = vrot.slane %v3260, 4
        %v3262 = vrot.slane %v2143, 5
        %v3263 = vsel %vm3091, %v3261, %v3262
        %v3264 = vrot.slane %v3262, 4
        %v3265 = vrot.slane %v2182, 5
        %v3266 = vsel %vm3091, %v3264, %v3265
        %v3267 = vrot.slane %v2986, 5
        %v3268 = vrot.slane %v3267, 4
        %v3269 = vrot.slane %v2145, 5
        %v3270 = vsel %vm3091, %v3268, %v3269
        %v3271 = vrot.slane %v3269, 4
        %v3272 = vrot.slane %v2183, 5
        %v3273 = vsel %vm3091, %v3271, %v3272
        %v3274 = vrot.slane %v2987, 5
        %v3275 = vrot.slane %v3274, 4
        %v3276 = vrot.slane %v2147, 5
        %v3277 = vsel %vm3091, %v3275, %v3276
        %v3278 = vrot.slane %v3276, 4
        %v3279 = vrot.slane %v2184, 5
        %v3280 = vsel %vm3091, %v3278, %v3279
        %v3281 = vrot.slane %v2988, 5
        %v3282 = vrot.slane %v3281, 4
        %v3283 = vrot.slane %v2149, 5
        %v3284 = vsel %vm3091, %v3282, %v3283
        %v3285 = vrot.slane %v3283, 4
        %v3286 = vrot.slane %v2185, 5
        %v3287 = vsel %vm3091, %v3285, %v3286
        %v3288 = vrot.slane %v2989, 5
        %v3289 = vrot.slane %v3288, 4
        %v3290 = vrot.slane %v2151, 5
        %v3291 = vsel %vm3091, %v3289, %v3290
        %v3292 = vrot.slane %v3290, 4
        %v3293 = vrot.slane %v2186, 5
        %v3294 = vsel %vm3091, %v3292, %v3293
        %v3295 = vrot.slane %v2990, 5
        %v3296 = vrot.slane %v3295, 4
        %v3297 = vrot.slane %v2153, 5
        %v3298 = vsel %vm3091, %v3296, %v3297
        %v3299 = vrot.slane %v3297, 4
        %v3300 = vrot.slane %v2187, 5
        %v3301 = vsel %vm3091, %v3299, %v3300
        %v3302 = vrot.slane %v2991, 5
        %v3303 = vrot.slane %v3302, 4
        %v3304 = vrot.slane %v2155, 5
        %v3305 = vsel %vm3091, %v3303, %v3304
        %v3306 = vrot.slane %v3304, 4
        %v3307 = vrot.slane %v2188, 5
        %v3308 = vsel %vm3091, %v3306, %v3307
        %v3309 = vrot.slane %v2992, 5
        %v3310 = vrot.slane %v3309, 4
        %v3311 = vrot.slane %v2157, 5
        %v3312 = vsel %vm3091, %v3310, %v3311
        %v3313 = vrot.slane %v3311, 4
        %v3314 = vrot.slane %v2189, 5
        %v3315 = vsel %vm3091, %v3313, %v3314
        %v3316 = vld [vmem:[%s836] sm:$0xf]
        %v3317 = vld [vmem:[%s836 + $0x4] sm:$0xf]
        %v3318 = vld [vmem:[%s836 + $0xc] sm:$0xf]
        %v3319 = vld [vmem:[%s836 + $0x10] sm:$0xf]
        %v3320 = vld [vmem:[%s836 + $0x18] sm:$0xf]
        %v3321 = vld [vmem:[%s836 + $0x1c] sm:$0xf]
        %v3322 = vld [vmem:[%s836 + $0x24] sm:$0xf]
        %v3323 = vld [vmem:[%s836 + $0x28] sm:$0xf]
        %v3324 = vld [vmem:[%s836 + $0x30] sm:$0xf]
        %v3325 = vld [vmem:[%s836 + $0x34] sm:$0xf]
        %v3326 = vld [vmem:[%s836 + $0x3c] sm:$0xf]
        %v3327 = vld [vmem:[%s836 + $0x40] sm:$0xf]
        %v3328 = vld [vmem:[%s836 + $0x48] sm:$0xf]
        %v3329 = vld [vmem:[%s836 + $0x4c] sm:$0xf]
        %v3330 = vld [vmem:[%s836 + $0x54] sm:$0xf]
        %v3331 = vld [vmem:[%s836 + $0x58] sm:$0xf]
        %v3332 = vld [vmem:[%s836 + $0x60] sm:$0xf]
        %v3333 = vld [vmem:[%s836 + $0x64] sm:$0xf]
        %v3334 = vld [vmem:[%s836 + $0x6c] sm:$0xf]
        %v3335 = vld [vmem:[%s836 + $0x70] sm:$0xf]
        %v3336 = vld [vmem:[%s836 + $0x78] sm:$0xf]
        %v3337 = vld [vmem:[%s836 + $0x7c] sm:$0xf]
        %v3338 = vld [vmem:[%s836 + $0x84] sm:$0xf]
        %v3339 = vld [vmem:[%s836 + $0x88] sm:$0xf]
        %v3340 = vld [vmem:[%s836 + $0x90] sm:$0xf]
        %v3341 = vld [vmem:[%s836 + $0x94] sm:$0xf]
        %v3342 = vld [vmem:[%s836 + $0x9c] sm:$0xf]
        %v3343 = vld [vmem:[%s836 + $0xa0] sm:$0xf]
        %v3344 = vld [vmem:[%s836 + $0xa8] sm:$0xf]
        %v3345 = vld [vmem:[%s836 + $0xac] sm:$0xf]
        %v3346 = vld [vmem:[%s836 + $0xb4] sm:$0xf]
        %v3347 = vld [vmem:[%s836 + $0xb8] sm:$0xf]
        %v3348 = vld [vmem:[%s836 + $0xd8] sm:$0xf]
        %v3349 = vld [vmem:[%s836 + $0xdc] sm:$0xf]
        %v3350 = vld [vmem:[%s836 + $0xe4] sm:$0xf]
        %v3351 = vld [vmem:[%s836 + $0xe8] sm:$0xf]
        %v3352 = vld [vmem:[%s836 + $0xf0] sm:$0xf]
        %v3353 = vld [vmem:[%s836 + $0xf4] sm:$0xf]
        %v3354 = vld [vmem:[%s836 + $0xfc] sm:$0xf]
        %v3355 = vld [vmem:[%s836 + $0x100] sm:$0xf]
        %v3356 = vld [vmem:[%s836 + $0x108] sm:$0xf]
        %v3357 = vld [vmem:[%s836 + $0x10c] sm:$0xf]
        %v3358 = vld [vmem:[%s836 + $0x114] sm:$0xf]
        %v3359 = vld [vmem:[%s836 + $0x118] sm:$0xf]
        %v3360 = vld [vmem:[%s836 + $0x120] sm:$0xf]
        %v3361 = vld [vmem:[%s836 + $0x124] sm:$0xf]
        %v3362 = vld [vmem:[%s836 + $0x12c] sm:$0xf]
        %v3363 = vld [vmem:[%s836 + $0x130] sm:$0xf]
        %v3364 = vld [vmem:[%s836 + $0x138] sm:$0xf]
        %v3365 = vld [vmem:[%s836 + $0x13c] sm:$0xf]
        %v3366 = vld [vmem:[%s836 + $0x144] sm:$0xf]
        %v3367 = vld [vmem:[%s836 + $0x148] sm:$0xf]
        %v3368 = vld [vmem:[%s836 + $0x150] sm:$0xf]
        %v3369 = vld [vmem:[%s836 + $0x154] sm:$0xf]
        %v3370 = vld [vmem:[%s836 + $0x15c] sm:$0xf]
        %v3371 = vld [vmem:[%s836 + $0x160] sm:$0xf]
        %v3372 = vld [vmem:[%s836 + $0x168] sm:$0xf]
        %v3373 = vld [vmem:[%s836 + $0x16c] sm:$0xf]
        %v3374 = vld [vmem:[%s836 + $0x174] sm:$0xf]
        %v3375 = vld [vmem:[%s836 + $0x178] sm:$0xf]
        %v3376 = vld [vmem:[%s836 + $0x180] sm:$0xf]
        %v3377 = vld [vmem:[%s836 + $0x184] sm:$0xf]
        %v3378 = vld [vmem:[%s836 + $0x18c] sm:$0xf]
        %v3379 = vld [vmem:[%s836 + $0x190] sm:$0xf]
        %v3380 = vld [vmem:[%s836 + $0x8] sm:$0x1]
        %v3381 = vld [vmem:[%s836 + $0x14] sm:$0x1]
        %v3382 = vld [vmem:[%s836 + $0x20] sm:$0x1]
        %v3383 = vld [vmem:[%s836 + $0x2c] sm:$0x1]
        %v3384 = vld [vmem:[%s836 + $0x38] sm:$0x1]
        %v3385 = vld [vmem:[%s836 + $0x44] sm:$0x1]
        %v3386 = vld [vmem:[%s836 + $0x50] sm:$0x1]
        %v3387 = vld [vmem:[%s836 + $0x5c] sm:$0x1]
        %v3388 = vld [vmem:[%s836 + $0x68] sm:$0x1]
        %v3389 = vld [vmem:[%s836 + $0x74] sm:$0x1]
        %v3390 = vld [vmem:[%s836 + $0x80] sm:$0x1]
        %v3391 = vld [vmem:[%s836 + $0x8c] sm:$0x1]
        %v3392 = vld [vmem:[%s836 + $0x98] sm:$0x1]
        %v3393 = vld [vmem:[%s836 + $0xa4] sm:$0x1]
        %v3394 = vld [vmem:[%s836 + $0xb0] sm:$0x1]
        %v3395 = vld [vmem:[%s836 + $0xbc] sm:$0x1]
        %v3396 = vld [vmem:[%s836 + $0xe0] sm:$0x1]
        %v3397 = vld [vmem:[%s836 + $0xec] sm:$0x1]
        %v3398 = vld [vmem:[%s836 + $0xf8] sm:$0x1]
        %v3399 = vld [vmem:[%s836 + $0x104] sm:$0x1]
        %v3400 = vld [vmem:[%s836 + $0x110] sm:$0x1]
        %v3401 = vld [vmem:[%s836 + $0x11c] sm:$0x1]
        %v3402 = vld [vmem:[%s836 + $0x128] sm:$0x1]
        %v3403 = vld [vmem:[%s836 + $0x134] sm:$0x1]
        %v3404 = vld [vmem:[%s836 + $0x140] sm:$0x1]
        %v3405 = vld [vmem:[%s836 + $0x14c] sm:$0x1]
        %v3406 = vld [vmem:[%s836 + $0x158] sm:$0x1]
        %v3407 = vld [vmem:[%s836 + $0x164] sm:$0x1]
        %v3408 = vld [vmem:[%s836 + $0x170] sm:$0x1]
        %v3409 = vld [vmem:[%s836 + $0x17c] sm:$0x1]
        %v3410 = vld [vmem:[%s836 + $0x188] sm:$0x1]
        %v3411 = vld [vmem:[%s836 + $0x194] sm:$0x1]
        %v3413 = vshrl.u32 %v3316, 16
        %v3415 = vrot.slane %v3413, 4
        %v3416 = vshll.u32 %v3316, 16
        %v3418 = vrot.slane %v3416, 5
        %v3419 = vor.u32 %v3415, %v3418
        %v3420 = vrot.slane %v3419, 4
        %v3422 = vshll.u32 %v3317, 16
        %v3424 = vrot.slane %v3422, 5
        %v3425 = vsel %vm2192, %v3420, %v3424
        %v3426 = vshrl.u32 %v3317, 16
        %v3428 = vrot.slane %v3426, 4
        %v3429 = vor.u32 %v3428, %v3424
        %v3430 = vrot.slane %v3429, 4
        %v3432 = vshll.u32 %v3380, 16
        %v3434 = vrot.slane %v3432, 5
        %v3435 = vsel %vm2192, %v3430, %v3434
        %v3437 = vshrl.u32 %v3318, 16
        %v3439 = vrot.slane %v3437, 4
        %v3440 = vshll.u32 %v3318, 16
        %v3442 = vrot.slane %v3440, 5
        %v3443 = vor.u32 %v3439, %v3442
        %v3444 = vrot.slane %v3443, 4
        %v3446 = vshll.u32 %v3319, 16
        %v3448 = vrot.slane %v3446, 5
        %v3449 = vsel %vm2192, %v3444, %v3448
        %v3450 = vshrl.u32 %v3319, 16
        %v3452 = vrot.slane %v3450, 4
        %v3453 = vor.u32 %v3452, %v3448
        %v3454 = vrot.slane %v3453, 4
        %v3456 = vshll.u32 %v3381, 16
        %v3458 = vrot.slane %v3456, 5
        %v3459 = vsel %vm2192, %v3454, %v3458
        %v3461 = vshrl.u32 %v3320, 16
        %v3463 = vrot.slane %v3461, 4
        %v3464 = vshll.u32 %v3320, 16
        %v3466 = vrot.slane %v3464, 5
        %v3467 = vor.u32 %v3463, %v3466
        %v3468 = vrot.slane %v3467, 4
        %v3470 = vshll.u32 %v3321, 16
        %v3472 = vrot.slane %v3470, 5
        %v3473 = vsel %vm2192, %v3468, %v3472
        %v3474 = vshrl.u32 %v3321, 16
        %v3476 = vrot.slane %v3474, 4
        %v3477 = vor.u32 %v3476, %v3472
        %v3478 = vrot.slane %v3477, 4
        %v3480 = vshll.u32 %v3382, 16
        %v3482 = vrot.slane %v3480, 5
        %v3483 = vsel %vm2192, %v3478, %v3482
        %v3485 = vshrl.u32 %v3322, 16
        %v3487 = vrot.slane %v3485, 4
        %v3488 = vshll.u32 %v3322, 16
        %v3490 = vrot.slane %v3488, 5
        %v3491 = vor.u32 %v3487, %v3490
        %v3492 = vrot.slane %v3491, 4
        %v3494 = vshll.u32 %v3323, 16
        %v3496 = vrot.slane %v3494, 5
        %v3497 = vsel %vm2192, %v3492, %v3496
        %v3498 = vshrl.u32 %v3323, 16
        %v3500 = vrot.slane %v3498, 4
        %v3501 = vor.u32 %v3500, %v3496
        %v3502 = vrot.slane %v3501, 4
        %v3504 = vshll.u32 %v3383, 16
        %v3506 = vrot.slane %v3504, 5
        %v3507 = vsel %vm2192, %v3502, %v3506
        %v3509 = vshrl.u32 %v3324, 16
        %v3511 = vrot.slane %v3509, 4
        %v3512 = vshll.u32 %v3324, 16
        %v3514 = vrot.slane %v3512, 5
        %v3515 = vor.u32 %v3511, %v3514
        %v3516 = vrot.slane %v3515, 4
        %v3518 = vshll.u32 %v3325, 16
        %v3520 = vrot.slane %v3518, 5
        %v3521 = vsel %vm2192, %v3516, %v3520
        %v3522 = vshrl.u32 %v3325, 16
        %v3524 = vrot.slane %v3522, 4
        %v3525 = vor.u32 %v3524, %v3520
        %v3526 = vrot.slane %v3525, 4
        %v3528 = vshll.u32 %v3384, 16
        %v3530 = vrot.slane %v3528, 5
        %v3531 = vsel %vm2192, %v3526, %v3530
        %v3533 = vshrl.u32 %v3326, 16
        %v3535 = vrot.slane %v3533, 4
        %v3536 = vshll.u32 %v3326, 16
        %v3538 = vrot.slane %v3536, 5
        %v3539 = vor.u32 %v3535, %v3538
        %v3540 = vrot.slane %v3539, 4
        %v3542 = vshll.u32 %v3327, 16
        %v3544 = vrot.slane %v3542, 5
        %v3545 = vsel %vm2192, %v3540, %v3544
        %v3546 = vshrl.u32 %v3327, 16
        %v3548 = vrot.slane %v3546, 4
        %v3549 = vor.u32 %v3548, %v3544
        %v3550 = vrot.slane %v3549, 4
        %v3552 = vshll.u32 %v3385, 16
        %v3554 = vrot.slane %v3552, 5
        %v3555 = vsel %vm2192, %v3550, %v3554
        %v3557 = vshrl.u32 %v3328, 16
        %v3559 = vrot.slane %v3557, 4
        %v3560 = vshll.u32 %v3328, 16
        %v3562 = vrot.slane %v3560, 5
        %v3563 = vor.u32 %v3559, %v3562
        %v3564 = vrot.slane %v3563, 4
        %v3566 = vshll.u32 %v3329, 16
        %v3568 = vrot.slane %v3566, 5
        %v3569 = vsel %vm2192, %v3564, %v3568
        %v3570 = vshrl.u32 %v3329, 16
        %v3572 = vrot.slane %v3570, 4
        %v3573 = vor.u32 %v3572, %v3568
        %v3574 = vrot.slane %v3573, 4
        %v3576 = vshll.u32 %v3386, 16
        %v3578 = vrot.slane %v3576, 5
        %v3579 = vsel %vm2192, %v3574, %v3578
        %v3581 = vshrl.u32 %v3330, 16
        %v3583 = vrot.slane %v3581, 4
        %v3584 = vshll.u32 %v3330, 16
        %v3586 = vrot.slane %v3584, 5
        %v3587 = vor.u32 %v3583, %v3586
        %v3588 = vrot.slane %v3587, 4
        %v3590 = vshll.u32 %v3331, 16
        %v3592 = vrot.slane %v3590, 5
        %v3593 = vsel %vm2192, %v3588, %v3592
        %v3594 = vshrl.u32 %v3331, 16
        %v3596 = vrot.slane %v3594, 4
        %v3597 = vor.u32 %v3596, %v3592
        %v3598 = vrot.slane %v3597, 4
        %v3600 = vshll.u32 %v3387, 16
        %v3602 = vrot.slane %v3600, 5
        %v3603 = vsel %vm2192, %v3598, %v3602
        %v3605 = vshrl.u32 %v3332, 16
        %v3607 = vrot.slane %v3605, 4
        %v3608 = vshll.u32 %v3332, 16
        %v3610 = vrot.slane %v3608, 5
        %v3611 = vor.u32 %v3607, %v3610
        %v3612 = vrot.slane %v3611, 4
        %v3614 = vshll.u32 %v3333, 16
        %v3616 = vrot.slane %v3614, 5
        %v3617 = vsel %vm2192, %v3612, %v3616
        %v3618 = vshrl.u32 %v3333, 16
        %v3620 = vrot.slane %v3618, 4
        %v3621 = vor.u32 %v3620, %v3616
        %v3622 = vrot.slane %v3621, 4
        %v3624 = vshll.u32 %v3388, 16
        %v3626 = vrot.slane %v3624, 5
        %v3627 = vsel %vm2192, %v3622, %v3626
        %v3629 = vshrl.u32 %v3334, 16
        %v3631 = vrot.slane %v3629, 4
        %v3632 = vshll.u32 %v3334, 16
        %v3634 = vrot.slane %v3632, 5
        %v3635 = vor.u32 %v3631, %v3634
        %v3636 = vrot.slane %v3635, 4
        %v3638 = vshll.u32 %v3335, 16
        %v3640 = vrot.slane %v3638, 5
        %v3641 = vsel %vm2192, %v3636, %v3640
        %v3642 = vshrl.u32 %v3335, 16
        %v3644 = vrot.slane %v3642, 4
        %v3645 = vor.u32 %v3644, %v3640
        %v3646 = vrot.slane %v3645, 4
        %v3648 = vshll.u32 %v3389, 16
        %v3650 = vrot.slane %v3648, 5
        %v3651 = vsel %vm2192, %v3646, %v3650
        %v3653 = vshrl.u32 %v3336, 16
        %v3655 = vrot.slane %v3653, 4
        %v3656 = vshll.u32 %v3336, 16
        %v3658 = vrot.slane %v3656, 5
        %v3659 = vor.u32 %v3655, %v3658
        %v3660 = vrot.slane %v3659, 4
        %v3662 = vshll.u32 %v3337, 16
        %v3664 = vrot.slane %v3662, 5
        %v3665 = vsel %vm2192, %v3660, %v3664
        %v3666 = vshrl.u32 %v3337, 16
        %v3668 = vrot.slane %v3666, 4
        %v3669 = vor.u32 %v3668, %v3664
        %v3670 = vrot.slane %v3669, 4
        %v3672 = vshll.u32 %v3390, 16
        %v3674 = vrot.slane %v3672, 5
        %v3675 = vsel %vm2192, %v3670, %v3674
        %v3677 = vshrl.u32 %v3338, 16
        %v3679 = vrot.slane %v3677, 4
        %v3680 = vshll.u32 %v3338, 16
        %v3682 = vrot.slane %v3680, 5
        %v3683 = vor.u32 %v3679, %v3682
        %v3684 = vrot.slane %v3683, 4
        %v3686 = vshll.u32 %v3339, 16
        %v3688 = vrot.slane %v3686, 5
        %v3689 = vsel %vm2192, %v3684, %v3688
        %v3690 = vshrl.u32 %v3339, 16
        %v3692 = vrot.slane %v3690, 4
        %v3693 = vor.u32 %v3692, %v3688
        %v3694 = vrot.slane %v3693, 4
        %v3696 = vshll.u32 %v3391, 16
        %v3698 = vrot.slane %v3696, 5
        %v3699 = vsel %vm2192, %v3694, %v3698
        %v3701 = vshrl.u32 %v3340, 16
        %v3703 = vrot.slane %v3701, 4
        %v3704 = vshll.u32 %v3340, 16
        %v3706 = vrot.slane %v3704, 5
        %v3707 = vor.u32 %v3703, %v3706
        %v3708 = vrot.slane %v3707, 4
        %v3710 = vshll.u32 %v3341, 16
        %v3712 = vrot.slane %v3710, 5
        %v3713 = vsel %vm2192, %v3708, %v3712
        %v3714 = vshrl.u32 %v3341, 16
        %v3716 = vrot.slane %v3714, 4
        %v3717 = vor.u32 %v3716, %v3712
        %v3718 = vrot.slane %v3717, 4
        %v3720 = vshll.u32 %v3392, 16
        %v3722 = vrot.slane %v3720, 5
        %v3723 = vsel %vm2192, %v3718, %v3722
        %v3725 = vshrl.u32 %v3342, 16
        %v3727 = vrot.slane %v3725, 4
        %v3728 = vshll.u32 %v3342, 16
        %v3730 = vrot.slane %v3728, 5
        %v3731 = vor.u32 %v3727, %v3730
        %v3732 = vrot.slane %v3731, 4
        %v3734 = vshll.u32 %v3343, 16
        %v3736 = vrot.slane %v3734, 5
        %v3737 = vsel %vm2192, %v3732, %v3736
        %v3738 = vshrl.u32 %v3343, 16
        %v3740 = vrot.slane %v3738, 4
        %v3741 = vor.u32 %v3740, %v3736
        %v3742 = vrot.slane %v3741, 4
        %v3744 = vshll.u32 %v3393, 16
        %v3746 = vrot.slane %v3744, 5
        %v3747 = vsel %vm2192, %v3742, %v3746
        %v3749 = vshrl.u32 %v3344, 16
        %v3751 = vrot.slane %v3749, 4
        %v3752 = vshll.u32 %v3344, 16
        %v3754 = vrot.slane %v3752, 5
        %v3755 = vor.u32 %v3751, %v3754
        %v3756 = vrot.slane %v3755, 4
        %v3758 = vshll.u32 %v3345, 16
        %v3760 = vrot.slane %v3758, 5
        %v3761 = vsel %vm2192, %v3756, %v3760
        %v3762 = vshrl.u32 %v3345, 16
        %v3764 = vrot.slane %v3762, 4
        %v3765 = vor.u32 %v3764, %v3760
        %v3766 = vrot.slane %v3765, 4
        %v3768 = vshll.u32 %v3394, 16
        %v3770 = vrot.slane %v3768, 5
        %v3771 = vsel %vm2192, %v3766, %v3770
        %v3773 = vshrl.u32 %v3346, 16
        %v3775 = vrot.slane %v3773, 4
        %v3776 = vshll.u32 %v3346, 16
        %v3778 = vrot.slane %v3776, 5
        %v3779 = vor.u32 %v3775, %v3778
        %v3780 = vrot.slane %v3779, 4
        %v3782 = vshll.u32 %v3347, 16
        %v3784 = vrot.slane %v3782, 5
        %v3785 = vsel %vm2192, %v3780, %v3784
        %v3786 = vshrl.u32 %v3347, 16
        %v3788 = vrot.slane %v3786, 4
        %v3789 = vor.u32 %v3788, %v3784
        %v3790 = vrot.slane %v3789, 4
        %v3792 = vshll.u32 %v3395, 16
        %v3794 = vrot.slane %v3792, 5
        %v3795 = vsel %vm2192, %v3790, %v3794
        %v3797 = vshrl.u32 %v3348, 16
        %v3799 = vrot.slane %v3797, 4
        %v3800 = vshll.u32 %v3348, 16
        %v3802 = vrot.slane %v3800, 5
        %v3803 = vor.u32 %v3799, %v3802
        %v3804 = vrot.slane %v3803, 4
        %v3806 = vshll.u32 %v3349, 16
        %v3808 = vrot.slane %v3806, 5
        %v3809 = vsel %vm2192, %v3804, %v3808
        %v3810 = vshrl.u32 %v3349, 16
        %v3812 = vrot.slane %v3810, 4
        %v3813 = vor.u32 %v3812, %v3808
        %v3814 = vrot.slane %v3813, 4
        %v3816 = vshll.u32 %v3396, 16
        %v3818 = vrot.slane %v3816, 5
        %v3819 = vsel %vm2192, %v3814, %v3818
        %v3821 = vshrl.u32 %v3350, 16
        %v3823 = vrot.slane %v3821, 4
        %v3824 = vshll.u32 %v3350, 16
        %v3826 = vrot.slane %v3824, 5
        %v3827 = vor.u32 %v3823, %v3826
        %v3828 = vrot.slane %v3827, 4
        %v3830 = vshll.u32 %v3351, 16
        %v3832 = vrot.slane %v3830, 5
        %v3833 = vsel %vm2192, %v3828, %v3832
        %v3834 = vshrl.u32 %v3351, 16
        %v3836 = vrot.slane %v3834, 4
        %v3837 = vor.u32 %v3836, %v3832
        %v3838 = vrot.slane %v3837, 4
        %v3840 = vshll.u32 %v3397, 16
        %v3842 = vrot.slane %v3840, 5
        %v3843 = vsel %vm2192, %v3838, %v3842
        %v3845 = vshrl.u32 %v3352, 16
        %v3847 = vrot.slane %v3845, 4
        %v3848 = vshll.u32 %v3352, 16
        %v3850 = vrot.slane %v3848, 5
        %v3851 = vor.u32 %v3847, %v3850
        %v3852 = vrot.slane %v3851, 4
        %v3854 = vshll.u32 %v3353, 16
        %v3856 = vrot.slane %v3854, 5
        %v3857 = vsel %vm2192, %v3852, %v3856
        %v3858 = vshrl.u32 %v3353, 16
        %v3860 = vrot.slane %v3858, 4
        %v3861 = vor.u32 %v3860, %v3856
        %v3862 = vrot.slane %v3861, 4
        %v3864 = vshll.u32 %v3398, 16
        %v3866 = vrot.slane %v3864, 5
        %v3867 = vsel %vm2192, %v3862, %v3866
        %v3869 = vshrl.u32 %v3354, 16
        %v3871 = vrot.slane %v3869, 4
        %v3872 = vshll.u32 %v3354, 16
        %v3874 = vrot.slane %v3872, 5
        %v3875 = vor.u32 %v3871, %v3874
        %v3876 = vrot.slane %v3875, 4
        %v3878 = vshll.u32 %v3355, 16
        %v3880 = vrot.slane %v3878, 5
        %v3881 = vsel %vm2192, %v3876, %v3880
        %v3882 = vshrl.u32 %v3355, 16
        %v3884 = vrot.slane %v3882, 4
        %v3885 = vor.u32 %v3884, %v3880
        %v3886 = vrot.slane %v3885, 4
        %v3888 = vshll.u32 %v3399, 16
        %v3890 = vrot.slane %v3888, 5
        %v3891 = vsel %vm2192, %v3886, %v3890
        %v3893 = vshrl.u32 %v3356, 16
        %v3895 = vrot.slane %v3893, 4
        %v3896 = vshll.u32 %v3356, 16
        %v3898 = vrot.slane %v3896, 5
        %v3899 = vor.u32 %v3895, %v3898
        %v3900 = vrot.slane %v3899, 4
        %v3902 = vshll.u32 %v3357, 16
        %v3904 = vrot.slane %v3902, 5
        %v3905 = vsel %vm2192, %v3900, %v3904
        %v3906 = vshrl.u32 %v3357, 16
        %v3908 = vrot.slane %v3906, 4
        %v3909 = vor.u32 %v3908, %v3904
        %v3910 = vrot.slane %v3909, 4
        %v3912 = vshll.u32 %v3400, 16
        %v3914 = vrot.slane %v3912, 5
        %v3915 = vsel %vm2192, %v3910, %v3914
        %v3917 = vshrl.u32 %v3358, 16
        %v3919 = vrot.slane %v3917, 4
        %v3920 = vshll.u32 %v3358, 16
        %v3922 = vrot.slane %v3920, 5
        %v3923 = vor.u32 %v3919, %v3922
        %v3924 = vrot.slane %v3923, 4
        %v3926 = vshll.u32 %v3359, 16
        %v3928 = vrot.slane %v3926, 5
        %v3929 = vsel %vm2192, %v3924, %v3928
        %v3930 = vshrl.u32 %v3359, 16
        %v3932 = vrot.slane %v3930, 4
        %v3933 = vor.u32 %v3932, %v3928
        %v3934 = vrot.slane %v3933, 4
        %v3936 = vshll.u32 %v3401, 16
        %v3938 = vrot.slane %v3936, 5
        %v3939 = vsel %vm2192, %v3934, %v3938
        %v3941 = vshrl.u32 %v3360, 16
        %v3943 = vrot.slane %v3941, 4
        %v3944 = vshll.u32 %v3360, 16
        %v3946 = vrot.slane %v3944, 5
        %v3947 = vor.u32 %v3943, %v3946
        %v3948 = vrot.slane %v3947, 4
        %v3950 = vshll.u32 %v3361, 16
        %v3952 = vrot.slane %v3950, 5
        %v3953 = vsel %vm2192, %v3948, %v3952
        %v3954 = vshrl.u32 %v3361, 16
        %v3956 = vrot.slane %v3954, 4
        %v3957 = vor.u32 %v3956, %v3952
        %v3958 = vrot.slane %v3957, 4
        %v3960 = vshll.u32 %v3402, 16
        %v3962 = vrot.slane %v3960, 5
        %v3963 = vsel %vm2192, %v3958, %v3962
        %v3965 = vshrl.u32 %v3362, 16
        %v3967 = vrot.slane %v3965, 4
        %v3968 = vshll.u32 %v3362, 16
        %v3970 = vrot.slane %v3968, 5
        %v3971 = vor.u32 %v3967, %v3970
        %v3972 = vrot.slane %v3971, 4
        %v3974 = vshll.u32 %v3363, 16
        %v3976 = vrot.slane %v3974, 5
        %v3977 = vsel %vm2192, %v3972, %v3976
        %v3978 = vshrl.u32 %v3363, 16
        %v3980 = vrot.slane %v3978, 4
        %v3981 = vor.u32 %v3980, %v3976
        %v3982 = vrot.slane %v3981, 4
        %v3984 = vshll.u32 %v3403, 16
        %v3986 = vrot.slane %v3984, 5
        %v3987 = vsel %vm2192, %v3982, %v3986
        %v3989 = vshrl.u32 %v3364, 16
        %v3991 = vrot.slane %v3989, 4
        %v3992 = vshll.u32 %v3364, 16
        %v3994 = vrot.slane %v3992, 5
        %v3995 = vor.u32 %v3991, %v3994
        %v3996 = vrot.slane %v3995, 4
        %v3998 = vshll.u32 %v3365, 16
        %v4000 = vrot.slane %v3998, 5
        %v4001 = vsel %vm2192, %v3996, %v4000
        %v4002 = vshrl.u32 %v3365, 16
        %v4004 = vrot.slane %v4002, 4
        %v4005 = vor.u32 %v4004, %v4000
        %v4006 = vrot.slane %v4005, 4
        %v4008 = vshll.u32 %v3404, 16
        %v4010 = vrot.slane %v4008, 5
        %v4011 = vsel %vm2192, %v4006, %v4010
        %v4013 = vshrl.u32 %v3366, 16
        %v4015 = vrot.slane %v4013, 4
        %v4016 = vshll.u32 %v3366, 16
        %v4018 = vrot.slane %v4016, 5
        %v4019 = vor.u32 %v4015, %v4018
        %v4020 = vrot.slane %v4019, 4
        %v4022 = vshll.u32 %v3367, 16
        %v4024 = vrot.slane %v4022, 5
        %v4025 = vsel %vm2192, %v4020, %v4024
        %v4026 = vshrl.u32 %v3367, 16
        %v4028 = vrot.slane %v4026, 4
        %v4029 = vor.u32 %v4028, %v4024
        %v4030 = vrot.slane %v4029, 4
        %v4032 = vshll.u32 %v3405, 16
        %v4034 = vrot.slane %v4032, 5
        %v4035 = vsel %vm2192, %v4030, %v4034
        %v4037 = vshrl.u32 %v3368, 16
        %v4039 = vrot.slane %v4037, 4
        %v4040 = vshll.u32 %v3368, 16
        %v4042 = vrot.slane %v4040, 5
        %v4043 = vor.u32 %v4039, %v4042
        %v4044 = vrot.slane %v4043, 4
        %v4046 = vshll.u32 %v3369, 16
        %v4048 = vrot.slane %v4046, 5
        %v4049 = vsel %vm2192, %v4044, %v4048
        %v4050 = vshrl.u32 %v3369, 16
        %v4052 = vrot.slane %v4050, 4
        %v4053 = vor.u32 %v4052, %v4048
        %v4054 = vrot.slane %v4053, 4
        %v4056 = vshll.u32 %v3406, 16
        %v4058 = vrot.slane %v4056, 5
        %v4059 = vsel %vm2192, %v4054, %v4058
        %v4061 = vshrl.u32 %v3370, 16
        %v4063 = vrot.slane %v4061, 4
        %v4064 = vshll.u32 %v3370, 16
        %v4066 = vrot.slane %v4064, 5
        %v4067 = vor.u32 %v4063, %v4066
        %v4068 = vrot.slane %v4067, 4
        %v4070 = vshll.u32 %v3371, 16
        %v4072 = vrot.slane %v4070, 5
        %v4073 = vsel %vm2192, %v4068, %v4072
        %v4074 = vshrl.u32 %v3371, 16
        %v4076 = vrot.slane %v4074, 4
        %v4077 = vor.u32 %v4076, %v4072
        %v4078 = vrot.slane %v4077, 4
        %v4080 = vshll.u32 %v3407, 16
        %v4082 = vrot.slane %v4080, 5
        %v4083 = vsel %vm2192, %v4078, %v4082
        %v4085 = vshrl.u32 %v3372, 16
        %v4087 = vrot.slane %v4085, 4
        %v4088 = vshll.u32 %v3372, 16
        %v4090 = vrot.slane %v4088, 5
        %v4091 = vor.u32 %v4087, %v4090
        %v4092 = vrot.slane %v4091, 4
        %v4094 = vshll.u32 %v3373, 16
        %v4096 = vrot.slane %v4094, 5
        %v4097 = vsel %vm2192, %v4092, %v4096
        %v4098 = vshrl.u32 %v3373, 16
        %v4100 = vrot.slane %v4098, 4
        %v4101 = vor.u32 %v4100, %v4096
        %v4102 = vrot.slane %v4101, 4
        %v4104 = vshll.u32 %v3408, 16
        %v4106 = vrot.slane %v4104, 5
        %v4107 = vsel %vm2192, %v4102, %v4106
        %v4109 = vshrl.u32 %v3374, 16
        %v4111 = vrot.slane %v4109, 4
        %v4112 = vshll.u32 %v3374, 16
        %v4114 = vrot.slane %v4112, 5
        %v4115 = vor.u32 %v4111, %v4114
        %v4116 = vrot.slane %v4115, 4
        %v4118 = vshll.u32 %v3375, 16
        %v4120 = vrot.slane %v4118, 5
        %v4121 = vsel %vm2192, %v4116, %v4120
        %v4122 = vshrl.u32 %v3375, 16
        %v4124 = vrot.slane %v4122, 4
        %v4125 = vor.u32 %v4124, %v4120
        %v4126 = vrot.slane %v4125, 4
        %v4128 = vshll.u32 %v3409, 16
        %v4130 = vrot.slane %v4128, 5
        %v4131 = vsel %vm2192, %v4126, %v4130
        %v4133 = vshrl.u32 %v3376, 16
        %v4135 = vrot.slane %v4133, 4
        %v4136 = vshll.u32 %v3376, 16
        %v4138 = vrot.slane %v4136, 5
        %v4139 = vor.u32 %v4135, %v4138
        %v4140 = vrot.slane %v4139, 4
        %v4142 = vshll.u32 %v3377, 16
        %v4144 = vrot.slane %v4142, 5
        %v4145 = vsel %vm2192, %v4140, %v4144
        %v4146 = vshrl.u32 %v3377, 16
        %v4148 = vrot.slane %v4146, 4
        %v4149 = vor.u32 %v4148, %v4144
        %v4150 = vrot.slane %v4149, 4
        %v4152 = vshll.u32 %v3410, 16
        %v4154 = vrot.slane %v4152, 5
        %v4155 = vsel %vm2192, %v4150, %v4154
        %v4157 = vshrl.u32 %v3378, 16
        %v4159 = vrot.slane %v4157, 4
        %v4160 = vshll.u32 %v3378, 16
        %v4162 = vrot.slane %v4160, 5
        %v4163 = vor.u32 %v4159, %v4162
        %v4164 = vrot.slane %v4163, 4
        %v4166 = vshll.u32 %v3379, 16
        %v4168 = vrot.slane %v4166, 5
        %v4169 = vsel %vm2192, %v4164, %v4168
        %v4170 = vshrl.u32 %v3379, 16
        %v4172 = vrot.slane %v4170, 4
        %v4173 = vor.u32 %v4172, %v4168
        %v4174 = vrot.slane %v4173, 4
        %v4176 = vshll.u32 %v3411, 16
        %v4178 = vrot.slane %v4176, 5
        %v4179 = vsel %vm2192, %v4174, %v4178
        %v4180 = vld [vmem:[%s836] sm:$0xe]
        %v4181 = vld [vmem:[%s836 + $0xc] sm:$0xe]
        %v4182 = vld [vmem:[%s836 + $0x18] sm:$0xe]
        %v4183 = vld [vmem:[%s836 + $0x24] sm:$0xe]
        %v4184 = vld [vmem:[%s836 + $0x30] sm:$0xe]
        %v4185 = vld [vmem:[%s836 + $0x3c] sm:$0xe]
        %v4186 = vld [vmem:[%s836 + $0x48] sm:$0xe]
        %v4187 = vld [vmem:[%s836 + $0x54] sm:$0xe]
        %v4188 = vld [vmem:[%s836 + $0x60] sm:$0xe]
        %v4189 = vld [vmem:[%s836 + $0x6c] sm:$0xe]
        %v4190 = vld [vmem:[%s836 + $0x78] sm:$0xe]
        %v4191 = vld [vmem:[%s836 + $0x84] sm:$0xe]
        %v4192 = vld [vmem:[%s836 + $0x90] sm:$0xe]
        %v4193 = vld [vmem:[%s836 + $0x9c] sm:$0xe]
        %v4194 = vld [vmem:[%s836 + $0xa8] sm:$0xe]
        %v4195 = vld [vmem:[%s836 + $0xb4] sm:$0xe]
        %v4196 = vld [vmem:[%s836 + $0xd8] sm:$0xe]
        %v4197 = vld [vmem:[%s836 + $0xe4] sm:$0xe]
        %v4198 = vld [vmem:[%s836 + $0xf0] sm:$0xe]
        %v4199 = vld [vmem:[%s836 + $0xfc] sm:$0xe]
        %v4200 = vld [vmem:[%s836 + $0x108] sm:$0xe]
        %v4201 = vld [vmem:[%s836 + $0x114] sm:$0xe]
        %v4202 = vld [vmem:[%s836 + $0x120] sm:$0xe]
        %v4203 = vld [vmem:[%s836 + $0x12c] sm:$0xe]
        %v4204 = vld [vmem:[%s836 + $0x138] sm:$0xe]
        %v4205 = vld [vmem:[%s836 + $0x144] sm:$0xe]
        %v4206 = vld [vmem:[%s836 + $0x150] sm:$0xe]
        %v4207 = vld [vmem:[%s836 + $0x15c] sm:$0xe]
        %v4208 = vld [vmem:[%s836 + $0x168] sm:$0xe]
        %v4209 = vld [vmem:[%s836 + $0x174] sm:$0xe]
        %v4210 = vld [vmem:[%s836 + $0x180] sm:$0xe]
        %v4211 = vld [vmem:[%s836 + $0x18c] sm:$0xe]
        %v4308 = vrot.slane %v4180, 5
        %v4309 = vrot.slane %v4308, 4
        %v4310 = vrot.slane %v3317, 5
        %v4311 = vsel %vm3091, %v4309, %v4310
        %v4312 = vrot.slane %v4310, 4
        %v4313 = vrot.slane %v3380, 5
        %v4314 = vsel %vm3091, %v4312, %v4313
        %v4315 = vrot.slane %v4181, 5
        %v4316 = vrot.slane %v4315, 4
        %v4317 = vrot.slane %v3319, 5
        %v4318 = vsel %vm3091, %v4316, %v4317
        %v4319 = vrot.slane %v4317, 4
        %v4320 = vrot.slane %v3381, 5
        %v4321 = vsel %vm3091, %v4319, %v4320
        %v4322 = vrot.slane %v4182, 5
        %v4323 = vrot.slane %v4322, 4
        %v4324 = vrot.slane %v3321, 5
        %v4325 = vsel %vm3091, %v4323, %v4324
        %v4326 = vrot.slane %v4324, 4
        %v4327 = vrot.slane %v3382, 5
        %v4328 = vsel %vm3091, %v4326, %v4327
        %v4329 = vrot.slane %v4183, 5
        %v4330 = vrot.slane %v4329, 4
        %v4331 = vrot.slane %v3323, 5
        %v4332 = vsel %vm3091, %v4330, %v4331
        %v4333 = vrot.slane %v4331, 4
        %v4334 = vrot.slane %v3383, 5
        %v4335 = vsel %vm3091, %v4333, %v4334
        %v4336 = vrot.slane %v4184, 5
        %v4337 = vrot.slane %v4336, 4
        %v4338 = vrot.slane %v3325, 5
        %v4339 = vsel %vm3091, %v4337, %v4338
        %v4340 = vrot.slane %v4338, 4
        %v4341 = vrot.slane %v3384, 5
        %v4342 = vsel %vm3091, %v4340, %v4341
        %v4343 = vrot.slane %v4185, 5
        %v4344 = vrot.slane %v4343, 4
        %v4345 = vrot.slane %v3327, 5
        %v4346 = vsel %vm3091, %v4344, %v4345
        %v4347 = vrot.slane %v4345, 4
        %v4348 = vrot.slane %v3385, 5
        %v4349 = vsel %vm3091, %v4347, %v4348
        %v4350 = vrot.slane %v4186, 5
        %v4351 = vrot.slane %v4350, 4
        %v4352 = vrot.slane %v3329, 5
        %v4353 = vsel %vm3091, %v4351, %v4352
        %v4354 = vrot.slane %v4352, 4
        %v4355 = vrot.slane %v3386, 5
        %v4356 = vsel %vm3091, %v4354, %v4355
        %v4357 = vrot.slane %v4187, 5
        %v4358 = vrot.slane %v4357, 4
        %v4359 = vrot.slane %v3331, 5
        %v4360 = vsel %vm3091, %v4358, %v4359
        %v4361 = vrot.slane %v4359, 4
        %v4362 = vrot.slane %v3387, 5
        %v4363 = vsel %vm3091, %v4361, %v4362
        %v4364 = vrot.slane %v4188, 5
        %v4365 = vrot.slane %v4364, 4
        %v4366 = vrot.slane %v3333, 5
        %v4367 = vsel %vm3091, %v4365, %v4366
        %v4368 = vrot.slane %v4366, 4
        %v4369 = vrot.slane %v3388, 5
        %v4370 = vsel %vm3091, %v4368, %v4369
        %v4371 = vrot.slane %v4189, 5
        %v4372 = vrot.slane %v4371, 4
        %v4373 = vrot.slane %v3335, 5
        %v4374 = vsel %vm3091, %v4372, %v4373
        %v4375 = vrot.slane %v4373, 4
        %v4376 = vrot.slane %v3389, 5
        %v4377 = vsel %vm3091, %v4375, %v4376
        %v4378 = vrot.slane %v4190, 5
        %v4379 = vrot.slane %v4378, 4
        %v4380 = vrot.slane %v3337, 5
        %v4381 = vsel %vm3091, %v4379, %v4380
        %v4382 = vrot.slane %v4380, 4
        %v4383 = vrot.slane %v3390, 5
        %v4384 = vsel %vm3091, %v4382, %v4383
        %v4385 = vrot.slane %v4191, 5
        %v4386 = vrot.slane %v4385, 4
        %v4387 = vrot.slane %v3339, 5
        %v4388 = vsel %vm3091, %v4386, %v4387
        %v4389 = vrot.slane %v4387, 4
        %v4390 = vrot.slane %v3391, 5
        %v4391 = vsel %vm3091, %v4389, %v4390
        %v4392 = vrot.slane %v4192, 5
        %v4393 = vrot.slane %v4392, 4
        %v4394 = vrot.slane %v3341, 5
        %v4395 = vsel %vm3091, %v4393, %v4394
        %v4396 = vrot.slane %v4394, 4
        %v4397 = vrot.slane %v3392, 5
        %v4398 = vsel %vm3091, %v4396, %v4397
        %v4399 = vrot.slane %v4193, 5
        %v4400 = vrot.slane %v4399, 4
        %v4401 = vrot.slane %v3343, 5
        %v4402 = vsel %vm3091, %v4400, %v4401
        %v4403 = vrot.slane %v4401, 4
        %v4404 = vrot.slane %v3393, 5
        %v4405 = vsel %vm3091, %v4403, %v4404
        %v4406 = vrot.slane %v4194, 5
        %v4407 = vrot.slane %v4406, 4
        %v4408 = vrot.slane %v3345, 5
        %v4409 = vsel %vm3091, %v4407, %v4408
        %v4410 = vrot.slane %v4408, 4
        %v4411 = vrot.slane %v3394, 5
        %v4412 = vsel %vm3091, %v4410, %v4411
        %v4413 = vrot.slane %v4195, 5
        %v4414 = vrot.slane %v4413, 4
        %v4415 = vrot.slane %v3347, 5
        %v4416 = vsel %vm3091, %v4414, %v4415
        %v4417 = vrot.slane %v4415, 4
        %v4418 = vrot.slane %v3395, 5
        %v4419 = vsel %vm3091, %v4417, %v4418
        %v4420 = vrot.slane %v4196, 5
        %v4421 = vrot.slane %v4420, 4
        %v4422 = vrot.slane %v3349, 5
        %v4423 = vsel %vm3091, %v4421, %v4422
        %v4424 = vrot.slane %v4422, 4
        %v4425 = vrot.slane %v3396, 5
        %v4426 = vsel %vm3091, %v4424, %v4425
        %v4427 = vrot.slane %v4197, 5
        %v4428 = vrot.slane %v4427, 4
        %v4429 = vrot.slane %v3351, 5
        %v4430 = vsel %vm3091, %v4428, %v4429
        %v4431 = vrot.slane %v4429, 4
        %v4432 = vrot.slane %v3397, 5
        %v4433 = vsel %vm3091, %v4431, %v4432
        %v4434 = vrot.slane %v4198, 5
        %v4435 = vrot.slane %v4434, 4
        %v4436 = vrot.slane %v3353, 5
        %v4437 = vsel %vm3091, %v4435, %v4436
        %v4438 = vrot.slane %v4436, 4
        %v4439 = vrot.slane %v3398, 5
        %v4440 = vsel %vm3091, %v4438, %v4439
        %v4441 = vrot.slane %v4199, 5
        %v4442 = vrot.slane %v4441, 4
        %v4443 = vrot.slane %v3355, 5
        %v4444 = vsel %vm3091, %v4442, %v4443
        %v4445 = vrot.slane %v4443, 4
        %v4446 = vrot.slane %v3399, 5
        %v4447 = vsel %vm3091, %v4445, %v4446
        %v4448 = vrot.slane %v4200, 5
        %v4449 = vrot.slane %v4448, 4
        %v4450 = vrot.slane %v3357, 5
        %v4451 = vsel %vm3091, %v4449, %v4450
        %v4452 = vrot.slane %v4450, 4
        %v4453 = vrot.slane %v3400, 5
        %v4454 = vsel %vm3091, %v4452, %v4453
        %v4455 = vrot.slane %v4201, 5
        %v4456 = vrot.slane %v4455, 4
        %v4457 = vrot.slane %v3359, 5
        %v4458 = vsel %vm3091, %v4456, %v4457
        %v4459 = vrot.slane %v4457, 4
        %v4460 = vrot.slane %v3401, 5
        %v4461 = vsel %vm3091, %v4459, %v4460
        %v4462 = vrot.slane %v4202, 5
        %v4463 = vrot.slane %v4462, 4
        %v4464 = vrot.slane %v3361, 5
        %v4465 = vsel %vm3091, %v4463, %v4464
        %v4466 = vrot.slane %v4464, 4
        %v4467 = vrot.slane %v3402, 5
        %v4468 = vsel %vm3091, %v4466, %v4467
        %v4469 = vrot.slane %v4203, 5
        %v4470 = vrot.slane %v4469, 4
        %v4471 = vrot.slane %v3363, 5
        %v4472 = vsel %vm3091, %v4470, %v4471
        %v4473 = vrot.slane %v4471, 4
        %v4474 = vrot.slane %v3403, 5
        %v4475 = vsel %vm3091, %v4473, %v4474
        %v4476 = vrot.slane %v4204, 5
        %v4477 = vrot.slane %v4476, 4
        %v4478 = vrot.slane %v3365, 5
        %v4479 = vsel %vm3091, %v4477, %v4478
        %v4480 = vrot.slane %v4478, 4
        %v4481 = vrot.slane %v3404, 5
        %v4482 = vsel %vm3091, %v4480, %v4481
        %v4483 = vrot.slane %v4205, 5
        %v4484 = vrot.slane %v4483, 4
        %v4485 = vrot.slane %v3367, 5
        %v4486 = vsel %vm3091, %v4484, %v4485
        %v4487 = vrot.slane %v4485, 4
        %v4488 = vrot.slane %v3405, 5
        %v4489 = vsel %vm3091, %v4487, %v4488
        %v4490 = vrot.slane %v4206, 5
        %v4491 = vrot.slane %v4490, 4
        %v4492 = vrot.slane %v3369, 5
        %v4493 = vsel %vm3091, %v4491, %v4492
        %v4494 = vrot.slane %v4492, 4
        %v4495 = vrot.slane %v3406, 5
        %v4496 = vsel %vm3091, %v4494, %v4495
        %v4497 = vrot.slane %v4207, 5
        %v4498 = vrot.slane %v4497, 4
        %v4499 = vrot.slane %v3371, 5
        %v4500 = vsel %vm3091, %v4498, %v4499
        %v4501 = vrot.slane %v4499, 4
        %v4502 = vrot.slane %v3407, 5
        %v4503 = vsel %vm3091, %v4501, %v4502
        %v4504 = vrot.slane %v4208, 5
        %v4505 = vrot.slane %v4504, 4
        %v4506 = vrot.slane %v3373, 5
        %v4507 = vsel %vm3091, %v4505, %v4506
        %v4508 = vrot.slane %v4506, 4
        %v4509 = vrot.slane %v3408, 5
        %v4510 = vsel %vm3091, %v4508, %v4509
        %v4511 = vrot.slane %v4209, 5
        %v4512 = vrot.slane %v4511, 4
        %v4513 = vrot.slane %v3375, 5
        %v4514 = vsel %vm3091, %v4512, %v4513
        %v4515 = vrot.slane %v4513, 4
        %v4516 = vrot.slane %v3409, 5
        %v4517 = vsel %vm3091, %v4515, %v4516
        %v4518 = vrot.slane %v4210, 5
        %v4519 = vrot.slane %v4518, 4
        %v4520 = vrot.slane %v3377, 5
        %v4521 = vsel %vm3091, %v4519, %v4520
        %v4522 = vrot.slane %v4520, 4
        %v4523 = vrot.slane %v3410, 5
        %v4524 = vsel %vm3091, %v4522, %v4523
        %v4525 = vrot.slane %v4211, 5
        %v4526 = vrot.slane %v4525, 4
        %v4527 = vrot.slane %v3379, 5
        %v4528 = vsel %vm3091, %v4526, %v4527
        %v4529 = vrot.slane %v4527, 4
        %v4530 = vrot.slane %v3411, 5
        %v4531 = vsel %vm3091, %v4529, %v4530
        %s4532 = scalar_lea.vmem [#allocation2], 24
        %v4533 = vld [vmem:[%s4532] sm:$0xf]
        %v4534 = vld [vmem:[%s4532 + $0x4] sm:$0xf]
        %v4535 = vld [vmem:[%s4532 + $0xc] sm:$0xf]
        %v4536 = vld [vmem:[%s4532 + $0x10] sm:$0xf]
        %v4537 = vld [vmem:[%s4532 + $0x18] sm:$0xf]
        %v4538 = vld [vmem:[%s4532 + $0x1c] sm:$0xf]
        %v4539 = vld [vmem:[%s4532 + $0x24] sm:$0xf]
        %v4540 = vld [vmem:[%s4532 + $0x28] sm:$0xf]
        %v4541 = vld [vmem:[%s4532 + $0x30] sm:$0xf]
        %v4542 = vld [vmem:[%s4532 + $0x34] sm:$0xf]
        %v4543 = vld [vmem:[%s4532 + $0x3c] sm:$0xf]
        %v4544 = vld [vmem:[%s4532 + $0x40] sm:$0xf]
        %v4545 = vld [vmem:[%s4532 + $0x48] sm:$0xf]
        %v4546 = vld [vmem:[%s4532 + $0x4c] sm:$0xf]
        %v4547 = vld [vmem:[%s4532 + $0x54] sm:$0xf]
        %v4548 = vld [vmem:[%s4532 + $0x58] sm:$0xf]
        %v4549 = vld [vmem:[%s4532 + $0x60] sm:$0xf]
        %v4550 = vld [vmem:[%s4532 + $0x64] sm:$0xf]
        %v4551 = vld [vmem:[%s4532 + $0x6c] sm:$0xf]
        %v4552 = vld [vmem:[%s4532 + $0x70] sm:$0xf]
        %v4553 = vld [vmem:[%s4532 + $0x78] sm:$0xf]
        %v4554 = vld [vmem:[%s4532 + $0x7c] sm:$0xf]
        %v4555 = vld [vmem:[%s4532 + $0x84] sm:$0xf]
        %v4556 = vld [vmem:[%s4532 + $0x88] sm:$0xf]
        %v4557 = vld [vmem:[%s4532 + $0x90] sm:$0xf]
        %v4558 = vld [vmem:[%s4532 + $0x94] sm:$0xf]
        %v4559 = vld [vmem:[%s4532 + $0x9c] sm:$0xf]
        %v4560 = vld [vmem:[%s4532 + $0xa0] sm:$0xf]
        %v4561 = vld [vmem:[%s4532 + $0xa8] sm:$0xf]
        %v4562 = vld [vmem:[%s4532 + $0xac] sm:$0xf]
        %v4563 = vld [vmem:[%s4532 + $0xb4] sm:$0xf]
        %v4564 = vld [vmem:[%s4532 + $0xb8] sm:$0xf]
        %v4565 = vld [vmem:[%s4532 + $0xd8] sm:$0xf]
        %v4566 = vld [vmem:[%s4532 + $0xdc] sm:$0xf]
        %v4567 = vld [vmem:[%s4532 + $0xe4] sm:$0xf]
        %v4568 = vld [vmem:[%s4532 + $0xe8] sm:$0xf]
        %v4569 = vld [vmem:[%s4532 + $0xf0] sm:$0xf]
        %v4570 = vld [vmem:[%s4532 + $0xf4] sm:$0xf]
        %v4571 = vld [vmem:[%s4532 + $0xfc] sm:$0xf]
        %v4572 = vld [vmem:[%s4532 + $0x100] sm:$0xf]
        %v4573 = vld [vmem:[%s4532 + $0x108] sm:$0xf]
        %v4574 = vld [vmem:[%s4532 + $0x10c] sm:$0xf]
        %v4575 = vld [vmem:[%s4532 + $0x114] sm:$0xf]
        %v4576 = vld [vmem:[%s4532 + $0x118] sm:$0xf]
        %v4577 = vld [vmem:[%s4532 + $0x120] sm:$0xf]
        %v4578 = vld [vmem:[%s4532 + $0x124] sm:$0xf]
        %v4579 = vld [vmem:[%s4532 + $0x12c] sm:$0xf]
        %v4580 = vld [vmem:[%s4532 + $0x130] sm:$0xf]
        %v4581 = vld [vmem:[%s4532 + $0x138] sm:$0xf]
        %v4582 = vld [vmem:[%s4532 + $0x13c] sm:$0xf]
        %v4583 = vld [vmem:[%s4532 + $0x144] sm:$0xf]
        %v4584 = vld [vmem:[%s4532 + $0x148] sm:$0xf]
        %v4585 = vld [vmem:[%s4532 + $0x150] sm:$0xf]
        %v4586 = vld [vmem:[%s4532 + $0x154] sm:$0xf]
        %v4587 = vld [vmem:[%s4532 + $0x15c] sm:$0xf]
        %v4588 = vld [vmem:[%s4532 + $0x160] sm:$0xf]
        %v4589 = vld [vmem:[%s4532 + $0x168] sm:$0xf]
        %v4590 = vld [vmem:[%s4532 + $0x16c] sm:$0xf]
        %v4591 = vld [vmem:[%s4532 + $0x174] sm:$0xf]
        %v4592 = vld [vmem:[%s4532 + $0x178] sm:$0xf]
        %v4593 = vld [vmem:[%s4532 + $0x180] sm:$0xf]
        %v4594 = vld [vmem:[%s4532 + $0x184] sm:$0xf]
        %v4595 = vld [vmem:[%s4532 + $0x18c] sm:$0xf]
        %v4596 = vld [vmem:[%s4532 + $0x190] sm:$0xf]
        %v4597 = vld [vmem:[%s4532 + $0x8] sm:$0x1]
        %v4598 = vld [vmem:[%s4532 + $0x14] sm:$0x1]
        %v4599 = vld [vmem:[%s4532 + $0x20] sm:$0x1]
        %v4600 = vld [vmem:[%s4532 + $0x2c] sm:$0x1]
        %v4601 = vld [vmem:[%s4532 + $0x38] sm:$0x1]
        %v4602 = vld [vmem:[%s4532 + $0x44] sm:$0x1]
        %v4603 = vld [vmem:[%s4532 + $0x50] sm:$0x1]
        %v4604 = vld [vmem:[%s4532 + $0x5c] sm:$0x1]
        %v4605 = vld [vmem:[%s4532 + $0x68] sm:$0x1]
        %v4606 = vld [vmem:[%s4532 + $0x74] sm:$0x1]
        %v4607 = vld [vmem:[%s4532 + $0x80] sm:$0x1]
        %v4608 = vld [vmem:[%s4532 + $0x8c] sm:$0x1]
        %v4609 = vld [vmem:[%s4532 + $0x98] sm:$0x1]
        %v4610 = vld [vmem:[%s4532 + $0xa4] sm:$0x1]
        %v4611 = vld [vmem:[%s4532 + $0xb0] sm:$0x1]
        %v4612 = vld [vmem:[%s4532 + $0xbc] sm:$0x1]
        %v4613 = vld [vmem:[%s4532 + $0xe0] sm:$0x1]
        %v4614 = vld [vmem:[%s4532 + $0xec] sm:$0x1]
        %v4615 = vld [vmem:[%s4532 + $0xf8] sm:$0x1]
        %v4616 = vld [vmem:[%s4532 + $0x104] sm:$0x1]
        %v4617 = vld [vmem:[%s4532 + $0x110] sm:$0x1]
        %v4618 = vld [vmem:[%s4532 + $0x11c] sm:$0x1]
        %v4619 = vld [vmem:[%s4532 + $0x128] sm:$0x1]
        %v4620 = vld [vmem:[%s4532 + $0x134] sm:$0x1]
        %v4621 = vld [vmem:[%s4532 + $0x140] sm:$0x1]
        %v4622 = vld [vmem:[%s4532 + $0x14c] sm:$0x1]
        %v4623 = vld [vmem:[%s4532 + $0x158] sm:$0x1]
        %v4624 = vld [vmem:[%s4532 + $0x164] sm:$0x1]
        %v4625 = vld [vmem:[%s4532 + $0x170] sm:$0x1]
        %v4626 = vld [vmem:[%s4532 + $0x17c] sm:$0x1]
        %v4627 = vld [vmem:[%s4532 + $0x188] sm:$0x1]
        %v4628 = vld [vmem:[%s4532 + $0x194] sm:$0x1]
        %v4630 = vshrl.u32 %v4533, 16
        %v4632 = vrot.slane %v4630, 4
        %v4633 = vshll.u32 %v4533, 16
        %v4635 = vrot.slane %v4633, 5
        %v4636 = vor.u32 %v4632, %v4635
        %v4637 = vrot.slane %v4636, 4
        %v4639 = vshll.u32 %v4534, 16
        %v4641 = vrot.slane %v4639, 5
        %v4642 = vsel %vm2192, %v4637, %v4641
        %v4643 = vshrl.u32 %v4534, 16
        %v4645 = vrot.slane %v4643, 4
        %v4646 = vor.u32 %v4645, %v4641
        %v4647 = vrot.slane %v4646, 4
        %v4649 = vshll.u32 %v4597, 16
        %v4651 = vrot.slane %v4649, 5
        %v4652 = vsel %vm2192, %v4647, %v4651
        %v4654 = vshrl.u32 %v4535, 16
        %v4656 = vrot.slane %v4654, 4
        %v4657 = vshll.u32 %v4535, 16
        %v4659 = vrot.slane %v4657, 5
        %v4660 = vor.u32 %v4656, %v4659
        %v4661 = vrot.slane %v4660, 4
        %v4663 = vshll.u32 %v4536, 16
        %v4665 = vrot.slane %v4663, 5
        %v4666 = vsel %vm2192, %v4661, %v4665
        %v4667 = vshrl.u32 %v4536, 16
        %v4669 = vrot.slane %v4667, 4
        %v4670 = vor.u32 %v4669, %v4665
        %v4671 = vrot.slane %v4670, 4
        %v4673 = vshll.u32 %v4598, 16
        %v4675 = vrot.slane %v4673, 5
        %v4676 = vsel %vm2192, %v4671, %v4675
        %v4678 = vshrl.u32 %v4537, 16
        %v4680 = vrot.slane %v4678, 4
        %v4681 = vshll.u32 %v4537, 16
        %v4683 = vrot.slane %v4681, 5
        %v4684 = vor.u32 %v4680, %v4683
        %v4685 = vrot.slane %v4684, 4
        %v4687 = vshll.u32 %v4538, 16
        %v4689 = vrot.slane %v4687, 5
        %v4690 = vsel %vm2192, %v4685, %v4689
        %v4691 = vshrl.u32 %v4538, 16
        %v4693 = vrot.slane %v4691, 4
        %v4694 = vor.u32 %v4693, %v4689
        %v4695 = vrot.slane %v4694, 4
        %v4697 = vshll.u32 %v4599, 16
        %v4699 = vrot.slane %v4697, 5
        %v4700 = vsel %vm2192, %v4695, %v4699
        %v4702 = vshrl.u32 %v4539, 16
        %v4704 = vrot.slane %v4702, 4
        %v4705 = vshll.u32 %v4539, 16
        %v4707 = vrot.slane %v4705, 5
        %v4708 = vor.u32 %v4704, %v4707
        %v4709 = vrot.slane %v4708, 4
        %v4711 = vshll.u32 %v4540, 16
        %v4713 = vrot.slane %v4711, 5
        %v4714 = vsel %vm2192, %v4709, %v4713
        %v4715 = vshrl.u32 %v4540, 16
        %v4717 = vrot.slane %v4715, 4
        %v4718 = vor.u32 %v4717, %v4713
        %v4719 = vrot.slane %v4718, 4
        %v4721 = vshll.u32 %v4600, 16
        %v4723 = vrot.slane %v4721, 5
        %v4724 = vsel %vm2192, %v4719, %v4723
        %v4726 = vshrl.u32 %v4541, 16
        %v4728 = vrot.slane %v4726, 4
        %v4729 = vshll.u32 %v4541, 16
        %v4731 = vrot.slane %v4729, 5
        %v4732 = vor.u32 %v4728, %v4731
        %v4733 = vrot.slane %v4732, 4
        %v4735 = vshll.u32 %v4542, 16
        %v4737 = vrot.slane %v4735, 5
        %v4738 = vsel %vm2192, %v4733, %v4737
        %v4739 = vshrl.u32 %v4542, 16
        %v4741 = vrot.slane %v4739, 4
        %v4742 = vor.u32 %v4741, %v4737
        %v4743 = vrot.slane %v4742, 4
        %v4745 = vshll.u32 %v4601, 16
        %v4747 = vrot.slane %v4745, 5
        %v4748 = vsel %vm2192, %v4743, %v4747
        %v4750 = vshrl.u32 %v4543, 16
        %v4752 = vrot.slane %v4750, 4
        %v4753 = vshll.u32 %v4543, 16
        %v4755 = vrot.slane %v4753, 5
        %v4756 = vor.u32 %v4752, %v4755
        %v4757 = vrot.slane %v4756, 4
        %v4759 = vshll.u32 %v4544, 16
        %v4761 = vrot.slane %v4759, 5
        %v4762 = vsel %vm2192, %v4757, %v4761
        %v4763 = vshrl.u32 %v4544, 16
        %v4765 = vrot.slane %v4763, 4
        %v4766 = vor.u32 %v4765, %v4761
        %v4767 = vrot.slane %v4766, 4
        %v4769 = vshll.u32 %v4602, 16
        %v4771 = vrot.slane %v4769, 5
        %v4772 = vsel %vm2192, %v4767, %v4771
        %v4774 = vshrl.u32 %v4545, 16
        %v4776 = vrot.slane %v4774, 4
        %v4777 = vshll.u32 %v4545, 16
        %v4779 = vrot.slane %v4777, 5
        %v4780 = vor.u32 %v4776, %v4779
        %v4781 = vrot.slane %v4780, 4
        %v4783 = vshll.u32 %v4546, 16
        %v4785 = vrot.slane %v4783, 5
        %v4786 = vsel %vm2192, %v4781, %v4785
        %v4787 = vshrl.u32 %v4546, 16
        %v4789 = vrot.slane %v4787, 4
        %v4790 = vor.u32 %v4789, %v4785
        %v4791 = vrot.slane %v4790, 4
        %v4793 = vshll.u32 %v4603, 16
        %v4795 = vrot.slane %v4793, 5
        %v4796 = vsel %vm2192, %v4791, %v4795
        %v4798 = vshrl.u32 %v4547, 16
        %v4800 = vrot.slane %v4798, 4
        %v4801 = vshll.u32 %v4547, 16
        %v4803 = vrot.slane %v4801, 5
        %v4804 = vor.u32 %v4800, %v4803
        %v4805 = vrot.slane %v4804, 4
        %v4807 = vshll.u32 %v4548, 16
        %v4809 = vrot.slane %v4807, 5
        %v4810 = vsel %vm2192, %v4805, %v4809
        %v4811 = vshrl.u32 %v4548, 16
        %v4813 = vrot.slane %v4811, 4
        %v4814 = vor.u32 %v4813, %v4809
        %v4815 = vrot.slane %v4814, 4
        %v4817 = vshll.u32 %v4604, 16
        %v4819 = vrot.slane %v4817, 5
        %v4820 = vsel %vm2192, %v4815, %v4819
        %v4822 = vshrl.u32 %v4549, 16
        %v4824 = vrot.slane %v4822, 4
        %v4825 = vshll.u32 %v4549, 16
        %v4827 = vrot.slane %v4825, 5
        %v4828 = vor.u32 %v4824, %v4827
        %v4829 = vrot.slane %v4828, 4
        %v4831 = vshll.u32 %v4550, 16
        %v4833 = vrot.slane %v4831, 5
        %v4834 = vsel %vm2192, %v4829, %v4833
        %v4835 = vshrl.u32 %v4550, 16
        %v4837 = vrot.slane %v4835, 4
        %v4838 = vor.u32 %v4837, %v4833
        %v4839 = vrot.slane %v4838, 4
        %v4841 = vshll.u32 %v4605, 16
        %v4843 = vrot.slane %v4841, 5
        %v4844 = vsel %vm2192, %v4839, %v4843
        %v4846 = vshrl.u32 %v4551, 16
        %v4848 = vrot.slane %v4846, 4
        %v4849 = vshll.u32 %v4551, 16
        %v4851 = vrot.slane %v4849, 5
        %v4852 = vor.u32 %v4848, %v4851
        %v4853 = vrot.slane %v4852, 4
        %v4855 = vshll.u32 %v4552, 16
        %v4857 = vrot.slane %v4855, 5
        %v4858 = vsel %vm2192, %v4853, %v4857
        %v4859 = vshrl.u32 %v4552, 16
        %v4861 = vrot.slane %v4859, 4
        %v4862 = vor.u32 %v4861, %v4857
        %v4863 = vrot.slane %v4862, 4
        %v4865 = vshll.u32 %v4606, 16
        %v4867 = vrot.slane %v4865, 5
        %v4868 = vsel %vm2192, %v4863, %v4867
        %v4870 = vshrl.u32 %v4553, 16
        %v4872 = vrot.slane %v4870, 4
        %v4873 = vshll.u32 %v4553, 16
        %v4875 = vrot.slane %v4873, 5
        %v4876 = vor.u32 %v4872, %v4875
        %v4877 = vrot.slane %v4876, 4
        %v4879 = vshll.u32 %v4554, 16
        %v4881 = vrot.slane %v4879, 5
        %v4882 = vsel %vm2192, %v4877, %v4881
        %v4883 = vshrl.u32 %v4554, 16
        %v4885 = vrot.slane %v4883, 4
        %v4886 = vor.u32 %v4885, %v4881
        %v4887 = vrot.slane %v4886, 4
        %v4889 = vshll.u32 %v4607, 16
        %v4891 = vrot.slane %v4889, 5
        %v4892 = vsel %vm2192, %v4887, %v4891
        %v4894 = vshrl.u32 %v4555, 16
        %v4896 = vrot.slane %v4894, 4
        %v4897 = vshll.u32 %v4555, 16
        %v4899 = vrot.slane %v4897, 5
        %v4900 = vor.u32 %v4896, %v4899
        %v4901 = vrot.slane %v4900, 4
        %v4903 = vshll.u32 %v4556, 16
        %v4905 = vrot.slane %v4903, 5
        %v4906 = vsel %vm2192, %v4901, %v4905
        %v4907 = vshrl.u32 %v4556, 16
        %v4909 = vrot.slane %v4907, 4
        %v4910 = vor.u32 %v4909, %v4905
        %v4911 = vrot.slane %v4910, 4
        %v4913 = vshll.u32 %v4608, 16
        %v4915 = vrot.slane %v4913, 5
        %v4916 = vsel %vm2192, %v4911, %v4915
        %v4918 = vshrl.u32 %v4557, 16
        %v4920 = vrot.slane %v4918, 4
        %v4921 = vshll.u32 %v4557, 16
        %v4923 = vrot.slane %v4921, 5
        %v4924 = vor.u32 %v4920, %v4923
        %v4925 = vrot.slane %v4924, 4
        %v4927 = vshll.u32 %v4558, 16
        %v4929 = vrot.slane %v4927, 5
        %v4930 = vsel %vm2192, %v4925, %v4929
        %v4931 = vshrl.u32 %v4558, 16
        %v4933 = vrot.slane %v4931, 4
        %v4934 = vor.u32 %v4933, %v4929
        %v4935 = vrot.slane %v4934, 4
        %v4937 = vshll.u32 %v4609, 16
        %v4939 = vrot.slane %v4937, 5
        %v4940 = vsel %vm2192, %v4935, %v4939
        %v4942 = vshrl.u32 %v4559, 16
        %v4944 = vrot.slane %v4942, 4
        %v4945 = vshll.u32 %v4559, 16
        %v4947 = vrot.slane %v4945, 5
        %v4948 = vor.u32 %v4944, %v4947
        %v4949 = vrot.slane %v4948, 4
        %v4951 = vshll.u32 %v4560, 16
        %v4953 = vrot.slane %v4951, 5
        %v4954 = vsel %vm2192, %v4949, %v4953
        %v4955 = vshrl.u32 %v4560, 16
        %v4957 = vrot.slane %v4955, 4
        %v4958 = vor.u32 %v4957, %v4953
        %v4959 = vrot.slane %v4958, 4
        %v4961 = vshll.u32 %v4610, 16
        %v4963 = vrot.slane %v4961, 5
        %v4964 = vsel %vm2192, %v4959, %v4963
        %v4966 = vshrl.u32 %v4561, 16
        %v4968 = vrot.slane %v4966, 4
        %v4969 = vshll.u32 %v4561, 16
        %v4971 = vrot.slane %v4969, 5
        %v4972 = vor.u32 %v4968, %v4971
        %v4973 = vrot.slane %v4972, 4
        %v4975 = vshll.u32 %v4562, 16
        %v4977 = vrot.slane %v4975, 5
        %v4978 = vsel %vm2192, %v4973, %v4977
        %v4979 = vshrl.u32 %v4562, 16
        %v4981 = vrot.slane %v4979, 4
        %v4982 = vor.u32 %v4981, %v4977
        %v4983 = vrot.slane %v4982, 4
        %v4985 = vshll.u32 %v4611, 16
        %v4987 = vrot.slane %v4985, 5
        %v4988 = vsel %vm2192, %v4983, %v4987
        %v4990 = vshrl.u32 %v4563, 16
        %v4992 = vrot.slane %v4990, 4
        %v4993 = vshll.u32 %v4563, 16
        %v4995 = vrot.slane %v4993, 5
        %v4996 = vor.u32 %v4992, %v4995
        %v4997 = vrot.slane %v4996, 4
        %v4999 = vshll.u32 %v4564, 16
        %v5001 = vrot.slane %v4999, 5
        %v5002 = vsel %vm2192, %v4997, %v5001
        %v5003 = vshrl.u32 %v4564, 16
        %v5005 = vrot.slane %v5003, 4
        %v5006 = vor.u32 %v5005, %v5001
        %v5007 = vrot.slane %v5006, 4
        %v5009 = vshll.u32 %v4612, 16
        %v5011 = vrot.slane %v5009, 5
        %v5012 = vsel %vm2192, %v5007, %v5011
        %v5014 = vshrl.u32 %v4565, 16
        %v5016 = vrot.slane %v5014, 4
        %v5017 = vshll.u32 %v4565, 16
        %v5019 = vrot.slane %v5017, 5
        %v5020 = vor.u32 %v5016, %v5019
        %v5021 = vrot.slane %v5020, 4
        %v5023 = vshll.u32 %v4566, 16
        %v5025 = vrot.slane %v5023, 5
        %v5026 = vsel %vm2192, %v5021, %v5025
        %v5027 = vshrl.u32 %v4566, 16
        %v5029 = vrot.slane %v5027, 4
        %v5030 = vor.u32 %v5029, %v5025
        %v5031 = vrot.slane %v5030, 4
        %v5033 = vshll.u32 %v4613, 16
        %v5035 = vrot.slane %v5033, 5
        %v5036 = vsel %vm2192, %v5031, %v5035
        %v5038 = vshrl.u32 %v4567, 16
        %v5040 = vrot.slane %v5038, 4
        %v5041 = vshll.u32 %v4567, 16
        %v5043 = vrot.slane %v5041, 5
        %v5044 = vor.u32 %v5040, %v5043
        %v5045 = vrot.slane %v5044, 4
        %v5047 = vshll.u32 %v4568, 16
        %v5049 = vrot.slane %v5047, 5
        %v5050 = vsel %vm2192, %v5045, %v5049
        %v5051 = vshrl.u32 %v4568, 16
        %v5053 = vrot.slane %v5051, 4
        %v5054 = vor.u32 %v5053, %v5049
        %v5055 = vrot.slane %v5054, 4
        %v5057 = vshll.u32 %v4614, 16
        %v5059 = vrot.slane %v5057, 5
        %v5060 = vsel %vm2192, %v5055, %v5059
        %v5062 = vshrl.u32 %v4569, 16
        %v5064 = vrot.slane %v5062, 4
        %v5065 = vshll.u32 %v4569, 16
        %v5067 = vrot.slane %v5065, 5
        %v5068 = vor.u32 %v5064, %v5067
        %v5069 = vrot.slane %v5068, 4
        %v5071 = vshll.u32 %v4570, 16
        %v5073 = vrot.slane %v5071, 5
        %v5074 = vsel %vm2192, %v5069, %v5073
        %v5075 = vshrl.u32 %v4570, 16
        %v5077 = vrot.slane %v5075, 4
        %v5078 = vor.u32 %v5077, %v5073
        %v5079 = vrot.slane %v5078, 4
        %v5081 = vshll.u32 %v4615, 16
        %v5083 = vrot.slane %v5081, 5
        %v5084 = vsel %vm2192, %v5079, %v5083
        %v5086 = vshrl.u32 %v4571, 16
        %v5088 = vrot.slane %v5086, 4
        %v5089 = vshll.u32 %v4571, 16
        %v5091 = vrot.slane %v5089, 5
        %v5092 = vor.u32 %v5088, %v5091
        %v5093 = vrot.slane %v5092, 4
        %v5095 = vshll.u32 %v4572, 16
        %v5097 = vrot.slane %v5095, 5
        %v5098 = vsel %vm2192, %v5093, %v5097
        %v5099 = vshrl.u32 %v4572, 16
        %v5101 = vrot.slane %v5099, 4
        %v5102 = vor.u32 %v5101, %v5097
        %v5103 = vrot.slane %v5102, 4
        %v5105 = vshll.u32 %v4616, 16
        %v5107 = vrot.slane %v5105, 5
        %v5108 = vsel %vm2192, %v5103, %v5107
        %v5110 = vshrl.u32 %v4573, 16
        %v5112 = vrot.slane %v5110, 4
        %v5113 = vshll.u32 %v4573, 16
        %v5115 = vrot.slane %v5113, 5
        %v5116 = vor.u32 %v5112, %v5115
        %v5117 = vrot.slane %v5116, 4
        %v5119 = vshll.u32 %v4574, 16
        %v5121 = vrot.slane %v5119, 5
        %v5122 = vsel %vm2192, %v5117, %v5121
        %v5123 = vshrl.u32 %v4574, 16
        %v5125 = vrot.slane %v5123, 4
        %v5126 = vor.u32 %v5125, %v5121
        %v5127 = vrot.slane %v5126, 4
        %v5129 = vshll.u32 %v4617, 16
        %v5131 = vrot.slane %v5129, 5
        %v5132 = vsel %vm2192, %v5127, %v5131
        %v5134 = vshrl.u32 %v4575, 16
        %v5136 = vrot.slane %v5134, 4
        %v5137 = vshll.u32 %v4575, 16
        %v5139 = vrot.slane %v5137, 5
        %v5140 = vor.u32 %v5136, %v5139
        %v5141 = vrot.slane %v5140, 4
        %v5143 = vshll.u32 %v4576, 16
        %v5145 = vrot.slane %v5143, 5
        %v5146 = vsel %vm2192, %v5141, %v5145
        %v5147 = vshrl.u32 %v4576, 16
        %v5149 = vrot.slane %v5147, 4
        %v5150 = vor.u32 %v5149, %v5145
        %v5151 = vrot.slane %v5150, 4
        %v5153 = vshll.u32 %v4618, 16
        %v5155 = vrot.slane %v5153, 5
        %v5156 = vsel %vm2192, %v5151, %v5155
        %v5158 = vshrl.u32 %v4577, 16
        %v5160 = vrot.slane %v5158, 4
        %v5161 = vshll.u32 %v4577, 16
        %v5163 = vrot.slane %v5161, 5
        %v5164 = vor.u32 %v5160, %v5163
        %v5165 = vrot.slane %v5164, 4
        %v5167 = vshll.u32 %v4578, 16
        %v5169 = vrot.slane %v5167, 5
        %v5170 = vsel %vm2192, %v5165, %v5169
        %v5171 = vshrl.u32 %v4578, 16
        %v5173 = vrot.slane %v5171, 4
        %v5174 = vor.u32 %v5173, %v5169
        %v5175 = vrot.slane %v5174, 4
        %v5177 = vshll.u32 %v4619, 16
        %v5179 = vrot.slane %v5177, 5
        %v5180 = vsel %vm2192, %v5175, %v5179
        %v5182 = vshrl.u32 %v4579, 16
        %v5184 = vrot.slane %v5182, 4
        %v5185 = vshll.u32 %v4579, 16
        %v5187 = vrot.slane %v5185, 5
        %v5188 = vor.u32 %v5184, %v5187
        %v5189 = vrot.slane %v5188, 4
        %v5191 = vshll.u32 %v4580, 16
        %v5193 = vrot.slane %v5191, 5
        %v5194 = vsel %vm2192, %v5189, %v5193
        %v5195 = vshrl.u32 %v4580, 16
        %v5197 = vrot.slane %v5195, 4
        %v5198 = vor.u32 %v5197, %v5193
        %v5199 = vrot.slane %v5198, 4
        %v5201 = vshll.u32 %v4620, 16
        %v5203 = vrot.slane %v5201, 5
        %v5204 = vsel %vm2192, %v5199, %v5203
        %v5206 = vshrl.u32 %v4581, 16
        %v5208 = vrot.slane %v5206, 4
        %v5209 = vshll.u32 %v4581, 16
        %v5211 = vrot.slane %v5209, 5
        %v5212 = vor.u32 %v5208, %v5211
        %v5213 = vrot.slane %v5212, 4
        %v5215 = vshll.u32 %v4582, 16
        %v5217 = vrot.slane %v5215, 5
        %v5218 = vsel %vm2192, %v5213, %v5217
        %v5219 = vshrl.u32 %v4582, 16
        %v5221 = vrot.slane %v5219, 4
        %v5222 = vor.u32 %v5221, %v5217
        %v5223 = vrot.slane %v5222, 4
        %v5225 = vshll.u32 %v4621, 16
        %v5227 = vrot.slane %v5225, 5
        %v5228 = vsel %vm2192, %v5223, %v5227
        %v5230 = vshrl.u32 %v4583, 16
        %v5232 = vrot.slane %v5230, 4
        %v5233 = vshll.u32 %v4583, 16
        %v5235 = vrot.slane %v5233, 5
        %v5236 = vor.u32 %v5232, %v5235
        %v5237 = vrot.slane %v5236, 4
        %v5239 = vshll.u32 %v4584, 16
        %v5241 = vrot.slane %v5239, 5
        %v5242 = vsel %vm2192, %v5237, %v5241
        %v5243 = vshrl.u32 %v4584, 16
        %v5245 = vrot.slane %v5243, 4
        %v5246 = vor.u32 %v5245, %v5241
        %v5247 = vrot.slane %v5246, 4
        %v5249 = vshll.u32 %v4622, 16
        %v5251 = vrot.slane %v5249, 5
        %v5252 = vsel %vm2192, %v5247, %v5251
        %v5254 = vshrl.u32 %v4585, 16
        %v5256 = vrot.slane %v5254, 4
        %v5257 = vshll.u32 %v4585, 16
        %v5259 = vrot.slane %v5257, 5
        %v5260 = vor.u32 %v5256, %v5259
        %v5261 = vrot.slane %v5260, 4
        %v5263 = vshll.u32 %v4586, 16
        %v5265 = vrot.slane %v5263, 5
        %v5266 = vsel %vm2192, %v5261, %v5265
        %v5267 = vshrl.u32 %v4586, 16
        %v5269 = vrot.slane %v5267, 4
        %v5270 = vor.u32 %v5269, %v5265
        %v5271 = vrot.slane %v5270, 4
        %v5273 = vshll.u32 %v4623, 16
        %v5275 = vrot.slane %v5273, 5
        %v5276 = vsel %vm2192, %v5271, %v5275
        %v5278 = vshrl.u32 %v4587, 16
        %v5280 = vrot.slane %v5278, 4
        %v5281 = vshll.u32 %v4587, 16
        %v5283 = vrot.slane %v5281, 5
        %v5284 = vor.u32 %v5280, %v5283
        %v5285 = vrot.slane %v5284, 4
        %v5287 = vshll.u32 %v4588, 16
        %v5289 = vrot.slane %v5287, 5
        %v5290 = vsel %vm2192, %v5285, %v5289
        %v5291 = vshrl.u32 %v4588, 16
        %v5293 = vrot.slane %v5291, 4
        %v5294 = vor.u32 %v5293, %v5289
        %v5295 = vrot.slane %v5294, 4
        %v5297 = vshll.u32 %v4624, 16
        %v5299 = vrot.slane %v5297, 5
        %v5300 = vsel %vm2192, %v5295, %v5299
        %v5302 = vshrl.u32 %v4589, 16
        %v5304 = vrot.slane %v5302, 4
        %v5305 = vshll.u32 %v4589, 16
        %v5307 = vrot.slane %v5305, 5
        %v5308 = vor.u32 %v5304, %v5307
        %v5309 = vrot.slane %v5308, 4
        %v5311 = vshll.u32 %v4590, 16
        %v5313 = vrot.slane %v5311, 5
        %v5314 = vsel %vm2192, %v5309, %v5313
        %v5315 = vshrl.u32 %v4590, 16
        %v5317 = vrot.slane %v5315, 4
        %v5318 = vor.u32 %v5317, %v5313
        %v5319 = vrot.slane %v5318, 4
        %v5321 = vshll.u32 %v4625, 16
        %v5323 = vrot.slane %v5321, 5
        %v5324 = vsel %vm2192, %v5319, %v5323
        %v5326 = vshrl.u32 %v4591, 16
        %v5328 = vrot.slane %v5326, 4
        %v5329 = vshll.u32 %v4591, 16
        %v5331 = vrot.slane %v5329, 5
        %v5332 = vor.u32 %v5328, %v5331
        %v5333 = vrot.slane %v5332, 4
        %v5335 = vshll.u32 %v4592, 16
        %v5337 = vrot.slane %v5335, 5
        %v5338 = vsel %vm2192, %v5333, %v5337
        %v5339 = vshrl.u32 %v4592, 16
        %v5341 = vrot.slane %v5339, 4
        %v5342 = vor.u32 %v5341, %v5337
        %v5343 = vrot.slane %v5342, 4
        %v5345 = vshll.u32 %v4626, 16
        %v5347 = vrot.slane %v5345, 5
        %v5348 = vsel %vm2192, %v5343, %v5347
        %v5350 = vshrl.u32 %v4593, 16
        %v5352 = vrot.slane %v5350, 4
        %v5353 = vshll.u32 %v4593, 16
        %v5355 = vrot.slane %v5353, 5
        %v5356 = vor.u32 %v5352, %v5355
        %v5357 = vrot.slane %v5356, 4
        %v5359 = vshll.u32 %v4594, 16
        %v5361 = vrot.slane %v5359, 5
        %v5362 = vsel %vm2192, %v5357, %v5361
        %v5363 = vshrl.u32 %v4594, 16
        %v5365 = vrot.slane %v5363, 4
        %v5366 = vor.u32 %v5365, %v5361
        %v5367 = vrot.slane %v5366, 4
        %v5369 = vshll.u32 %v4627, 16
        %v5371 = vrot.slane %v5369, 5
        %v5372 = vsel %vm2192, %v5367, %v5371
        %v5374 = vshrl.u32 %v4595, 16
        %v5376 = vrot.slane %v5374, 4
        %v5377 = vshll.u32 %v4595, 16
        %v5379 = vrot.slane %v5377, 5
        %v5380 = vor.u32 %v5376, %v5379
        %v5381 = vrot.slane %v5380, 4
        %v5383 = vshll.u32 %v4596, 16
        %v5385 = vrot.slane %v5383, 5
        %v5386 = vsel %vm2192, %v5381, %v5385
        %v5387 = vshrl.u32 %v4596, 16
        %v5389 = vrot.slane %v5387, 4
        %v5390 = vor.u32 %v5389, %v5385
        %v5391 = vrot.slane %v5390, 4
        %v5393 = vshll.u32 %v4628, 16
        %v5395 = vrot.slane %v5393, 5
        %v5396 = vsel %vm2192, %v5391, %v5395
        %v5397 = vld [vmem:[%s4532] sm:$0xe]
        %v5398 = vld [vmem:[%s4532 + $0xc] sm:$0xe]
        %v5399 = vld [vmem:[%s4532 + $0x18] sm:$0xe]
        %v5400 = vld [vmem:[%s4532 + $0x24] sm:$0xe]
        %v5401 = vld [vmem:[%s4532 + $0x30] sm:$0xe]
        %v5402 = vld [vmem:[%s4532 + $0x3c] sm:$0xe]
        %v5403 = vld [vmem:[%s4532 + $0x48] sm:$0xe]
        %v5404 = vld [vmem:[%s4532 + $0x54] sm:$0xe]
        %v5405 = vld [vmem:[%s4532 + $0x60] sm:$0xe]
        %v5406 = vld [vmem:[%s4532 + $0x6c] sm:$0xe]
        %v5407 = vld [vmem:[%s4532 + $0x78] sm:$0xe]
        %v5408 = vld [vmem:[%s4532 + $0x84] sm:$0xe]
        %v5409 = vld [vmem:[%s4532 + $0x90] sm:$0xe]
        %v5410 = vld [vmem:[%s4532 + $0x9c] sm:$0xe]
        %v5411 = vld [vmem:[%s4532 + $0xa8] sm:$0xe]
        %v5412 = vld [vmem:[%s4532 + $0xb4] sm:$0xe]
        %v5413 = vld [vmem:[%s4532 + $0xd8] sm:$0xe]
        %v5414 = vld [vmem:[%s4532 + $0xe4] sm:$0xe]
        %v5415 = vld [vmem:[%s4532 + $0xf0] sm:$0xe]
        %v5416 = vld [vmem:[%s4532 + $0xfc] sm:$0xe]
        %v5417 = vld [vmem:[%s4532 + $0x108] sm:$0xe]
        %v5418 = vld [vmem:[%s4532 + $0x114] sm:$0xe]
        %v5419 = vld [vmem:[%s4532 + $0x120] sm:$0xe]
        %v5420 = vld [vmem:[%s4532 + $0x12c] sm:$0xe]
        %v5421 = vld [vmem:[%s4532 + $0x138] sm:$0xe]
        %v5422 = vld [vmem:[%s4532 + $0x144] sm:$0xe]
        %v5423 = vld [vmem:[%s4532 + $0x150] sm:$0xe]
        %v5424 = vld [vmem:[%s4532 + $0x15c] sm:$0xe]
        %v5425 = vld [vmem:[%s4532 + $0x168] sm:$0xe]
        %v5426 = vld [vmem:[%s4532 + $0x174] sm:$0xe]
        %v5427 = vld [vmem:[%s4532 + $0x180] sm:$0xe]
        %v5428 = vld [vmem:[%s4532 + $0x18c] sm:$0xe]
        %v5525 = vrot.slane %v5397, 5
        %v5526 = vrot.slane %v5525, 4
        %v5527 = vrot.slane %v4534, 5
        %v5528 = vsel %vm3091, %v5526, %v5527
        %v5529 = vrot.slane %v5527, 4
        %v5530 = vrot.slane %v4597, 5
        %v5531 = vsel %vm3091, %v5529, %v5530
        %v5532 = vrot.slane %v5398, 5
        %v5533 = vrot.slane %v5532, 4
        %v5534 = vrot.slane %v4536, 5
        %v5535 = vsel %vm3091, %v5533, %v5534
        %v5536 = vrot.slane %v5534, 4
        %v5537 = vrot.slane %v4598, 5
        %v5538 = vsel %vm3091, %v5536, %v5537
        %v5539 = vrot.slane %v5399, 5
        %v5540 = vrot.slane %v5539, 4
        %v5541 = vrot.slane %v4538, 5
        %v5542 = vsel %vm3091, %v5540, %v5541
        %v5543 = vrot.slane %v5541, 4
        %v5544 = vrot.slane %v4599, 5
        %v5545 = vsel %vm3091, %v5543, %v5544
        %v5546 = vrot.slane %v5400, 5
        %v5547 = vrot.slane %v5546, 4
        %v5548 = vrot.slane %v4540, 5
        %v5549 = vsel %vm3091, %v5547, %v5548
        %v5550 = vrot.slane %v5548, 4
        %v5551 = vrot.slane %v4600, 5
        %v5552 = vsel %vm3091, %v5550, %v5551
        %v5553 = vrot.slane %v5401, 5
        %v5554 = vrot.slane %v5553, 4
        %v5555 = vrot.slane %v4542, 5
        %v5556 = vsel %vm3091, %v5554, %v5555
        %v5557 = vrot.slane %v5555, 4
        %v5558 = vrot.slane %v4601, 5
        %v5559 = vsel %vm3091, %v5557, %v5558
        %v5560 = vrot.slane %v5402, 5
        %v5561 = vrot.slane %v5560, 4
        %v5562 = vrot.slane %v4544, 5
        %v5563 = vsel %vm3091, %v5561, %v5562
        %v5564 = vrot.slane %v5562, 4
        %v5565 = vrot.slane %v4602, 5
        %v5566 = vsel %vm3091, %v5564, %v5565
        %v5567 = vrot.slane %v5403, 5
        %v5568 = vrot.slane %v5567, 4
        %v5569 = vrot.slane %v4546, 5
        %v5570 = vsel %vm3091, %v5568, %v5569
        %v5571 = vrot.slane %v5569, 4
        %v5572 = vrot.slane %v4603, 5
        %v5573 = vsel %vm3091, %v5571, %v5572
        %v5574 = vrot.slane %v5404, 5
        %v5575 = vrot.slane %v5574, 4
        %v5576 = vrot.slane %v4548, 5
        %v5577 = vsel %vm3091, %v5575, %v5576
        %v5578 = vrot.slane %v5576, 4
        %v5579 = vrot.slane %v4604, 5
        %v5580 = vsel %vm3091, %v5578, %v5579
        %v5581 = vrot.slane %v5405, 5
        %v5582 = vrot.slane %v5581, 4
        %v5583 = vrot.slane %v4550, 5
        %v5584 = vsel %vm3091, %v5582, %v5583
        %v5585 = vrot.slane %v5583, 4
        %v5586 = vrot.slane %v4605, 5
        %v5587 = vsel %vm3091, %v5585, %v5586
        %v5588 = vrot.slane %v5406, 5
        %v5589 = vrot.slane %v5588, 4
        %v5590 = vrot.slane %v4552, 5
        %v5591 = vsel %vm3091, %v5589, %v5590
        %v5592 = vrot.slane %v5590, 4
        %v5593 = vrot.slane %v4606, 5
        %v5594 = vsel %vm3091, %v5592, %v5593
        %v5595 = vrot.slane %v5407, 5
        %v5596 = vrot.slane %v5595, 4
        %v5597 = vrot.slane %v4554, 5
        %v5598 = vsel %vm3091, %v5596, %v5597
        %v5599 = vrot.slane %v5597, 4
        %v5600 = vrot.slane %v4607, 5
        %v5601 = vsel %vm3091, %v5599, %v5600
        %v5602 = vrot.slane %v5408, 5
        %v5603 = vrot.slane %v5602, 4
        %v5604 = vrot.slane %v4556, 5
        %v5605 = vsel %vm3091, %v5603, %v5604
        %v5606 = vrot.slane %v5604, 4
        %v5607 = vrot.slane %v4608, 5
        %v5608 = vsel %vm3091, %v5606, %v5607
        %v5609 = vrot.slane %v5409, 5
        %v5610 = vrot.slane %v5609, 4
        %v5611 = vrot.slane %v4558, 5
        %v5612 = vsel %vm3091, %v5610, %v5611
        %v5613 = vrot.slane %v5611, 4
        %v5614 = vrot.slane %v4609, 5
        %v5615 = vsel %vm3091, %v5613, %v5614
        %v5616 = vrot.slane %v5410, 5
        %v5617 = vrot.slane %v5616, 4
        %v5618 = vrot.slane %v4560, 5
        %v5619 = vsel %vm3091, %v5617, %v5618
        %v5620 = vrot.slane %v5618, 4
        %v5621 = vrot.slane %v4610, 5
        %v5622 = vsel %vm3091, %v5620, %v5621
        %v5623 = vrot.slane %v5411, 5
        %v5624 = vrot.slane %v5623, 4
        %v5625 = vrot.slane %v4562, 5
        %v5626 = vsel %vm3091, %v5624, %v5625
        %v5627 = vrot.slane %v5625, 4
        %v5628 = vrot.slane %v4611, 5
        %v5629 = vsel %vm3091, %v5627, %v5628
        %v5630 = vrot.slane %v5412, 5
        %v5631 = vrot.slane %v5630, 4
        %v5632 = vrot.slane %v4564, 5
        %v5633 = vsel %vm3091, %v5631, %v5632
        %v5634 = vrot.slane %v5632, 4
        %v5635 = vrot.slane %v4612, 5
        %v5636 = vsel %vm3091, %v5634, %v5635
        %v5637 = vrot.slane %v5413, 5
        %v5638 = vrot.slane %v5637, 4
        %v5639 = vrot.slane %v4566, 5
        %v5640 = vsel %vm3091, %v5638, %v5639
        %v5641 = vrot.slane %v5639, 4
        %v5642 = vrot.slane %v4613, 5
        %v5643 = vsel %vm3091, %v5641, %v5642
        %v5644 = vrot.slane %v5414, 5
        %v5645 = vrot.slane %v5644, 4
        %v5646 = vrot.slane %v4568, 5
        %v5647 = vsel %vm3091, %v5645, %v5646
        %v5648 = vrot.slane %v5646, 4
        %v5649 = vrot.slane %v4614, 5
        %v5650 = vsel %vm3091, %v5648, %v5649
        %v5651 = vrot.slane %v5415, 5
        %v5652 = vrot.slane %v5651, 4
        %v5653 = vrot.slane %v4570, 5
        %v5654 = vsel %vm3091, %v5652, %v5653
        %v5655 = vrot.slane %v5653, 4
        %v5656 = vrot.slane %v4615, 5
        %v5657 = vsel %vm3091, %v5655, %v5656
        %v5658 = vrot.slane %v5416, 5
        %v5659 = vrot.slane %v5658, 4
        %v5660 = vrot.slane %v4572, 5
        %v5661 = vsel %vm3091, %v5659, %v5660
        %v5662 = vrot.slane %v5660, 4
        %v5663 = vrot.slane %v4616, 5
        %v5664 = vsel %vm3091, %v5662, %v5663
        %v5665 = vrot.slane %v5417, 5
        %v5666 = vrot.slane %v5665, 4
        %v5667 = vrot.slane %v4574, 5
        %v5668 = vsel %vm3091, %v5666, %v5667
        %v5669 = vrot.slane %v5667, 4
        %v5670 = vrot.slane %v4617, 5
        %v5671 = vsel %vm3091, %v5669, %v5670
        %v5672 = vrot.slane %v5418, 5
        %v5673 = vrot.slane %v5672, 4
        %v5674 = vrot.slane %v4576, 5
        %v5675 = vsel %vm3091, %v5673, %v5674
        %v5676 = vrot.slane %v5674, 4
        %v5677 = vrot.slane %v4618, 5
        %v5678 = vsel %vm3091, %v5676, %v5677
        %v5679 = vrot.slane %v5419, 5
        %v5680 = vrot.slane %v5679, 4
        %v5681 = vrot.slane %v4578, 5
        %v5682 = vsel %vm3091, %v5680, %v5681
        %v5683 = vrot.slane %v5681, 4
        %v5684 = vrot.slane %v4619, 5
        %v5685 = vsel %vm3091, %v5683, %v5684
        %v5686 = vrot.slane %v5420, 5
        %v5687 = vrot.slane %v5686, 4
        %v5688 = vrot.slane %v4580, 5
        %v5689 = vsel %vm3091, %v5687, %v5688
        %v5690 = vrot.slane %v5688, 4
        %v5691 = vrot.slane %v4620, 5
        %v5692 = vsel %vm3091, %v5690, %v5691
        %v5693 = vrot.slane %v5421, 5
        %v5694 = vrot.slane %v5693, 4
        %v5695 = vrot.slane %v4582, 5
        %v5696 = vsel %vm3091, %v5694, %v5695
        %v5697 = vrot.slane %v5695, 4
        %v5698 = vrot.slane %v4621, 5
        %v5699 = vsel %vm3091, %v5697, %v5698
        %v5700 = vrot.slane %v5422, 5
        %v5701 = vrot.slane %v5700, 4
        %v5702 = vrot.slane %v4584, 5
        %v5703 = vsel %vm3091, %v5701, %v5702
        %v5704 = vrot.slane %v5702, 4
        %v5705 = vrot.slane %v4622, 5
        %v5706 = vsel %vm3091, %v5704, %v5705
        %v5707 = vrot.slane %v5423, 5
        %v5708 = vrot.slane %v5707, 4
        %v5709 = vrot.slane %v4586, 5
        %v5710 = vsel %vm3091, %v5708, %v5709
        %v5711 = vrot.slane %v5709, 4
        %v5712 = vrot.slane %v4623, 5
        %v5713 = vsel %vm3091, %v5711, %v5712
        %v5714 = vrot.slane %v5424, 5
        %v5715 = vrot.slane %v5714, 4
        %v5716 = vrot.slane %v4588, 5
        %v5717 = vsel %vm3091, %v5715, %v5716
        %v5718 = vrot.slane %v5716, 4
        %v5719 = vrot.slane %v4624, 5
        %v5720 = vsel %vm3091, %v5718, %v5719
        %v5721 = vrot.slane %v5425, 5
        %v5722 = vrot.slane %v5721, 4
        %v5723 = vrot.slane %v4590, 5
        %v5724 = vsel %vm3091, %v5722, %v5723
        %v5725 = vrot.slane %v5723, 4
        %v5726 = vrot.slane %v4625, 5
        %v5727 = vsel %vm3091, %v5725, %v5726
        %v5728 = vrot.slane %v5426, 5
        %v5729 = vrot.slane %v5728, 4
        %v5730 = vrot.slane %v4592, 5
        %v5731 = vsel %vm3091, %v5729, %v5730
        %v5732 = vrot.slane %v5730, 4
        %v5733 = vrot.slane %v4626, 5
        %v5734 = vsel %vm3091, %v5732, %v5733
        %v5735 = vrot.slane %v5427, 5
        %v5736 = vrot.slane %v5735, 4
        %v5737 = vrot.slane %v4594, 5
        %v5738 = vsel %vm3091, %v5736, %v5737
        %v5739 = vrot.slane %v5737, 4
        %v5740 = vrot.slane %v4627, 5
        %v5741 = vsel %vm3091, %v5739, %v5740
        %v5742 = vrot.slane %v5428, 5
        %v5743 = vrot.slane %v5742, 4
        %v5744 = vrot.slane %v4596, 5
        %v5745 = vsel %vm3091, %v5743, %v5744
        %v5746 = vrot.slane %v5744, 4
        %v5747 = vrot.slane %v4628, 5
        %v5748 = vsel %vm3091, %v5746, %v5747
        %v5781 = vunpack.c.l.b16 %v2094
        %v5782 = vunpack.c.l.b16 %v2095
        %v5783 = vunpack.c.l.b16 %v2096
        %v5784 = vunpack.c.l.b16 %v2097
        %v5785 = vunpack.c.l.b16 %v2098
        %v5786 = vunpack.c.l.b16 %v2099
        %v5787 = vunpack.c.l.b16 %v2100
        %v5788 = vunpack.c.l.b16 %v2101
        %v5789 = vunpack.c.l.b16 %v2102
        %v5790 = vunpack.c.l.b16 %v2103
        %v5791 = vunpack.c.l.b16 %v2104
        %v5792 = vunpack.c.l.b16 %v2105
        %v5793 = vunpack.c.l.b16 %v2106
        %v5794 = vunpack.c.l.b16 %v2107
        %v5795 = vunpack.c.l.b16 %v2108
        %v5796 = vunpack.c.l.b16 %v2109
        %v5797 = vunpack.c.l.b16 %v2110
        %v5798 = vunpack.c.l.b16 %v2111
        %v5799 = vunpack.c.l.b16 %v2112
        %v5800 = vunpack.c.l.b16 %v2113
        %v5801 = vunpack.c.l.b16 %v2114
        %v5802 = vunpack.c.l.b16 %v2115
        %v5803 = vunpack.c.l.b16 %v2116
        %v5804 = vunpack.c.l.b16 %v2117
        %v5805 = vunpack.c.l.b16 %v2118
        %v5806 = vunpack.c.l.b16 %v2119
        %v5807 = vunpack.c.l.b16 %v2120
        %v5808 = vunpack.c.l.b16 %v2121
        %v5809 = vunpack.c.l.b16 %v2122
        %v5810 = vunpack.c.l.b16 %v2123
        %v5811 = vunpack.c.l.b16 %v2124
        %v5812 = vunpack.c.l.b16 %v2125
        %v5813 = vunpack.c.l.b16 %v2126
        %v5814 = vunpack.c.l.b16 %v2127
        %v5815 = vunpack.c.l.b16 %v2128
        %v5816 = vunpack.c.l.b16 %v2129
        %v5817 = vunpack.c.l.b16 %v2130
        %v5818 = vunpack.c.l.b16 %v2131
        %v5819 = vunpack.c.l.b16 %v2132
        %v5820 = vunpack.c.l.b16 %v2133
        %v5821 = vunpack.c.l.b16 %v2134
        %v5822 = vunpack.c.l.b16 %v2135
        %v5823 = vunpack.c.l.b16 %v2136
        %v5824 = vunpack.c.l.b16 %v2137
        %v5825 = vunpack.c.l.b16 %v2138
        %v5826 = vunpack.c.l.b16 %v2139
        %v5827 = vunpack.c.l.b16 %v2140
        %v5828 = vunpack.c.l.b16 %v2141
        %v5829 = vunpack.c.l.b16 %v2142
        %v5830 = vunpack.c.l.b16 %v2143
        %v5831 = vunpack.c.l.b16 %v2144
        %v5832 = vunpack.c.l.b16 %v2145
        %v5833 = vunpack.c.l.b16 %v2146
        %v5834 = vunpack.c.l.b16 %v2147
        %v5835 = vunpack.c.l.b16 %v2148
        %v5836 = vunpack.c.l.b16 %v2149
        %v5837 = vunpack.c.l.b16 %v2150
        %v5838 = vunpack.c.l.b16 %v2151
        %v5839 = vunpack.c.l.b16 %v2152
        %v5840 = vunpack.c.l.b16 %v2153
        %v5841 = vunpack.c.l.b16 %v2154
        %v5842 = vunpack.c.l.b16 %v2155
        %v5843 = vunpack.c.l.b16 %v2156
        %v5844 = vunpack.c.l.b16 %v2157
        %v5845 = vpack.c.b16 %v5782, %v5781
        %v5846 = vpack.c.b16 %v5784, %v5783
        %v5847 = vpack.c.b16 %v5786, %v5785
        %v5848 = vpack.c.b16 %v5788, %v5787
        %v5849 = vpack.c.b16 %v5790, %v5789
        %v5850 = vpack.c.b16 %v5792, %v5791
        %v5851 = vpack.c.b16 %v5794, %v5793
        %v5852 = vpack.c.b16 %v5796, %v5795
        %v5853 = vpack.c.b16 %v5798, %v5797
        %v5854 = vpack.c.b16 %v5800, %v5799
        %v5855 = vpack.c.b16 %v5802, %v5801
        %v5856 = vpack.c.b16 %v5804, %v5803
        %v5857 = vpack.c.b16 %v5806, %v5805
        %v5858 = vpack.c.b16 %v5808, %v5807
        %v5859 = vpack.c.b16 %v5810, %v5809
        %v5860 = vpack.c.b16 %v5812, %v5811
        %v5861 = vpack.c.b16 %v5814, %v5813
        %v5862 = vpack.c.b16 %v5816, %v5815
        %v5863 = vpack.c.b16 %v5818, %v5817
        %v5864 = vpack.c.b16 %v5820, %v5819
        %v5865 = vpack.c.b16 %v5822, %v5821
        %v5866 = vpack.c.b16 %v5824, %v5823
        %v5867 = vpack.c.b16 %v5826, %v5825
        %v5868 = vpack.c.b16 %v5828, %v5827
        %v5869 = vpack.c.b16 %v5830, %v5829
        %v5870 = vpack.c.b16 %v5832, %v5831
        %v5871 = vpack.c.b16 %v5834, %v5833
        %v5872 = vpack.c.b16 %v5836, %v5835
        %v5873 = vpack.c.b16 %v5838, %v5837
        %v5874 = vpack.c.b16 %v5840, %v5839
        %v5875 = vpack.c.b16 %v5842, %v5841
        %v5876 = vpack.c.b16 %v5844, %v5843
        %v5877 = vunpack.c.l.b16 %v2206
        %v5878 = vunpack.c.l.b16 %v2216
        %v5879 = vunpack.c.l.b16 %v2230
        %v5880 = vunpack.c.l.b16 %v2240
        %v5881 = vunpack.c.l.b16 %v2254
        %v5882 = vunpack.c.l.b16 %v2264
        %v5883 = vunpack.c.l.b16 %v2278
        %v5884 = vunpack.c.l.b16 %v2288
        %v5885 = vunpack.c.l.b16 %v2302
        %v5886 = vunpack.c.l.b16 %v2312
        %v5887 = vunpack.c.l.b16 %v2326
        %v5888 = vunpack.c.l.b16 %v2336
        %v5889 = vunpack.c.l.b16 %v2350
        %v5890 = vunpack.c.l.b16 %v2360
        %v5891 = vunpack.c.l.b16 %v2374
        %v5892 = vunpack.c.l.b16 %v2384
        %v5893 = vunpack.c.l.b16 %v2398
        %v5894 = vunpack.c.l.b16 %v2408
        %v5895 = vunpack.c.l.b16 %v2422
        %v5896 = vunpack.c.l.b16 %v2432
        %v5897 = vunpack.c.l.b16 %v2446
        %v5898 = vunpack.c.l.b16 %v2456
        %v5899 = vunpack.c.l.b16 %v2470
        %v5900 = vunpack.c.l.b16 %v2480
        %v5901 = vunpack.c.l.b16 %v2494
        %v5902 = vunpack.c.l.b16 %v2504
        %v5903 = vunpack.c.l.b16 %v2518
        %v5904 = vunpack.c.l.b16 %v2528
        %v5905 = vunpack.c.l.b16 %v2542
        %v5906 = vunpack.c.l.b16 %v2552
        %v5907 = vunpack.c.l.b16 %v2566
        %v5908 = vunpack.c.l.b16 %v2576
        %v5909 = vunpack.c.l.b16 %v2590
        %v5910 = vunpack.c.l.b16 %v2600
        %v5911 = vunpack.c.l.b16 %v2614
        %v5912 = vunpack.c.l.b16 %v2624
        %v5913 = vunpack.c.l.b16 %v2638
        %v5914 = vunpack.c.l.b16 %v2648
        %v5915 = vunpack.c.l.b16 %v2662
        %v5916 = vunpack.c.l.b16 %v2672
        %v5917 = vunpack.c.l.b16 %v2686
        %v5918 = vunpack.c.l.b16 %v2696
        %v5919 = vunpack.c.l.b16 %v2710
        %v5920 = vunpack.c.l.b16 %v2720
        %v5921 = vunpack.c.l.b16 %v2734
        %v5922 = vunpack.c.l.b16 %v2744
        %v5923 = vunpack.c.l.b16 %v2758
        %v5924 = vunpack.c.l.b16 %v2768
        %v5925 = vunpack.c.l.b16 %v2782
        %v5926 = vunpack.c.l.b16 %v2792
        %v5927 = vunpack.c.l.b16 %v2806
        %v5928 = vunpack.c.l.b16 %v2816
        %v5929 = vunpack.c.l.b16 %v2830
        %v5930 = vunpack.c.l.b16 %v2840
        %v5931 = vunpack.c.l.b16 %v2854
        %v5932 = vunpack.c.l.b16 %v2864
        %v5933 = vunpack.c.l.b16 %v2878
        %v5934 = vunpack.c.l.b16 %v2888
        %v5935 = vunpack.c.l.b16 %v2902
        %v5936 = vunpack.c.l.b16 %v2912
        %v5937 = vunpack.c.l.b16 %v2926
        %v5938 = vunpack.c.l.b16 %v2936
        %v5939 = vunpack.c.l.b16 %v2950
        %v5940 = vunpack.c.l.b16 %v2960
        %v5941 = vpack.c.b16 %v5878, %v5877
        %v5942 = vpack.c.b16 %v5880, %v5879
        %v5943 = vpack.c.b16 %v5882, %v5881
        %v5944 = vpack.c.b16 %v5884, %v5883
        %v5945 = vpack.c.b16 %v5886, %v5885
        %v5946 = vpack.c.b16 %v5888, %v5887
        %v5947 = vpack.c.b16 %v5890, %v5889
        %v5948 = vpack.c.b16 %v5892, %v5891
        %v5949 = vpack.c.b16 %v5894, %v5893
        %v5950 = vpack.c.b16 %v5896, %v5895
        %v5951 = vpack.c.b16 %v5898, %v5897
        %v5952 = vpack.c.b16 %v5900, %v5899
        %v5953 = vpack.c.b16 %v5902, %v5901
        %v5954 = vpack.c.b16 %v5904, %v5903
        %v5955 = vpack.c.b16 %v5906, %v5905
        %v5956 = vpack.c.b16 %v5908, %v5907
        %v5957 = vpack.c.b16 %v5910, %v5909
        %v5958 = vpack.c.b16 %v5912, %v5911
        %v5959 = vpack.c.b16 %v5914, %v5913
        %v5960 = vpack.c.b16 %v5916, %v5915
        %v5961 = vpack.c.b16 %v5918, %v5917
        %v5962 = vpack.c.b16 %v5920, %v5919
        %v5963 = vpack.c.b16 %v5922, %v5921
        %v5964 = vpack.c.b16 %v5924, %v5923
        %v5965 = vpack.c.b16 %v5926, %v5925
        %v5966 = vpack.c.b16 %v5928, %v5927
        %v5967 = vpack.c.b16 %v5930, %v5929
        %v5968 = vpack.c.b16 %v5932, %v5931
        %v5969 = vpack.c.b16 %v5934, %v5933
        %v5970 = vpack.c.b16 %v5936, %v5935
        %v5971 = vpack.c.b16 %v5938, %v5937
        %v5972 = vpack.c.b16 %v5940, %v5939
        %5973 = vrot.lane.b32.xlu0 %v5941, 32
        %v5974 = vpop.permute.xlu0 %5973
        %5975 = vrot.lane.b32.xlu0 %v5942, 32
        %v5976 = vpop.permute.xlu0 %5975
        %5977 = vrot.lane.b32.xlu0 %v5943, 32
        %v5978 = vpop.permute.xlu0 %5977
        %5979 = vrot.lane.b32.xlu0 %v5944, 32
        %v5980 = vpop.permute.xlu0 %5979
        %5981 = vrot.lane.b32.xlu0 %v5945, 32
        %v5982 = vpop.permute.xlu0 %5981
        %5983 = vrot.lane.b32.xlu0 %v5946, 32
        %v5984 = vpop.permute.xlu0 %5983
        %5985 = vrot.lane.b32.xlu0 %v5947, 32
        %v5986 = vpop.permute.xlu0 %5985
        %5987 = vrot.lane.b32.xlu0 %v5948, 32
        %v5988 = vpop.permute.xlu0 %5987
        %5989 = vrot.lane.b32.xlu0 %v5949, 32
        %v5990 = vpop.permute.xlu0 %5989
        %5991 = vrot.lane.b32.xlu0 %v5950, 32
        %v5992 = vpop.permute.xlu0 %5991
        %5993 = vrot.lane.b32.xlu0 %v5951, 32
        %v5994 = vpop.permute.xlu0 %5993
        %5995 = vrot.lane.b32.xlu0 %v5952, 32
        %v5996 = vpop.permute.xlu0 %5995
        %5997 = vrot.lane.b32.xlu0 %v5953, 32
        %v5998 = vpop.permute.xlu0 %5997
        %5999 = vrot.lane.b32.xlu0 %v5954, 32
        %v6000 = vpop.permute.xlu0 %5999
        %6001 = vrot.lane.b32.xlu0 %v5955, 32
        %v6002 = vpop.permute.xlu0 %6001
        %6003 = vrot.lane.b32.xlu0 %v5956, 32
        %v6004 = vpop.permute.xlu0 %6003
        %6005 = vrot.lane.b32.xlu0 %v5957, 32
        %v6006 = vpop.permute.xlu0 %6005
        %6007 = vrot.lane.b32.xlu0 %v5958, 32
        %v6008 = vpop.permute.xlu0 %6007
        %6009 = vrot.lane.b32.xlu0 %v5959, 32
        %v6010 = vpop.permute.xlu0 %6009
        %6011 = vrot.lane.b32.xlu0 %v5960, 32
        %v6012 = vpop.permute.xlu0 %6011
        %6013 = vrot.lane.b32.xlu0 %v5961, 32
        %v6014 = vpop.permute.xlu0 %6013
        %6015 = vrot.lane.b32.xlu0 %v5962, 32
        %v6016 = vpop.permute.xlu0 %6015
        %6017 = vrot.lane.b32.xlu0 %v5963, 32
        %v6018 = vpop.permute.xlu0 %6017
        %6019 = vrot.lane.b32.xlu0 %v5964, 32
        %v6020 = vpop.permute.xlu0 %6019
        %6021 = vrot.lane.b32.xlu0 %v5965, 32
        %v6022 = vpop.permute.xlu0 %6021
        %6023 = vrot.lane.b32.xlu0 %v5966, 32
        %v6024 = vpop.permute.xlu0 %6023
        %6025 = vrot.lane.b32.xlu0 %v5967, 32
        %v6026 = vpop.permute.xlu0 %6025
        %6027 = vrot.lane.b32.xlu0 %v5968, 32
        %v6028 = vpop.permute.xlu0 %6027
        %6029 = vrot.lane.b32.xlu0 %v5969, 32
        %v6030 = vpop.permute.xlu0 %6029
        %6031 = vrot.lane.b32.xlu0 %v5970, 32
        %v6032 = vpop.permute.xlu0 %6031
        %6033 = vrot.lane.b32.xlu0 %v5971, 32
        %v6034 = vpop.permute.xlu0 %6033
        %6035 = vrot.lane.b32.xlu0 %v5972, 32
        %v6036 = vpop.permute.xlu0 %6035
        %v6037 = vunpack.c.l.b16 %v3095
        %v6038 = vunpack.c.l.b16 %v3098
        %v6039 = vunpack.c.l.b16 %v3102
        %v6040 = vunpack.c.l.b16 %v3105
        %v6041 = vunpack.c.l.b16 %v3109
        %v6042 = vunpack.c.l.b16 %v3112
        %v6043 = vunpack.c.l.b16 %v3116
        %v6044 = vunpack.c.l.b16 %v3119
        %v6045 = vunpack.c.l.b16 %v3123
        %v6046 = vunpack.c.l.b16 %v3126
        %v6047 = vunpack.c.l.b16 %v3130
        %v6048 = vunpack.c.l.b16 %v3133
        %v6049 = vunpack.c.l.b16 %v3137
        %v6050 = vunpack.c.l.b16 %v3140
        %v6051 = vunpack.c.l.b16 %v3144
        %v6052 = vunpack.c.l.b16 %v3147
        %v6053 = vunpack.c.l.b16 %v3151
        %v6054 = vunpack.c.l.b16 %v3154
        %v6055 = vunpack.c.l.b16 %v3158
        %v6056 = vunpack.c.l.b16 %v3161
        %v6057 = vunpack.c.l.b16 %v3165
        %v6058 = vunpack.c.l.b16 %v3168
        %v6059 = vunpack.c.l.b16 %v3172
        %v6060 = vunpack.c.l.b16 %v3175
        %v6061 = vunpack.c.l.b16 %v3179
        %v6062 = vunpack.c.l.b16 %v3182
        %v6063 = vunpack.c.l.b16 %v3186
        %v6064 = vunpack.c.l.b16 %v3189
        %v6065 = vunpack.c.l.b16 %v3193
        %v6066 = vunpack.c.l.b16 %v3196
        %v6067 = vunpack.c.l.b16 %v3200
        %v6068 = vunpack.c.l.b16 %v3203
        %v6069 = vunpack.c.l.b16 %v3207
        %v6070 = vunpack.c.l.b16 %v3210
        %v6071 = vunpack.c.l.b16 %v3214
        %v6072 = vunpack.c.l.b16 %v3217
        %v6073 = vunpack.c.l.b16 %v3221
        %v6074 = vunpack.c.l.b16 %v3224
        %v6075 = vunpack.c.l.b16 %v3228
        %v6076 = vunpack.c.l.b16 %v3231
        %v6077 = vunpack.c.l.b16 %v3235
        %v6078 = vunpack.c.l.b16 %v3238
        %v6079 = vunpack.c.l.b16 %v3242
        %v6080 = vunpack.c.l.b16 %v3245
        %v6081 = vunpack.c.l.b16 %v3249
        %v6082 = vunpack.c.l.b16 %v3252
        %v6083 = vunpack.c.l.b16 %v3256
        %v6084 = vunpack.c.l.b16 %v3259
        %v6085 = vunpack.c.l.b16 %v3263
        %v6086 = vunpack.c.l.b16 %v3266
        %v6087 = vunpack.c.l.b16 %v3270
        %v6088 = vunpack.c.l.b16 %v3273
        %v6089 = vunpack.c.l.b16 %v3277
        %v6090 = vunpack.c.l.b16 %v3280
        %v6091 = vunpack.c.l.b16 %v3284
        %v6092 = vunpack.c.l.b16 %v3287
        %v6093 = vunpack.c.l.b16 %v3291
        %v6094 = vunpack.c.l.b16 %v3294
        %v6095 = vunpack.c.l.b16 %v3298
        %v6096 = vunpack.c.l.b16 %v3301
        %v6097 = vunpack.c.l.b16 %v3305
        %v6098 = vunpack.c.l.b16 %v3308
        %v6099 = vunpack.c.l.b16 %v3312
        %v6100 = vunpack.c.l.b16 %v3315
        %v6101 = vpack.c.b16 %v6038, %v6037
        %v6102 = vpack.c.b16 %v6040, %v6039
        %v6103 = vpack.c.b16 %v6042, %v6041
        %v6104 = vpack.c.b16 %v6044, %v6043
        %v6105 = vpack.c.b16 %v6046, %v6045
        %v6106 = vpack.c.b16 %v6048, %v6047
        %v6107 = vpack.c.b16 %v6050, %v6049
        %v6108 = vpack.c.b16 %v6052, %v6051
        %v6109 = vpack.c.b16 %v6054, %v6053
        %v6110 = vpack.c.b16 %v6056, %v6055
        %v6111 = vpack.c.b16 %v6058, %v6057
        %v6112 = vpack.c.b16 %v6060, %v6059
        %v6113 = vpack.c.b16 %v6062, %v6061
        %v6114 = vpack.c.b16 %v6064, %v6063
        %v6115 = vpack.c.b16 %v6066, %v6065
        %v6116 = vpack.c.b16 %v6068, %v6067
        %v6117 = vpack.c.b16 %v6070, %v6069
        %v6118 = vpack.c.b16 %v6072, %v6071
        %v6119 = vpack.c.b16 %v6074, %v6073
        %v6120 = vpack.c.b16 %v6076, %v6075
        %v6121 = vpack.c.b16 %v6078, %v6077
        %v6122 = vpack.c.b16 %v6080, %v6079
        %v6123 = vpack.c.b16 %v6082, %v6081
        %v6124 = vpack.c.b16 %v6084, %v6083
        %v6125 = vpack.c.b16 %v6086, %v6085
        %v6126 = vpack.c.b16 %v6088, %v6087
        %v6127 = vpack.c.b16 %v6090, %v6089
        %v6128 = vpack.c.b16 %v6092, %v6091
        %v6129 = vpack.c.b16 %v6094, %v6093
        %v6130 = vpack.c.b16 %v6096, %v6095
        %v6131 = vpack.c.b16 %v6098, %v6097
        %v6132 = vpack.c.b16 %v6100, %v6099
        %6133 = vrot.lane.b32.xlu0 %v6101, 64
        %v6134 = vpop.permute.xlu0 %6133
        %6135 = vrot.lane.b32.xlu0 %v6102, 64
        %v6136 = vpop.permute.xlu0 %6135
        %6137 = vrot.lane.b32.xlu0 %v6103, 64
        %v6138 = vpop.permute.xlu0 %6137
        %6139 = vrot.lane.b32.xlu0 %v6104, 64
        %v6140 = vpop.permute.xlu0 %6139
        %6141 = vrot.lane.b32.xlu0 %v6105, 64
        %v6142 = vpop.permute.xlu0 %6141
        %6143 = vrot.lane.b32.xlu0 %v6106, 64
        %v6144 = vpop.permute.xlu0 %6143
        %6145 = vrot.lane.b32.xlu0 %v6107, 64
        %v6146 = vpop.permute.xlu0 %6145
        %6147 = vrot.lane.b32.xlu0 %v6108, 64
        %v6148 = vpop.permute.xlu0 %6147
        %6149 = vrot.lane.b32.xlu0 %v6109, 64
        %v6150 = vpop.permute.xlu0 %6149
        %6151 = vrot.lane.b32.xlu0 %v6110, 64
        %v6152 = vpop.permute.xlu0 %6151
        %6153 = vrot.lane.b32.xlu0 %v6111, 64
        %v6154 = vpop.permute.xlu0 %6153
        %6155 = vrot.lane.b32.xlu0 %v6112, 64
        %v6156 = vpop.permute.xlu0 %6155
        %6157 = vrot.lane.b32.xlu0 %v6113, 64
        %v6158 = vpop.permute.xlu0 %6157
        %6159 = vrot.lane.b32.xlu0 %v6114, 64
        %v6160 = vpop.permute.xlu0 %6159
        %6161 = vrot.lane.b32.xlu0 %v6115, 64
        %v6162 = vpop.permute.xlu0 %6161
        %6163 = vrot.lane.b32.xlu0 %v6116, 64
        %v6164 = vpop.permute.xlu0 %6163
        %6165 = vrot.lane.b32.xlu0 %v6117, 64
        %v6166 = vpop.permute.xlu0 %6165
        %6167 = vrot.lane.b32.xlu0 %v6118, 64
        %v6168 = vpop.permute.xlu0 %6167
        %6169 = vrot.lane.b32.xlu0 %v6119, 64
        %v6170 = vpop.permute.xlu0 %6169
        %6171 = vrot.lane.b32.xlu0 %v6120, 64
        %v6172 = vpop.permute.xlu0 %6171
        %6173 = vrot.lane.b32.xlu0 %v6121, 64
        %v6174 = vpop.permute.xlu0 %6173
        %6175 = vrot.lane.b32.xlu0 %v6122, 64
        %v6176 = vpop.permute.xlu0 %6175
        %6177 = vrot.lane.b32.xlu0 %v6123, 64
        %v6178 = vpop.permute.xlu0 %6177
        %6179 = vrot.lane.b32.xlu0 %v6124, 64
        %v6180 = vpop.permute.xlu0 %6179
        %6181 = vrot.lane.b32.xlu0 %v6125, 64
        %v6182 = vpop.permute.xlu0 %6181
        %6183 = vrot.lane.b32.xlu0 %v6126, 64
        %v6184 = vpop.permute.xlu0 %6183
        %6185 = vrot.lane.b32.xlu0 %v6127, 64
        %v6186 = vpop.permute.xlu0 %6185
        %6187 = vrot.lane.b32.xlu0 %v6128, 64
        %v6188 = vpop.permute.xlu0 %6187
        %6189 = vrot.lane.b32.xlu0 %v6129, 64
        %v6190 = vpop.permute.xlu0 %6189
        %6191 = vrot.lane.b32.xlu0 %v6130, 64
        %v6192 = vpop.permute.xlu0 %6191
        %6193 = vrot.lane.b32.xlu0 %v6131, 64
        %v6194 = vpop.permute.xlu0 %6193
        %6195 = vrot.lane.b32.xlu0 %v6132, 64
        %v6196 = vpop.permute.xlu0 %6195
        %v6229 = vunpack.c.l.b16 %v3316
        %v6230 = vunpack.c.l.b16 %v3317
        %v6231 = vunpack.c.l.b16 %v3318
        %v6232 = vunpack.c.l.b16 %v3319
        %v6233 = vunpack.c.l.b16 %v3320
        %v6234 = vunpack.c.l.b16 %v3321
        %v6235 = vunpack.c.l.b16 %v3322
        %v6236 = vunpack.c.l.b16 %v3323
        %v6237 = vunpack.c.l.b16 %v3324
        %v6238 = vunpack.c.l.b16 %v3325
        %v6239 = vunpack.c.l.b16 %v3326
        %v6240 = vunpack.c.l.b16 %v3327
        %v6241 = vunpack.c.l.b16 %v3328
        %v6242 = vunpack.c.l.b16 %v3329
        %v6243 = vunpack.c.l.b16 %v3330
        %v6244 = vunpack.c.l.b16 %v3331
        %v6245 = vunpack.c.l.b16 %v3332
        %v6246 = vunpack.c.l.b16 %v3333
        %v6247 = vunpack.c.l.b16 %v3334
        %v6248 = vunpack.c.l.b16 %v3335
        %v6249 = vunpack.c.l.b16 %v3336
        %v6250 = vunpack.c.l.b16 %v3337
        %v6251 = vunpack.c.l.b16 %v3338
        %v6252 = vunpack.c.l.b16 %v3339
        %v6253 = vunpack.c.l.b16 %v3340
        %v6254 = vunpack.c.l.b16 %v3341
        %v6255 = vunpack.c.l.b16 %v3342
        %v6256 = vunpack.c.l.b16 %v3343
        %v6257 = vunpack.c.l.b16 %v3344
        %v6258 = vunpack.c.l.b16 %v3345
        %v6259 = vunpack.c.l.b16 %v3346
        %v6260 = vunpack.c.l.b16 %v3347
        %v6261 = vunpack.c.l.b16 %v3348
        %v6262 = vunpack.c.l.b16 %v3349
        %v6263 = vunpack.c.l.b16 %v3350
        %v6264 = vunpack.c.l.b16 %v3351
        %v6265 = vunpack.c.l.b16 %v3352
        %v6266 = vunpack.c.l.b16 %v3353
        %v6267 = vunpack.c.l.b16 %v3354
        %v6268 = vunpack.c.l.b16 %v3355
        %v6269 = vunpack.c.l.b16 %v3356
        %v6270 = vunpack.c.l.b16 %v3357
        %v6271 = vunpack.c.l.b16 %v3358
        %v6272 = vunpack.c.l.b16 %v3359
        %v6273 = vunpack.c.l.b16 %v3360
        %v6274 = vunpack.c.l.b16 %v3361
        %v6275 = vunpack.c.l.b16 %v3362
        %v6276 = vunpack.c.l.b16 %v3363
        %v6277 = vunpack.c.l.b16 %v3364
        %v6278 = vunpack.c.l.b16 %v3365
        %v6279 = vunpack.c.l.b16 %v3366
        %v6280 = vunpack.c.l.b16 %v3367
        %v6281 = vunpack.c.l.b16 %v3368
        %v6282 = vunpack.c.l.b16 %v3369
        %v6283 = vunpack.c.l.b16 %v3370
        %v6284 = vunpack.c.l.b16 %v3371
        %v6285 = vunpack.c.l.b16 %v3372
        %v6286 = vunpack.c.l.b16 %v3373
        %v6287 = vunpack.c.l.b16 %v3374
        %v6288 = vunpack.c.l.b16 %v3375
        %v6289 = vunpack.c.l.b16 %v3376
        %v6290 = vunpack.c.l.b16 %v3377
        %v6291 = vunpack.c.l.b16 %v3378
        %v6292 = vunpack.c.l.b16 %v3379
        %v6293 = vpack.c.b16 %v6230, %v6229
        %v6294 = vpack.c.b16 %v6232, %v6231
        %v6295 = vpack.c.b16 %v6234, %v6233
        %v6296 = vpack.c.b16 %v6236, %v6235
        %v6297 = vpack.c.b16 %v6238, %v6237
        %v6298 = vpack.c.b16 %v6240, %v6239
        %v6299 = vpack.c.b16 %v6242, %v6241
        %v6300 = vpack.c.b16 %v6244, %v6243
        %v6301 = vpack.c.b16 %v6246, %v6245
        %v6302 = vpack.c.b16 %v6248, %v6247
        %v6303 = vpack.c.b16 %v6250, %v6249
        %v6304 = vpack.c.b16 %v6252, %v6251
        %v6305 = vpack.c.b16 %v6254, %v6253
        %v6306 = vpack.c.b16 %v6256, %v6255
        %v6307 = vpack.c.b16 %v6258, %v6257
        %v6308 = vpack.c.b16 %v6260, %v6259
        %v6309 = vpack.c.b16 %v6262, %v6261
        %v6310 = vpack.c.b16 %v6264, %v6263
        %v6311 = vpack.c.b16 %v6266, %v6265
        %v6312 = vpack.c.b16 %v6268, %v6267
        %v6313 = vpack.c.b16 %v6270, %v6269
        %v6314 = vpack.c.b16 %v6272, %v6271
        %v6315 = vpack.c.b16 %v6274, %v6273
        %v6316 = vpack.c.b16 %v6276, %v6275
        %v6317 = vpack.c.b16 %v6278, %v6277
        %v6318 = vpack.c.b16 %v6280, %v6279
        %v6319 = vpack.c.b16 %v6282, %v6281
        %v6320 = vpack.c.b16 %v6284, %v6283
        %v6321 = vpack.c.b16 %v6286, %v6285
        %v6322 = vpack.c.b16 %v6288, %v6287
        %v6323 = vpack.c.b16 %v6290, %v6289
        %v6324 = vpack.c.b16 %v6292, %v6291
        %6325 = vrot.lane.b32.xlu0 %v6293, 96
        %v6326 = vpop.permute.xlu0 %6325
        %6327 = vrot.lane.b32.xlu0 %v6294, 96
        %v6328 = vpop.permute.xlu0 %6327
        %6329 = vrot.lane.b32.xlu0 %v6295, 96
        %v6330 = vpop.permute.xlu0 %6329
        %6331 = vrot.lane.b32.xlu0 %v6296, 96
        %v6332 = vpop.permute.xlu0 %6331
        %6333 = vrot.lane.b32.xlu0 %v6297, 96
        %v6334 = vpop.permute.xlu0 %6333
        %6335 = vrot.lane.b32.xlu0 %v6298, 96
        %v6336 = vpop.permute.xlu0 %6335
        %6337 = vrot.lane.b32.xlu0 %v6299, 96
        %v6338 = vpop.permute.xlu0 %6337
        %6339 = vrot.lane.b32.xlu0 %v6300, 96
        %v6340 = vpop.permute.xlu0 %6339
        %6341 = vrot.lane.b32.xlu0 %v6301, 96
        %v6342 = vpop.permute.xlu0 %6341
        %6343 = vrot.lane.b32.xlu0 %v6302, 96
        %v6344 = vpop.permute.xlu0 %6343
        %6345 = vrot.lane.b32.xlu0 %v6303, 96
        %v6346 = vpop.permute.xlu0 %6345
        %6347 = vrot.lane.b32.xlu0 %v6304, 96
        %v6348 = vpop.permute.xlu0 %6347
        %6349 = vrot.lane.b32.xlu0 %v6305, 96
        %v6350 = vpop.permute.xlu0 %6349
        %6351 = vrot.lane.b32.xlu0 %v6306, 96
        %v6352 = vpop.permute.xlu0 %6351
        %6353 = vrot.lane.b32.xlu0 %v6307, 96
        %v6354 = vpop.permute.xlu0 %6353
        %6355 = vrot.lane.b32.xlu0 %v6308, 96
        %v6356 = vpop.permute.xlu0 %6355
        %6357 = vrot.lane.b32.xlu0 %v6309, 96
        %v6358 = vpop.permute.xlu0 %6357
        %6359 = vrot.lane.b32.xlu0 %v6310, 96
        %v6360 = vpop.permute.xlu0 %6359
        %6361 = vrot.lane.b32.xlu0 %v6311, 96
        %v6362 = vpop.permute.xlu0 %6361
        %6363 = vrot.lane.b32.xlu0 %v6312, 96
        %v6364 = vpop.permute.xlu0 %6363
        %6365 = vrot.lane.b32.xlu0 %v6313, 96
        %v6366 = vpop.permute.xlu0 %6365
        %6367 = vrot.lane.b32.xlu0 %v6314, 96
        %v6368 = vpop.permute.xlu0 %6367
        %6369 = vrot.lane.b32.xlu0 %v6315, 96
        %v6370 = vpop.permute.xlu0 %6369
        %6371 = vrot.lane.b32.xlu0 %v6316, 96
        %v6372 = vpop.permute.xlu0 %6371
        %6373 = vrot.lane.b32.xlu0 %v6317, 96
        %v6374 = vpop.permute.xlu0 %6373
        %6375 = vrot.lane.b32.xlu0 %v6318, 96
        %v6376 = vpop.permute.xlu0 %6375
        %6377 = vrot.lane.b32.xlu0 %v6319, 96
        %v6378 = vpop.permute.xlu0 %6377
        %6379 = vrot.lane.b32.xlu0 %v6320, 96
        %v6380 = vpop.permute.xlu0 %6379
        %6381 = vrot.lane.b32.xlu0 %v6321, 96
        %v6382 = vpop.permute.xlu0 %6381
        %6383 = vrot.lane.b32.xlu0 %v6322, 96
        %v6384 = vpop.permute.xlu0 %6383
        %6385 = vrot.lane.b32.xlu0 %v6323, 96
        %v6386 = vpop.permute.xlu0 %6385
        %6387 = vrot.lane.b32.xlu0 %v6324, 96
        %v6388 = vpop.permute.xlu0 %6387
        %v6389 = vunpack.c.l.b16 %v3425
        %v6390 = vunpack.c.l.b16 %v3435
        %v6391 = vunpack.c.l.b16 %v3449
        %v6392 = vunpack.c.l.b16 %v3459
        %v6393 = vunpack.c.l.b16 %v3473
        %v6394 = vunpack.c.l.b16 %v3483
        %v6395 = vunpack.c.l.b16 %v3497
        %v6396 = vunpack.c.l.b16 %v3507
        %v6397 = vunpack.c.l.b16 %v3521
        %v6398 = vunpack.c.l.b16 %v3531
        %v6399 = vunpack.c.l.b16 %v3545
        %v6400 = vunpack.c.l.b16 %v3555
        %v6401 = vunpack.c.l.b16 %v3569
        %v6402 = vunpack.c.l.b16 %v3579
        %v6403 = vunpack.c.l.b16 %v3593
        %v6404 = vunpack.c.l.b16 %v3603
        %v6405 = vunpack.c.l.b16 %v3617
        %v6406 = vunpack.c.l.b16 %v3627
        %v6407 = vunpack.c.l.b16 %v3641
        %v6408 = vunpack.c.l.b16 %v3651
        %v6409 = vunpack.c.l.b16 %v3665
        %v6410 = vunpack.c.l.b16 %v3675
        %v6411 = vunpack.c.l.b16 %v3689
        %v6412 = vunpack.c.l.b16 %v3699
        %v6413 = vunpack.c.l.b16 %v3713
        %v6414 = vunpack.c.l.b16 %v3723
        %v6415 = vunpack.c.l.b16 %v3737
        %v6416 = vunpack.c.l.b16 %v3747
        %v6417 = vunpack.c.l.b16 %v3761
        %v6418 = vunpack.c.l.b16 %v3771
        %v6419 = vunpack.c.l.b16 %v3785
        %v6420 = vunpack.c.l.b16 %v3795
        %v6421 = vunpack.c.l.b16 %v3809
        %v6422 = vunpack.c.l.b16 %v3819
        %v6423 = vunpack.c.l.b16 %v3833
        %v6424 = vunpack.c.l.b16 %v3843
        %v6425 = vunpack.c.l.b16 %v3857
        %v6426 = vunpack.c.l.b16 %v3867
        %v6427 = vunpack.c.l.b16 %v3881
        %v6428 = vunpack.c.l.b16 %v3891
        %v6429 = vunpack.c.l.b16 %v3905
        %v6430 = vunpack.c.l.b16 %v3915
        %v6431 = vunpack.c.l.b16 %v3929
        %v6432 = vunpack.c.l.b16 %v3939
        %v6433 = vunpack.c.l.b16 %v3953
        %v6434 = vunpack.c.l.b16 %v3963
        %v6435 = vunpack.c.l.b16 %v3977
        %v6436 = vunpack.c.l.b16 %v3987
        %v6437 = vunpack.c.l.b16 %v4001
        %v6438 = vunpack.c.l.b16 %v4011
        %v6439 = vunpack.c.l.b16 %v4025
        %v6440 = vunpack.c.l.b16 %v4035
        %v6441 = vunpack.c.l.b16 %v4049
        %v6442 = vunpack.c.l.b16 %v4059
        %v6443 = vunpack.c.l.b16 %v4073
        %v6444 = vunpack.c.l.b16 %v4083
        %v6445 = vunpack.c.l.b16 %v4097
        %v6446 = vunpack.c.l.b16 %v4107
        %v6447 = vunpack.c.l.b16 %v4121
        %v6448 = vunpack.c.l.b16 %v4131
        %v6449 = vunpack.c.l.b16 %v4145
        %v6450 = vunpack.c.l.b16 %v4155
        %v6451 = vunpack.c.l.b16 %v4169
        %v6452 = vunpack.c.l.b16 %v4179
        %v6453 = vpack.c.b16 %v6390, %v6389
        %v6454 = vpack.c.b16 %v6392, %v6391
        %v6455 = vpack.c.b16 %v6394, %v6393
        %v6456 = vpack.c.b16 %v6396, %v6395
        %v6457 = vpack.c.b16 %v6398, %v6397
        %v6458 = vpack.c.b16 %v6400, %v6399
        %v6459 = vpack.c.b16 %v6402, %v6401
        %v6460 = vpack.c.b16 %v6404, %v6403
        %v6461 = vpack.c.b16 %v6406, %v6405
        %v6462 = vpack.c.b16 %v6408, %v6407
        %v6463 = vpack.c.b16 %v6410, %v6409
        %v6464 = vpack.c.b16 %v6412, %v6411
        %v6465 = vpack.c.b16 %v6414, %v6413
        %v6466 = vpack.c.b16 %v6416, %v6415
        %v6467 = vpack.c.b16 %v6418, %v6417
        %v6468 = vpack.c.b16 %v6420, %v6419
        %v6469 = vpack.c.b16 %v6422, %v6421
        %v6470 = vpack.c.b16 %v6424, %v6423
        %v6471 = vpack.c.b16 %v6426, %v6425
        %v6472 = vpack.c.b16 %v6428, %v6427
        %v6473 = vpack.c.b16 %v6430, %v6429
        %v6474 = vpack.c.b16 %v6432, %v6431
        %v6475 = vpack.c.b16 %v6434, %v6433
        %v6476 = vpack.c.b16 %v6436, %v6435
        %v6477 = vpack.c.b16 %v6438, %v6437
        %v6478 = vpack.c.b16 %v6440, %v6439
        %v6479 = vpack.c.b16 %v6442, %v6441
        %v6480 = vpack.c.b16 %v6444, %v6443
        %v6481 = vpack.c.b16 %v6446, %v6445
        %v6482 = vpack.c.b16 %v6448, %v6447
        %v6483 = vpack.c.b16 %v6450, %v6449
        %v6484 = vpack.c.b16 %v6452, %v6451
        %v6485 = vunpack.c.l.b16 %v4311
        %v6486 = vunpack.c.l.b16 %v4314
        %v6487 = vunpack.c.l.b16 %v4318
        %v6488 = vunpack.c.l.b16 %v4321
        %v6489 = vunpack.c.l.b16 %v4325
        %v6490 = vunpack.c.l.b16 %v4328
        %v6491 = vunpack.c.l.b16 %v4332
        %v6492 = vunpack.c.l.b16 %v4335
        %v6493 = vunpack.c.l.b16 %v4339
        %v6494 = vunpack.c.l.b16 %v4342
        %v6495 = vunpack.c.l.b16 %v4346
        %v6496 = vunpack.c.l.b16 %v4349
        %v6497 = vunpack.c.l.b16 %v4353
        %v6498 = vunpack.c.l.b16 %v4356
        %v6499 = vunpack.c.l.b16 %v4360
        %v6500 = vunpack.c.l.b16 %v4363
        %v6501 = vunpack.c.l.b16 %v4367
        %v6502 = vunpack.c.l.b16 %v4370
        %v6503 = vunpack.c.l.b16 %v4374
        %v6504 = vunpack.c.l.b16 %v4377
        %v6505 = vunpack.c.l.b16 %v4381
        %v6506 = vunpack.c.l.b16 %v4384
        %v6507 = vunpack.c.l.b16 %v4388
        %v6508 = vunpack.c.l.b16 %v4391
        %v6509 = vunpack.c.l.b16 %v4395
        %v6510 = vunpack.c.l.b16 %v4398
        %v6511 = vunpack.c.l.b16 %v4402
        %v6512 = vunpack.c.l.b16 %v4405
        %v6513 = vunpack.c.l.b16 %v4409
        %v6514 = vunpack.c.l.b16 %v4412
        %v6515 = vunpack.c.l.b16 %v4416
        %v6516 = vunpack.c.l.b16 %v4419
        %v6517 = vunpack.c.l.b16 %v4423
        %v6518 = vunpack.c.l.b16 %v4426
        %v6519 = vunpack.c.l.b16 %v4430
        %v6520 = vunpack.c.l.b16 %v4433
        %v6521 = vunpack.c.l.b16 %v4437
        %v6522 = vunpack.c.l.b16 %v4440
        %v6523 = vunpack.c.l.b16 %v4444
        %v6524 = vunpack.c.l.b16 %v4447
        %v6525 = vunpack.c.l.b16 %v4451
        %v6526 = vunpack.c.l.b16 %v4454
        %v6527 = vunpack.c.l.b16 %v4458
        %v6528 = vunpack.c.l.b16 %v4461
        %v6529 = vunpack.c.l.b16 %v4465
        %v6530 = vunpack.c.l.b16 %v4468
        %v6531 = vunpack.c.l.b16 %v4472
        %v6532 = vunpack.c.l.b16 %v4475
        %v6533 = vunpack.c.l.b16 %v4479
        %v6534 = vunpack.c.l.b16 %v4482
        %v6535 = vunpack.c.l.b16 %v4486
        %v6536 = vunpack.c.l.b16 %v4489
        %v6537 = vunpack.c.l.b16 %v4493
        %v6538 = vunpack.c.l.b16 %v4496
        %v6539 = vunpack.c.l.b16 %v4500
        %v6540 = vunpack.c.l.b16 %v4503
        %v6541 = vunpack.c.l.b16 %v4507
        %v6542 = vunpack.c.l.b16 %v4510
        %v6543 = vunpack.c.l.b16 %v4514
        %v6544 = vunpack.c.l.b16 %v4517
        %v6545 = vunpack.c.l.b16 %v4521
        %v6546 = vunpack.c.l.b16 %v4524
        %v6547 = vunpack.c.l.b16 %v4528
        %v6548 = vunpack.c.l.b16 %v4531
        %v6549 = vpack.c.b16 %v6486, %v6485
        %v6550 = vpack.c.b16 %v6488, %v6487
        %v6551 = vpack.c.b16 %v6490, %v6489
        %v6552 = vpack.c.b16 %v6492, %v6491
        %v6553 = vpack.c.b16 %v6494, %v6493
        %v6554 = vpack.c.b16 %v6496, %v6495
        %v6555 = vpack.c.b16 %v6498, %v6497
        %v6556 = vpack.c.b16 %v6500, %v6499
        %v6557 = vpack.c.b16 %v6502, %v6501
        %v6558 = vpack.c.b16 %v6504, %v6503
        %v6559 = vpack.c.b16 %v6506, %v6505
        %v6560 = vpack.c.b16 %v6508, %v6507
        %v6561 = vpack.c.b16 %v6510, %v6509
        %v6562 = vpack.c.b16 %v6512, %v6511
        %v6563 = vpack.c.b16 %v6514, %v6513
        %v6564 = vpack.c.b16 %v6516, %v6515
        %v6565 = vpack.c.b16 %v6518, %v6517
        %v6566 = vpack.c.b16 %v6520, %v6519
        %v6567 = vpack.c.b16 %v6522, %v6521
        %v6568 = vpack.c.b16 %v6524, %v6523
        %v6569 = vpack.c.b16 %v6526, %v6525
        %v6570 = vpack.c.b16 %v6528, %v6527
        %v6571 = vpack.c.b16 %v6530, %v6529
        %v6572 = vpack.c.b16 %v6532, %v6531
        %v6573 = vpack.c.b16 %v6534, %v6533
        %v6574 = vpack.c.b16 %v6536, %v6535
        %v6575 = vpack.c.b16 %v6538, %v6537
        %v6576 = vpack.c.b16 %v6540, %v6539
        %v6577 = vpack.c.b16 %v6542, %v6541
        %v6578 = vpack.c.b16 %v6544, %v6543
        %v6579 = vpack.c.b16 %v6546, %v6545
        %v6580 = vpack.c.b16 %v6548, %v6547
        %6581 = vrot.lane.b32.xlu0 %v6549, 32
        %v6582 = vpop.permute.xlu0 %6581
        %6583 = vrot.lane.b32.xlu0 %v6550, 32
        %v6584 = vpop.permute.xlu0 %6583
        %6585 = vrot.lane.b32.xlu0 %v6551, 32
        %v6586 = vpop.permute.xlu0 %6585
        %6587 = vrot.lane.b32.xlu0 %v6552, 32
        %v6588 = vpop.permute.xlu0 %6587
        %6589 = vrot.lane.b32.xlu0 %v6553, 32
        %v6590 = vpop.permute.xlu0 %6589
        %6591 = vrot.lane.b32.xlu0 %v6554, 32
        %v6592 = vpop.permute.xlu0 %6591
        %6593 = vrot.lane.b32.xlu0 %v6555, 32
        %v6594 = vpop.permute.xlu0 %6593
        %6595 = vrot.lane.b32.xlu0 %v6556, 32
        %v6596 = vpop.permute.xlu0 %6595
        %6597 = vrot.lane.b32.xlu0 %v6557, 32
        %v6598 = vpop.permute.xlu0 %6597
        %6599 = vrot.lane.b32.xlu0 %v6558, 32
        %v6600 = vpop.permute.xlu0 %6599
        %6601 = vrot.lane.b32.xlu0 %v6559, 32
        %v6602 = vpop.permute.xlu0 %6601
        %6603 = vrot.lane.b32.xlu0 %v6560, 32
        %v6604 = vpop.permute.xlu0 %6603
        %6605 = vrot.lane.b32.xlu0 %v6561, 32
        %v6606 = vpop.permute.xlu0 %6605
        %6607 = vrot.lane.b32.xlu0 %v6562, 32
        %v6608 = vpop.permute.xlu0 %6607
        %6609 = vrot.lane.b32.xlu0 %v6563, 32
        %v6610 = vpop.permute.xlu0 %6609
        %6611 = vrot.lane.b32.xlu0 %v6564, 32
        %v6612 = vpop.permute.xlu0 %6611
        %6613 = vrot.lane.b32.xlu0 %v6565, 32
        %v6614 = vpop.permute.xlu0 %6613
        %6615 = vrot.lane.b32.xlu0 %v6566, 32
        %v6616 = vpop.permute.xlu0 %6615
        %6617 = vrot.lane.b32.xlu0 %v6567, 32
        %v6618 = vpop.permute.xlu0 %6617
        %6619 = vrot.lane.b32.xlu0 %v6568, 32
        %v6620 = vpop.permute.xlu0 %6619
        %6621 = vrot.lane.b32.xlu0 %v6569, 32
        %v6622 = vpop.permute.xlu0 %6621
        %6623 = vrot.lane.b32.xlu0 %v6570, 32
        %v6624 = vpop.permute.xlu0 %6623
        %6625 = vrot.lane.b32.xlu0 %v6571, 32
        %v6626 = vpop.permute.xlu0 %6625
        %6627 = vrot.lane.b32.xlu0 %v6572, 32
        %v6628 = vpop.permute.xlu0 %6627
        %6629 = vrot.lane.b32.xlu0 %v6573, 32
        %v6630 = vpop.permute.xlu0 %6629
        %6631 = vrot.lane.b32.xlu0 %v6574, 32
        %v6632 = vpop.permute.xlu0 %6631
        %6633 = vrot.lane.b32.xlu0 %v6575, 32
        %v6634 = vpop.permute.xlu0 %6633
        %6635 = vrot.lane.b32.xlu0 %v6576, 32
        %v6636 = vpop.permute.xlu0 %6635
        %6637 = vrot.lane.b32.xlu0 %v6577, 32
        %v6638 = vpop.permute.xlu0 %6637
        %6639 = vrot.lane.b32.xlu0 %v6578, 32
        %v6640 = vpop.permute.xlu0 %6639
        %6641 = vrot.lane.b32.xlu0 %v6579, 32
        %v6642 = vpop.permute.xlu0 %6641
        %6643 = vrot.lane.b32.xlu0 %v6580, 32
        %v6644 = vpop.permute.xlu0 %6643
        %v6677 = vunpack.c.l.b16 %v4533
        %v6678 = vunpack.c.l.b16 %v4534
        %v6679 = vunpack.c.l.b16 %v4535
        %v6680 = vunpack.c.l.b16 %v4536
        %v6681 = vunpack.c.l.b16 %v4537
        %v6682 = vunpack.c.l.b16 %v4538
        %v6683 = vunpack.c.l.b16 %v4539
        %v6684 = vunpack.c.l.b16 %v4540
        %v6685 = vunpack.c.l.b16 %v4541
        %v6686 = vunpack.c.l.b16 %v4542
        %v6687 = vunpack.c.l.b16 %v4543
        %v6688 = vunpack.c.l.b16 %v4544
        %v6689 = vunpack.c.l.b16 %v4545
        %v6690 = vunpack.c.l.b16 %v4546
        %v6691 = vunpack.c.l.b16 %v4547
        %v6692 = vunpack.c.l.b16 %v4548
        %v6693 = vunpack.c.l.b16 %v4549
        %v6694 = vunpack.c.l.b16 %v4550
        %v6695 = vunpack.c.l.b16 %v4551
        %v6696 = vunpack.c.l.b16 %v4552
        %v6697 = vunpack.c.l.b16 %v4553
        %v6698 = vunpack.c.l.b16 %v4554
        %v6699 = vunpack.c.l.b16 %v4555
        %v6700 = vunpack.c.l.b16 %v4556
        %v6701 = vunpack.c.l.b16 %v4557
        %v6702 = vunpack.c.l.b16 %v4558
        %v6703 = vunpack.c.l.b16 %v4559
        %v6704 = vunpack.c.l.b16 %v4560
        %v6705 = vunpack.c.l.b16 %v4561
        %v6706 = vunpack.c.l.b16 %v4562
        %v6707 = vunpack.c.l.b16 %v4563
        %v6708 = vunpack.c.l.b16 %v4564
        %v6709 = vunpack.c.l.b16 %v4565
        %v6710 = vunpack.c.l.b16 %v4566
        %v6711 = vunpack.c.l.b16 %v4567
        %v6712 = vunpack.c.l.b16 %v4568
        %v6713 = vunpack.c.l.b16 %v4569
        %v6714 = vunpack.c.l.b16 %v4570
        %v6715 = vunpack.c.l.b16 %v4571
        %v6716 = vunpack.c.l.b16 %v4572
        %v6717 = vunpack.c.l.b16 %v4573
        %v6718 = vunpack.c.l.b16 %v4574
        %v6719 = vunpack.c.l.b16 %v4575
        %v6720 = vunpack.c.l.b16 %v4576
        %v6721 = vunpack.c.l.b16 %v4577
        %v6722 = vunpack.c.l.b16 %v4578
        %v6723 = vunpack.c.l.b16 %v4579
        %v6724 = vunpack.c.l.b16 %v4580
        %v6725 = vunpack.c.l.b16 %v4581
        %v6726 = vunpack.c.l.b16 %v4582
        %v6727 = vunpack.c.l.b16 %v4583
        %v6728 = vunpack.c.l.b16 %v4584
        %v6729 = vunpack.c.l.b16 %v4585
        %v6730 = vunpack.c.l.b16 %v4586
        %v6731 = vunpack.c.l.b16 %v4587
        %v6732 = vunpack.c.l.b16 %v4588
        %v6733 = vunpack.c.l.b16 %v4589
        %v6734 = vunpack.c.l.b16 %v4590
        %v6735 = vunpack.c.l.b16 %v4591
        %v6736 = vunpack.c.l.b16 %v4592
        %v6737 = vunpack.c.l.b16 %v4593
        %v6738 = vunpack.c.l.b16 %v4594
        %v6739 = vunpack.c.l.b16 %v4595
        %v6740 = vunpack.c.l.b16 %v4596
        %v6741 = vpack.c.b16 %v6678, %v6677
        %v6742 = vpack.c.b16 %v6680, %v6679
        %v6743 = vpack.c.b16 %v6682, %v6681
        %v6744 = vpack.c.b16 %v6684, %v6683
        %v6745 = vpack.c.b16 %v6686, %v6685
        %v6746 = vpack.c.b16 %v6688, %v6687
        %v6747 = vpack.c.b16 %v6690, %v6689
        %v6748 = vpack.c.b16 %v6692, %v6691
        %v6749 = vpack.c.b16 %v6694, %v6693
        %v6750 = vpack.c.b16 %v6696, %v6695
        %v6751 = vpack.c.b16 %v6698, %v6697
        %v6752 = vpack.c.b16 %v6700, %v6699
        %v6753 = vpack.c.b16 %v6702, %v6701
        %v6754 = vpack.c.b16 %v6704, %v6703
        %v6755 = vpack.c.b16 %v6706, %v6705
        %v6756 = vpack.c.b16 %v6708, %v6707
        %v6757 = vpack.c.b16 %v6710, %v6709
        %v6758 = vpack.c.b16 %v6712, %v6711
        %v6759 = vpack.c.b16 %v6714, %v6713
        %v6760 = vpack.c.b16 %v6716, %v6715
        %v6761 = vpack.c.b16 %v6718, %v6717
        %v6762 = vpack.c.b16 %v6720, %v6719
        %v6763 = vpack.c.b16 %v6722, %v6721
        %v6764 = vpack.c.b16 %v6724, %v6723
        %v6765 = vpack.c.b16 %v6726, %v6725
        %v6766 = vpack.c.b16 %v6728, %v6727
        %v6767 = vpack.c.b16 %v6730, %v6729
        %v6768 = vpack.c.b16 %v6732, %v6731
        %v6769 = vpack.c.b16 %v6734, %v6733
        %v6770 = vpack.c.b16 %v6736, %v6735
        %v6771 = vpack.c.b16 %v6738, %v6737
        %v6772 = vpack.c.b16 %v6740, %v6739
        %6773 = vrot.lane.b32.xlu0 %v6741, 64
        %v6774 = vpop.permute.xlu0 %6773
        %6775 = vrot.lane.b32.xlu0 %v6742, 64
        %v6776 = vpop.permute.xlu0 %6775
        %6777 = vrot.lane.b32.xlu0 %v6743, 64
        %v6778 = vpop.permute.xlu0 %6777
        %6779 = vrot.lane.b32.xlu0 %v6744, 64
        %v6780 = vpop.permute.xlu0 %6779
        %6781 = vrot.lane.b32.xlu0 %v6745, 64
        %v6782 = vpop.permute.xlu0 %6781
        %6783 = vrot.lane.b32.xlu0 %v6746, 64
        %v6784 = vpop.permute.xlu0 %6783
        %6785 = vrot.lane.b32.xlu0 %v6747, 64
        %v6786 = vpop.permute.xlu0 %6785
        %6787 = vrot.lane.b32.xlu0 %v6748, 64
        %v6788 = vpop.permute.xlu0 %6787
        %6789 = vrot.lane.b32.xlu0 %v6749, 64
        %v6790 = vpop.permute.xlu0 %6789
        %6791 = vrot.lane.b32.xlu0 %v6750, 64
        %v6792 = vpop.permute.xlu0 %6791
        %6793 = vrot.lane.b32.xlu0 %v6751, 64
        %v6794 = vpop.permute.xlu0 %6793
        %6795 = vrot.lane.b32.xlu0 %v6752, 64
        %v6796 = vpop.permute.xlu0 %6795
        %6797 = vrot.lane.b32.xlu0 %v6753, 64
        %v6798 = vpop.permute.xlu0 %6797
        %6799 = vrot.lane.b32.xlu0 %v6754, 64
        %v6800 = vpop.permute.xlu0 %6799
        %6801 = vrot.lane.b32.xlu0 %v6755, 64
        %v6802 = vpop.permute.xlu0 %6801
        %6803 = vrot.lane.b32.xlu0 %v6756, 64
        %v6804 = vpop.permute.xlu0 %6803
        %6805 = vrot.lane.b32.xlu0 %v6757, 64
        %v6806 = vpop.permute.xlu0 %6805
        %6807 = vrot.lane.b32.xlu0 %v6758, 64
        %v6808 = vpop.permute.xlu0 %6807
        %6809 = vrot.lane.b32.xlu0 %v6759, 64
        %v6810 = vpop.permute.xlu0 %6809
        %6811 = vrot.lane.b32.xlu0 %v6760, 64
        %v6812 = vpop.permute.xlu0 %6811
        %6813 = vrot.lane.b32.xlu0 %v6761, 64
        %v6814 = vpop.permute.xlu0 %6813
        %6815 = vrot.lane.b32.xlu0 %v6762, 64
        %v6816 = vpop.permute.xlu0 %6815
        %6817 = vrot.lane.b32.xlu0 %v6763, 64
        %v6818 = vpop.permute.xlu0 %6817
        %6819 = vrot.lane.b32.xlu0 %v6764, 64
        %v6820 = vpop.permute.xlu0 %6819
        %6821 = vrot.lane.b32.xlu0 %v6765, 64
        %v6822 = vpop.permute.xlu0 %6821
        %6823 = vrot.lane.b32.xlu0 %v6766, 64
        %v6824 = vpop.permute.xlu0 %6823
        %6825 = vrot.lane.b32.xlu0 %v6767, 64
        %v6826 = vpop.permute.xlu0 %6825
        %6827 = vrot.lane.b32.xlu0 %v6768, 64
        %v6828 = vpop.permute.xlu0 %6827
        %6829 = vrot.lane.b32.xlu0 %v6769, 64
        %v6830 = vpop.permute.xlu0 %6829
        %6831 = vrot.lane.b32.xlu0 %v6770, 64
        %v6832 = vpop.permute.xlu0 %6831
        %6833 = vrot.lane.b32.xlu0 %v6771, 64
        %v6834 = vpop.permute.xlu0 %6833
        %6835 = vrot.lane.b32.xlu0 %v6772, 64
        %v6836 = vpop.permute.xlu0 %6835
        %v6837 = vunpack.c.l.b16 %v4642
        %v6838 = vunpack.c.l.b16 %v4652
        %v6839 = vunpack.c.l.b16 %v4666
        %v6840 = vunpack.c.l.b16 %v4676
        %v6841 = vunpack.c.l.b16 %v4690
        %v6842 = vunpack.c.l.b16 %v4700
        %v6843 = vunpack.c.l.b16 %v4714
        %v6844 = vunpack.c.l.b16 %v4724
        %v6845 = vunpack.c.l.b16 %v4738
        %v6846 = vunpack.c.l.b16 %v4748
        %v6847 = vunpack.c.l.b16 %v4762
        %v6848 = vunpack.c.l.b16 %v4772
        %v6849 = vunpack.c.l.b16 %v4786
        %v6850 = vunpack.c.l.b16 %v4796
        %v6851 = vunpack.c.l.b16 %v4810
        %v6852 = vunpack.c.l.b16 %v4820
        %v6853 = vunpack.c.l.b16 %v4834
        %v6854 = vunpack.c.l.b16 %v4844
        %v6855 = vunpack.c.l.b16 %v4858
        %v6856 = vunpack.c.l.b16 %v4868
        %v6857 = vunpack.c.l.b16 %v4882
        %v6858 = vunpack.c.l.b16 %v4892
        %v6859 = vunpack.c.l.b16 %v4906
        %v6860 = vunpack.c.l.b16 %v4916
        %v6861 = vunpack.c.l.b16 %v4930
        %v6862 = vunpack.c.l.b16 %v4940
        %v6863 = vunpack.c.l.b16 %v4954
        %v6864 = vunpack.c.l.b16 %v4964
        %v6865 = vunpack.c.l.b16 %v4978
        %v6866 = vunpack.c.l.b16 %v4988
        %v6867 = vunpack.c.l.b16 %v5002
        %v6868 = vunpack.c.l.b16 %v5012
        %v6869 = vunpack.c.l.b16 %v5026
        %v6870 = vunpack.c.l.b16 %v5036
        %v6871 = vunpack.c.l.b16 %v5050
        %v6872 = vunpack.c.l.b16 %v5060
        %v6873 = vunpack.c.l.b16 %v5074
        %v6874 = vunpack.c.l.b16 %v5084
        %v6875 = vunpack.c.l.b16 %v5098
        %v6876 = vunpack.c.l.b16 %v5108
        %v6877 = vunpack.c.l.b16 %v5122
        %v6878 = vunpack.c.l.b16 %v5132
        %v6879 = vunpack.c.l.b16 %v5146
        %v6880 = vunpack.c.l.b16 %v5156
        %v6881 = vunpack.c.l.b16 %v5170
        %v6882 = vunpack.c.l.b16 %v5180
        %v6883 = vunpack.c.l.b16 %v5194
        %v6884 = vunpack.c.l.b16 %v5204
        %v6885 = vunpack.c.l.b16 %v5218
        %v6886 = vunpack.c.l.b16 %v5228
        %v6887 = vunpack.c.l.b16 %v5242
        %v6888 = vunpack.c.l.b16 %v5252
        %v6889 = vunpack.c.l.b16 %v5266
        %v6890 = vunpack.c.l.b16 %v5276
        %v6891 = vunpack.c.l.b16 %v5290
        %v6892 = vunpack.c.l.b16 %v5300
        %v6893 = vunpack.c.l.b16 %v5314
        %v6894 = vunpack.c.l.b16 %v5324
        %v6895 = vunpack.c.l.b16 %v5338
        %v6896 = vunpack.c.l.b16 %v5348
        %v6897 = vunpack.c.l.b16 %v5362
        %v6898 = vunpack.c.l.b16 %v5372
        %v6899 = vunpack.c.l.b16 %v5386
        %v6900 = vunpack.c.l.b16 %v5396
        %v6901 = vpack.c.b16 %v6838, %v6837
        %v6902 = vpack.c.b16 %v6840, %v6839
        %v6903 = vpack.c.b16 %v6842, %v6841
        %v6904 = vpack.c.b16 %v6844, %v6843
        %v6905 = vpack.c.b16 %v6846, %v6845
        %v6906 = vpack.c.b16 %v6848, %v6847
        %v6907 = vpack.c.b16 %v6850, %v6849
        %v6908 = vpack.c.b16 %v6852, %v6851
        %v6909 = vpack.c.b16 %v6854, %v6853
        %v6910 = vpack.c.b16 %v6856, %v6855
        %v6911 = vpack.c.b16 %v6858, %v6857
        %v6912 = vpack.c.b16 %v6860, %v6859
        %v6913 = vpack.c.b16 %v6862, %v6861
        %v6914 = vpack.c.b16 %v6864, %v6863
        %v6915 = vpack.c.b16 %v6866, %v6865
        %v6916 = vpack.c.b16 %v6868, %v6867
        %v6917 = vpack.c.b16 %v6870, %v6869
        %v6918 = vpack.c.b16 %v6872, %v6871
        %v6919 = vpack.c.b16 %v6874, %v6873
        %v6920 = vpack.c.b16 %v6876, %v6875
        %v6921 = vpack.c.b16 %v6878, %v6877
        %v6922 = vpack.c.b16 %v6880, %v6879
        %v6923 = vpack.c.b16 %v6882, %v6881
        %v6924 = vpack.c.b16 %v6884, %v6883
        %v6925 = vpack.c.b16 %v6886, %v6885
        %v6926 = vpack.c.b16 %v6888, %v6887
        %v6927 = vpack.c.b16 %v6890, %v6889
        %v6928 = vpack.c.b16 %v6892, %v6891
        %v6929 = vpack.c.b16 %v6894, %v6893
        %v6930 = vpack.c.b16 %v6896, %v6895
        %v6931 = vpack.c.b16 %v6898, %v6897
        %v6932 = vpack.c.b16 %v6900, %v6899
        %6933 = vrot.lane.b32.xlu0 %v6901, 96
        %v6934 = vpop.permute.xlu0 %6933
        %6935 = vrot.lane.b32.xlu0 %v6902, 96
        %v6936 = vpop.permute.xlu0 %6935
        %6937 = vrot.lane.b32.xlu0 %v6903, 96
        %v6938 = vpop.permute.xlu0 %6937
        %6939 = vrot.lane.b32.xlu0 %v6904, 96
        %v6940 = vpop.permute.xlu0 %6939
        %6941 = vrot.lane.b32.xlu0 %v6905, 96
        %v6942 = vpop.permute.xlu0 %6941
        %6943 = vrot.lane.b32.xlu0 %v6906, 96
        %v6944 = vpop.permute.xlu0 %6943
        %6945 = vrot.lane.b32.xlu0 %v6907, 96
        %v6946 = vpop.permute.xlu0 %6945
        %6947 = vrot.lane.b32.xlu0 %v6908, 96
        %v6948 = vpop.permute.xlu0 %6947
        %6949 = vrot.lane.b32.xlu0 %v6909, 96
        %v6950 = vpop.permute.xlu0 %6949
        %6951 = vrot.lane.b32.xlu0 %v6910, 96
        %v6952 = vpop.permute.xlu0 %6951
        %6953 = vrot.lane.b32.xlu0 %v6911, 96
        %v6954 = vpop.permute.xlu0 %6953
        %6955 = vrot.lane.b32.xlu0 %v6912, 96
        %v6956 = vpop.permute.xlu0 %6955
        %6957 = vrot.lane.b32.xlu0 %v6913, 96
        %v6958 = vpop.permute.xlu0 %6957
        %6959 = vrot.lane.b32.xlu0 %v6914, 96
        %v6960 = vpop.permute.xlu0 %6959
        %6961 = vrot.lane.b32.xlu0 %v6915, 96
        %v6962 = vpop.permute.xlu0 %6961
        %6963 = vrot.lane.b32.xlu0 %v6916, 96
        %v6964 = vpop.permute.xlu0 %6963
        %6965 = vrot.lane.b32.xlu0 %v6917, 96
        %v6966 = vpop.permute.xlu0 %6965
        %6967 = vrot.lane.b32.xlu0 %v6918, 96
        %v6968 = vpop.permute.xlu0 %6967
        %6969 = vrot.lane.b32.xlu0 %v6919, 96
        %v6970 = vpop.permute.xlu0 %6969
        %6971 = vrot.lane.b32.xlu0 %v6920, 96
        %v6972 = vpop.permute.xlu0 %6971
        %6973 = vrot.lane.b32.xlu0 %v6921, 96
        %v6974 = vpop.permute.xlu0 %6973
        %6975 = vrot.lane.b32.xlu0 %v6922, 96
        %v6976 = vpop.permute.xlu0 %6975
        %6977 = vrot.lane.b32.xlu0 %v6923, 96
        %v6978 = vpop.permute.xlu0 %6977
        %6979 = vrot.lane.b32.xlu0 %v6924, 96
        %v6980 = vpop.permute.xlu0 %6979
        %6981 = vrot.lane.b32.xlu0 %v6925, 96
        %v6982 = vpop.permute.xlu0 %6981
        %6983 = vrot.lane.b32.xlu0 %v6926, 96
        %v6984 = vpop.permute.xlu0 %6983
        %6985 = vrot.lane.b32.xlu0 %v6927, 96
        %v6986 = vpop.permute.xlu0 %6985
        %6987 = vrot.lane.b32.xlu0 %v6928, 96
        %v6988 = vpop.permute.xlu0 %6987
        %6989 = vrot.lane.b32.xlu0 %v6929, 96
        %v6990 = vpop.permute.xlu0 %6989
        %6991 = vrot.lane.b32.xlu0 %v6930, 96
        %v6992 = vpop.permute.xlu0 %6991
        %6993 = vrot.lane.b32.xlu0 %v6931, 96
        %v6994 = vpop.permute.xlu0 %6993
        %6995 = vrot.lane.b32.xlu0 %v6932, 96
        %v6996 = vpop.permute.xlu0 %6995
        %v6997 = vunpack.c.l.b16 %v5528
        %v6998 = vunpack.c.l.b16 %v5531
        %v6999 = vunpack.c.l.b16 %v5535
        %v7000 = vunpack.c.l.b16 %v5538
        %v7001 = vunpack.c.l.b16 %v5542
        %v7002 = vunpack.c.l.b16 %v5545
        %v7003 = vunpack.c.l.b16 %v5549
        %v7004 = vunpack.c.l.b16 %v5552
        %v7005 = vunpack.c.l.b16 %v5556
        %v7006 = vunpack.c.l.b16 %v5559
        %v7007 = vunpack.c.l.b16 %v5563
        %v7008 = vunpack.c.l.b16 %v5566
        %v7009 = vunpack.c.l.b16 %v5570
        %v7010 = vunpack.c.l.b16 %v5573
        %v7011 = vunpack.c.l.b16 %v5577
        %v7012 = vunpack.c.l.b16 %v5580
        %v7013 = vunpack.c.l.b16 %v5584
        %v7014 = vunpack.c.l.b16 %v5587
        %v7015 = vunpack.c.l.b16 %v5591
        %v7016 = vunpack.c.l.b16 %v5594
        %v7017 = vunpack.c.l.b16 %v5598
        %v7018 = vunpack.c.l.b16 %v5601
        %v7019 = vunpack.c.l.b16 %v5605
        %v7020 = vunpack.c.l.b16 %v5608
        %v7021 = vunpack.c.l.b16 %v5612
        %v7022 = vunpack.c.l.b16 %v5615
        %v7023 = vunpack.c.l.b16 %v5619
        %v7024 = vunpack.c.l.b16 %v5622
        %v7025 = vunpack.c.l.b16 %v5626
        %v7026 = vunpack.c.l.b16 %v5629
        %v7027 = vunpack.c.l.b16 %v5633
        %v7028 = vunpack.c.l.b16 %v5636
        %v7029 = vunpack.c.l.b16 %v5640
        %v7030 = vunpack.c.l.b16 %v5643
        %v7031 = vunpack.c.l.b16 %v5647
        %v7032 = vunpack.c.l.b16 %v5650
        %v7033 = vunpack.c.l.b16 %v5654
        %v7034 = vunpack.c.l.b16 %v5657
        %v7035 = vunpack.c.l.b16 %v5661
        %v7036 = vunpack.c.l.b16 %v5664
        %v7037 = vunpack.c.l.b16 %v5668
        %v7038 = vunpack.c.l.b16 %v5671
        %v7039 = vunpack.c.l.b16 %v5675
        %v7040 = vunpack.c.l.b16 %v5678
        %v7041 = vunpack.c.l.b16 %v5682
        %v7042 = vunpack.c.l.b16 %v5685
        %v7043 = vunpack.c.l.b16 %v5689
        %v7044 = vunpack.c.l.b16 %v5692
        %v7045 = vunpack.c.l.b16 %v5696
        %v7046 = vunpack.c.l.b16 %v5699
        %v7047 = vunpack.c.l.b16 %v5703
        %v7048 = vunpack.c.l.b16 %v5706
        %v7049 = vunpack.c.l.b16 %v5710
        %v7050 = vunpack.c.l.b16 %v5713
        %v7051 = vunpack.c.l.b16 %v5717
        %v7052 = vunpack.c.l.b16 %v5720
        %v7053 = vunpack.c.l.b16 %v5724
        %v7054 = vunpack.c.l.b16 %v5727
        %v7055 = vunpack.c.l.b16 %v5731
        %v7056 = vunpack.c.l.b16 %v5734
        %v7057 = vunpack.c.l.b16 %v5738
        %v7058 = vunpack.c.l.b16 %v5741
        %v7059 = vunpack.c.l.b16 %v5745
        %v7060 = vunpack.c.l.b16 %v5748
        %v7061 = vpack.c.b16 %v6998, %v6997
        %v7062 = vpack.c.b16 %v7000, %v6999
        %v7063 = vpack.c.b16 %v7002, %v7001
        %v7064 = vpack.c.b16 %v7004, %v7003
        %v7065 = vpack.c.b16 %v7006, %v7005
        %v7066 = vpack.c.b16 %v7008, %v7007
        %v7067 = vpack.c.b16 %v7010, %v7009
        %v7068 = vpack.c.b16 %v7012, %v7011
        %v7069 = vpack.c.b16 %v7014, %v7013
        %v7070 = vpack.c.b16 %v7016, %v7015
        %v7071 = vpack.c.b16 %v7018, %v7017
        %v7072 = vpack.c.b16 %v7020, %v7019
        %v7073 = vpack.c.b16 %v7022, %v7021
        %v7074 = vpack.c.b16 %v7024, %v7023
        %v7075 = vpack.c.b16 %v7026, %v7025
        %v7076 = vpack.c.b16 %v7028, %v7027
        %v7077 = vpack.c.b16 %v7030, %v7029
        %v7078 = vpack.c.b16 %v7032, %v7031
        %v7079 = vpack.c.b16 %v7034, %v7033
        %v7080 = vpack.c.b16 %v7036, %v7035
        %v7081 = vpack.c.b16 %v7038, %v7037
        %v7082 = vpack.c.b16 %v7040, %v7039
        %v7083 = vpack.c.b16 %v7042, %v7041
        %v7084 = vpack.c.b16 %v7044, %v7043
        %v7085 = vpack.c.b16 %v7046, %v7045
        %v7086 = vpack.c.b16 %v7048, %v7047
        %v7087 = vpack.c.b16 %v7050, %v7049
        %v7088 = vpack.c.b16 %v7052, %v7051
        %v7089 = vpack.c.b16 %v7054, %v7053
        %v7090 = vpack.c.b16 %v7056, %v7055
        %v7091 = vpack.c.b16 %v7058, %v7057
        %v7092 = vpack.c.b16 %v7060, %v7059
        %vm7093 = vcmask 261120
        %v7096 = vsel %vm7093, %v5845, %v5974
        %v7099 = vsel %vm7093, %v5846, %v5976
        %v7102 = vsel %vm7093, %v5847, %v5978
        %v7105 = vsel %vm7093, %v5848, %v5980
        %v7108 = vsel %vm7093, %v5849, %v5982
        %v7111 = vsel %vm7093, %v5850, %v5984
        %v7114 = vsel %vm7093, %v5851, %v5986
        %v7117 = vsel %vm7093, %v5852, %v5988
        %v7120 = vsel %vm7093, %v5853, %v5990
        %v7123 = vsel %vm7093, %v5854, %v5992
        %v7126 = vsel %vm7093, %v5855, %v5994
        %v7129 = vsel %vm7093, %v5856, %v5996
        %v7132 = vsel %vm7093, %v5857, %v5998
        %v7135 = vsel %vm7093, %v5858, %v6000
        %v7138 = vsel %vm7093, %v5859, %v6002
        %v7141 = vsel %vm7093, %v5860, %v6004
        %v7144 = vsel %vm7093, %v5861, %v6006
        %v7147 = vsel %vm7093, %v5862, %v6008
        %v7150 = vsel %vm7093, %v5863, %v6010
        %v7153 = vsel %vm7093, %v5864, %v6012
        %v7156 = vsel %vm7093, %v5865, %v6014
        %v7159 = vsel %vm7093, %v5866, %v6016
        %v7162 = vsel %vm7093, %v5867, %v6018
        %v7165 = vsel %vm7093, %v5868, %v6020
        %v7168 = vsel %vm7093, %v5869, %v6022
        %v7171 = vsel %vm7093, %v5870, %v6024
        %v7174 = vsel %vm7093, %v5871, %v6026
        %v7177 = vsel %vm7093, %v5872, %v6028
        %v7180 = vsel %vm7093, %v5873, %v6030
        %v7183 = vsel %vm7093, %v5874, %v6032
        %v7186 = vsel %vm7093, %v5875, %v6034
        %v7189 = vsel %vm7093, %v5876, %v6036
        %vm7190 = vcmask 523264
        %v7192 = vsel %vm7190, %v7096, %v6134
        %v7194 = vsel %vm7190, %v7099, %v6136
        %v7196 = vsel %vm7190, %v7102, %v6138
        %v7198 = vsel %vm7190, %v7105, %v6140
        %v7200 = vsel %vm7190, %v7108, %v6142
        %v7202 = vsel %vm7190, %v7111, %v6144
        %v7204 = vsel %vm7190, %v7114, %v6146
        %v7206 = vsel %vm7190, %v7117, %v6148
        %v7208 = vsel %vm7190, %v7120, %v6150
        %v7210 = vsel %vm7190, %v7123, %v6152
        %v7212 = vsel %vm7190, %v7126, %v6154
        %v7214 = vsel %vm7190, %v7129, %v6156
        %v7216 = vsel %vm7190, %v7132, %v6158
        %v7218 = vsel %vm7190, %v7135, %v6160
        %v7220 = vsel %vm7190, %v7138, %v6162
        %v7222 = vsel %vm7190, %v7141, %v6164
        %v7224 = vsel %vm7190, %v7144, %v6166
        %v7226 = vsel %vm7190, %v7147, %v6168
        %v7228 = vsel %vm7190, %v7150, %v6170
        %v7230 = vsel %vm7190, %v7153, %v6172
        %v7232 = vsel %vm7190, %v7156, %v6174
        %v7234 = vsel %vm7190, %v7159, %v6176
        %v7236 = vsel %vm7190, %v7162, %v6178
        %v7238 = vsel %vm7190, %v7165, %v6180
        %v7240 = vsel %vm7190, %v7168, %v6182
        %v7242 = vsel %vm7190, %v7171, %v6184
        %v7244 = vsel %vm7190, %v7174, %v6186
        %v7246 = vsel %vm7190, %v7177, %v6188
        %v7248 = vsel %vm7190, %v7180, %v6190
        %v7250 = vsel %vm7190, %v7183, %v6192
        %v7252 = vsel %vm7190, %v7186, %v6194
        %v7254 = vsel %vm7190, %v7189, %v6196
        %vm7255 = vcmask 785408
        %v7257 = vsel %vm7255, %v7192, %v6326
        %v7260 = vsel %vm7255, %v7194, %v6328
        %v7263 = vsel %vm7255, %v7196, %v6330
        %v7266 = vsel %vm7255, %v7198, %v6332
        %v7269 = vsel %vm7255, %v7200, %v6334
        %v7272 = vsel %vm7255, %v7202, %v6336
        %v7275 = vsel %vm7255, %v7204, %v6338
        %v7278 = vsel %vm7255, %v7206, %v6340
        %v7281 = vsel %vm7255, %v7208, %v6342
        %v7284 = vsel %vm7255, %v7210, %v6344
        %v7287 = vsel %vm7255, %v7212, %v6346
        %v7290 = vsel %vm7255, %v7214, %v6348
        %v7293 = vsel %vm7255, %v7216, %v6350
        %v7296 = vsel %vm7255, %v7218, %v6352
        %v7299 = vsel %vm7255, %v7220, %v6354
        %v7302 = vsel %vm7255, %v7222, %v6356
        %v7305 = vsel %vm7255, %v7224, %v6358
        %v7308 = vsel %vm7255, %v7226, %v6360
        %v7311 = vsel %vm7255, %v7228, %v6362
        %v7314 = vsel %vm7255, %v7230, %v6364
        %v7317 = vsel %vm7255, %v7232, %v6366
        %v7320 = vsel %vm7255, %v7234, %v6368
        %v7323 = vsel %vm7255, %v7236, %v6370
        %v7326 = vsel %vm7255, %v7238, %v6372
        %v7329 = vsel %vm7255, %v7240, %v6374
        %v7332 = vsel %vm7255, %v7242, %v6376
        %v7335 = vsel %vm7255, %v7244, %v6378
        %v7338 = vsel %vm7255, %v7246, %v6380
        %v7341 = vsel %vm7255, %v7248, %v6382
        %v7344 = vsel %vm7255, %v7250, %v6384
        %v7347 = vsel %vm7255, %v7252, %v6386
        %v7350 = vsel %vm7255, %v7254, %v6388
        %v7354 = vsel %vm7093, %v6453, %v6582
        %v7357 = vsel %vm7093, %v6454, %v6584
        %v7360 = vsel %vm7093, %v6455, %v6586
        %v7363 = vsel %vm7093, %v6456, %v6588
        %v7366 = vsel %vm7093, %v6457, %v6590
        %v7369 = vsel %vm7093, %v6458, %v6592
        %v7372 = vsel %vm7093, %v6459, %v6594
        %v7375 = vsel %vm7093, %v6460, %v6596
        %v7378 = vsel %vm7093, %v6461, %v6598
        %v7381 = vsel %vm7093, %v6462, %v6600
        %v7384 = vsel %vm7093, %v6463, %v6602
        %v7387 = vsel %vm7093, %v6464, %v6604
        %v7390 = vsel %vm7093, %v6465, %v6606
        %v7393 = vsel %vm7093, %v6466, %v6608
        %v7396 = vsel %vm7093, %v6467, %v6610
        %v7399 = vsel %vm7093, %v6468, %v6612
        %v7402 = vsel %vm7093, %v6469, %v6614
        %v7405 = vsel %vm7093, %v6470, %v6616
        %v7408 = vsel %vm7093, %v6471, %v6618
        %v7411 = vsel %vm7093, %v6472, %v6620
        %v7414 = vsel %vm7093, %v6473, %v6622
        %v7417 = vsel %vm7093, %v6474, %v6624
        %v7420 = vsel %vm7093, %v6475, %v6626
        %v7423 = vsel %vm7093, %v6476, %v6628
        %v7426 = vsel %vm7093, %v6477, %v6630
        %v7429 = vsel %vm7093, %v6478, %v6632
        %v7432 = vsel %vm7093, %v6479, %v6634
        %v7435 = vsel %vm7093, %v6480, %v6636
        %v7438 = vsel %vm7093, %v6481, %v6638
        %v7441 = vsel %vm7093, %v6482, %v6640
        %v7444 = vsel %vm7093, %v6483, %v6642
        %v7447 = vsel %vm7093, %v6484, %v6644
        %v7449 = vsel %vm7190, %v7354, %v6774
        %v7451 = vsel %vm7190, %v7357, %v6776
        %v7453 = vsel %vm7190, %v7360, %v6778
        %v7455 = vsel %vm7190, %v7363, %v6780
        %v7457 = vsel %vm7190, %v7366, %v6782
        %v7459 = vsel %vm7190, %v7369, %v6784
        %v7461 = vsel %vm7190, %v7372, %v6786
        %v7463 = vsel %vm7190, %v7375, %v6788
        %v7465 = vsel %vm7190, %v7378, %v6790
        %v7467 = vsel %vm7190, %v7381, %v6792
        %v7469 = vsel %vm7190, %v7384, %v6794
        %v7471 = vsel %vm7190, %v7387, %v6796
        %v7473 = vsel %vm7190, %v7390, %v6798
        %v7475 = vsel %vm7190, %v7393, %v6800
        %v7477 = vsel %vm7190, %v7396, %v6802
        %v7479 = vsel %vm7190, %v7399, %v6804
        %v7481 = vsel %vm7190, %v7402, %v6806
        %v7483 = vsel %vm7190, %v7405, %v6808
        %v7485 = vsel %vm7190, %v7408, %v6810
        %v7487 = vsel %vm7190, %v7411, %v6812
        %v7489 = vsel %vm7190, %v7414, %v6814
        %v7491 = vsel %vm7190, %v7417, %v6816
        %v7493 = vsel %vm7190, %v7420, %v6818
        %v7495 = vsel %vm7190, %v7423, %v6820
        %v7497 = vsel %vm7190, %v7426, %v6822
        %v7499 = vsel %vm7190, %v7429, %v6824
        %v7501 = vsel %vm7190, %v7432, %v6826
        %v7503 = vsel %vm7190, %v7435, %v6828
        %v7505 = vsel %vm7190, %v7438, %v6830
        %v7507 = vsel %vm7190, %v7441, %v6832
        %v7509 = vsel %vm7190, %v7444, %v6834
        %v7511 = vsel %vm7190, %v7447, %v6836
        %v7513 = vsel %vm7255, %v7449, %v6934
        %v7516 = vsel %vm7255, %v7451, %v6936
        %v7519 = vsel %vm7255, %v7453, %v6938
        %v7522 = vsel %vm7255, %v7455, %v6940
        %v7525 = vsel %vm7255, %v7457, %v6942
        %v7528 = vsel %vm7255, %v7459, %v6944
        %v7531 = vsel %vm7255, %v7461, %v6946
        %v7534 = vsel %vm7255, %v7463, %v6948
        %v7537 = vsel %vm7255, %v7465, %v6950
        %v7540 = vsel %vm7255, %v7467, %v6952
        %v7543 = vsel %vm7255, %v7469, %v6954
        %v7546 = vsel %vm7255, %v7471, %v6956
        %v7549 = vsel %vm7255, %v7473, %v6958
        %v7552 = vsel %vm7255, %v7475, %v6960
        %v7555 = vsel %vm7255, %v7477, %v6962
        %v7558 = vsel %vm7255, %v7479, %v6964
        %v7561 = vsel %vm7255, %v7481, %v6966
        %v7564 = vsel %vm7255, %v7483, %v6968
        %v7567 = vsel %vm7255, %v7485, %v6970
        %v7570 = vsel %vm7255, %v7487, %v6972
        %v7573 = vsel %vm7255, %v7489, %v6974
        %v7576 = vsel %vm7255, %v7491, %v6976
        %v7579 = vsel %vm7255, %v7493, %v6978
        %v7582 = vsel %vm7255, %v7495, %v6980
        %v7585 = vsel %vm7255, %v7497, %v6982
        %v7588 = vsel %vm7255, %v7499, %v6984
        %v7591 = vsel %vm7255, %v7501, %v6986
        %v7594 = vsel %vm7255, %v7503, %v6988
        %v7597 = vsel %vm7255, %v7505, %v6990
        %v7600 = vsel %vm7255, %v7507, %v6992
        %v7603 = vsel %vm7255, %v7509, %v6994
        %v7606 = vsel %vm7255, %v7511, %v6996
        %v7608 = vld [vmem:[%s3] sm:$0xf]
        %v7609 = vld [vmem:[%s3 + $0x4] sm:$0xf]
        %v7610 = vld [vmem:[%s3 + $0x8] sm:$0xf]
        %v7611 = vld [vmem:[%s3 + $0xc] sm:$0xf]
        %v7612 = vld [vmem:[%s3 + $0x10] sm:$0xf]
        %v7613 = vld [vmem:[%s3 + $0x14] sm:$0xf]
        %v7614 = vld [vmem:[%s3 + $0x18] sm:$0xf]
        %v7615 = vld [vmem:[%s3 + $0x1c] sm:$0xf]
        %v7616 = vld [vmem:[%s3 + $0x20] sm:$0xf]
        %v7617 = vld [vmem:[%s3 + $0x24] sm:$0xf]
        %v7618 = vld [vmem:[%s3 + $0x28] sm:$0xf]
        %v7619 = vld [vmem:[%s3 + $0x2c] sm:$0xf]
        %v7620 = vld [vmem:[%s3 + $0x30] sm:$0xf]
        %v7621 = vld [vmem:[%s3 + $0x34] sm:$0xf]
        %v7622 = vld [vmem:[%s3 + $0x38] sm:$0xf]
        %v7623 = vld [vmem:[%s3 + $0x3c] sm:$0xf]
        %v7624 = vld [vmem:[%s3 + $0x40] sm:$0xf]
        %v7625 = vld [vmem:[%s3 + $0x44] sm:$0xf]
        %v7626 = vld [vmem:[%s3 + $0x48] sm:$0xf]
        %v7627 = vld [vmem:[%s3 + $0x4c] sm:$0xf]
        %v7628 = vld [vmem:[%s3 + $0x50] sm:$0xf]
        %v7629 = vld [vmem:[%s3 + $0x54] sm:$0xf]
        %v7630 = vld [vmem:[%s3 + $0x58] sm:$0xf]
        %v7631 = vld [vmem:[%s3 + $0x5c] sm:$0xf]
        %v7632 = vld [vmem:[%s3 + $0x60] sm:$0xf]
        %v7633 = vld [vmem:[%s3 + $0x64] sm:$0xf]
        %v7634 = vld [vmem:[%s3 + $0x68] sm:$0xf]
        %v7635 = vld [vmem:[%s3 + $0x6c] sm:$0xf]
        %v7636 = vld [vmem:[%s3 + $0x70] sm:$0xf]
        %v7637 = vld [vmem:[%s3 + $0x74] sm:$0xf]
        %v7638 = vld [vmem:[%s3 + $0x78] sm:$0xf]
        %v7639 = vld [vmem:[%s3 + $0x7c] sm:$0xf]
        %v7640 = vld [vmem:[%s3 + $0x80] sm:$0xf]
        %v7641 = vld [vmem:[%s3 + $0x84] sm:$0xf]
        %v7642 = vld [vmem:[%s3 + $0x88] sm:$0xf]
        %v7643 = vld [vmem:[%s3 + $0x8c] sm:$0xf]
        %v7644 = vld [vmem:[%s4] sm:$0x1]
        %v7646 = vlaneseq
        %v7647 = vshrl.u32 %v7646, 7
        %v7648 = vsub.s32 0, %v7647
        %v7649 = vrot.slane %v7644, %v7648
        %v7687 = vunpack.c.l.b16 %v7608
        %v7688 = vunpack.c.l.b16 %v7609
        %v7689 = vunpack.c.l.b16 %v7610
        %v7690 = vunpack.c.l.b16 %v7611
        %v7691 = vunpack.c.l.b16 %v7612
        %v7692 = vunpack.c.l.b16 %v7613
        %v7693 = vunpack.c.l.b16 %v7614
        %v7694 = vunpack.c.l.b16 %v7615
        %v7695 = vunpack.c.l.b16 %v7616
        %v7696 = vunpack.c.l.b16 %v7617
        %v7697 = vunpack.c.l.b16 %v7618
        %v7698 = vunpack.c.l.b16 %v7619
        %v7699 = vunpack.c.l.b16 %v7620
        %v7700 = vunpack.c.l.b16 %v7621
        %v7701 = vunpack.c.l.b16 %v7622
        %v7702 = vunpack.c.l.b16 %v7623
        %v7703 = vunpack.c.l.b16 %v7624
        %v7704 = vunpack.c.l.b16 %v7625
        %v7705 = vunpack.c.l.b16 %v7626
        %v7706 = vunpack.c.l.b16 %v7627
        %v7707 = vunpack.c.l.b16 %v7628
        %v7708 = vunpack.c.l.b16 %v7629
        %v7709 = vunpack.c.l.b16 %v7630
        %v7710 = vunpack.c.l.b16 %v7631
        %v7711 = vunpack.c.l.b16 %v7632
        %v7712 = vunpack.c.l.b16 %v7633
        %v7713 = vunpack.c.l.b16 %v7634
        %v7714 = vunpack.c.l.b16 %v7635
        %v7715 = vunpack.c.l.b16 %v7636
        %v7716 = vunpack.c.l.b16 %v7637
        %v7717 = vunpack.c.l.b16 %v7638
        %v7718 = vunpack.c.l.b16 %v7639
        %v7719 = vunpack.c.l.b16 %v7640
        %v7720 = vunpack.c.l.b16 %v7641
        %v7721 = vunpack.c.l.b16 %v7642
        %v7722 = vunpack.c.l.b16 %v7643
        %v7723 = vpack.c.b16 %v7688, %v7687
        %v7724 = vpack.c.b16 %v7690, %v7689
        %v7725 = vpack.c.b16 %v7692, %v7691
        %v7726 = vpack.c.b16 %v7694, %v7693
        %v7727 = vpack.c.b16 %v7696, %v7695
        %v7728 = vpack.c.b16 %v7698, %v7697
        %v7729 = vpack.c.b16 %v7700, %v7699
        %v7730 = vpack.c.b16 %v7702, %v7701
        %v7731 = vpack.c.b16 %v7704, %v7703
        %v7732 = vpack.c.b16 %v7706, %v7705
        %v7733 = vpack.c.b16 %v7708, %v7707
        %v7734 = vpack.c.b16 %v7710, %v7709
        %v7735 = vpack.c.b16 %v7712, %v7711
        %v7736 = vpack.c.b16 %v7714, %v7713
        %v7737 = vpack.c.b16 %v7716, %v7715
        %v7738 = vpack.c.b16 %v7718, %v7717
        %v7739 = vpack.c.b16 %v7720, %v7719
        %v7740 = vpack.c.b16 %v7722, %v7721
        %v7760 = vsel %vm7093, %v7061, 0
        %v7763 = vsel %vm7093, %v7062, 0
        %v7766 = vsel %vm7093, %v7063, 0
        %v7769 = vsel %vm7093, %v7064, 0
        %v7772 = vsel %vm7093, %v7065, 0
        %v7775 = vsel %vm7093, %v7066, 0
        %v7778 = vsel %vm7093, %v7067, 0
        %v7781 = vsel %vm7093, %v7068, 0
        %v7784 = vsel %vm7093, %v7069, 0
        %v7787 = vsel %vm7093, %v7070, 0
        %v7790 = vsel %vm7093, %v7071, 0
        %v7793 = vsel %vm7093, %v7072, 0
        %v7796 = vsel %vm7093, %v7073, 0
        %v7799 = vsel %vm7093, %v7074, 0
        %v7802 = vsel %vm7093, %v7075, 0
        %v7805 = vsel %vm7093, %v7076, 0
        %v7808 = vsel %vm7093, %v7077, 0
        %v7811 = vsel %vm7093, %v7078, 0
        %v7814 = vsel %vm7093, %v7079, 0
        %v7817 = vsel %vm7093, %v7080, 0
        %v7820 = vsel %vm7093, %v7081, 0
        %v7823 = vsel %vm7093, %v7082, 0
        %v7826 = vsel %vm7093, %v7083, 0
        %v7829 = vsel %vm7093, %v7084, 0
        %v7832 = vsel %vm7093, %v7085, 0
        %v7835 = vsel %vm7093, %v7086, 0
        %v7838 = vsel %vm7093, %v7087, 0
        %v7841 = vsel %vm7093, %v7088, 0
        %v7844 = vsel %vm7093, %v7089, 0
        %v7847 = vsel %vm7093, %v7090, 0
        %v7850 = vsel %vm7093, %v7091, 0
        %v7853 = vsel %vm7093, %v7092, 0
        %7855 = vmatprep.subr.bf16.mxu0 0
        %7856 = vmatpush1.bf16.msra.mxu0 %v7730
        %7857 = vmatprep.subr.bf16.mxu0 0
        %7858 = vmatpush1.bf16.msra.mxu0 %v7729
        %7859 = vmatprep.subr.bf16.mxu0 0
        %7860 = vmatpush1.bf16.msra.mxu0 %v7728
        %7861 = vmatprep.subr.bf16.mxu0 0
        %7862 = vmatpush1.bf16.msra.mxu0 %v7727
        %7863 = vmatprep.subr.bf16.mxu0 0
        %7864 = vmatpush1.bf16.msra.mxu0 %v7726
        %7865 = vmatprep.subr.bf16.mxu0 0
        %7866 = vmatpush1.bf16.msra.mxu0 %v7725
        %7867 = vmatprep.subr.bf16.mxu0 0
        %7868 = vmatpush1.bf16.msra.mxu0 %v7724
        %7869 = vmatprep.subr.bf16.mxu0 0
        %7870 = vmatpush1.bf16.msra.mxu0 %v7723
        %7871 = vmatprep.subr.bf16.mxu0 0
        %7872 = vmatpush2.bf16.msra.mxu0 %v7738
        %7873 = vmatprep.subr.bf16.mxu0 0
        %7874 = vmatpush2.bf16.msra.mxu0 %v7737
        %7875 = vmatprep.subr.bf16.mxu0 0
        %7876 = vmatpush2.bf16.msra.mxu0 %v7736
        %7877 = vmatprep.subr.bf16.mxu0 0
        %7878 = vmatpush2.bf16.msra.mxu0 %v7735
        %7879 = vmatprep.subr.bf16.mxu0 0
        %7880 = vmatpush2.bf16.msra.mxu0 %v7734
        %7881 = vmatprep.subr.bf16.mxu0 0
        %7882 = vmatpush2.bf16.msra.mxu0 %v7733
        %7883 = vmatprep.subr.bf16.mxu0 0
        %7884 = vmatpush2.bf16.msra.mxu0 %v7732
        %7885 = vmatprep.subr.bf16.mxu0 0
        %7886 = vmatpush2.bf16.msra.mxu0 %v7731
        %7887 = vmatprep.mubr.bf16.mxu0 %v7513
        %7888 = vmatmul.mubr.bf16.gmra.mxu0 %v7257
        %v7889 = vpop.f32.mrf.mxu0
        %v7890 = vadd.f32 %v7649, %v7889
        %v7891 = vpop.f32.mrf.mxu0
        %v7892 = vpop.f32.mrf.mxu0
        %v7893 = vadd.f32 %v7649, %v7892
        %v7894 = vpop.f32.mrf.mxu0
        %7895 = vmatprep.mubr.bf16.mxu0 %v7516
        %7896 = vmatmul.mubr.bf16.gmra.mxu0 %v7260
        %v7897 = vpop.f32.mrf.mxu0
        %v7898 = vadd.f32 %v7649, %v7897
        %v7899 = vpop.f32.mrf.mxu0
        %v7900 = vpop.f32.mrf.mxu0
        %v7901 = vadd.f32 %v7649, %v7900
        %v7902 = vpop.f32.mrf.mxu0
        %7903 = vmatprep.mubr.bf16.mxu0 %v7519
        %7904 = vmatmul.mubr.bf16.gmra.mxu0 %v7263
        %v7905 = vpop.f32.mrf.mxu0
        %v7906 = vadd.f32 %v7649, %v7905
        %v7907 = vpop.f32.mrf.mxu0
        %v7908 = vpop.f32.mrf.mxu0
        %v7909 = vadd.f32 %v7649, %v7908
        %v7910 = vpop.f32.mrf.mxu0
        %7911 = vmatprep.mubr.bf16.mxu0 %v7522
        %7912 = vmatmul.mubr.bf16.gmra.mxu0 %v7266
        %v7913 = vpop.f32.mrf.mxu0
        %v7914 = vadd.f32 %v7649, %v7913
        %v7915 = vpop.f32.mrf.mxu0
        %v7916 = vpop.f32.mrf.mxu0
        %v7917 = vadd.f32 %v7649, %v7916
        %v7918 = vpop.f32.mrf.mxu0
        %7919 = vmatprep.mubr.bf16.mxu0 %v7525
        %7920 = vmatmul.mubr.bf16.gmra.mxu0 %v7269
        %v7921 = vpop.f32.mrf.mxu0
        %v7922 = vadd.f32 %v7649, %v7921
        %v7923 = vpop.f32.mrf.mxu0
        %v7924 = vpop.f32.mrf.mxu0
        %v7925 = vadd.f32 %v7649, %v7924
        %v7926 = vpop.f32.mrf.mxu0
        %7927 = vmatprep.mubr.bf16.mxu0 %v7528
        %7928 = vmatmul.mubr.bf16.gmra.mxu0 %v7272
        %v7929 = vpop.f32.mrf.mxu0
        %v7930 = vadd.f32 %v7649, %v7929
        %v7931 = vpop.f32.mrf.mxu0
        %v7932 = vpop.f32.mrf.mxu0
        %v7933 = vadd.f32 %v7649, %v7932
        %v7934 = vpop.f32.mrf.mxu0
        %7935 = vmatprep.mubr.bf16.mxu0 %v7531
        %7936 = vmatmul.mubr.bf16.gmra.mxu0 %v7275
        %v7937 = vpop.f32.mrf.mxu0
        %v7938 = vadd.f32 %v7649, %v7937
        %v7939 = vpop.f32.mrf.mxu0
        %v7940 = vpop.f32.mrf.mxu0
        %v7941 = vadd.f32 %v7649, %v7940
        %v7942 = vpop.f32.mrf.mxu0
        %7943 = vmatprep.mubr.bf16.mxu0 %v7534
        %7944 = vmatmul.mubr.bf16.gmra.mxu0 %v7278
        %v7945 = vpop.f32.mrf.mxu0
        %v7946 = vadd.f32 %v7649, %v7945
        %v7947 = vpop.f32.mrf.mxu0
        %v7948 = vpop.f32.mrf.mxu0
        %v7949 = vadd.f32 %v7649, %v7948
        %v7950 = vpop.f32.mrf.mxu0
        %7951 = vmatprep.mubr.bf16.mxu0 %v7537
        %7952 = vmatmul.mubr.bf16.gmra.mxu0 %v7281
        %v7953 = vpop.f32.mrf.mxu0
        %v7954 = vadd.f32 %v7649, %v7953
        %v7955 = vpop.f32.mrf.mxu0
        %v7956 = vpop.f32.mrf.mxu0
        %v7957 = vadd.f32 %v7649, %v7956
        %v7958 = vpop.f32.mrf.mxu0
        %7959 = vmatprep.mubr.bf16.mxu0 %v7540
        %7960 = vmatmul.mubr.bf16.gmra.mxu0 %v7284
        %v7961 = vpop.f32.mrf.mxu0
        %v7962 = vadd.f32 %v7649, %v7961
        %v7963 = vpop.f32.mrf.mxu0
        %v7964 = vpop.f32.mrf.mxu0
        %v7965 = vadd.f32 %v7649, %v7964
        %v7966 = vpop.f32.mrf.mxu0
        %7967 = vmatprep.mubr.bf16.mxu0 %v7543
        %7968 = vmatmul.mubr.bf16.gmra.mxu0 %v7287
        %v7969 = vpop.f32.mrf.mxu0
        %v7970 = vadd.f32 %v7649, %v7969
        %v7971 = vpop.f32.mrf.mxu0
        %v7972 = vpop.f32.mrf.mxu0
        %v7973 = vadd.f32 %v7649, %v7972
        %v7974 = vpop.f32.mrf.mxu0
        %7975 = vmatprep.mubr.bf16.mxu0 %v7546
        %7976 = vmatmul.mubr.bf16.gmra.mxu0 %v7290
        %v7977 = vpop.f32.mrf.mxu0
        %v7978 = vadd.f32 %v7649, %v7977
        %v7979 = vpop.f32.mrf.mxu0
        %v7980 = vpop.f32.mrf.mxu0
        %v7981 = vadd.f32 %v7649, %v7980
        %v7982 = vpop.f32.mrf.mxu0
        %7983 = vmatprep.mubr.bf16.mxu0 %v7549
        %7984 = vmatmul.mubr.bf16.gmra.mxu0 %v7293
        %v7985 = vpop.f32.mrf.mxu0
        %v7986 = vadd.f32 %v7649, %v7985
        %v7987 = vpop.f32.mrf.mxu0
        %v7988 = vpop.f32.mrf.mxu0
        %v7989 = vadd.f32 %v7649, %v7988
        %v7990 = vpop.f32.mrf.mxu0
        %7991 = vmatprep.mubr.bf16.mxu0 %v7552
        %7992 = vmatmul.mubr.bf16.gmra.mxu0 %v7296
        %v7993 = vpop.f32.mrf.mxu0
        %v7994 = vadd.f32 %v7649, %v7993
        %v7995 = vpop.f32.mrf.mxu0
        %v7996 = vpop.f32.mrf.mxu0
        %v7997 = vadd.f32 %v7649, %v7996
        %v7998 = vpop.f32.mrf.mxu0
        %7999 = vmatprep.mubr.bf16.mxu0 %v7555
        %8000 = vmatmul.mubr.bf16.gmra.mxu0 %v7299
        %v8001 = vpop.f32.mrf.mxu0
        %v8002 = vadd.f32 %v7649, %v8001
        %v8003 = vpop.f32.mrf.mxu0
        %v8004 = vpop.f32.mrf.mxu0
        %v8005 = vadd.f32 %v7649, %v8004
        %v8006 = vpop.f32.mrf.mxu0
        %8007 = vmatprep.mubr.bf16.mxu0 %v7558
        %8008 = vmatmul.mubr.bf16.gmra.mxu0 %v7302
        %v8009 = vpop.f32.mrf.mxu0
        %v8010 = vadd.f32 %v7649, %v8009
        %v8011 = vpop.f32.mrf.mxu0
        %v8012 = vpop.f32.mrf.mxu0
        %v8013 = vadd.f32 %v7649, %v8012
        %v8014 = vpop.f32.mrf.mxu0
        %8015 = vmatprep.mubr.bf16.mxu0 %v7561
        %8016 = vmatmul.mubr.bf16.gmra.mxu0 %v7305
        %v8017 = vpop.f32.mrf.mxu0
        %v8018 = vadd.f32 %v7649, %v8017
        %v8019 = vpop.f32.mrf.mxu0
        %v8020 = vpop.f32.mrf.mxu0
        %v8021 = vadd.f32 %v7649, %v8020
        %v8022 = vpop.f32.mrf.mxu0
        %8023 = vmatprep.mubr.bf16.mxu0 %v7564
        %8024 = vmatmul.mubr.bf16.gmra.mxu0 %v7308
        %v8025 = vpop.f32.mrf.mxu0
        %v8026 = vadd.f32 %v7649, %v8025
        %v8027 = vpop.f32.mrf.mxu0
        %v8028 = vpop.f32.mrf.mxu0
        %v8029 = vadd.f32 %v7649, %v8028
        %v8030 = vpop.f32.mrf.mxu0
        %8031 = vmatprep.mubr.bf16.mxu0 %v7567
        %8032 = vmatmul.mubr.bf16.gmra.mxu0 %v7311
        %v8033 = vpop.f32.mrf.mxu0
        %v8034 = vadd.f32 %v7649, %v8033
        %v8035 = vpop.f32.mrf.mxu0
        %v8036 = vpop.f32.mrf.mxu0
        %v8037 = vadd.f32 %v7649, %v8036
        %v8038 = vpop.f32.mrf.mxu0
        %8039 = vmatprep.mubr.bf16.mxu0 %v7570
        %8040 = vmatmul.mubr.bf16.gmra.mxu0 %v7314
        %v8041 = vpop.f32.mrf.mxu0
        %v8042 = vadd.f32 %v7649, %v8041
        %v8043 = vpop.f32.mrf.mxu0
        %v8044 = vpop.f32.mrf.mxu0
        %v8045 = vadd.f32 %v7649, %v8044
        %v8046 = vpop.f32.mrf.mxu0
        %8047 = vmatprep.mubr.bf16.mxu0 %v7573
        %8048 = vmatmul.mubr.bf16.gmra.mxu0 %v7317
        %v8049 = vpop.f32.mrf.mxu0
        %v8050 = vadd.f32 %v7649, %v8049
        %v8051 = vpop.f32.mrf.mxu0
        %v8052 = vpop.f32.mrf.mxu0
        %v8053 = vadd.f32 %v7649, %v8052
        %v8054 = vpop.f32.mrf.mxu0
        %8055 = vmatprep.mubr.bf16.mxu0 %v7576
        %8056 = vmatmul.mubr.bf16.gmra.mxu0 %v7320
        %v8057 = vpop.f32.mrf.mxu0
        %v8058 = vadd.f32 %v7649, %v8057
        %v8059 = vpop.f32.mrf.mxu0
        %v8060 = vpop.f32.mrf.mxu0
        %v8061 = vadd.f32 %v7649, %v8060
        %v8062 = vpop.f32.mrf.mxu0
        %8063 = vmatprep.mubr.bf16.mxu0 %v7579
        %8064 = vmatmul.mubr.bf16.gmra.mxu0 %v7323
        %v8065 = vpop.f32.mrf.mxu0
        %v8066 = vadd.f32 %v7649, %v8065
        %v8067 = vpop.f32.mrf.mxu0
        %v8068 = vpop.f32.mrf.mxu0
        %v8069 = vadd.f32 %v7649, %v8068
        %v8070 = vpop.f32.mrf.mxu0
        %8071 = vmatprep.mubr.bf16.mxu0 %v7582
        %8072 = vmatmul.mubr.bf16.gmra.mxu0 %v7326
        %v8073 = vpop.f32.mrf.mxu0
        %v8074 = vadd.f32 %v7649, %v8073
        %v8075 = vpop.f32.mrf.mxu0
        %v8076 = vpop.f32.mrf.mxu0
        %v8077 = vadd.f32 %v7649, %v8076
        %v8078 = vpop.f32.mrf.mxu0
        %8079 = vmatprep.mubr.bf16.mxu0 %v7585
        %8080 = vmatmul.mubr.bf16.gmra.mxu0 %v7329
        %v8081 = vpop.f32.mrf.mxu0
        %v8082 = vadd.f32 %v7649, %v8081
        %v8083 = vpop.f32.mrf.mxu0
        %v8084 = vpop.f32.mrf.mxu0
        %v8085 = vadd.f32 %v7649, %v8084
        %v8086 = vpop.f32.mrf.mxu0
        %8087 = vmatprep.mubr.bf16.mxu0 %v7588
        %8088 = vmatmul.mubr.bf16.gmra.mxu0 %v7332
        %v8089 = vpop.f32.mrf.mxu0
        %v8090 = vadd.f32 %v7649, %v8089
        %v8091 = vpop.f32.mrf.mxu0
        %v8092 = vpop.f32.mrf.mxu0
        %v8093 = vadd.f32 %v7649, %v8092
        %v8094 = vpop.f32.mrf.mxu0
        %8095 = vmatprep.mubr.bf16.mxu0 %v7591
        %8096 = vmatmul.mubr.bf16.gmra.mxu0 %v7335
        %v8097 = vpop.f32.mrf.mxu0
        %v8098 = vadd.f32 %v7649, %v8097
        %v8099 = vpop.f32.mrf.mxu0
        %v8100 = vpop.f32.mrf.mxu0
        %v8101 = vadd.f32 %v7649, %v8100
        %v8102 = vpop.f32.mrf.mxu0
        %8103 = vmatprep.mubr.bf16.mxu0 %v7594
        %8104 = vmatmul.mubr.bf16.gmra.mxu0 %v7338
        %v8105 = vpop.f32.mrf.mxu0
        %v8106 = vadd.f32 %v7649, %v8105
        %v8107 = vpop.f32.mrf.mxu0
        %v8108 = vpop.f32.mrf.mxu0
        %v8109 = vadd.f32 %v7649, %v8108
        %v8110 = vpop.f32.mrf.mxu0
        %8111 = vmatprep.mubr.bf16.mxu0 %v7597
        %8112 = vmatmul.mubr.bf16.gmra.mxu0 %v7341
        %v8113 = vpop.f32.mrf.mxu0
        %v8114 = vadd.f32 %v7649, %v8113
        %v8115 = vpop.f32.mrf.mxu0
        %v8116 = vpop.f32.mrf.mxu0
        %v8117 = vadd.f32 %v7649, %v8116
        %v8118 = vpop.f32.mrf.mxu0
        %8119 = vmatprep.mubr.bf16.mxu0 %v7600
        %8120 = vmatmul.mubr.bf16.gmra.mxu0 %v7344
        %v8121 = vpop.f32.mrf.mxu0
        %v8122 = vadd.f32 %v7649, %v8121
        %v8123 = vpop.f32.mrf.mxu0
        %v8124 = vpop.f32.mrf.mxu0
        %v8125 = vadd.f32 %v7649, %v8124
        %v8126 = vpop.f32.mrf.mxu0
        %8127 = vmatprep.mubr.bf16.mxu0 %v7603
        %8128 = vmatmul.mubr.bf16.gmra.mxu0 %v7347
        %v8129 = vpop.f32.mrf.mxu0
        %v8130 = vadd.f32 %v7649, %v8129
        %v8131 = vpop.f32.mrf.mxu0
        %v8132 = vpop.f32.mrf.mxu0
        %v8133 = vadd.f32 %v7649, %v8132
        %v8134 = vpop.f32.mrf.mxu0
        %8135 = vmatprep.mubr.bf16.mxu0 %v7606
        %8136 = vmatmul.mubr.bf16.gmra.mxu0 %v7350
        %v8137 = vpop.f32.mrf.mxu0
        %v8138 = vadd.f32 %v7649, %v8137
        %v8139 = vpop.f32.mrf.mxu0
        %v8140 = vpop.f32.mrf.mxu0
        %v8141 = vadd.f32 %v7649, %v8140
        %v8142 = vpop.f32.mrf.mxu0
        %8143 = vdwg.mxu0
        %8144 = vmatprep.subr.bf16.mxu0 0
        %8145 = vmatpush1.bf16.msra.mxu0 0
        %8146 = vmatprep.subr.bf16.mxu0 0
        %8147 = vmatpush1.bf16.msra.mxu0 0
        %8148 = vmatprep.subr.bf16.mxu0 0
        %8149 = vmatpush1.bf16.msra.mxu0 0
        %8150 = vmatprep.subr.bf16.mxu0 0
        %8151 = vmatpush1.bf16.msra.mxu0 0
        %8152 = vmatprep.subr.bf16.mxu0 0
        %8153 = vmatpush1.bf16.msra.mxu0 0
        %8154 = vmatprep.subr.bf16.mxu0 0
        %8155 = vmatpush1.bf16.msra.mxu0 0
        %8156 = vmatprep.subr.bf16.mxu0 0
        %8157 = vmatpush1.bf16.msra.mxu0 %v7740
        %8158 = vmatprep.subr.bf16.mxu0 0
        %8159 = vmatpush1.bf16.msra.mxu0 %v7739
        %8160 = vmatprep.subr.bf16.mxu0 0
        %8161 = vmatpush2.bf16.msra.mxu0 0
        %8162 = vmatprep.subr.bf16.mxu0 0
        %8163 = vmatpush2.bf16.msra.mxu0 0
        %8164 = vmatprep.subr.bf16.mxu0 0
        %8165 = vmatpush2.bf16.msra.mxu0 0
        %8166 = vmatprep.subr.bf16.mxu0 0
        %8167 = vmatpush2.bf16.msra.mxu0 0
        %8168 = vmatprep.subr.bf16.mxu0 0
        %8169 = vmatpush2.bf16.msra.mxu0 0
        %8170 = vmatprep.subr.bf16.mxu0 0
        %8171 = vmatpush2.bf16.msra.mxu0 0
        %8172 = vmatprep.subr.bf16.mxu0 0
        %8173 = vmatpush2.bf16.msra.mxu0 0
        %8174 = vmatprep.subr.bf16.mxu0 0
        %8175 = vmatpush2.bf16.msra.mxu0 0
        %8176 = vmatprep.mubr.bf16.mxu0 0
        %8177 = vmatmul.mubr.bf16.gmra.mxu0 %v7760
        %v8178 = vpop.f32.mrf.mxu0
        %v8179 = vadd.f32 %v7890, %v8178
        %v8180 = vpop.f32.mrf.mxu0
        %v8181 = vpop.f32.mrf.mxu0
        %v8182 = vadd.f32 %v7893, %v8181
        %v8183 = vpop.f32.mrf.mxu0
        %8184 = vmatprep.mubr.bf16.mxu0 0
        %8185 = vmatmul.mubr.bf16.gmra.mxu0 %v7763
        %v8186 = vpop.f32.mrf.mxu0
        %v8187 = vadd.f32 %v7898, %v8186
        %v8188 = vpop.f32.mrf.mxu0
        %v8189 = vpop.f32.mrf.mxu0
        %v8190 = vadd.f32 %v7901, %v8189
        %v8191 = vpop.f32.mrf.mxu0
        %8192 = vmatprep.mubr.bf16.mxu0 0
        %8193 = vmatmul.mubr.bf16.gmra.mxu0 %v7766
        %v8194 = vpop.f32.mrf.mxu0
        %v8195 = vadd.f32 %v7906, %v8194
        %v8196 = vpop.f32.mrf.mxu0
        %v8197 = vpop.f32.mrf.mxu0
        %v8198 = vadd.f32 %v7909, %v8197
        %v8199 = vpop.f32.mrf.mxu0
        %8200 = vmatprep.mubr.bf16.mxu0 0
        %8201 = vmatmul.mubr.bf16.gmra.mxu0 %v7769
        %v8202 = vpop.f32.mrf.mxu0
        %v8203 = vadd.f32 %v7914, %v8202
        %v8204 = vpop.f32.mrf.mxu0
        %v8205 = vpop.f32.mrf.mxu0
        %v8206 = vadd.f32 %v7917, %v8205
        %v8207 = vpop.f32.mrf.mxu0
        %8208 = vmatprep.mubr.bf16.mxu0 0
        %8209 = vmatmul.mubr.bf16.gmra.mxu0 %v7772
        %v8210 = vpop.f32.mrf.mxu0
        %v8211 = vadd.f32 %v7922, %v8210
        %v8212 = vpop.f32.mrf.mxu0
        %v8213 = vpop.f32.mrf.mxu0
        %v8214 = vadd.f32 %v7925, %v8213
        %v8215 = vpop.f32.mrf.mxu0
        %8216 = vmatprep.mubr.bf16.mxu0 0
        %8217 = vmatmul.mubr.bf16.gmra.mxu0 %v7775
        %v8218 = vpop.f32.mrf.mxu0
        %v8219 = vadd.f32 %v7930, %v8218
        %v8220 = vpop.f32.mrf.mxu0
        %v8221 = vpop.f32.mrf.mxu0
        %v8222 = vadd.f32 %v7933, %v8221
        %v8223 = vpop.f32.mrf.mxu0
        %8224 = vmatprep.mubr.bf16.mxu0 0
        %8225 = vmatmul.mubr.bf16.gmra.mxu0 %v7778
        %v8226 = vpop.f32.mrf.mxu0
        %v8227 = vadd.f32 %v7938, %v8226
        %v8228 = vpop.f32.mrf.mxu0
        %v8229 = vpop.f32.mrf.mxu0
        %v8230 = vadd.f32 %v7941, %v8229
        %v8231 = vpop.f32.mrf.mxu0
        %8232 = vmatprep.mubr.bf16.mxu0 0
        %8233 = vmatmul.mubr.bf16.gmra.mxu0 %v7781
        %v8234 = vpop.f32.mrf.mxu0
        %v8235 = vadd.f32 %v7946, %v8234
        %v8236 = vpop.f32.mrf.mxu0
        %v8237 = vpop.f32.mrf.mxu0
        %v8238 = vadd.f32 %v7949, %v8237
        %v8239 = vpop.f32.mrf.mxu0
        %8240 = vmatprep.mubr.bf16.mxu0 0
        %8241 = vmatmul.mubr.bf16.gmra.mxu0 %v7784
        %v8242 = vpop.f32.mrf.mxu0
        %v8243 = vadd.f32 %v7954, %v8242
        %v8244 = vpop.f32.mrf.mxu0
        %v8245 = vpop.f32.mrf.mxu0
        %v8246 = vadd.f32 %v7957, %v8245
        %v8247 = vpop.f32.mrf.mxu0
        %8248 = vmatprep.mubr.bf16.mxu0 0
        %8249 = vmatmul.mubr.bf16.gmra.mxu0 %v7787
        %v8250 = vpop.f32.mrf.mxu0
        %v8251 = vadd.f32 %v7962, %v8250
        %v8252 = vpop.f32.mrf.mxu0
        %v8253 = vpop.f32.mrf.mxu0
        %v8254 = vadd.f32 %v7965, %v8253
        %v8255 = vpop.f32.mrf.mxu0
        %8256 = vmatprep.mubr.bf16.mxu0 0
        %8257 = vmatmul.mubr.bf16.gmra.mxu0 %v7790
        %v8258 = vpop.f32.mrf.mxu0
        %v8259 = vadd.f32 %v7970, %v8258
        %v8260 = vpop.f32.mrf.mxu0
        %v8261 = vpop.f32.mrf.mxu0
        %v8262 = vadd.f32 %v7973, %v8261
        %v8263 = vpop.f32.mrf.mxu0
        %8264 = vmatprep.mubr.bf16.mxu0 0
        %8265 = vmatmul.mubr.bf16.gmra.mxu0 %v7793
        %v8266 = vpop.f32.mrf.mxu0
        %v8267 = vadd.f32 %v7978, %v8266
        %v8268 = vpop.f32.mrf.mxu0
        %v8269 = vpop.f32.mrf.mxu0
        %v8270 = vadd.f32 %v7981, %v8269
        %v8271 = vpop.f32.mrf.mxu0
        %8272 = vmatprep.mubr.bf16.mxu0 0
        %8273 = vmatmul.mubr.bf16.gmra.mxu0 %v7796
        %v8274 = vpop.f32.mrf.mxu0
        %v8275 = vadd.f32 %v7986, %v8274
        %v8276 = vpop.f32.mrf.mxu0
        %v8277 = vpop.f32.mrf.mxu0
        %v8278 = vadd.f32 %v7989, %v8277
        %v8279 = vpop.f32.mrf.mxu0
        %8280 = vmatprep.mubr.bf16.mxu0 0
        %8281 = vmatmul.mubr.bf16.gmra.mxu0 %v7799
        %v8282 = vpop.f32.mrf.mxu0
        %v8283 = vadd.f32 %v7994, %v8282
        %v8284 = vpop.f32.mrf.mxu0
        %v8285 = vpop.f32.mrf.mxu0
        %v8286 = vadd.f32 %v7997, %v8285
        %v8287 = vpop.f32.mrf.mxu0
        %8288 = vmatprep.mubr.bf16.mxu0 0
        %8289 = vmatmul.mubr.bf16.gmra.mxu0 %v7802
        %v8290 = vpop.f32.mrf.mxu0
        %v8291 = vadd.f32 %v8002, %v8290
        %v8292 = vpop.f32.mrf.mxu0
        %v8293 = vpop.f32.mrf.mxu0
        %v8294 = vadd.f32 %v8005, %v8293
        %v8295 = vpop.f32.mrf.mxu0
        %8296 = vmatprep.mubr.bf16.mxu0 0
        %8297 = vmatmul.mubr.bf16.gmra.mxu0 %v7805
        %v8298 = vpop.f32.mrf.mxu0
        %v8299 = vadd.f32 %v8010, %v8298
        %v8300 = vpop.f32.mrf.mxu0
        %v8301 = vpop.f32.mrf.mxu0
        %v8302 = vadd.f32 %v8013, %v8301
        %v8303 = vpop.f32.mrf.mxu0
        %8304 = vmatprep.mubr.bf16.mxu0 0
        %8305 = vmatmul.mubr.bf16.gmra.mxu0 %v7808
        %v8306 = vpop.f32.mrf.mxu0
        %v8307 = vadd.f32 %v8018, %v8306
        %v8308 = vpop.f32.mrf.mxu0
        %v8309 = vpop.f32.mrf.mxu0
        %v8310 = vadd.f32 %v8021, %v8309
        %v8311 = vpop.f32.mrf.mxu0
        %8312 = vmatprep.mubr.bf16.mxu0 0
        %8313 = vmatmul.mubr.bf16.gmra.mxu0 %v7811
        %v8314 = vpop.f32.mrf.mxu0
        %v8315 = vadd.f32 %v8026, %v8314
        %v8316 = vpop.f32.mrf.mxu0
        %v8317 = vpop.f32.mrf.mxu0
        %v8318 = vadd.f32 %v8029, %v8317
        %v8319 = vpop.f32.mrf.mxu0
        %8320 = vmatprep.mubr.bf16.mxu0 0
        %8321 = vmatmul.mubr.bf16.gmra.mxu0 %v7814
        %v8322 = vpop.f32.mrf.mxu0
        %v8323 = vadd.f32 %v8034, %v8322
        %v8324 = vpop.f32.mrf.mxu0
        %v8325 = vpop.f32.mrf.mxu0
        %v8326 = vadd.f32 %v8037, %v8325
        %v8327 = vpop.f32.mrf.mxu0
        %8328 = vmatprep.mubr.bf16.mxu0 0
        %8329 = vmatmul.mubr.bf16.gmra.mxu0 %v7817
        %v8330 = vpop.f32.mrf.mxu0
        %v8331 = vadd.f32 %v8042, %v8330
        %v8332 = vpop.f32.mrf.mxu0
        %v8333 = vpop.f32.mrf.mxu0
        %v8334 = vadd.f32 %v8045, %v8333
        %v8335 = vpop.f32.mrf.mxu0
        %8336 = vmatprep.mubr.bf16.mxu0 0
        %8337 = vmatmul.mubr.bf16.gmra.mxu0 %v7820
        %v8338 = vpop.f32.mrf.mxu0
        %v8339 = vadd.f32 %v8050, %v8338
        %v8340 = vpop.f32.mrf.mxu0
        %v8341 = vpop.f32.mrf.mxu0
        %v8342 = vadd.f32 %v8053, %v8341
        %v8343 = vpop.f32.mrf.mxu0
        %8344 = vmatprep.mubr.bf16.mxu0 0
        %8345 = vmatmul.mubr.bf16.gmra.mxu0 %v7823
        %v8346 = vpop.f32.mrf.mxu0
        %v8347 = vadd.f32 %v8058, %v8346
        %v8348 = vpop.f32.mrf.mxu0
        %v8349 = vpop.f32.mrf.mxu0
        %v8350 = vadd.f32 %v8061, %v8349
        %v8351 = vpop.f32.mrf.mxu0
        %8352 = vmatprep.mubr.bf16.mxu0 0
        %8353 = vmatmul.mubr.bf16.gmra.mxu0 %v7826
        %v8354 = vpop.f32.mrf.mxu0
        %v8355 = vadd.f32 %v8066, %v8354
        %v8356 = vpop.f32.mrf.mxu0
        %v8357 = vpop.f32.mrf.mxu0
        %v8358 = vadd.f32 %v8069, %v8357
        %v8359 = vpop.f32.mrf.mxu0
        %8360 = vmatprep.mubr.bf16.mxu0 0
        %8361 = vmatmul.mubr.bf16.gmra.mxu0 %v7829
        %v8362 = vpop.f32.mrf.mxu0
        %v8363 = vadd.f32 %v8074, %v8362
        %v8364 = vpop.f32.mrf.mxu0
        %v8365 = vpop.f32.mrf.mxu0
        %v8366 = vadd.f32 %v8077, %v8365
        %v8367 = vpop.f32.mrf.mxu0
        %8368 = vmatprep.mubr.bf16.mxu0 0
        %8369 = vmatmul.mubr.bf16.gmra.mxu0 %v7832
        %v8370 = vpop.f32.mrf.mxu0
        %v8371 = vadd.f32 %v8082, %v8370
        %v8372 = vpop.f32.mrf.mxu0
        %v8373 = vpop.f32.mrf.mxu0
        %v8374 = vadd.f32 %v8085, %v8373
        %v8375 = vpop.f32.mrf.mxu0
        %8376 = vmatprep.mubr.bf16.mxu0 0
        %8377 = vmatmul.mubr.bf16.gmra.mxu0 %v7835
        %v8378 = vpop.f32.mrf.mxu0
        %v8379 = vadd.f32 %v8090, %v8378
        %v8380 = vpop.f32.mrf.mxu0
        %v8381 = vpop.f32.mrf.mxu0
        %v8382 = vadd.f32 %v8093, %v8381
        %v8383 = vpop.f32.mrf.mxu0
        %8384 = vmatprep.mubr.bf16.mxu0 0
        %8385 = vmatmul.mubr.bf16.gmra.mxu0 %v7838
        %v8386 = vpop.f32.mrf.mxu0
        %v8387 = vadd.f32 %v8098, %v8386
        %v8388 = vpop.f32.mrf.mxu0
        %v8389 = vpop.f32.mrf.mxu0
        %v8390 = vadd.f32 %v8101, %v8389
        %v8391 = vpop.f32.mrf.mxu0
        %8392 = vmatprep.mubr.bf16.mxu0 0
        %8393 = vmatmul.mubr.bf16.gmra.mxu0 %v7841
        %v8394 = vpop.f32.mrf.mxu0
        %v8395 = vadd.f32 %v8106, %v8394
        %v8396 = vpop.f32.mrf.mxu0
        %v8397 = vpop.f32.mrf.mxu0
        %v8398 = vadd.f32 %v8109, %v8397
        %v8399 = vpop.f32.mrf.mxu0
        %8400 = vmatprep.mubr.bf16.mxu0 0
        %8401 = vmatmul.mubr.bf16.gmra.mxu0 %v7844
        %v8402 = vpop.f32.mrf.mxu0
        %v8403 = vadd.f32 %v8114, %v8402
        %v8404 = vpop.f32.mrf.mxu0
        %v8405 = vpop.f32.mrf.mxu0
        %v8406 = vadd.f32 %v8117, %v8405
        %v8407 = vpop.f32.mrf.mxu0
        %8408 = vmatprep.mubr.bf16.mxu0 0
        %8409 = vmatmul.mubr.bf16.gmra.mxu0 %v7847
        %v8410 = vpop.f32.mrf.mxu0
        %v8411 = vadd.f32 %v8122, %v8410
        %v8412 = vpop.f32.mrf.mxu0
        %v8413 = vpop.f32.mrf.mxu0
        %v8414 = vadd.f32 %v8125, %v8413
        %v8415 = vpop.f32.mrf.mxu0
        %8416 = vmatprep.mubr.bf16.mxu0 0
        %8417 = vmatmul.mubr.bf16.gmra.mxu0 %v7850
        %v8418 = vpop.f32.mrf.mxu0
        %v8419 = vadd.f32 %v8130, %v8418
        %v8420 = vpop.f32.mrf.mxu0
        %v8421 = vpop.f32.mrf.mxu0
        %v8422 = vadd.f32 %v8133, %v8421
        %v8423 = vpop.f32.mrf.mxu0
        %8424 = vmatprep.mubr.bf16.mxu0 0
        %8425 = vmatmul.mubr.bf16.gmra.mxu0 %v7853
        %v8426 = vpop.f32.mrf.mxu0
        %v8427 = vadd.f32 %v8138, %v8426
        %v8428 = vpop.f32.mrf.mxu0
        %v8429 = vpop.f32.mrf.mxu0
        %v8430 = vadd.f32 %v8141, %v8429
        %v8431 = vpop.f32.mrf.mxu0
        %8432 = vdwg.mxu0
        %v8433 = vmax.f32 %v8179, 0.0
        %v8434 = vmax.f32 %v8182, 0.0
        %v8435 = vmax.f32 %v8187, 0.0
        %v8436 = vmax.f32 %v8190, 0.0
        %v8437 = vmax.f32 %v8195, 0.0
        %v8438 = vmax.f32 %v8198, 0.0
        %v8439 = vmax.f32 %v8203, 0.0
        %v8440 = vmax.f32 %v8206, 0.0
        %v8441 = vmax.f32 %v8211, 0.0
        %v8442 = vmax.f32 %v8214, 0.0
        %v8443 = vmax.f32 %v8219, 0.0
        %v8444 = vmax.f32 %v8222, 0.0
        %v8445 = vmax.f32 %v8227, 0.0
        %v8446 = vmax.f32 %v8230, 0.0
        %v8447 = vmax.f32 %v8235, 0.0
        %v8448 = vmax.f32 %v8238, 0.0
        %v8449 = vmax.f32 %v8243, 0.0
        %v8450 = vmax.f32 %v8246, 0.0
        %v8451 = vmax.f32 %v8251, 0.0
        %v8452 = vmax.f32 %v8254, 0.0
        %v8453 = vmax.f32 %v8259, 0.0
        %v8454 = vmax.f32 %v8262, 0.0
        %v8455 = vmax.f32 %v8267, 0.0
        %v8456 = vmax.f32 %v8270, 0.0
        %v8457 = vmax.f32 %v8275, 0.0
        %v8458 = vmax.f32 %v8278, 0.0
        %v8459 = vmax.f32 %v8283, 0.0
        %v8460 = vmax.f32 %v8286, 0.0
        %v8461 = vmax.f32 %v8291, 0.0
        %v8462 = vmax.f32 %v8294, 0.0
        %v8463 = vmax.f32 %v8299, 0.0
        %v8464 = vmax.f32 %v8302, 0.0
        %v8465 = vmax.f32 %v8307, 0.0
        %v8466 = vmax.f32 %v8310, 0.0
        %v8467 = vmax.f32 %v8315, 0.0
        %v8468 = vmax.f32 %v8318, 0.0
        %v8469 = vmax.f32 %v8323, 0.0
        %v8470 = vmax.f32 %v8326, 0.0
        %v8471 = vmax.f32 %v8331, 0.0
        %v8472 = vmax.f32 %v8334, 0.0
        %v8473 = vmax.f32 %v8339, 0.0
        %v8474 = vmax.f32 %v8342, 0.0
        %v8475 = vmax.f32 %v8347, 0.0
        %v8476 = vmax.f32 %v8350, 0.0
        %v8477 = vmax.f32 %v8355, 0.0
        %v8478 = vmax.f32 %v8358, 0.0
        %v8479 = vmax.f32 %v8363, 0.0
        %v8480 = vmax.f32 %v8366, 0.0
        %v8481 = vmax.f32 %v8371, 0.0
        %v8482 = vmax.f32 %v8374, 0.0
        %v8483 = vmax.f32 %v8379, 0.0
        %v8484 = vmax.f32 %v8382, 0.0
        %v8485 = vmax.f32 %v8387, 0.0
        %v8486 = vmax.f32 %v8390, 0.0
        %v8487 = vmax.f32 %v8395, 0.0
        %v8488 = vmax.f32 %v8398, 0.0
        %v8489 = vmax.f32 %v8403, 0.0
        %v8490 = vmax.f32 %v8406, 0.0
        %v8491 = vmax.f32 %v8411, 0.0
        %v8492 = vmax.f32 %v8414, 0.0
        %v8493 = vmax.f32 %v8419, 0.0
        %v8494 = vmax.f32 %v8422, 0.0
        %v8495 = vmax.f32 %v8427, 0.0
        %v8496 = vmax.f32 %v8430, 0.0
        %v8497 = vpack.c.bf16 %v8434, %v8433
        %v8498 = vpack.c.bf16 %v8436, %v8435
        %v8499 = vpack.c.bf16 %v8438, %v8437
        %v8500 = vpack.c.bf16 %v8440, %v8439
        %v8501 = vpack.c.bf16 %v8442, %v8441
        %v8502 = vpack.c.bf16 %v8444, %v8443
        %v8503 = vpack.c.bf16 %v8446, %v8445
        %v8504 = vpack.c.bf16 %v8448, %v8447
        %v8505 = vpack.c.bf16 %v8450, %v8449
        %v8506 = vpack.c.bf16 %v8452, %v8451
        %v8507 = vpack.c.bf16 %v8454, %v8453
        %v8508 = vpack.c.bf16 %v8456, %v8455
        %v8509 = vpack.c.bf16 %v8458, %v8457
        %v8510 = vpack.c.bf16 %v8460, %v8459
        %v8511 = vpack.c.bf16 %v8462, %v8461
        %v8512 = vpack.c.bf16 %v8464, %v8463
        %v8513 = vpack.c.bf16 %v8466, %v8465
        %v8514 = vpack.c.bf16 %v8468, %v8467
        %v8515 = vpack.c.bf16 %v8470, %v8469
        %v8516 = vpack.c.bf16 %v8472, %v8471
        %v8517 = vpack.c.bf16 %v8474, %v8473
        %v8518 = vpack.c.bf16 %v8476, %v8475
        %v8519 = vpack.c.bf16 %v8478, %v8477
        %v8520 = vpack.c.bf16 %v8480, %v8479
        %v8521 = vpack.c.bf16 %v8482, %v8481
        %v8522 = vpack.c.bf16 %v8484, %v8483
        %v8523 = vpack.c.bf16 %v8486, %v8485
        %v8524 = vpack.c.bf16 %v8488, %v8487
        %v8525 = vpack.c.bf16 %v8490, %v8489
        %v8526 = vpack.c.bf16 %v8492, %v8491
        %v8527 = vpack.c.bf16 %v8494, %v8493
        %v8528 = vpack.c.bf16 %v8496, %v8495
        %v8529 = vld [vmem:[%s5] sm:$0xf]
        %v8530 = vld [vmem:[%s5 + $0x4] sm:$0xf]
        %v8531 = vld [vmem:[%s5 + $0x8] sm:$0xf]
        %v8532 = vld [vmem:[%s5 + $0xc] sm:$0xf]
        %v8533 = vld [vmem:[%s6] sm:$0x1]
        %v8535 = vlaneseq
        %v8536 = vshrl.u32 %v8535, 7
        %v8537 = vsub.s32 0, %v8536
        %v8538 = vrot.slane %v8533, %v8537
        %v8544 = vunpack.c.l.b16 %v8529
        %v8545 = vunpack.c.l.b16 %v8530
        %v8546 = vunpack.c.l.b16 %v8531
        %v8547 = vunpack.c.l.b16 %v8532
        %v8548 = vpack.c.b16 %v8545, %v8544
        %v8549 = vpack.c.b16 %v8547, %v8546
        %v8553 = vsel %vm7093, %v8497, 0
        %v8556 = vsel %vm7093, %v8498, 0
        %v8559 = vsel %vm7093, %v8499, 0
        %v8562 = vsel %vm7093, %v8500, 0
        %v8565 = vsel %vm7093, %v8501, 0
        %v8568 = vsel %vm7093, %v8502, 0
        %v8571 = vsel %vm7093, %v8503, 0
        %v8574 = vsel %vm7093, %v8504, 0
        %v8577 = vsel %vm7093, %v8505, 0
        %v8580 = vsel %vm7093, %v8506, 0
        %v8583 = vsel %vm7093, %v8507, 0
        %v8586 = vsel %vm7093, %v8508, 0
        %v8589 = vsel %vm7093, %v8509, 0
        %v8592 = vsel %vm7093, %v8510, 0
        %v8595 = vsel %vm7093, %v8511, 0
        %v8598 = vsel %vm7093, %v8512, 0
        %v8601 = vsel %vm7093, %v8513, 0
        %v8604 = vsel %vm7093, %v8514, 0
        %v8607 = vsel %vm7093, %v8515, 0
        %v8610 = vsel %vm7093, %v8516, 0
        %v8613 = vsel %vm7093, %v8517, 0
        %v8616 = vsel %vm7093, %v8518, 0
        %v8619 = vsel %vm7093, %v8519, 0
        %v8622 = vsel %vm7093, %v8520, 0
        %v8625 = vsel %vm7093, %v8521, 0
        %v8628 = vsel %vm7093, %v8522, 0
        %v8631 = vsel %vm7093, %v8523, 0
        %v8634 = vsel %vm7093, %v8524, 0
        %v8637 = vsel %vm7093, %v8525, 0
        %v8640 = vsel %vm7093, %v8526, 0
        %v8643 = vsel %vm7093, %v8527, 0
        %v8646 = vsel %vm7093, %v8528, 0
        %8648 = vmatprep.subr.bf16.mxu0 0
        %8649 = vmatpush1.bf16.msra.mxu0 0
        %8650 = vmatprep.subr.bf16.mxu0 0
        %8651 = vmatpush1.bf16.msra.mxu0 0
        %8652 = vmatprep.subr.bf16.mxu0 0
        %8653 = vmatpush1.bf16.msra.mxu0 0
        %8654 = vmatprep.subr.bf16.mxu0 0
        %8655 = vmatpush1.bf16.msra.mxu0 0
        %8656 = vmatprep.subr.bf16.mxu0 0
        %8657 = vmatpush1.bf16.msra.mxu0 0
        %8658 = vmatprep.subr.bf16.mxu0 0
        %8659 = vmatpush1.bf16.msra.mxu0 0
        %8660 = vmatprep.subr.bf16.mxu0 0
        %8661 = vmatpush1.bf16.msra.mxu0 %v8549
        %8662 = vmatprep.subr.bf16.mxu0 0
        %8663 = vmatpush1.bf16.msra.mxu0 %v8548
        %8664 = vmatprep.subr.bf16.mxu0 0
        %8665 = vmatpush2.bf16.msra.mxu0 0
        %8666 = vmatprep.subr.bf16.mxu0 0
        %8667 = vmatpush2.bf16.msra.mxu0 0
        %8668 = vmatprep.subr.bf16.mxu0 0
        %8669 = vmatpush2.bf16.msra.mxu0 0
        %8670 = vmatprep.subr.bf16.mxu0 0
        %8671 = vmatpush2.bf16.msra.mxu0 0
        %8672 = vmatprep.subr.bf16.mxu0 0
        %8673 = vmatpush2.bf16.msra.mxu0 0
        %8674 = vmatprep.subr.bf16.mxu0 0
        %8675 = vmatpush2.bf16.msra.mxu0 0
        %8676 = vmatprep.subr.bf16.mxu0 0
        %8677 = vmatpush2.bf16.msra.mxu0 0
        %8678 = vmatprep.subr.bf16.mxu0 0
        %8679 = vmatpush2.bf16.msra.mxu0 0
        %8680 = vmatprep.mubr.bf16.mxu0 0
        %8681 = vmatmul.mubr.bf16.gmra.mxu0 %v8553
        %v8682 = vpop.f32.mrf.mxu0
        %v8683 = vadd.f32 %v8538, %v8682
        %v8684 = vpop.f32.mrf.mxu0
        %v8685 = vpop.f32.mrf.mxu0
        %v8686 = vadd.f32 %v8538, %v8685
        %v8687 = vpop.f32.mrf.mxu0
        %8688 = vmatprep.mubr.bf16.mxu0 0
        %8689 = vmatmul.mubr.bf16.gmra.mxu0 %v8556
        %v8690 = vpop.f32.mrf.mxu0
        %v8691 = vadd.f32 %v8538, %v8690
        %v8692 = vpop.f32.mrf.mxu0
        %v8693 = vpop.f32.mrf.mxu0
        %v8694 = vadd.f32 %v8538, %v8693
        %v8695 = vpop.f32.mrf.mxu0
        %8696 = vmatprep.mubr.bf16.mxu0 0
        %8697 = vmatmul.mubr.bf16.gmra.mxu0 %v8559
        %v8698 = vpop.f32.mrf.mxu0
        %v8699 = vadd.f32 %v8538, %v8698
        %v8700 = vpop.f32.mrf.mxu0
        %v8701 = vpop.f32.mrf.mxu0
        %v8702 = vadd.f32 %v8538, %v8701
        %v8703 = vpop.f32.mrf.mxu0
        %8704 = vmatprep.mubr.bf16.mxu0 0
        %8705 = vmatmul.mubr.bf16.gmra.mxu0 %v8562
        %v8706 = vpop.f32.mrf.mxu0
        %v8707 = vadd.f32 %v8538, %v8706
        %v8708 = vpop.f32.mrf.mxu0
        %v8709 = vpop.f32.mrf.mxu0
        %v8710 = vadd.f32 %v8538, %v8709
        %v8711 = vpop.f32.mrf.mxu0
        %8712 = vmatprep.mubr.bf16.mxu0 0
        %8713 = vmatmul.mubr.bf16.gmra.mxu0 %v8565
        %v8714 = vpop.f32.mrf.mxu0
        %v8715 = vadd.f32 %v8538, %v8714
        %v8716 = vpop.f32.mrf.mxu0
        %v8717 = vpop.f32.mrf.mxu0
        %v8718 = vadd.f32 %v8538, %v8717
        %v8719 = vpop.f32.mrf.mxu0
        %8720 = vmatprep.mubr.bf16.mxu0 0
        %8721 = vmatmul.mubr.bf16.gmra.mxu0 %v8568
        %v8722 = vpop.f32.mrf.mxu0
        %v8723 = vadd.f32 %v8538, %v8722
        %v8724 = vpop.f32.mrf.mxu0
        %v8725 = vpop.f32.mrf.mxu0
        %v8726 = vadd.f32 %v8538, %v8725
        %v8727 = vpop.f32.mrf.mxu0
        %8728 = vmatprep.mubr.bf16.mxu0 0
        %8729 = vmatmul.mubr.bf16.gmra.mxu0 %v8571
        %v8730 = vpop.f32.mrf.mxu0
        %v8731 = vadd.f32 %v8538, %v8730
        %v8732 = vpop.f32.mrf.mxu0
        %v8733 = vpop.f32.mrf.mxu0
        %v8734 = vadd.f32 %v8538, %v8733
        %v8735 = vpop.f32.mrf.mxu0
        %8736 = vmatprep.mubr.bf16.mxu0 0
        %8737 = vmatmul.mubr.bf16.gmra.mxu0 %v8574
        %v8738 = vpop.f32.mrf.mxu0
        %v8739 = vadd.f32 %v8538, %v8738
        %v8740 = vpop.f32.mrf.mxu0
        %v8741 = vpop.f32.mrf.mxu0
        %v8742 = vadd.f32 %v8538, %v8741
        %v8743 = vpop.f32.mrf.mxu0
        %8744 = vmatprep.mubr.bf16.mxu0 0
        %8745 = vmatmul.mubr.bf16.gmra.mxu0 %v8577
        %v8746 = vpop.f32.mrf.mxu0
        %v8747 = vadd.f32 %v8538, %v8746
        %v8748 = vpop.f32.mrf.mxu0
        %v8749 = vpop.f32.mrf.mxu0
        %v8750 = vadd.f32 %v8538, %v8749
        %v8751 = vpop.f32.mrf.mxu0
        %8752 = vmatprep.mubr.bf16.mxu0 0
        %8753 = vmatmul.mubr.bf16.gmra.mxu0 %v8580
        %v8754 = vpop.f32.mrf.mxu0
        %v8755 = vadd.f32 %v8538, %v8754
        %v8756 = vpop.f32.mrf.mxu0
        %v8757 = vpop.f32.mrf.mxu0
        %v8758 = vadd.f32 %v8538, %v8757
        %v8759 = vpop.f32.mrf.mxu0
        %8760 = vmatprep.mubr.bf16.mxu0 0
        %8761 = vmatmul.mubr.bf16.gmra.mxu0 %v8583
        %v8762 = vpop.f32.mrf.mxu0
        %v8763 = vadd.f32 %v8538, %v8762
        %v8764 = vpop.f32.mrf.mxu0
        %v8765 = vpop.f32.mrf.mxu0
        %v8766 = vadd.f32 %v8538, %v8765
        %v8767 = vpop.f32.mrf.mxu0
        %8768 = vmatprep.mubr.bf16.mxu0 0
        %8769 = vmatmul.mubr.bf16.gmra.mxu0 %v8586
        %v8770 = vpop.f32.mrf.mxu0
        %v8771 = vadd.f32 %v8538, %v8770
        %v8772 = vpop.f32.mrf.mxu0
        %v8773 = vpop.f32.mrf.mxu0
        %v8774 = vadd.f32 %v8538, %v8773
        %v8775 = vpop.f32.mrf.mxu0
        %8776 = vmatprep.mubr.bf16.mxu0 0
        %8777 = vmatmul.mubr.bf16.gmra.mxu0 %v8589
        %v8778 = vpop.f32.mrf.mxu0
        %v8779 = vadd.f32 %v8538, %v8778
        %v8780 = vpop.f32.mrf.mxu0
        %v8781 = vpop.f32.mrf.mxu0
        %v8782 = vadd.f32 %v8538, %v8781
        %v8783 = vpop.f32.mrf.mxu0
        %8784 = vmatprep.mubr.bf16.mxu0 0
        %8785 = vmatmul.mubr.bf16.gmra.mxu0 %v8592
        %v8786 = vpop.f32.mrf.mxu0
        %v8787 = vadd.f32 %v8538, %v8786
        %v8788 = vpop.f32.mrf.mxu0
        %v8789 = vpop.f32.mrf.mxu0
        %v8790 = vadd.f32 %v8538, %v8789
        %v8791 = vpop.f32.mrf.mxu0
        %8792 = vmatprep.mubr.bf16.mxu0 0
        %8793 = vmatmul.mubr.bf16.gmra.mxu0 %v8595
        %v8794 = vpop.f32.mrf.mxu0
        %v8795 = vadd.f32 %v8538, %v8794
        %v8796 = vpop.f32.mrf.mxu0
        %v8797 = vpop.f32.mrf.mxu0
        %v8798 = vadd.f32 %v8538, %v8797
        %v8799 = vpop.f32.mrf.mxu0
        %8800 = vmatprep.mubr.bf16.mxu0 0
        %8801 = vmatmul.mubr.bf16.gmra.mxu0 %v8598
        %v8802 = vpop.f32.mrf.mxu0
        %v8803 = vadd.f32 %v8538, %v8802
        %v8804 = vpop.f32.mrf.mxu0
        %v8805 = vpop.f32.mrf.mxu0
        %v8806 = vadd.f32 %v8538, %v8805
        %v8807 = vpop.f32.mrf.mxu0
        %8808 = vmatprep.mubr.bf16.mxu0 0
        %8809 = vmatmul.mubr.bf16.gmra.mxu0 %v8601
        %v8810 = vpop.f32.mrf.mxu0
        %v8811 = vadd.f32 %v8538, %v8810
        %v8812 = vpop.f32.mrf.mxu0
        %v8813 = vpop.f32.mrf.mxu0
        %v8814 = vadd.f32 %v8538, %v8813
        %v8815 = vpop.f32.mrf.mxu0
        %8816 = vmatprep.mubr.bf16.mxu0 0
        %8817 = vmatmul.mubr.bf16.gmra.mxu0 %v8604
        %v8818 = vpop.f32.mrf.mxu0
        %v8819 = vadd.f32 %v8538, %v8818
        %v8820 = vpop.f32.mrf.mxu0
        %v8821 = vpop.f32.mrf.mxu0
        %v8822 = vadd.f32 %v8538, %v8821
        %v8823 = vpop.f32.mrf.mxu0
        %8824 = vmatprep.mubr.bf16.mxu0 0
        %8825 = vmatmul.mubr.bf16.gmra.mxu0 %v8607
        %v8826 = vpop.f32.mrf.mxu0
        %v8827 = vadd.f32 %v8538, %v8826
        %v8828 = vpop.f32.mrf.mxu0
        %v8829 = vpop.f32.mrf.mxu0
        %v8830 = vadd.f32 %v8538, %v8829
        %v8831 = vpop.f32.mrf.mxu0
        %8832 = vmatprep.mubr.bf16.mxu0 0
        %8833 = vmatmul.mubr.bf16.gmra.mxu0 %v8610
        %v8834 = vpop.f32.mrf.mxu0
        %v8835 = vadd.f32 %v8538, %v8834
        %v8836 = vpop.f32.mrf.mxu0
        %v8837 = vpop.f32.mrf.mxu0
        %v8838 = vadd.f32 %v8538, %v8837
        %v8839 = vpop.f32.mrf.mxu0
        %8840 = vmatprep.mubr.bf16.mxu0 0
        %8841 = vmatmul.mubr.bf16.gmra.mxu0 %v8613
        %v8842 = vpop.f32.mrf.mxu0
        %v8843 = vadd.f32 %v8538, %v8842
        %v8844 = vpop.f32.mrf.mxu0
        %v8845 = vpop.f32.mrf.mxu0
        %v8846 = vadd.f32 %v8538, %v8845
        %v8847 = vpop.f32.mrf.mxu0
        %8848 = vmatprep.mubr.bf16.mxu0 0
        %8849 = vmatmul.mubr.bf16.gmra.mxu0 %v8616
        %v8850 = vpop.f32.mrf.mxu0
        %v8851 = vadd.f32 %v8538, %v8850
        %v8852 = vpop.f32.mrf.mxu0
        %v8853 = vpop.f32.mrf.mxu0
        %v8854 = vadd.f32 %v8538, %v8853
        %v8855 = vpop.f32.mrf.mxu0
        %8856 = vmatprep.mubr.bf16.mxu0 0
        %8857 = vmatmul.mubr.bf16.gmra.mxu0 %v8619
        %v8858 = vpop.f32.mrf.mxu0
        %v8859 = vadd.f32 %v8538, %v8858
        %v8860 = vpop.f32.mrf.mxu0
        %v8861 = vpop.f32.mrf.mxu0
        %v8862 = vadd.f32 %v8538, %v8861
        %v8863 = vpop.f32.mrf.mxu0
        %8864 = vmatprep.mubr.bf16.mxu0 0
        %8865 = vmatmul.mubr.bf16.gmra.mxu0 %v8622
        %v8866 = vpop.f32.mrf.mxu0
        %v8867 = vadd.f32 %v8538, %v8866
        %v8868 = vpop.f32.mrf.mxu0
        %v8869 = vpop.f32.mrf.mxu0
        %v8870 = vadd.f32 %v8538, %v8869
        %v8871 = vpop.f32.mrf.mxu0
        %8872 = vmatprep.mubr.bf16.mxu0 0
        %8873 = vmatmul.mubr.bf16.gmra.mxu0 %v8625
        %v8874 = vpop.f32.mrf.mxu0
        %v8875 = vadd.f32 %v8538, %v8874
        %v8876 = vpop.f32.mrf.mxu0
        %v8877 = vpop.f32.mrf.mxu0
        %v8878 = vadd.f32 %v8538, %v8877
        %v8879 = vpop.f32.mrf.mxu0
        %8880 = vmatprep.mubr.bf16.mxu0 0
        %8881 = vmatmul.mubr.bf16.gmra.mxu0 %v8628
        %v8882 = vpop.f32.mrf.mxu0
        %v8883 = vadd.f32 %v8538, %v8882
        %v8884 = vpop.f32.mrf.mxu0
        %v8885 = vpop.f32.mrf.mxu0
        %v8886 = vadd.f32 %v8538, %v8885
        %v8887 = vpop.f32.mrf.mxu0
        %8888 = vmatprep.mubr.bf16.mxu0 0
        %8889 = vmatmul.mubr.bf16.gmra.mxu0 %v8631
        %v8890 = vpop.f32.mrf.mxu0
        %v8891 = vadd.f32 %v8538, %v8890
        %v8892 = vpop.f32.mrf.mxu0
        %v8893 = vpop.f32.mrf.mxu0
        %v8894 = vadd.f32 %v8538, %v8893
        %v8895 = vpop.f32.mrf.mxu0
        %8896 = vmatprep.mubr.bf16.mxu0 0
        %8897 = vmatmul.mubr.bf16.gmra.mxu0 %v8634
        %v8898 = vpop.f32.mrf.mxu0
        %v8899 = vadd.f32 %v8538, %v8898
        %v8900 = vpop.f32.mrf.mxu0
        %v8901 = vpop.f32.mrf.mxu0
        %v8902 = vadd.f32 %v8538, %v8901
        %v8903 = vpop.f32.mrf.mxu0
        %8904 = vmatprep.mubr.bf16.mxu0 0
        %8905 = vmatmul.mubr.bf16.gmra.mxu0 %v8637
        %v8906 = vpop.f32.mrf.mxu0
        %v8907 = vadd.f32 %v8538, %v8906
        %v8908 = vpop.f32.mrf.mxu0
        %v8909 = vpop.f32.mrf.mxu0
        %v8910 = vadd.f32 %v8538, %v8909
        %v8911 = vpop.f32.mrf.mxu0
        %8912 = vmatprep.mubr.bf16.mxu0 0
        %8913 = vmatmul.mubr.bf16.gmra.mxu0 %v8640
        %v8914 = vpop.f32.mrf.mxu0
        %v8915 = vadd.f32 %v8538, %v8914
        %v8916 = vpop.f32.mrf.mxu0
        %v8917 = vpop.f32.mrf.mxu0
        %v8918 = vadd.f32 %v8538, %v8917
        %v8919 = vpop.f32.mrf.mxu0
        %8920 = vmatprep.mubr.bf16.mxu0 0
        %8921 = vmatmul.mubr.bf16.gmra.mxu0 %v8643
        %v8922 = vpop.f32.mrf.mxu0
        %v8923 = vadd.f32 %v8538, %v8922
        %v8924 = vpop.f32.mrf.mxu0
        %v8925 = vpop.f32.mrf.mxu0
        %v8926 = vadd.f32 %v8538, %v8925
        %v8927 = vpop.f32.mrf.mxu0
        %8928 = vmatprep.mubr.bf16.mxu0 0
        %8929 = vmatmul.mubr.bf16.gmra.mxu0 %v8646
        %v8930 = vpop.f32.mrf.mxu0
        %v8931 = vadd.f32 %v8538, %v8930
        %v8932 = vpop.f32.mrf.mxu0
        %v8933 = vpop.f32.mrf.mxu0
        %v8934 = vadd.f32 %v8538, %v8933
        %v8935 = vpop.f32.mrf.mxu0
        %8936 = vdwg.mxu0
        %v8937 = vadd.f32 %v8683, %v301
        %v8938 = vadd.f32 %v8686, %v302
        %v8939 = vadd.f32 %v8691, %v303
        %v8940 = vadd.f32 %v8694, %v304
        %v8941 = vadd.f32 %v8699, %v305
        %v8942 = vadd.f32 %v8702, %v306
        %v8943 = vadd.f32 %v8707, %v307
        %v8944 = vadd.f32 %v8710, %v308
        %v8945 = vadd.f32 %v8715, %v309
        %v8946 = vadd.f32 %v8718, %v310
        %v8947 = vadd.f32 %v8723, %v311
        %v8948 = vadd.f32 %v8726, %v312
        %v8949 = vadd.f32 %v8731, %v313
        %v8950 = vadd.f32 %v8734, %v314
        %v8951 = vadd.f32 %v8739, %v315
        %v8952 = vadd.f32 %v8742, %v316
        %v8953 = vadd.f32 %v8747, %v317
        %v8954 = vadd.f32 %v8750, %v318
        %v8955 = vadd.f32 %v8755, %v319
        %v8956 = vadd.f32 %v8758, %v320
        %v8957 = vadd.f32 %v8763, %v321
        %v8958 = vadd.f32 %v8766, %v322
        %v8959 = vadd.f32 %v8771, %v323
        %v8960 = vadd.f32 %v8774, %v324
        %v8961 = vadd.f32 %v8779, %v325
        %v8962 = vadd.f32 %v8782, %v326
        %v8963 = vadd.f32 %v8787, %v327
        %v8964 = vadd.f32 %v8790, %v328
        %v8965 = vadd.f32 %v8795, %v329
        %v8966 = vadd.f32 %v8798, %v330
        %v8967 = vadd.f32 %v8803, %v331
        %v8968 = vadd.f32 %v8806, %v332
        %v8969 = vadd.f32 %v8811, %v333
        %v8970 = vadd.f32 %v8814, %v334
        %v8971 = vadd.f32 %v8819, %v335
        %v8972 = vadd.f32 %v8822, %v336
        %v8973 = vadd.f32 %v8827, %v337
        %v8974 = vadd.f32 %v8830, %v338
        %v8975 = vadd.f32 %v8835, %v339
        %v8976 = vadd.f32 %v8838, %v340
        %v8977 = vadd.f32 %v8843, %v341
        %v8978 = vadd.f32 %v8846, %v342
        %v8979 = vadd.f32 %v8851, %v343
        %v8980 = vadd.f32 %v8854, %v344
        %v8981 = vadd.f32 %v8859, %v345
        %v8982 = vadd.f32 %v8862, %v346
        %v8983 = vadd.f32 %v8867, %v347
        %v8984 = vadd.f32 %v8870, %v348
        %v8985 = vadd.f32 %v8875, %v349
        %v8986 = vadd.f32 %v8878, %v350
        %v8987 = vadd.f32 %v8883, %v351
        %v8988 = vadd.f32 %v8886, %v352
        %v8989 = vadd.f32 %v8891, %v353
        %v8990 = vadd.f32 %v8894, %v354
        %v8991 = vadd.f32 %v8899, %v355
        %v8992 = vadd.f32 %v8902, %v356
        %v8993 = vadd.f32 %v8907, %v357
        %v8994 = vadd.f32 %v8910, %v358
        %v8995 = vadd.f32 %v8915, %v359
        %v8996 = vadd.f32 %v8918, %v360
        %v8997 = vadd.f32 %v8923, %v361
        %v8998 = vadd.f32 %v8926, %v362
        %v8999 = vadd.f32 %v8931, %v363
        %v9000 = vadd.f32 %v8934, %v364
        %v9001 = vmax.f32 %v8937, 0.0
        %v9002 = vmax.f32 %v8938, 0.0
        %v9003 = vmax.f32 %v8939, 0.0
        %v9004 = vmax.f32 %v8940, 0.0
        %v9005 = vmax.f32 %v8941, 0.0
        %v9006 = vmax.f32 %v8942, 0.0
        %v9007 = vmax.f32 %v8943, 0.0
        %v9008 = vmax.f32 %v8944, 0.0
        %v9009 = vmax.f32 %v8945, 0.0
        %v9010 = vmax.f32 %v8946, 0.0
        %v9011 = vmax.f32 %v8947, 0.0
        %v9012 = vmax.f32 %v8948, 0.0
        %v9013 = vmax.f32 %v8949, 0.0
        %v9014 = vmax.f32 %v8950, 0.0
        %v9015 = vmax.f32 %v8951, 0.0
        %v9016 = vmax.f32 %v8952, 0.0
        %v9017 = vmax.f32 %v8953, 0.0
        %v9018 = vmax.f32 %v8954, 0.0
        %v9019 = vmax.f32 %v8955, 0.0
        %v9020 = vmax.f32 %v8956, 0.0
        %v9021 = vmax.f32 %v8957, 0.0
        %v9022 = vmax.f32 %v8958, 0.0
        %v9023 = vmax.f32 %v8959, 0.0
        %v9024 = vmax.f32 %v8960, 0.0
        %v9025 = vmax.f32 %v8961, 0.0
        %v9026 = vmax.f32 %v8962, 0.0
        %v9027 = vmax.f32 %v8963, 0.0
        %v9028 = vmax.f32 %v8964, 0.0
        %v9029 = vmax.f32 %v8965, 0.0
        %v9030 = vmax.f32 %v8966, 0.0
        %v9031 = vmax.f32 %v8967, 0.0
        %v9032 = vmax.f32 %v8968, 0.0
        %v9033 = vmax.f32 %v8969, 0.0
        %v9034 = vmax.f32 %v8970, 0.0
        %v9035 = vmax.f32 %v8971, 0.0
        %v9036 = vmax.f32 %v8972, 0.0
        %v9037 = vmax.f32 %v8973, 0.0
        %v9038 = vmax.f32 %v8974, 0.0
        %v9039 = vmax.f32 %v8975, 0.0
        %v9040 = vmax.f32 %v8976, 0.0
        %v9041 = vmax.f32 %v8977, 0.0
        %v9042 = vmax.f32 %v8978, 0.0
        %v9043 = vmax.f32 %v8979, 0.0
        %v9044 = vmax.f32 %v8980, 0.0
        %v9045 = vmax.f32 %v8981, 0.0
        %v9046 = vmax.f32 %v8982, 0.0
        %v9047 = vmax.f32 %v8983, 0.0
        %v9048 = vmax.f32 %v8984, 0.0
        %v9049 = vmax.f32 %v8985, 0.0
        %v9050 = vmax.f32 %v8986, 0.0
        %v9051 = vmax.f32 %v8987, 0.0
        %v9052 = vmax.f32 %v8988, 0.0
        %v9053 = vmax.f32 %v8989, 0.0
        %v9054 = vmax.f32 %v8990, 0.0
        %v9055 = vmax.f32 %v8991, 0.0
        %v9056 = vmax.f32 %v8992, 0.0
        %v9057 = vmax.f32 %v8993, 0.0
        %v9058 = vmax.f32 %v8994, 0.0
        %v9059 = vmax.f32 %v8995, 0.0
        %v9060 = vmax.f32 %v8996, 0.0
        %v9061 = vmax.f32 %v8997, 0.0
        %v9062 = vmax.f32 %v8998, 0.0
        %v9063 = vmax.f32 %v8999, 0.0
        %v9064 = vmax.f32 %v9000, 0.0
        %9065 = vst [vmem:[%s297] sm:$0xff] %v9001
        %9066 = vst [vmem:[%s297 + $0x8] sm:$0xff] %v9002
        %9067 = vst [vmem:[%s297 + $0x10] sm:$0xff] %v9003
        %9068 = vst [vmem:[%s297 + $0x18] sm:$0xff] %v9004
        %9069 = vst [vmem:[%s297 + $0x20] sm:$0xff] %v9005
        %9070 = vst [vmem:[%s297 + $0x28] sm:$0xff] %v9006
        %9071 = vst [vmem:[%s297 + $0x30] sm:$0xff] %v9007
        %9072 = vst [vmem:[%s297 + $0x38] sm:$0xff] %v9008
        %9073 = vst [vmem:[%s297 + $0x40] sm:$0xff] %v9009
        %9074 = vst [vmem:[%s297 + $0x48] sm:$0xff] %v9010
        %9075 = vst [vmem:[%s297 + $0x50] sm:$0xff] %v9011
        %9076 = vst [vmem:[%s297 + $0x58] sm:$0xff] %v9012
        %9077 = vst [vmem:[%s297 + $0x60] sm:$0xff] %v9013
        %9078 = vst [vmem:[%s297 + $0x68] sm:$0xff] %v9014
        %9079 = vst [vmem:[%s297 + $0x70] sm:$0xff] %v9015
        %9080 = vst [vmem:[%s297 + $0x78] sm:$0xff] %v9016
        %9081 = vst [vmem:[%s297 + $0x80] sm:$0xff] %v9017
        %9082 = vst [vmem:[%s297 + $0x88] sm:$0xff] %v9018
        %9083 = vst [vmem:[%s297 + $0x90] sm:$0xff] %v9019
        %9084 = vst [vmem:[%s297 + $0x98] sm:$0xff] %v9020
        %9085 = vst [vmem:[%s297 + $0xa0] sm:$0xff] %v9021
        %9086 = vst [vmem:[%s297 + $0xa8] sm:$0xff] %v9022
        %9087 = vst [vmem:[%s297 + $0xb0] sm:$0xff] %v9023
        %9088 = vst [vmem:[%s297 + $0xb8] sm:$0xff] %v9024
        %9089 = vst [vmem:[%s297 + $0xc0] sm:$0xff] %v9025
        %9090 = vst [vmem:[%s297 + $0xc8] sm:$0xff] %v9026
        %9091 = vst [vmem:[%s297 + $0xd0] sm:$0xff] %v9027
        %9092 = vst [vmem:[%s297 + $0xd8] sm:$0xff] %v9028
        %9093 = vst [vmem:[%s297 + $0xe0] sm:$0xff] %v9029
        %9094 = vst [vmem:[%s297 + $0xe8] sm:$0xff] %v9030
        %9095 = vst [vmem:[%s297 + $0xf0] sm:$0xff] %v9031
        %9096 = vst [vmem:[%s297 + $0xf8] sm:$0xff] %v9032
        %9097 = vst [vmem:[%s297 + $0x100] sm:$0xff] %v9033
        %9098 = vst [vmem:[%s297 + $0x108] sm:$0xff] %v9034
        %9099 = vst [vmem:[%s297 + $0x110] sm:$0xff] %v9035
        %9100 = vst [vmem:[%s297 + $0x118] sm:$0xff] %v9036
        %9101 = vst [vmem:[%s297 + $0x120] sm:$0xff] %v9037
        %9102 = vst [vmem:[%s297 + $0x128] sm:$0xff] %v9038
        %9103 = vst [vmem:[%s297 + $0x130] sm:$0xff] %v9039
        %9104 = vst [vmem:[%s297 + $0x138] sm:$0xff] %v9040
        %9105 = vst [vmem:[%s297 + $0x140] sm:$0xff] %v9041
        %9106 = vst [vmem:[%s297 + $0x148] sm:$0xff] %v9042
        %9107 = vst [vmem:[%s297 + $0x150] sm:$0xff] %v9043
        %9108 = vst [vmem:[%s297 + $0x158] sm:$0xff] %v9044
        %9109 = vst [vmem:[%s297 + $0x160] sm:$0xff] %v9045
        %9110 = vst [vmem:[%s297 + $0x168] sm:$0xff] %v9046
        %9111 = vst [vmem:[%s297 + $0x170] sm:$0xff] %v9047
        %9112 = vst [vmem:[%s297 + $0x178] sm:$0xff] %v9048
        %9113 = vst [vmem:[%s297 + $0x180] sm:$0xff] %v9049
        %9114 = vst [vmem:[%s297 + $0x188] sm:$0xff] %v9050
        %9115 = vst [vmem:[%s297 + $0x190] sm:$0xff] %v9051
        %9116 = vst [vmem:[%s297 + $0x198] sm:$0xff] %v9052
        %9117 = vst [vmem:[%s297 + $0x1a0] sm:$0xff] %v9053
        %9118 = vst [vmem:[%s297 + $0x1a8] sm:$0xff] %v9054
        %9119 = vst [vmem:[%s297 + $0x1b0] sm:$0xff] %v9055
        %9120 = vst [vmem:[%s297 + $0x1b8] sm:$0xff] %v9056
        %9121 = vst [vmem:[%s297 + $0x1c0] sm:$0xff] %v9057
        %9122 = vst [vmem:[%s297 + $0x1c8] sm:$0xff] %v9058
        %9123 = vst [vmem:[%s297 + $0x1d0] sm:$0xff] %v9059
        %9124 = vst [vmem:[%s297 + $0x1d8] sm:$0xff] %v9060
        %9125 = vst [vmem:[%s297 + $0x1e0] sm:$0xff] %v9061
        %9126 = vst [vmem:[%s297 + $0x1e8] sm:$0xff] %v9062
        %9127 = vst [vmem:[%s297 + $0x1f0] sm:$0xff] %v9063
        %9128 = vst [vmem:[%s297 + $0x1f8] sm:$0xff] %v9064
        %s9129 = sand.u32 %s184, 1
        %s9130 = scalar_lea.sflag [#allocation5], %s9129
        %s9131 = sand.u32 %s184, 1
        %s9132 = smul.addr %s9131, 512
        %s9133 = scalar_lea.vmem [#allocation6], %s9132
        // Predicated region
        $region53: #{bottleneck_forward.1} parent=47 // pred_check
          %p9134 = pneg %p194
        $region54: #{bottleneck_forward.1} parent=47 // pred_check_branch
          %9136 = sbr.rel (%p9134) target = $region56
        $region55: #{bottleneck_forward.1} parent=47 // pred_region
          %s9137 = smul.u32 2, %s24
          %s9139 = ssub.s32 8192, 8192
          %9140 = vsyncadd %s9130, %s9139
          %s9141 = smul.addr %s9137, 32
          %s9142 = smul.addr %s9141, 128
          %s9143 = scalar_lea.hbm %s7, %s9142
          %s9144 = sshll.u32 %s9133, 4
          %s9145 = int_to_ptr.vmem [resolvable:$true] %s9144
          %9150 = dma.vmem_to_hbm [thread:$0]  %s9145, 8192, %s9143, %s9130, 128, 128, 8
        $region56: #{bottleneck_forward.1} parent=47 // pred_fallthru
          _
      $region48: #{bottleneck_forward.1} parent=5 // pred_fallthru
        _
      %p9151 = scmp.le.s32.totalorder 2, %s19
      // Predicated region
      $region57: #{bottleneck_forward.1} parent=5 // pred_check
        %p9152 = pneg %p9151
      $region58: #{bottleneck_forward.1} parent=5 // pred_check_branch
        %9154 = sbr.rel (%p9152) target = $region60
      $region59: #{bottleneck_forward.1} parent=5 // pred_region
        %s9155 = ssub.s32 %s19, 2
        // Predicated region
        $region61: #{bottleneck_forward.1} parent=59 // pred_check
          %p9156 = pneg %p200
        $region62: #{bottleneck_forward.1} parent=59 // pred_check_branch
          %9158 = sbr.rel (%p9156) target = $region64
        $region63: #{bottleneck_forward.1} parent=59 // pred_region
          %s9159 = sand.u32 %s185, 1
          %s9160 = scalar_lea.sflag [#allocation5], %s9159
          %s9161 = sand.u32 %s185, 1
          %s9162 = smul.addr %s9161, 512
          %s9163 = scalar_lea.vmem [#allocation6], %s9162
          %9164 = dma.done %s9160, 8192
        $region64: #{bottleneck_forward.1} parent=59 // pred_fallthru
          _
      $region60: #{bottleneck_forward.1} parent=5 // pred_fallthru
        _
    $region6: #{bottleneck_forward.1} parent=1 // loop_footer
      %s23 = sadd.s32 1, %s19
    $region7: #{bottleneck_forward.1} parent=1 // loop_footer_branch
      %18 = sbr.rel target = $region3
    $region8: #{bottleneck_forward.1} parent=1 // loop_exit
      _
    %9165 = vsyncpa [#allocation4], 1
    %s9166 = scalar_lea.sflag [#allocation4], 1
    %9167 = vsyncpa %s9166, 1
    %9168 = vsyncpa [#allocation5], 1
    %s9169 = scalar_lea.sflag [#allocation5], 1
    %9170 = vsyncpa %s9169, 1

</llo_original>
